<compile_context>
chip_gen: v7x
topology: tpu7x:2x2x1
jax: 0.10.0
libtpu: 0.0.40
codegen_flags: <defaults>
</compile_context>

<pallas_src>
import jax
import jax.numpy as jnp
from jax.experimental import pallas as pl
from jax.experimental.pallas import tpu as pltpu


# ------------------------------ configuration ----------------------------- #

def _cfg(in_channels, height, width, output_size):
    s1, k1 = 4, 8          # conv1
    s2, k2 = 2, 4          # conv2
    s3, k3 = 1, 3          # conv3
    c1o, c2o, c3o = 32, 64, 64

    oh1, ow1 = (height - k1) // s1 + 1, (width - k1) // s1 + 1
    oh2, ow2 = (oh1 - k2) // s2 + 1, (ow1 - k2) // s2 + 1
    oh3, ow3 = (oh2 - k3) // s3 + 1, (ow2 - k3) // s3 + 1
    assert min(oh1, ow1, oh2, ow2, oh3, ow3) >= 1, \
        "input spatially too small for this CNN (needs >= 36x36)"

    gh, gw = -(-height // s1), -(-width // s1)   # ceil-div: zero-padded s2d grid
    hp, wp = gh * s1, gw * s1
    r1 = k1 // s1                                # conv1 -> r1 x r1 stride-1 conv on grid
    s2dc = s1 * s1 * in_channels                 # space-to-depth channel count

    L0 = gh * gw                                 # s2d rows per image
    L1 = gw * (oh1 - 1) + ow1                    # conv1 extended-rows length (pitch gw)
    L3 = ow2 * (oh3 - 1) + ow3                   # conv3 extended length over DENSE a2
    n_flatten = c3o * oh3 * ow3

    # static in-bounds guarantees for every slice used in the kernel
    assert oh1 + r1 - 1 <= gh and ow1 + r1 - 1 <= gw
    assert (r1 - 1) * gw + (r1 - 1) + L1 <= L0
    assert (2 * (oh2 - 1) + k2 - 1) * gw + (k2 - 1) + 2 * (ow2 - 1) <= L1 - 1
    assert (k3 - 1) * ow2 + (k3 - 1) + L3 <= oh2 * ow2

    return dict(
        s1=s1, k1=k1, s2=s2, k2=k2, s3=s3, k3=k3,
        c1o=c1o, c2o=c2o, c3o=c3o,
        gh=gh, gw=gw, hp=hp, wp=wp, r1=r1, s2dc=s2dc,
        oh1=oh1, ow1=ow1, oh2=oh2, ow2=ow2, oh3=oh3, ow3=ow3,
        L0=L0, L1=L1, L3=L3, n_flatten=n_flatten, out=output_size,
        w1m_rows=r1 * r1 * s2dc, w2m_rows=k2 * k2 * c1o, w3m_rows=k3 * k3 * c2o,
    )


# ------------------------------ Pallas kernel ------------------------------ #

def _make_kernel(cfg, batch_tile):
    gw, r1, s2dc = cfg["gw"], cfg["r1"], cfg["s2dc"]
    s2, k2, k3 = cfg["s2"], cfg["k2"], cfg["k3"]
    c1o, c2o, c3o = cfg["c1o"], cfg["c2o"], cfg["c3o"]
    L1, L3 = cfg["L1"], cfg["L3"]
    oh2, ow2, oh3, ow3 = cfg["oh2"], cfg["ow2"], cfg["oh3"], cfg["ow3"]
    bt = batch_tile

    def kernel(x4_ref, w1_ref, b1_ref, w2_ref, b2_ref, w3_ref, b3_ref,
               wl_ref, bl_ref, o_ref, a1_ref, a2_ref, flat_ref):
        for b in range(bt):
            # ---- conv1: r1 x r1 stride-1 conv over the s2d grid (extended) -- #
            acc = None
            for kh in range(r1):
                for kw in range(r1):
                    t = kh * r1 + kw
                    start = kh * gw + kw
                    blk = x4_ref[b, start:start + L1, :]            # (L1, s2dc) bf16
                    wk = w1_ref[t * s2dc:(t + 1) * s2dc, :]
                    d = jnp.dot(blk, wk, preferred_element_type=jnp.float32)
                    acc = d if acc is None else acc + d
            a1_ref[...] = jnp.maximum(acc + b1_ref[...], 0.0)       # (L1, c1o) f32

            # ---- conv2: per-output-row bands, strided width reads -> dense -- #
            for i2 in range(oh2):
                acc = None
                for kh in range(k2):
                    row0 = (s2 * i2 + kh) * gw
                    for kw in range(k2):
                        t = kh * k2 + kw
                        blk = a1_ref[pl.ds(row0 + kw, ow2, stride=s2), :]
                        blk = blk.astype(jnp.bfloat16)              # (ow2, c1o)
                        wk = w2_ref[t * c1o:(t + 1) * c1o, :]
                        d = jnp.dot(blk, wk, preferred_element_type=jnp.float32)
                        acc = d if acc is None else acc + d
                a2_ref[i2 * ow2:(i2 + 1) * ow2, :] = jnp.maximum(acc + b2_ref[...], 0.0)

            # ---- conv3: extended rows over the DENSE a2 (~1.25x rows) ------- #
            acc = None
            for kh in range(k3):
                for kw in range(k3):
                    t = kh * k3 + kw
                    start = kh * ow2 + kw
                    blk = a2_ref[start:start + L3, :].astype(jnp.bfloat16)
                    wk = w3_ref[t * c2o:(t + 1) * c2o, :]
                    d = jnp.dot(blk, wk, preferred_element_type=jnp.float32)
                    acc = d if acc is None else acc + d
            a3 = jnp.maximum(acc + b3_ref[...], 0.0).astype(jnp.bfloat16)   # (L3, c3o)

            # ---- stage valid conv3 rows into this image's flatten row ------- #
            # (h, w, c) order; wlm is repacked identically in prepare_params.
            for i3 in range(oh3):
                for j3 in range(ow3):
                    p = i3 * ow3 + j3
                    r = i3 * ow2 + j3
                    flat_ref[b:b + 1, p * c3o:(p + 1) * c3o] = a3[r:r + 1, :]

        # ---- one (bt, n_flatten) x (n_flatten, OUT) matmul + ReLU ----------- #
        y = jnp.dot(flat_ref[...], wl_ref[...], preferred_element_type=jnp.float32)
        o_ref[0] = jnp.maximum(y + bl_ref[...], 0.0)

    return kernel


# ------------------------------- JAX wrapper ------------------------------- #

def prepare_params(params, in_channels, height, width, output_size):
    """One-time weight repacking into the kernel layout (outside jit), bf16."""
    cfg = _cfg(in_channels, height, width, output_size)
    r1, s1 = cfg["r1"], cfg["s1"]
    bf = jnp.bfloat16

    w1 = params["w1"].reshape(cfg["c1o"], in_channels, r1, s1, r1, s1)
    w1m = jnp.transpose(w1, (2, 4, 3, 5, 1, 0)).reshape(cfg["w1m_rows"], cfg["c1o"])
    w2m = jnp.transpose(params["w2"], (2, 3, 1, 0)).reshape(cfg["w2m_rows"], cfg["c2o"])
    w3m = jnp.transpose(params["w3"], (2, 3, 1, 0)).reshape(cfg["w3m_rows"], cfg["c3o"])
    wl = params["wl"].reshape(output_size, cfg["c3o"], cfg["oh3"], cfg["ow3"])
    wlm = jnp.transpose(wl, (2, 3, 1, 0)).reshape(cfg["n_flatten"], output_size)

    return {
        "w1m": w1m.astype(bf), "b1": params["b1"].reshape(1, -1).astype(jnp.float32),
        "w2m": w2m.astype(bf), "b2": params["b2"].reshape(1, -1).astype(jnp.float32),
        "w3m": w3m.astype(bf), "b3": params["b3"].reshape(1, -1).astype(jnp.float32),
        "wlm": wlm.astype(bf), "bl": params["bl"].reshape(1, -1).astype(jnp.float32),
    }


def build_cnn_forward(in_channels, height, width, output_size, batch_tile=2):
    cfg = _cfg(in_channels, height, width, output_size)
    kernel = _make_kernel(cfg, batch_tile)
    bt, OUT = batch_tile, output_size

    def forward(x_nchw, kp):
        n = x_nchw.shape[0]
        # pad H/W to multiples of the first stride; padded cells never feed
        # valid outputs (conv2/conv3 only ever read valid predecessor rows).
        ph, pw = cfg["hp"] - height, cfg["wp"] - width
        x = x_nchw
        if ph or pw:
            x = jnp.pad(x, ((0, 0), (0, 0), (0, ph), (0, pw)))
        # space-to-depth(4): NCHW -> (n, gh*gw, 16*C), channel order (rh, rw, c)
        s1, gh, gw = cfg["s1"], cfg["gh"], cfg["gw"]
        x = x.reshape(n, in_channels, gh, s1, gw, s1)
        x = jnp.transpose(x, (0, 2, 4, 3, 5, 1)).reshape(n, gh * gw, cfg["s2dc"])
        x4 = x.astype(jnp.bfloat16)
        # pad batch to a multiple of the batch tile (padded images sliced off)
        n_pad = -(-n // bt) * bt
        if n_pad != n:
            x4 = jnp.pad(x4, ((0, n_pad - n), (0, 0), (0, 0)))
        n_tiles = n_pad // bt

        out = pl.pallas_call(
            kernel,
            out_shape=jax.ShapeDtypeStruct((n_tiles, bt, OUT), jnp.float32),
            grid_spec=pltpu.PrefetchScalarGridSpec(
                num_scalar_prefetch=0,
                grid=(n_tiles,),
                in_specs=[
                    pl.BlockSpec((bt, cfg["L0"], cfg["s2dc"]), lambda i: (i, 0, 0)),
                    pl.BlockSpec((cfg["w1m_rows"], cfg["c1o"]), lambda i: (0, 0)),
                    pl.BlockSpec((1, cfg["c1o"]), lambda i: (0, 0)),
                    pl.BlockSpec((cfg["w2m_rows"], cfg["c2o"]), lambda i: (0, 0)),
                    pl.BlockSpec((1, cfg["c2o"]), lambda i: (0, 0)),
                    pl.BlockSpec((cfg["w3m_rows"], cfg["c3o"]), lambda i: (0, 0)),
                    pl.BlockSpec((1, cfg["c3o"]), lambda i: (0, 0)),
                    pl.BlockSpec((cfg["n_flatten"], OUT), lambda i: (0, 0)),
                    pl.BlockSpec((1, OUT), lambda i: (0, 0)),
                ],
                out_specs=pl.BlockSpec((1, bt, OUT), lambda i: (i, 0, 0)),
                scratch_shapes=[
                    pltpu.VMEM((cfg["L1"], cfg["c1o"]), jnp.float32),              # a1
                    pltpu.VMEM((cfg["oh2"] * cfg["ow2"], cfg["c2o"]), jnp.float32),  # a2
                    pltpu.VMEM((bt, cfg["n_flatten"]), jnp.bfloat16),              # flatten
                ],
            ),
            compiler_params=pltpu.CompilerParams(
                dimension_semantics=("parallel",)),
        )(x4, kp["w1m"], kp["b1"], kp["w2m"], kp["b2"],
          kp["w3m"], kp["b3"], kp["wlm"], kp["bl"])
        return out.reshape(n_pad, OUT)[:n]

    return forward


# --------------------------- params & reference ---------------------------- #

def init_params(key, in_channels, n_flatten, output_size):
    keys = jax.random.split(key, 8)

    def w(k, shape, fan_in):
        return jax.random.normal(k, shape, jnp.float32) / jnp.sqrt(float(fan_in))

    return {
        "w1": w(keys[0], (32, in_channels, 8, 8), in_channels * 8 * 8),
        "b1": 0.01 * jax.random.normal(keys[1], (32,), jnp.float32),
        "w2": w(keys[2], (64, 32, 4, 4), 32 * 4 * 4),
        "b2": 0.01 * jax.random.normal(keys[3], (64,), jnp.float32),
        "w3": w(keys[4], (64, 64, 3, 3), 64 * 3 * 3),
        "b3": 0.01 * jax.random.normal(keys[5], (64,), jnp.float32),
        "wl": w(keys[6], (output_size, n_flatten), n_flatten),
        "bl": 0.01 * jax.random.normal(keys[7], (output_size,), jnp.float32),
    }


def _reference_forward(x_nchw, params):
    """Pure-JAX f32 reference (lax.conv) for correctness checking."""
    def conv(x, w, b, s):
        y = jax.lax.conv_general_dilated(
            x, w, window_strides=(s, s), padding="VALID",
            dimension_numbers=("NCHW", "OIHW", "NCHW"))
        return jax.nn.relu(y + b[None, :, None, None])
    x = conv(x_nchw, params["w1"], params["b1"], 4)
    x = conv(x, params["w2"], params["b2"], 2)
    x = conv(x, params["w3"], params["b3"], 1)
    x = x.reshape(x.shape[0], -1)
    return jax.nn.relu(x @ params["wl"].T + params["bl"])


# ----------------------------------- main ---------------------------------- #

if __name__ == "__main__":
    key = jax.random.PRNGKey(0)
    k_x, k_p = jax.random.split(key)

    # 36 -> (36-8)//4+1 = 8 -> (8-4)//2+1 = 3 -> (3-3)//1+1 = 1  => n_flatten = 64
    # (36 is the smallest spatial size this CNN accepts.)
    N, C, H, W = 4, 4, 36, 36
    OUTPUT_SIZE = 16
    BATCH_TILE = 2          # 2 images per grid step -> 2 grid steps (>=2 for v7x megacore)

    cfg = _cfg(C, H, W, OUTPUT_SIZE)
    x = jax.random.uniform(k_x, (N, C, H, W), jnp.float32)
    params = init_params(k_p, C, cfg["n_flatten"], OUTPUT_SIZE)

    # Weight repacking (and bf16 cast) happens once, outside the jitted forward.
    kparams = prepare_params(params, C, H, W, OUTPUT_SIZE)
    forward = jax.jit(build_cnn_forward(C, H, W, OUTPUT_SIZE, batch_tile=BATCH_TILE))

    y = forward(x, kparams)
    y = jax.block_until_ready(y)
    assert y.shape == (N, OUTPUT_SIZE) and y.dtype == jnp.float32

    # bf16 dot operands with f32 accumulation -> a few-percent tolerance vs f32 ref.
    y_ref = _reference_forward(x, params)
    assert jnp.allclose(y, y_ref, rtol=2e-2, atol=2e-2), "mismatch vs reference"

    print("KERNEL_OK")
</pallas_src>

<mosaic_0001>
module attributes {stable_mosaic.version = 11 : i64} {
  func.func @kernel(%arg0: i32, %arg1: memref<2x81x64xbf16, #tpu.memory_space<vmem>>, %arg2: memref<256x32xbf16, #tpu.memory_space<vmem>>, %arg3: memref<1x32xf32, #tpu.memory_space<vmem>>, %arg4: memref<512x64xbf16, #tpu.memory_space<vmem>>, %arg5: memref<1x64xf32, #tpu.memory_space<vmem>>, %arg6: memref<576x64xbf16, #tpu.memory_space<vmem>>, %arg7: memref<1x64xf32, #tpu.memory_space<vmem>>, %arg8: memref<64x16xbf16, #tpu.memory_space<vmem>>, %arg9: memref<1x16xf32, #tpu.memory_space<vmem>>, %arg10: memref<1x2x16xf32, #tpu.memory_space<vmem>>, %arg11: memref<71x32xf32, #tpu.memory_space<vmem>>, %arg12: memref<9x64xf32, #tpu.memory_space<vmem>>, %arg13: memref<2x64xbf16, #tpu.memory_space<vmem>>) attributes {dimension_semantics = [#tpu.dimension_semantics<parallel>], iteration_bounds = array<i64: 2>, scalar_prefetch = 0 : i64, scratch_operands = 3 : i64, tpu.core_type = #tpu.core_type<tc>, window_params = [{transform_indices = @transform_0, window_bounds = array<i64: 2, 81, 64>}, {pipeline_mode = #tpu.pipeline_mode<synchronous>, transform_indices = @transform_1, window_bounds = array<i64: 256, 32>}, {pipeline_mode = #tpu.pipeline_mode<synchronous>, transform_indices = @transform_2, window_bounds = array<i64: 1, 32>}, {pipeline_mode = #tpu.pipeline_mode<synchronous>, transform_indices = @transform_3, window_bounds = array<i64: 512, 64>}, {pipeline_mode = #tpu.pipeline_mode<synchronous>, transform_indices = @transform_4, window_bounds = array<i64: 1, 64>}, {pipeline_mode = #tpu.pipeline_mode<synchronous>, transform_indices = @transform_5, window_bounds = array<i64: 576, 64>}, {pipeline_mode = #tpu.pipeline_mode<synchronous>, transform_indices = @transform_6, window_bounds = array<i64: 1, 64>}, {pipeline_mode = #tpu.pipeline_mode<synchronous>, transform_indices = @transform_7, window_bounds = array<i64: 64, 16>}, {pipeline_mode = #tpu.pipeline_mode<synchronous>, transform_indices = @transform_8, window_bounds = array<i64: 1, 16>}, {transform_indices = @transform_9, window_bounds = array<i64: 1, 2, 16>}]} {
    %c0 = arith.constant 0 : index
    %c0_0 = arith.constant 0 : index
    %c0_1 = arith.constant 0 : index
    %0 = vector.load %arg1[%c0, %c0_0, %c0_1] : memref<2x81x64xbf16, #tpu.memory_space<vmem>>, vector<1x71x64xbf16>
    %1 = vector.shape_cast %0 : vector<1x71x64xbf16> to vector<71x64xbf16>
    %c0_2 = arith.constant 0 : index
    %c0_3 = arith.constant 0 : index
    %2 = vector.load %arg2[%c0_2, %c0_3] : memref<256x32xbf16, #tpu.memory_space<vmem>>, vector<64x32xbf16>
    %cst = arith.constant dense<0.000000e+00> : vector<71x32xf32>
    %3 = tpu.matmul %1, %2, %cst {dimension_numbers = #tpu.dot_dimension_numbers<[1], [0], [0], [1], [0, 0, 1, 1], [], []>} : vector<71x64xbf16>, vector<64x32xbf16>, vector<71x32xf32> -> vector<71x32xf32>
    %c0_4 = arith.constant 0 : index
    %c1 = arith.constant 1 : index
    %c0_5 = arith.constant 0 : index
    %4 = vector.load %arg1[%c0_4, %c1, %c0_5] : memref<2x81x64xbf16, #tpu.memory_space<vmem>>, vector<1x71x64xbf16>
    %5 = vector.shape_cast %4 : vector<1x71x64xbf16> to vector<71x64xbf16>
    %c64 = arith.constant 64 : index
    %c0_6 = arith.constant 0 : index
    %6 = vector.load %arg2[%c64, %c0_6] : memref<256x32xbf16, #tpu.memory_space<vmem>>, vector<64x32xbf16>
    %cst_7 = arith.constant dense<0.000000e+00> : vector<71x32xf32>
    %7 = tpu.matmul %5, %6, %cst_7 {dimension_numbers = #tpu.dot_dimension_numbers<[1], [0], [0], [1], [0, 0, 1, 1], [], []>} : vector<71x64xbf16>, vector<64x32xbf16>, vector<71x32xf32> -> vector<71x32xf32>
    %8 = arith.addf %3, %7 : vector<71x32xf32>
    %c0_8 = arith.constant 0 : index
    %c9 = arith.constant 9 : index
    %c0_9 = arith.constant 0 : index
    %9 = vector.load %arg1[%c0_8, %c9, %c0_9] : memref<2x81x64xbf16, #tpu.memory_space<vmem>>, vector<1x71x64xbf16>
    %10 = vector.shape_cast %9 : vector<1x71x64xbf16> to vector<71x64xbf16>
    %c128 = arith.constant 128 : index
    %c0_10 = arith.constant 0 : index
    %11 = vector.load %arg2[%c128, %c0_10] : memref<256x32xbf16, #tpu.memory_space<vmem>>, vector<64x32xbf16>
    %cst_11 = arith.constant dense<0.000000e+00> : vector<71x32xf32>
    %12 = tpu.matmul %10, %11, %cst_11 {dimension_numbers = #tpu.dot_dimension_numbers<[1], [0], [0], [1], [0, 0, 1, 1], [], []>} : vector<71x64xbf16>, vector<64x32xbf16>, vector<71x32xf32> -> vector<71x32xf32>
    %13 = arith.addf %8, %12 : vector<71x32xf32>
    %c0_12 = arith.constant 0 : index
    %c10 = arith.constant 10 : index
    %c0_13 = arith.constant 0 : index
    %14 = vector.load %arg1[%c0_12, %c10, %c0_13] : memref<2x81x64xbf16, #tpu.memory_space<vmem>>, vector<1x71x64xbf16>
    %15 = vector.shape_cast %14 : vector<1x71x64xbf16> to vector<71x64xbf16>
    %c192 = arith.constant 192 : index
    %c0_14 = arith.constant 0 : index
    %16 = vector.load %arg2[%c192, %c0_14] : memref<256x32xbf16, #tpu.memory_space<vmem>>, vector<64x32xbf16>
    %cst_15 = arith.constant dense<0.000000e+00> : vector<71x32xf32>
    %17 = tpu.matmul %15, %16, %cst_15 {dimension_numbers = #tpu.dot_dimension_numbers<[1], [0], [0], [1], [0, 0, 1, 1], [], []>} : vector<71x64xbf16>, vector<64x32xbf16>, vector<71x32xf32> -> vector<71x32xf32>
    %18 = arith.addf %13, %17 : vector<71x32xf32>
    %c0_16 = arith.constant 0 : index
    %c0_17 = arith.constant 0 : index
    %19 = vector.load %arg3[%c0_16, %c0_17] : memref<1x32xf32, #tpu.memory_space<vmem>>, vector<1x32xf32>
    %20 = vector.broadcast %19 : vector<1x32xf32> to vector<71x32xf32>
    %21 = arith.addf %18, %20 : vector<71x32xf32>
    %cst_18 = arith.constant 0.000000e+00 : f32
    %22 = vector.broadcast %cst_18 : f32 to vector<71x32xf32>
    %23 = arith.maximumf %21, %22 : vector<71x32xf32>
    %c0_19 = arith.constant 0 : index
    %c0_20 = arith.constant 0 : index
    %24 = vector.load %arg11[%c0_19, %c0_20] : memref<71x32xf32, #tpu.memory_space<vmem>>, vector<71x32xf32>
    tpu.vector_store %arg11[%c0_19, %c0_20], %23 {strides = array<i32>} : memref<71x32xf32, #tpu.memory_space<vmem>>, vector<71x32xf32>,
    %c0_21 = arith.constant 0 : index
    %c0_22 = arith.constant 0 : index
    %25 = tpu.strided_load %arg11[%c0_21, %c0_22] {strides = array<i32: 2, 1>} : memref<71x32xf32, #tpu.memory_space<vmem>>, vector<3x32xf32>
    %26 = arith.truncf %25 : vector<3x32xf32> to vector<3x32xbf16>
    %c0_23 = arith.constant 0 : index
    %c0_24 = arith.constant 0 : index
    %27 = vector.load %arg4[%c0_23, %c0_24] : memref<512x64xbf16, #tpu.memory_space<vmem>>, vector<32x64xbf16>
    %cst_25 = arith.constant dense<0.000000e+00> : vector<3x64xf32>
    %28 = tpu.matmul %26, %27, %cst_25 {dimension_numbers = #tpu.dot_dimension_numbers<[1], [0], [0], [1], [0, 0, 1, 1], [], []>} : vector<3x32xbf16>, vector<32x64xbf16>, vector<3x64xf32> -> vector<3x64xf32>
    %c1_26 = arith.constant 1 : index
    %c0_27 = arith.constant 0 : index
    %29 = tpu.strided_load %arg11[%c1_26, %c0_27] {strides = array<i32: 2, 1>} : memref<71x32xf32, #tpu.memory_space<vmem>>, vector<3x32xf32>
    %30 = arith.truncf %29 : vector<3x32xf32> to vector<3x32xbf16>
    %c32 = arith.constant 32 : index
    %c0_28 = arith.constant 0 : index
    %31 = vector.load %arg4[%c32, %c0_28] : memref<512x64xbf16, #tpu.memory_space<vmem>>, vector<32x64xbf16>
    %cst_29 = arith.constant dense<0.000000e+00> : vector<3x64xf32>
    %32 = tpu.matmul %30, %31, %cst_29 {dimension_numbers = #tpu.dot_dimension_numbers<[1], [0], [0], [1], [0, 0, 1, 1], [], []>} : vector<3x32xbf16>, vector<32x64xbf16>, vector<3x64xf32> -> vector<3x64xf32>
    %33 = arith.addf %28, %32 : vector<3x64xf32>
    %c2 = arith.constant 2 : index
    %c0_30 = arith.constant 0 : index
    %34 = tpu.strided_load %arg11[%c2, %c0_30] {strides = array<i32: 2, 1>} : memref<71x32xf32, #tpu.memory_space<vmem>>, vector<3x32xf32>
    %35 = arith.truncf %34 : vector<3x32xf32> to vector<3x32xbf16>
    %c64_31 = arith.constant 64 : index
    %c0_32 = arith.constant 0 : index
    %36 = vector.load %arg4[%c64_31, %c0_32] : memref<512x64xbf16, #tpu.memory_space<vmem>>, vector<32x64xbf16>
    %cst_33 = arith.constant dense<0.000000e+00> : vector<3x64xf32>
    %37 = tpu.matmul %35, %36, %cst_33 {dimension_numbers = #tpu.dot_dimension_numbers<[1], [0], [0], [1], [0, 0, 1, 1], [], []>} : vector<3x32xbf16>, vector<32x64xbf16>, vector<3x64xf32> -> vector<3x64xf32>
    %38 = arith.addf %33, %37 : vector<3x64xf32>
    %c3 = arith.constant 3 : index
    %c0_34 = arith.constant 0 : index
    %39 = tpu.strided_load %arg11[%c3, %c0_34] {strides = array<i32: 2, 1>} : memref<71x32xf32, #tpu.memory_space<vmem>>, vector<3x32xf32>
    %40 = arith.truncf %39 : vector<3x32xf32> to vector<3x32xbf16>
    %c96 = arith.constant 96 : index
    %c0_35 = arith.constant 0 : index
    %41 = vector.load %arg4[%c96, %c0_35] : memref<512x64xbf16, #tpu.memory_space<vmem>>, vector<32x64xbf16>
    %cst_36 = arith.constant dense<0.000000e+00> : vector<3x64xf32>
    %42 = tpu.matmul %40, %41, %cst_36 {dimension_numbers = #tpu.dot_dimension_numbers<[1], [0], [0], [1], [0, 0, 1, 1], [], []>} : vector<3x32xbf16>, vector<32x64xbf16>, vector<3x64xf32> -> vector<3x64xf32>
    %43 = arith.addf %38, %42 : vector<3x64xf32>
    %c9_37 = arith.constant 9 : index
    %c0_38 = arith.constant 0 : index
    %44 = tpu.strided_load %arg11[%c9_37, %c0_38] {strides = array<i32: 2, 1>} : memref<71x32xf32, #tpu.memory_space<vmem>>, vector<3x32xf32>
    %45 = arith.truncf %44 : vector<3x32xf32> to vector<3x32xbf16>
    %c128_39 = arith.constant 128 : index
    %c0_40 = arith.constant 0 : index
    %46 = vector.load %arg4[%c128_39, %c0_40] : memref<512x64xbf16, #tpu.memory_space<vmem>>, vector<32x64xbf16>
    %cst_41 = arith.constant dense<0.000000e+00> : vector<3x64xf32>
    %47 = tpu.matmul %45, %46, %cst_41 {dimension_numbers = #tpu.dot_dimension_numbers<[1], [0], [0], [1], [0, 0, 1, 1], [], []>} : vector<3x32xbf16>, vector<32x64xbf16>, vector<3x64xf32> -> vector<3x64xf32>
    %48 = arith.addf %43, %47 : vector<3x64xf32>
    %c10_42 = arith.constant 10 : index
    %c0_43 = arith.constant 0 : index
    %49 = tpu.strided_load %arg11[%c10_42, %c0_43] {strides = array<i32: 2, 1>} : memref<71x32xf32, #tpu.memory_space<vmem>>, vector<3x32xf32>
    %50 = arith.truncf %49 : vector<3x32xf32> to vector<3x32xbf16>
    %c160 = arith.constant 160 : index
    %c0_44 = arith.constant 0 : index
    %51 = vector.load %arg4[%c160, %c0_44] : memref<512x64xbf16, #tpu.memory_space<vmem>>, vector<32x64xbf16>
    %cst_45 = arith.constant dense<0.000000e+00> : vector<3x64xf32>
    %52 = tpu.matmul %50, %51, %cst_45 {dimension_numbers = #tpu.dot_dimension_numbers<[1], [0], [0], [1], [0, 0, 1, 1], [], []>} : vector<3x32xbf16>, vector<32x64xbf16>, vector<3x64xf32> -> vector<3x64xf32>
    %53 = arith.addf %48, %52 : vector<3x64xf32>
    %c11 = arith.constant 11 : index
    %c0_46 = arith.constant 0 : index
    %54 = tpu.strided_load %arg11[%c11, %c0_46] {strides = array<i32: 2, 1>} : memref<71x32xf32, #tpu.memory_space<vmem>>, vector<3x32xf32>
    %55 = arith.truncf %54 : vector<3x32xf32> to vector<3x32xbf16>
    %c192_47 = arith.constant 192 : index
    %c0_48 = arith.constant 0 : index
    %56 = vector.load %arg4[%c192_47, %c0_48] : memref<512x64xbf16, #tpu.memory_space<vmem>>, vector<32x64xbf16>
    %cst_49 = arith.constant dense<0.000000e+00> : vector<3x64xf32>
    %57 = tpu.matmul %55, %56, %cst_49 {dimension_numbers = #tpu.dot_dimension_numbers<[1], [0], [0], [1], [0, 0, 1, 1], [], []>} : vector<3x32xbf16>, vector<32x64xbf16>, vector<3x64xf32> -> vector<3x64xf32>
    %58 = arith.addf %53, %57 : vector<3x64xf32>
    %c12 = arith.constant 12 : index
    %c0_50 = arith.constant 0 : index
    %59 = tpu.strided_load %arg11[%c12, %c0_50] {strides = array<i32: 2, 1>} : memref<71x32xf32, #tpu.memory_space<vmem>>, vector<3x32xf32>
    %60 = arith.truncf %59 : vector<3x32xf32> to vector<3x32xbf16>
    %c224 = arith.constant 224 : index
    %c0_51 = arith.constant 0 : index
    %61 = vector.load %arg4[%c224, %c0_51] : memref<512x64xbf16, #tpu.memory_space<vmem>>, vector<32x64xbf16>
    %cst_52 = arith.constant dense<0.000000e+00> : vector<3x64xf32>
    %62 = tpu.matmul %60, %61, %cst_52 {dimension_numbers = #tpu.dot_dimension_numbers<[1], [0], [0], [1], [0, 0, 1, 1], [], []>} : vector<3x32xbf16>, vector<32x64xbf16>, vector<3x64xf32> -> vector<3x64xf32>
    %63 = arith.addf %58, %62 : vector<3x64xf32>
    %c18 = arith.constant 18 : index
    %c0_53 = arith.constant 0 : index
    %64 = tpu.strided_load %arg11[%c18, %c0_53] {strides = array<i32: 2, 1>} : memref<71x32xf32, #tpu.memory_space<vmem>>, vector<3x32xf32>
    %65 = arith.truncf %64 : vector<3x32xf32> to vector<3x32xbf16>
    %c256 = arith.constant 256 : index
    %c0_54 = arith.constant 0 : index
    %66 = vector.load %arg4[%c256, %c0_54] : memref<512x64xbf16, #tpu.memory_space<vmem>>, vector<32x64xbf16>
    %cst_55 = arith.constant dense<0.000000e+00> : vector<3x64xf32>
    %67 = tpu.matmul %65, %66, %cst_55 {dimension_numbers = #tpu.dot_dimension_numbers<[1], [0], [0], [1], [0, 0, 1, 1], [], []>} : vector<3x32xbf16>, vector<32x64xbf16>, vector<3x64xf32> -> vector<3x64xf32>
    %68 = arith.addf %63, %67 : vector<3x64xf32>
    %c19 = arith.constant 19 : index
    %c0_56 = arith.constant 0 : index
    %69 = tpu.strided_load %arg11[%c19, %c0_56] {strides = array<i32: 2, 1>} : memref<71x32xf32, #tpu.memory_space<vmem>>, vector<3x32xf32>
    %70 = arith.truncf %69 : vector<3x32xf32> to vector<3x32xbf16>
    %c288 = arith.constant 288 : index
    %c0_57 = arith.constant 0 : index
    %71 = vector.load %arg4[%c288, %c0_57] : memref<512x64xbf16, #tpu.memory_space<vmem>>, vector<32x64xbf16>
    %cst_58 = arith.constant dense<0.000000e+00> : vector<3x64xf32>
    %72 = tpu.matmul %70, %71, %cst_58 {dimension_numbers = #tpu.dot_dimension_numbers<[1], [0], [0], [1], [0, 0, 1, 1], [], []>} : vector<3x32xbf16>, vector<32x64xbf16>, vector<3x64xf32> -> vector<3x64xf32>
    %73 = arith.addf %68, %72 : vector<3x64xf32>
    %c20 = arith.constant 20 : index
    %c0_59 = arith.constant 0 : index
    %74 = tpu.strided_load %arg11[%c20, %c0_59] {strides = array<i32: 2, 1>} : memref<71x32xf32, #tpu.memory_space<vmem>>, vector<3x32xf32>
    %75 = arith.truncf %74 : vector<3x32xf32> to vector<3x32xbf16>
    %c320 = arith.constant 320 : index
    %c0_60 = arith.constant 0 : index
    %76 = vector.load %arg4[%c320, %c0_60] : memref<512x64xbf16, #tpu.memory_space<vmem>>, vector<32x64xbf16>
    %cst_61 = arith.constant dense<0.000000e+00> : vector<3x64xf32>
    %77 = tpu.matmul %75, %76, %cst_61 {dimension_numbers = #tpu.dot_dimension_numbers<[1], [0], [0], [1], [0, 0, 1, 1], [], []>} : vector<3x32xbf16>, vector<32x64xbf16>, vector<3x64xf32> -> vector<3x64xf32>
    %78 = arith.addf %73, %77 : vector<3x64xf32>
    %c21 = arith.constant 21 : index
    %c0_62 = arith.constant 0 : index
    %79 = tpu.strided_load %arg11[%c21, %c0_62] {strides = array<i32: 2, 1>} : memref<71x32xf32, #tpu.memory_space<vmem>>, vector<3x32xf32>
    %80 = arith.truncf %79 : vector<3x32xf32> to vector<3x32xbf16>
    %c352 = arith.constant 352 : index
    %c0_63 = arith.constant 0 : index
    %81 = vector.load %arg4[%c352, %c0_63] : memref<512x64xbf16, #tpu.memory_space<vmem>>, vector<32x64xbf16>
    %cst_64 = arith.constant dense<0.000000e+00> : vector<3x64xf32>
    %82 = tpu.matmul %80, %81, %cst_64 {dimension_numbers = #tpu.dot_dimension_numbers<[1], [0], [0], [1], [0, 0, 1, 1], [], []>} : vector<3x32xbf16>, vector<32x64xbf16>, vector<3x64xf32> -> vector<3x64xf32>
    %83 = arith.addf %78, %82 : vector<3x64xf32>
    %c27 = arith.constant 27 : index
    %c0_65 = arith.constant 0 : index
    %84 = tpu.strided_load %arg11[%c27, %c0_65] {strides = array<i32: 2, 1>} : memref<71x32xf32, #tpu.memory_space<vmem>>, vector<3x32xf32>
    %85 = arith.truncf %84 : vector<3x32xf32> to vector<3x32xbf16>
    %c384 = arith.constant 384 : index
    %c0_66 = arith.constant 0 : index
    %86 = vector.load %arg4[%c384, %c0_66] : memref<512x64xbf16, #tpu.memory_space<vmem>>, vector<32x64xbf16>
    %cst_67 = arith.constant dense<0.000000e+00> : vector<3x64xf32>
    %87 = tpu.matmul %85, %86, %cst_67 {dimension_numbers = #tpu.dot_dimension_numbers<[1], [0], [0], [1], [0, 0, 1, 1], [], []>} : vector<3x32xbf16>, vector<32x64xbf16>, vector<3x64xf32> -> vector<3x64xf32>
    %88 = arith.addf %83, %87 : vector<3x64xf32>
    %c28 = arith.constant 28 : index
    %c0_68 = arith.constant 0 : index
    %89 = tpu.strided_load %arg11[%c28, %c0_68] {strides = array<i32: 2, 1>} : memref<71x32xf32, #tpu.memory_space<vmem>>, vector<3x32xf32>
    %90 = arith.truncf %89 : vector<3x32xf32> to vector<3x32xbf16>
    %c416 = arith.constant 416 : index
    %c0_69 = arith.constant 0 : index
    %91 = vector.load %arg4[%c416, %c0_69] : memref<512x64xbf16, #tpu.memory_space<vmem>>, vector<32x64xbf16>
    %cst_70 = arith.constant dense<0.000000e+00> : vector<3x64xf32>
    %92 = tpu.matmul %90, %91, %cst_70 {dimension_numbers = #tpu.dot_dimension_numbers<[1], [0], [0], [1], [0, 0, 1, 1], [], []>} : vector<3x32xbf16>, vector<32x64xbf16>, vector<3x64xf32> -> vector<3x64xf32>
    %93 = arith.addf %88, %92 : vector<3x64xf32>
    %c29 = arith.constant 29 : index
    %c0_71 = arith.constant 0 : index
    %94 = tpu.strided_load %arg11[%c29, %c0_71] {strides = array<i32: 2, 1>} : memref<71x32xf32, #tpu.memory_space<vmem>>, vector<3x32xf32>
    %95 = arith.truncf %94 : vector<3x32xf32> to vector<3x32xbf16>
    %c448 = arith.constant 448 : index
    %c0_72 = arith.constant 0 : index
    %96 = vector.load %arg4[%c448, %c0_72] : memref<512x64xbf16, #tpu.memory_space<vmem>>, vector<32x64xbf16>
    %cst_73 = arith.constant dense<0.000000e+00> : vector<3x64xf32>
    %97 = tpu.matmul %95, %96, %cst_73 {dimension_numbers = #tpu.dot_dimension_numbers<[1], [0], [0], [1], [0, 0, 1, 1], [], []>} : vector<3x32xbf16>, vector<32x64xbf16>, vector<3x64xf32> -> vector<3x64xf32>
    %98 = arith.addf %93, %97 : vector<3x64xf32>
    %c30 = arith.constant 30 : index
    %c0_74 = arith.constant 0 : index
    %99 = tpu.strided_load %arg11[%c30, %c0_74] {strides = array<i32: 2, 1>} : memref<71x32xf32, #tpu.memory_space<vmem>>, vector<3x32xf32>
    %100 = arith.truncf %99 : vector<3x32xf32> to vector<3x32xbf16>
    %c480 = arith.constant 480 : index
    %c0_75 = arith.constant 0 : index
    %101 = vector.load %arg4[%c480, %c0_75] : memref<512x64xbf16, #tpu.memory_space<vmem>>, vector<32x64xbf16>
    %cst_76 = arith.constant dense<0.000000e+00> : vector<3x64xf32>
    %102 = tpu.matmul %100, %101, %cst_76 {dimension_numbers = #tpu.dot_dimension_numbers<[1], [0], [0], [1], [0, 0, 1, 1], [], []>} : vector<3x32xbf16>, vector<32x64xbf16>, vector<3x64xf32> -> vector<3x64xf32>
    %103 = arith.addf %98, %102 : vector<3x64xf32>
    %c0_77 = arith.constant 0 : index
    %c0_78 = arith.constant 0 : index
    %104 = vector.load %arg5[%c0_77, %c0_78] : memref<1x64xf32, #tpu.memory_space<vmem>>, vector<1x64xf32>
    %105 = vector.broadcast %104 : vector<1x64xf32> to vector<3x64xf32>
    %106 = arith.addf %103, %105 : vector<3x64xf32>
    %cst_79 = arith.constant 0.000000e+00 : f32
    %107 = vector.broadcast %cst_79 : f32 to vector<3x64xf32>
    %108 = arith.maximumf %106, %107 : vector<3x64xf32>
    %c0_80 = arith.constant 0 : index
    %c0_81 = arith.constant 0 : index
    %109 = vector.load %arg12[%c0_80, %c0_81] : memref<9x64xf32, #tpu.memory_space<vmem>>, vector<3x64xf32>
    tpu.vector_store %arg12[%c0_80, %c0_81], %108 {strides = array<i32>} : memref<9x64xf32, #tpu.memory_space<vmem>>, vector<3x64xf32>,
    %c18_82 = arith.constant 18 : index
    %c0_83 = arith.constant 0 : index
    %110 = tpu.strided_load %arg11[%c18_82, %c0_83] {strides = array<i32: 2, 1>} : memref<71x32xf32, #tpu.memory_space<vmem>>, vector<3x32xf32>
    %111 = arith.truncf %110 : vector<3x32xf32> to vector<3x32xbf16>
    %c0_84 = arith.constant 0 : index
    %c0_85 = arith.constant 0 : index
    %112 = vector.load %arg4[%c0_84, %c0_85] : memref<512x64xbf16, #tpu.memory_space<vmem>>, vector<32x64xbf16>
    %cst_86 = arith.constant dense<0.000000e+00> : vector<3x64xf32>
    %113 = tpu.matmul %111, %112, %cst_86 {dimension_numbers = #tpu.dot_dimension_numbers<[1], [0], [0], [1], [0, 0, 1, 1], [], []>} : vector<3x32xbf16>, vector<32x64xbf16>, vector<3x64xf32> -> vector<3x64xf32>
    %c19_87 = arith.constant 19 : index
    %c0_88 = arith.constant 0 : index
    %114 = tpu.strided_load %arg11[%c19_87, %c0_88] {strides = array<i32: 2, 1>} : memref<71x32xf32, #tpu.memory_space<vmem>>, vector<3x32xf32>
    %115 = arith.truncf %114 : vector<3x32xf32> to vector<3x32xbf16>
    %c32_89 = arith.constant 32 : index
    %c0_90 = arith.constant 0 : index
    %116 = vector.load %arg4[%c32_89, %c0_90] : memref<512x64xbf16, #tpu.memory_space<vmem>>, vector<32x64xbf16>
    %cst_91 = arith.constant dense<0.000000e+00> : vector<3x64xf32>
    %117 = tpu.matmul %115, %116, %cst_91 {dimension_numbers = #tpu.dot_dimension_numbers<[1], [0], [0], [1], [0, 0, 1, 1], [], []>} : vector<3x32xbf16>, vector<32x64xbf16>, vector<3x64xf32> -> vector<3x64xf32>
    %118 = arith.addf %113, %117 : vector<3x64xf32>
    %c20_92 = arith.constant 20 : index
    %c0_93 = arith.constant 0 : index
    %119 = tpu.strided_load %arg11[%c20_92, %c0_93] {strides = array<i32: 2, 1>} : memref<71x32xf32, #tpu.memory_space<vmem>>, vector<3x32xf32>
    %120 = arith.truncf %119 : vector<3x32xf32> to vector<3x32xbf16>
    %c64_94 = arith.constant 64 : index
    %c0_95 = arith.constant 0 : index
    %121 = vector.load %arg4[%c64_94, %c0_95] : memref<512x64xbf16, #tpu.memory_space<vmem>>, vector<32x64xbf16>
    %cst_96 = arith.constant dense<0.000000e+00> : vector<3x64xf32>
    %122 = tpu.matmul %120, %121, %cst_96 {dimension_numbers = #tpu.dot_dimension_numbers<[1], [0], [0], [1], [0, 0, 1, 1], [], []>} : vector<3x32xbf16>, vector<32x64xbf16>, vector<3x64xf32> -> vector<3x64xf32>
    %123 = arith.addf %118, %122 : vector<3x64xf32>
    %c21_97 = arith.constant 21 : index
    %c0_98 = arith.constant 0 : index
    %124 = tpu.strided_load %arg11[%c21_97, %c0_98] {strides = array<i32: 2, 1>} : memref<71x32xf32, #tpu.memory_space<vmem>>, vector<3x32xf32>
    %125 = arith.truncf %124 : vector<3x32xf32> to vector<3x32xbf16>
    %c96_99 = arith.constant 96 : index
    %c0_100 = arith.constant 0 : index
    %126 = vector.load %arg4[%c96_99, %c0_100] : memref<512x64xbf16, #tpu.memory_space<vmem>>, vector<32x64xbf16>
    %cst_101 = arith.constant dense<0.000000e+00> : vector<3x64xf32>
    %127 = tpu.matmul %125, %126, %cst_101 {dimension_numbers = #tpu.dot_dimension_numbers<[1], [0], [0], [1], [0, 0, 1, 1], [], []>} : vector<3x32xbf16>, vector<32x64xbf16>, vector<3x64xf32> -> vector<3x64xf32>
    %128 = arith.addf %123, %127 : vector<3x64xf32>
    %c27_102 = arith.constant 27 : index
    %c0_103 = arith.constant 0 : index
    %129 = tpu.strided_load %arg11[%c27_102, %c0_103] {strides = array<i32: 2, 1>} : memref<71x32xf32, #tpu.memory_space<vmem>>, vector<3x32xf32>
    %130 = arith.truncf %129 : vector<3x32xf32> to vector<3x32xbf16>
    %c128_104 = arith.constant 128 : index
    %c0_105 = arith.constant 0 : index
    %131 = vector.load %arg4[%c128_104, %c0_105] : memref<512x64xbf16, #tpu.memory_space<vmem>>, vector<32x64xbf16>
    %cst_106 = arith.constant dense<0.000000e+00> : vector<3x64xf32>
    %132 = tpu.matmul %130, %131, %cst_106 {dimension_numbers = #tpu.dot_dimension_numbers<[1], [0], [0], [1], [0, 0, 1, 1], [], []>} : vector<3x32xbf16>, vector<32x64xbf16>, vector<3x64xf32> -> vector<3x64xf32>
    %133 = arith.addf %128, %132 : vector<3x64xf32>
    %c28_107 = arith.constant 28 : index
    %c0_108 = arith.constant 0 : index
    %134 = tpu.strided_load %arg11[%c28_107, %c0_108] {strides = array<i32: 2, 1>} : memref<71x32xf32, #tpu.memory_space<vmem>>, vector<3x32xf32>
    %135 = arith.truncf %134 : vector<3x32xf32> to vector<3x32xbf16>
    %c160_109 = arith.constant 160 : index
    %c0_110 = arith.constant 0 : index
    %136 = vector.load %arg4[%c160_109, %c0_110] : memref<512x64xbf16, #tpu.memory_space<vmem>>, vector<32x64xbf16>
    %cst_111 = arith.constant dense<0.000000e+00> : vector<3x64xf32>
    %137 = tpu.matmul %135, %136, %cst_111 {dimension_numbers = #tpu.dot_dimension_numbers<[1], [0], [0], [1], [0, 0, 1, 1], [], []>} : vector<3x32xbf16>, vector<32x64xbf16>, vector<3x64xf32> -> vector<3x64xf32>
    %138 = arith.addf %133, %137 : vector<3x64xf32>
    %c29_112 = arith.constant 29 : index
    %c0_113 = arith.constant 0 : index
    %139 = tpu.strided_load %arg11[%c29_112, %c0_113] {strides = array<i32: 2, 1>} : memref<71x32xf32, #tpu.memory_space<vmem>>, vector<3x32xf32>
    %140 = arith.truncf %139 : vector<3x32xf32> to vector<3x32xbf16>
    %c192_114 = arith.constant 192 : index
    %c0_115 = arith.constant 0 : index
    %141 = vector.load %arg4[%c192_114, %c0_115] : memref<512x64xbf16, #tpu.memory_space<vmem>>, vector<32x64xbf16>
    %cst_116 = arith.constant dense<0.000000e+00> : vector<3x64xf32>
    %142 = tpu.matmul %140, %141, %cst_116 {dimension_numbers = #tpu.dot_dimension_numbers<[1], [0], [0], [1], [0, 0, 1, 1], [], []>} : vector<3x32xbf16>, vector<32x64xbf16>, vector<3x64xf32> -> vector<3x64xf32>
    %143 = arith.addf %138, %142 : vector<3x64xf32>
    %c30_117 = arith.constant 30 : index
    %c0_118 = arith.constant 0 : index
    %144 = tpu.strided_load %arg11[%c30_117, %c0_118] {strides = array<i32: 2, 1>} : memref<71x32xf32, #tpu.memory_space<vmem>>, vector<3x32xf32>
    %145 = arith.truncf %144 : vector<3x32xf32> to vector<3x32xbf16>
    %c224_119 = arith.constant 224 : index
    %c0_120 = arith.constant 0 : index
    %146 = vector.load %arg4[%c224_119, %c0_120] : memref<512x64xbf16, #tpu.memory_space<vmem>>, vector<32x64xbf16>
    %cst_121 = arith.constant dense<0.000000e+00> : vector<3x64xf32>
    %147 = tpu.matmul %145, %146, %cst_121 {dimension_numbers = #tpu.dot_dimension_numbers<[1], [0], [0], [1], [0, 0, 1, 1], [], []>} : vector<3x32xbf16>, vector<32x64xbf16>, vector<3x64xf32> -> vector<3x64xf32>
    %148 = arith.addf %143, %147 : vector<3x64xf32>
    %c36 = arith.constant 36 : index
    %c0_122 = arith.constant 0 : index
    %149 = tpu.strided_load %arg11[%c36, %c0_122] {strides = array<i32: 2, 1>} : memref<71x32xf32, #tpu.memory_space<vmem>>, vector<3x32xf32>
    %150 = arith.truncf %149 : vector<3x32xf32> to vector<3x32xbf16>
    %c256_123 = arith.constant 256 : index
    %c0_124 = arith.constant 0 : index
    %151 = vector.load %arg4[%c256_123, %c0_124] : memref<512x64xbf16, #tpu.memory_space<vmem>>, vector<32x64xbf16>
    %cst_125 = arith.constant dense<0.000000e+00> : vector<3x64xf32>
    %152 = tpu.matmul %150, %151, %cst_125 {dimension_numbers = #tpu.dot_dimension_numbers<[1], [0], [0], [1], [0, 0, 1, 1], [], []>} : vector<3x32xbf16>, vector<32x64xbf16>, vector<3x64xf32> -> vector<3x64xf32>
    %153 = arith.addf %148, %152 : vector<3x64xf32>
    %c37 = arith.constant 37 : index
    %c0_126 = arith.constant 0 : index
    %154 = tpu.strided_load %arg11[%c37, %c0_126] {strides = array<i32: 2, 1>} : memref<71x32xf32, #tpu.memory_space<vmem>>, vector<3x32xf32>
    %155 = arith.truncf %154 : vector<3x32xf32> to vector<3x32xbf16>
    %c288_127 = arith.constant 288 : index
    %c0_128 = arith.constant 0 : index
    %156 = vector.load %arg4[%c288_127, %c0_128] : memref<512x64xbf16, #tpu.memory_space<vmem>>, vector<32x64xbf16>
    %cst_129 = arith.constant dense<0.000000e+00> : vector<3x64xf32>
    %157 = tpu.matmul %155, %156, %cst_129 {dimension_numbers = #tpu.dot_dimension_numbers<[1], [0], [0], [1], [0, 0, 1, 1], [], []>} : vector<3x32xbf16>, vector<32x64xbf16>, vector<3x64xf32> -> vector<3x64xf32>
    %158 = arith.addf %153, %157 : vector<3x64xf32>
    %c38 = arith.constant 38 : index
    %c0_130 = arith.constant 0 : index
    %159 = tpu.strided_load %arg11[%c38, %c0_130] {strides = array<i32: 2, 1>} : memref<71x32xf32, #tpu.memory_space<vmem>>, vector<3x32xf32>
    %160 = arith.truncf %159 : vector<3x32xf32> to vector<3x32xbf16>
    %c320_131 = arith.constant 320 : index
    %c0_132 = arith.constant 0 : index
    %161 = vector.load %arg4[%c320_131, %c0_132] : memref<512x64xbf16, #tpu.memory_space<vmem>>, vector<32x64xbf16>
    %cst_133 = arith.constant dense<0.000000e+00> : vector<3x64xf32>
    %162 = tpu.matmul %160, %161, %cst_133 {dimension_numbers = #tpu.dot_dimension_numbers<[1], [0], [0], [1], [0, 0, 1, 1], [], []>} : vector<3x32xbf16>, vector<32x64xbf16>, vector<3x64xf32> -> vector<3x64xf32>
    %163 = arith.addf %158, %162 : vector<3x64xf32>
    %c39 = arith.constant 39 : index
    %c0_134 = arith.constant 0 : index
    %164 = tpu.strided_load %arg11[%c39, %c0_134] {strides = array<i32: 2, 1>} : memref<71x32xf32, #tpu.memory_space<vmem>>, vector<3x32xf32>
    %165 = arith.truncf %164 : vector<3x32xf32> to vector<3x32xbf16>
    %c352_135 = arith.constant 352 : index
    %c0_136 = arith.constant 0 : index
    %166 = vector.load %arg4[%c352_135, %c0_136] : memref<512x64xbf16, #tpu.memory_space<vmem>>, vector<32x64xbf16>
    %cst_137 = arith.constant dense<0.000000e+00> : vector<3x64xf32>
    %167 = tpu.matmul %165, %166, %cst_137 {dimension_numbers = #tpu.dot_dimension_numbers<[1], [0], [0], [1], [0, 0, 1, 1], [], []>} : vector<3x32xbf16>, vector<32x64xbf16>, vector<3x64xf32> -> vector<3x64xf32>
    %168 = arith.addf %163, %167 : vector<3x64xf32>
    %c45 = arith.constant 45 : index
    %c0_138 = arith.constant 0 : index
    %169 = tpu.strided_load %arg11[%c45, %c0_138] {strides = array<i32: 2, 1>} : memref<71x32xf32, #tpu.memory_space<vmem>>, vector<3x32xf32>
    %170 = arith.truncf %169 : vector<3x32xf32> to vector<3x32xbf16>
    %c384_139 = arith.constant 384 : index
    %c0_140 = arith.constant 0 : index
    %171 = vector.load %arg4[%c384_139, %c0_140] : memref<512x64xbf16, #tpu.memory_space<vmem>>, vector<32x64xbf16>
    %cst_141 = arith.constant dense<0.000000e+00> : vector<3x64xf32>
    %172 = tpu.matmul %170, %171, %cst_141 {dimension_numbers = #tpu.dot_dimension_numbers<[1], [0], [0], [1], [0, 0, 1, 1], [], []>} : vector<3x32xbf16>, vector<32x64xbf16>, vector<3x64xf32> -> vector<3x64xf32>
    %173 = arith.addf %168, %172 : vector<3x64xf32>
    %c46 = arith.constant 46 : index
    %c0_142 = arith.constant 0 : index
    %174 = tpu.strided_load %arg11[%c46, %c0_142] {strides = array<i32: 2, 1>} : memref<71x32xf32, #tpu.memory_space<vmem>>, vector<3x32xf32>
    %175 = arith.truncf %174 : vector<3x32xf32> to vector<3x32xbf16>
    %c416_143 = arith.constant 416 : index
    %c0_144 = arith.constant 0 : index
    %176 = vector.load %arg4[%c416_143, %c0_144] : memref<512x64xbf16, #tpu.memory_space<vmem>>, vector<32x64xbf16>
    %cst_145 = arith.constant dense<0.000000e+00> : vector<3x64xf32>
    %177 = tpu.matmul %175, %176, %cst_145 {dimension_numbers = #tpu.dot_dimension_numbers<[1], [0], [0], [1], [0, 0, 1, 1], [], []>} : vector<3x32xbf16>, vector<32x64xbf16>, vector<3x64xf32> -> vector<3x64xf32>
    %178 = arith.addf %173, %177 : vector<3x64xf32>
    %c47 = arith.constant 47 : index
    %c0_146 = arith.constant 0 : index
    %179 = tpu.strided_load %arg11[%c47, %c0_146] {strides = array<i32: 2, 1>} : memref<71x32xf32, #tpu.memory_space<vmem>>, vector<3x32xf32>
    %180 = arith.truncf %179 : vector<3x32xf32> to vector<3x32xbf16>
    %c448_147 = arith.constant 448 : index
    %c0_148 = arith.constant 0 : index
    %181 = vector.load %arg4[%c448_147, %c0_148] : memref<512x64xbf16, #tpu.memory_space<vmem>>, vector<32x64xbf16>
    %cst_149 = arith.constant dense<0.000000e+00> : vector<3x64xf32>
    %182 = tpu.matmul %180, %181, %cst_149 {dimension_numbers = #tpu.dot_dimension_numbers<[1], [0], [0], [1], [0, 0, 1, 1], [], []>} : vector<3x32xbf16>, vector<32x64xbf16>, vector<3x64xf32> -> vector<3x64xf32>
    %183 = arith.addf %178, %182 : vector<3x64xf32>
    %c48 = arith.constant 48 : index
    %c0_150 = arith.constant 0 : index
    %184 = tpu.strided_load %arg11[%c48, %c0_150] {strides = array<i32: 2, 1>} : memref<71x32xf32, #tpu.memory_space<vmem>>, vector<3x32xf32>
    %185 = arith.truncf %184 : vector<3x32xf32> to vector<3x32xbf16>
    %c480_151 = arith.constant 480 : index
    %c0_152 = arith.constant 0 : index
    %186 = vector.load %arg4[%c480_151, %c0_152] : memref<512x64xbf16, #tpu.memory_space<vmem>>, vector<32x64xbf16>
    %cst_153 = arith.constant dense<0.000000e+00> : vector<3x64xf32>
    %187 = tpu.matmul %185, %186, %cst_153 {dimension_numbers = #tpu.dot_dimension_numbers<[1], [0], [0], [1], [0, 0, 1, 1], [], []>} : vector<3x32xbf16>, vector<32x64xbf16>, vector<3x64xf32> -> vector<3x64xf32>
    %188 = arith.addf %183, %187 : vector<3x64xf32>
    %c0_154 = arith.constant 0 : index
    %c0_155 = arith.constant 0 : index
    %189 = vector.load %arg5[%c0_154, %c0_155] : memref<1x64xf32, #tpu.memory_space<vmem>>, vector<1x64xf32>
    %190 = vector.broadcast %189 : vector<1x64xf32> to vector<3x64xf32>
    %191 = arith.addf %188, %190 : vector<3x64xf32>
    %cst_156 = arith.constant 0.000000e+00 : f32
    %192 = vector.broadcast %cst_156 : f32 to vector<3x64xf32>
    %193 = arith.maximumf %191, %192 : vector<3x64xf32>
    %c3_157 = arith.constant 3 : index
    %c0_158 = arith.constant 0 : index
    %194 = vector.load %arg12[%c3_157, %c0_158] : memref<9x64xf32, #tpu.memory_space<vmem>>, vector<3x64xf32>
    tpu.vector_store %arg12[%c3_157, %c0_158], %193 {strides = array<i32>} : memref<9x64xf32, #tpu.memory_space<vmem>>, vector<3x64xf32>,
    %c36_159 = arith.constant 36 : index
    %c0_160 = arith.constant 0 : index
    %195 = tpu.strided_load %arg11[%c36_159, %c0_160] {strides = array<i32: 2, 1>} : memref<71x32xf32, #tpu.memory_space<vmem>>, vector<3x32xf32>
    %196 = arith.truncf %195 : vector<3x32xf32> to vector<3x32xbf16>
    %c0_161 = arith.constant 0 : index
    %c0_162 = arith.constant 0 : index
    %197 = vector.load %arg4[%c0_161, %c0_162] : memref<512x64xbf16, #tpu.memory_space<vmem>>, vector<32x64xbf16>
    %cst_163 = arith.constant dense<0.000000e+00> : vector<3x64xf32>
    %198 = tpu.matmul %196, %197, %cst_163 {dimension_numbers = #tpu.dot_dimension_numbers<[1], [0], [0], [1], [0, 0, 1, 1], [], []>} : vector<3x32xbf16>, vector<32x64xbf16>, vector<3x64xf32> -> vector<3x64xf32>
    %c37_164 = arith.constant 37 : index
    %c0_165 = arith.constant 0 : index
    %199 = tpu.strided_load %arg11[%c37_164, %c0_165] {strides = array<i32: 2, 1>} : memref<71x32xf32, #tpu.memory_space<vmem>>, vector<3x32xf32>
    %200 = arith.truncf %199 : vector<3x32xf32> to vector<3x32xbf16>
    %c32_166 = arith.constant 32 : index
    %c0_167 = arith.constant 0 : index
    %201 = vector.load %arg4[%c32_166, %c0_167] : memref<512x64xbf16, #tpu.memory_space<vmem>>, vector<32x64xbf16>
    %cst_168 = arith.constant dense<0.000000e+00> : vector<3x64xf32>
    %202 = tpu.matmul %200, %201, %cst_168 {dimension_numbers = #tpu.dot_dimension_numbers<[1], [0], [0], [1], [0, 0, 1, 1], [], []>} : vector<3x32xbf16>, vector<32x64xbf16>, vector<3x64xf32> -> vector<3x64xf32>
    %203 = arith.addf %198, %202 : vector<3x64xf32>
    %c38_169 = arith.constant 38 : index
    %c0_170 = arith.constant 0 : index
    %204 = tpu.strided_load %arg11[%c38_169, %c0_170] {strides = array<i32: 2, 1>} : memref<71x32xf32, #tpu.memory_space<vmem>>, vector<3x32xf32>
    %205 = arith.truncf %204 : vector<3x32xf32> to vector<3x32xbf16>
    %c64_171 = arith.constant 64 : index
    %c0_172 = arith.constant 0 : index
    %206 = vector.load %arg4[%c64_171, %c0_172] : memref<512x64xbf16, #tpu.memory_space<vmem>>, vector<32x64xbf16>
    %cst_173 = arith.constant dense<0.000000e+00> : vector<3x64xf32>
    %207 = tpu.matmul %205, %206, %cst_173 {dimension_numbers = #tpu.dot_dimension_numbers<[1], [0], [0], [1], [0, 0, 1, 1], [], []>} : vector<3x32xbf16>, vector<32x64xbf16>, vector<3x64xf32> -> vector<3x64xf32>
    %208 = arith.addf %203, %207 : vector<3x64xf32>
    %c39_174 = arith.constant 39 : index
    %c0_175 = arith.constant 0 : index
    %209 = tpu.strided_load %arg11[%c39_174, %c0_175] {strides = array<i32: 2, 1>} : memref<71x32xf32, #tpu.memory_space<vmem>>, vector<3x32xf32>
    %210 = arith.truncf %209 : vector<3x32xf32> to vector<3x32xbf16>
    %c96_176 = arith.constant 96 : index
    %c0_177 = arith.constant 0 : index
    %211 = vector.load %arg4[%c96_176, %c0_177] : memref<512x64xbf16, #tpu.memory_space<vmem>>, vector<32x64xbf16>
    %cst_178 = arith.constant dense<0.000000e+00> : vector<3x64xf32>
    %212 = tpu.matmul %210, %211, %cst_178 {dimension_numbers = #tpu.dot_dimension_numbers<[1], [0], [0], [1], [0, 0, 1, 1], [], []>} : vector<3x32xbf16>, vector<32x64xbf16>, vector<3x64xf32> -> vector<3x64xf32>
    %213 = arith.addf %208, %212 : vector<3x64xf32>
    %c45_179 = arith.constant 45 : index
    %c0_180 = arith.constant 0 : index
    %214 = tpu.strided_load %arg11[%c45_179, %c0_180] {strides = array<i32: 2, 1>} : memref<71x32xf32, #tpu.memory_space<vmem>>, vector<3x32xf32>
    %215 = arith.truncf %214 : vector<3x32xf32> to vector<3x32xbf16>
    %c128_181 = arith.constant 128 : index
    %c0_182 = arith.constant 0 : index
    %216 = vector.load %arg4[%c128_181, %c0_182] : memref<512x64xbf16, #tpu.memory_space<vmem>>, vector<32x64xbf16>
    %cst_183 = arith.constant dense<0.000000e+00> : vector<3x64xf32>
    %217 = tpu.matmul %215, %216, %cst_183 {dimension_numbers = #tpu.dot_dimension_numbers<[1], [0], [0], [1], [0, 0, 1, 1], [], []>} : vector<3x32xbf16>, vector<32x64xbf16>, vector<3x64xf32> -> vector<3x64xf32>
    %218 = arith.addf %213, %217 : vector<3x64xf32>
    %c46_184 = arith.constant 46 : index
    %c0_185 = arith.constant 0 : index
    %219 = tpu.strided_load %arg11[%c46_184, %c0_185] {strides = array<i32: 2, 1>} : memref<71x32xf32, #tpu.memory_space<vmem>>, vector<3x32xf32>
    %220 = arith.truncf %219 : vector<3x32xf32> to vector<3x32xbf16>
    %c160_186 = arith.constant 160 : index
    %c0_187 = arith.constant 0 : index
    %221 = vector.load %arg4[%c160_186, %c0_187] : memref<512x64xbf16, #tpu.memory_space<vmem>>, vector<32x64xbf16>
    %cst_188 = arith.constant dense<0.000000e+00> : vector<3x64xf32>
    %222 = tpu.matmul %220, %221, %cst_188 {dimension_numbers = #tpu.dot_dimension_numbers<[1], [0], [0], [1], [0, 0, 1, 1], [], []>} : vector<3x32xbf16>, vector<32x64xbf16>, vector<3x64xf32> -> vector<3x64xf32>
    %223 = arith.addf %218, %222 : vector<3x64xf32>
    %c47_189 = arith.constant 47 : index
    %c0_190 = arith.constant 0 : index
    %224 = tpu.strided_load %arg11[%c47_189, %c0_190] {strides = array<i32: 2, 1>} : memref<71x32xf32, #tpu.memory_space<vmem>>, vector<3x32xf32>
    %225 = arith.truncf %224 : vector<3x32xf32> to vector<3x32xbf16>
    %c192_191 = arith.constant 192 : index
    %c0_192 = arith.constant 0 : index
    %226 = vector.load %arg4[%c192_191, %c0_192] : memref<512x64xbf16, #tpu.memory_space<vmem>>, vector<32x64xbf16>
    %cst_193 = arith.constant dense<0.000000e+00> : vector<3x64xf32>
    %227 = tpu.matmul %225, %226, %cst_193 {dimension_numbers = #tpu.dot_dimension_numbers<[1], [0], [0], [1], [0, 0, 1, 1], [], []>} : vector<3x32xbf16>, vector<32x64xbf16>, vector<3x64xf32> -> vector<3x64xf32>
    %228 = arith.addf %223, %227 : vector<3x64xf32>
    %c48_194 = arith.constant 48 : index
    %c0_195 = arith.constant 0 : index
    %229 = tpu.strided_load %arg11[%c48_194, %c0_195] {strides = array<i32: 2, 1>} : memref<71x32xf32, #tpu.memory_space<vmem>>, vector<3x32xf32>
    %230 = arith.truncf %229 : vector<3x32xf32> to vector<3x32xbf16>
    %c224_196 = arith.constant 224 : index
    %c0_197 = arith.constant 0 : index
    %231 = vector.load %arg4[%c224_196, %c0_197] : memref<512x64xbf16, #tpu.memory_space<vmem>>, vector<32x64xbf16>
    %cst_198 = arith.constant dense<0.000000e+00> : vector<3x64xf32>
    %232 = tpu.matmul %230, %231, %cst_198 {dimension_numbers = #tpu.dot_dimension_numbers<[1], [0], [0], [1], [0, 0, 1, 1], [], []>} : vector<3x32xbf16>, vector<32x64xbf16>, vector<3x64xf32> -> vector<3x64xf32>
    %233 = arith.addf %228, %232 : vector<3x64xf32>
    %c54 = arith.constant 54 : index
    %c0_199 = arith.constant 0 : index
    %234 = tpu.strided_load %arg11[%c54, %c0_199] {strides = array<i32: 2, 1>} : memref<71x32xf32, #tpu.memory_space<vmem>>, vector<3x32xf32>
    %235 = arith.truncf %234 : vector<3x32xf32> to vector<3x32xbf16>
    %c256_200 = arith.constant 256 : index
    %c0_201 = arith.constant 0 : index
    %236 = vector.load %arg4[%c256_200, %c0_201] : memref<512x64xbf16, #tpu.memory_space<vmem>>, vector<32x64xbf16>
    %cst_202 = arith.constant dense<0.000000e+00> : vector<3x64xf32>
    %237 = tpu.matmul %235, %236, %cst_202 {dimension_numbers = #tpu.dot_dimension_numbers<[1], [0], [0], [1], [0, 0, 1, 1], [], []>} : vector<3x32xbf16>, vector<32x64xbf16>, vector<3x64xf32> -> vector<3x64xf32>
    %238 = arith.addf %233, %237 : vector<3x64xf32>
    %c55 = arith.constant 55 : index
    %c0_203 = arith.constant 0 : index
    %239 = tpu.strided_load %arg11[%c55, %c0_203] {strides = array<i32: 2, 1>} : memref<71x32xf32, #tpu.memory_space<vmem>>, vector<3x32xf32>
    %240 = arith.truncf %239 : vector<3x32xf32> to vector<3x32xbf16>
    %c288_204 = arith.constant 288 : index
    %c0_205 = arith.constant 0 : index
    %241 = vector.load %arg4[%c288_204, %c0_205] : memref<512x64xbf16, #tpu.memory_space<vmem>>, vector<32x64xbf16>
    %cst_206 = arith.constant dense<0.000000e+00> : vector<3x64xf32>
    %242 = tpu.matmul %240, %241, %cst_206 {dimension_numbers = #tpu.dot_dimension_numbers<[1], [0], [0], [1], [0, 0, 1, 1], [], []>} : vector<3x32xbf16>, vector<32x64xbf16>, vector<3x64xf32> -> vector<3x64xf32>
    %243 = arith.addf %238, %242 : vector<3x64xf32>
    %c56 = arith.constant 56 : index
    %c0_207 = arith.constant 0 : index
    %244 = tpu.strided_load %arg11[%c56, %c0_207] {strides = array<i32: 2, 1>} : memref<71x32xf32, #tpu.memory_space<vmem>>, vector<3x32xf32>
    %245 = arith.truncf %244 : vector<3x32xf32> to vector<3x32xbf16>
    %c320_208 = arith.constant 320 : index
    %c0_209 = arith.constant 0 : index
    %246 = vector.load %arg4[%c320_208, %c0_209] : memref<512x64xbf16, #tpu.memory_space<vmem>>, vector<32x64xbf16>
    %cst_210 = arith.constant dense<0.000000e+00> : vector<3x64xf32>
    %247 = tpu.matmul %245, %246, %cst_210 {dimension_numbers = #tpu.dot_dimension_numbers<[1], [0], [0], [1], [0, 0, 1, 1], [], []>} : vector<3x32xbf16>, vector<32x64xbf16>, vector<3x64xf32> -> vector<3x64xf32>
    %248 = arith.addf %243, %247 : vector<3x64xf32>
    %c57 = arith.constant 57 : index
    %c0_211 = arith.constant 0 : index
    %249 = tpu.strided_load %arg11[%c57, %c0_211] {strides = array<i32: 2, 1>} : memref<71x32xf32, #tpu.memory_space<vmem>>, vector<3x32xf32>
    %250 = arith.truncf %249 : vector<3x32xf32> to vector<3x32xbf16>
    %c352_212 = arith.constant 352 : index
    %c0_213 = arith.constant 0 : index
    %251 = vector.load %arg4[%c352_212, %c0_213] : memref<512x64xbf16, #tpu.memory_space<vmem>>, vector<32x64xbf16>
    %cst_214 = arith.constant dense<0.000000e+00> : vector<3x64xf32>
    %252 = tpu.matmul %250, %251, %cst_214 {dimension_numbers = #tpu.dot_dimension_numbers<[1], [0], [0], [1], [0, 0, 1, 1], [], []>} : vector<3x32xbf16>, vector<32x64xbf16>, vector<3x64xf32> -> vector<3x64xf32>
    %253 = arith.addf %248, %252 : vector<3x64xf32>
    %c63 = arith.constant 63 : index
    %c0_215 = arith.constant 0 : index
    %254 = tpu.strided_load %arg11[%c63, %c0_215] {strides = array<i32: 2, 1>} : memref<71x32xf32, #tpu.memory_space<vmem>>, vector<3x32xf32>
    %255 = arith.truncf %254 : vector<3x32xf32> to vector<3x32xbf16>
    %c384_216 = arith.constant 384 : index
    %c0_217 = arith.constant 0 : index
    %256 = vector.load %arg4[%c384_216, %c0_217] : memref<512x64xbf16, #tpu.memory_space<vmem>>, vector<32x64xbf16>
    %cst_218 = arith.constant dense<0.000000e+00> : vector<3x64xf32>
    %257 = tpu.matmul %255, %256, %cst_218 {dimension_numbers = #tpu.dot_dimension_numbers<[1], [0], [0], [1], [0, 0, 1, 1], [], []>} : vector<3x32xbf16>, vector<32x64xbf16>, vector<3x64xf32> -> vector<3x64xf32>
    %258 = arith.addf %253, %257 : vector<3x64xf32>
    %c64_219 = arith.constant 64 : index
    %c0_220 = arith.constant 0 : index
    %259 = tpu.strided_load %arg11[%c64_219, %c0_220] {strides = array<i32: 2, 1>} : memref<71x32xf32, #tpu.memory_space<vmem>>, vector<3x32xf32>
    %260 = arith.truncf %259 : vector<3x32xf32> to vector<3x32xbf16>
    %c416_221 = arith.constant 416 : index
    %c0_222 = arith.constant 0 : index
    %261 = vector.load %arg4[%c416_221, %c0_222] : memref<512x64xbf16, #tpu.memory_space<vmem>>, vector<32x64xbf16>
    %cst_223 = arith.constant dense<0.000000e+00> : vector<3x64xf32>
    %262 = tpu.matmul %260, %261, %cst_223 {dimension_numbers = #tpu.dot_dimension_numbers<[1], [0], [0], [1], [0, 0, 1, 1], [], []>} : vector<3x32xbf16>, vector<32x64xbf16>, vector<3x64xf32> -> vector<3x64xf32>
    %263 = arith.addf %258, %262 : vector<3x64xf32>
    %c65 = arith.constant 65 : index
    %c0_224 = arith.constant 0 : index
    %264 = tpu.strided_load %arg11[%c65, %c0_224] {strides = array<i32: 2, 1>} : memref<71x32xf32, #tpu.memory_space<vmem>>, vector<3x32xf32>
    %265 = arith.truncf %264 : vector<3x32xf32> to vector<3x32xbf16>
    %c448_225 = arith.constant 448 : index
    %c0_226 = arith.constant 0 : index
    %266 = vector.load %arg4[%c448_225, %c0_226] : memref<512x64xbf16, #tpu.memory_space<vmem>>, vector<32x64xbf16>
    %cst_227 = arith.constant dense<0.000000e+00> : vector<3x64xf32>
    %267 = tpu.matmul %265, %266, %cst_227 {dimension_numbers = #tpu.dot_dimension_numbers<[1], [0], [0], [1], [0, 0, 1, 1], [], []>} : vector<3x32xbf16>, vector<32x64xbf16>, vector<3x64xf32> -> vector<3x64xf32>
    %268 = arith.addf %263, %267 : vector<3x64xf32>
    %c66 = arith.constant 66 : index
    %c0_228 = arith.constant 0 : index
    %269 = tpu.strided_load %arg11[%c66, %c0_228] {strides = array<i32: 2, 1>} : memref<71x32xf32, #tpu.memory_space<vmem>>, vector<3x32xf32>
    %270 = arith.truncf %269 : vector<3x32xf32> to vector<3x32xbf16>
    %c480_229 = arith.constant 480 : index
    %c0_230 = arith.constant 0 : index
    %271 = vector.load %arg4[%c480_229, %c0_230] : memref<512x64xbf16, #tpu.memory_space<vmem>>, vector<32x64xbf16>
    %cst_231 = arith.constant dense<0.000000e+00> : vector<3x64xf32>
    %272 = tpu.matmul %270, %271, %cst_231 {dimension_numbers = #tpu.dot_dimension_numbers<[1], [0], [0], [1], [0, 0, 1, 1], [], []>} : vector<3x32xbf16>, vector<32x64xbf16>, vector<3x64xf32> -> vector<3x64xf32>
    %273 = arith.addf %268, %272 : vector<3x64xf32>
    %c0_232 = arith.constant 0 : index
    %c0_233 = arith.constant 0 : index
    %274 = vector.load %arg5[%c0_232, %c0_233] : memref<1x64xf32, #tpu.memory_space<vmem>>, vector<1x64xf32>
    %275 = vector.broadcast %274 : vector<1x64xf32> to vector<3x64xf32>
    %276 = arith.addf %273, %275 : vector<3x64xf32>
    %cst_234 = arith.constant 0.000000e+00 : f32
    %277 = vector.broadcast %cst_234 : f32 to vector<3x64xf32>
    %278 = arith.maximumf %276, %277 : vector<3x64xf32>
    %c6 = arith.constant 6 : index
    %c0_235 = arith.constant 0 : index
    %279 = vector.load %arg12[%c6, %c0_235] : memref<9x64xf32, #tpu.memory_space<vmem>>, vector<3x64xf32>
    tpu.vector_store %arg12[%c6, %c0_235], %278 {strides = array<i32>} : memref<9x64xf32, #tpu.memory_space<vmem>>, vector<3x64xf32>,
    %c0_236 = arith.constant 0 : index
    %c0_237 = arith.constant 0 : index
    %280 = vector.load %arg12[%c0_236, %c0_237] : memref<9x64xf32, #tpu.memory_space<vmem>>, vector<1x64xf32>
    %281 = arith.truncf %280 : vector<1x64xf32> to vector<1x64xbf16>
    %c0_238 = arith.constant 0 : index
    %c0_239 = arith.constant 0 : index
    %282 = vector.load %arg6[%c0_238, %c0_239] : memref<576x64xbf16, #tpu.memory_space<vmem>>, vector<64x64xbf16>
    %cst_240 = arith.constant dense<0.000000e+00> : vector<1x64xf32>
    %283 = tpu.matmul %281, %282, %cst_240 {dimension_numbers = #tpu.dot_dimension_numbers<[1], [0], [0], [1], [0, 0, 1, 1], [], []>} : vector<1x64xbf16>, vector<64x64xbf16>, vector<1x64xf32> -> vector<1x64xf32>
    %c1_241 = arith.constant 1 : index
    %c0_242 = arith.constant 0 : index
    %284 = vector.load %arg12[%c1_241, %c0_242] : memref<9x64xf32, #tpu.memory_space<vmem>>, vector<1x64xf32>
    %285 = arith.truncf %284 : vector<1x64xf32> to vector<1x64xbf16>
    %c64_243 = arith.constant 64 : index
    %c0_244 = arith.constant 0 : index
    %286 = vector.load %arg6[%c64_243, %c0_244] : memref<576x64xbf16, #tpu.memory_space<vmem>>, vector<64x64xbf16>
    %cst_245 = arith.constant dense<0.000000e+00> : vector<1x64xf32>
    %287 = tpu.matmul %285, %286, %cst_245 {dimension_numbers = #tpu.dot_dimension_numbers<[1], [0], [0], [1], [0, 0, 1, 1], [], []>} : vector<1x64xbf16>, vector<64x64xbf16>, vector<1x64xf32> -> vector<1x64xf32>
    %288 = arith.addf %283, %287 : vector<1x64xf32>
    %c2_246 = arith.constant 2 : index
    %c0_247 = arith.constant 0 : index
    %289 = vector.load %arg12[%c2_246, %c0_247] : memref<9x64xf32, #tpu.memory_space<vmem>>, vector<1x64xf32>
    %290 = arith.truncf %289 : vector<1x64xf32> to vector<1x64xbf16>
    %c128_248 = arith.constant 128 : index
    %c0_249 = arith.constant 0 : index
    %291 = vector.load %arg6[%c128_248, %c0_249] : memref<576x64xbf16, #tpu.memory_space<vmem>>, vector<64x64xbf16>
    %cst_250 = arith.constant dense<0.000000e+00> : vector<1x64xf32>
    %292 = tpu.matmul %290, %291, %cst_250 {dimension_numbers = #tpu.dot_dimension_numbers<[1], [0], [0], [1], [0, 0, 1, 1], [], []>} : vector<1x64xbf16>, vector<64x64xbf16>, vector<1x64xf32> -> vector<1x64xf32>
    %293 = arith.addf %288, %292 : vector<1x64xf32>
    %c3_251 = arith.constant 3 : index
    %c0_252 = arith.constant 0 : index
    %294 = vector.load %arg12[%c3_251, %c0_252] : memref<9x64xf32, #tpu.memory_space<vmem>>, vector<1x64xf32>
    %295 = arith.truncf %294 : vector<1x64xf32> to vector<1x64xbf16>
    %c192_253 = arith.constant 192 : index
    %c0_254 = arith.constant 0 : index
    %296 = vector.load %arg6[%c192_253, %c0_254] : memref<576x64xbf16, #tpu.memory_space<vmem>>, vector<64x64xbf16>
    %cst_255 = arith.constant dense<0.000000e+00> : vector<1x64xf32>
    %297 = tpu.matmul %295, %296, %cst_255 {dimension_numbers = #tpu.dot_dimension_numbers<[1], [0], [0], [1], [0, 0, 1, 1], [], []>} : vector<1x64xbf16>, vector<64x64xbf16>, vector<1x64xf32> -> vector<1x64xf32>
    %298 = arith.addf %293, %297 : vector<1x64xf32>
    %c4 = arith.constant 4 : index
    %c0_256 = arith.constant 0 : index
    %299 = vector.load %arg12[%c4, %c0_256] : memref<9x64xf32, #tpu.memory_space<vmem>>, vector<1x64xf32>
    %300 = arith.truncf %299 : vector<1x64xf32> to vector<1x64xbf16>
    %c256_257 = arith.constant 256 : index
    %c0_258 = arith.constant 0 : index
    %301 = vector.load %arg6[%c256_257, %c0_258] : memref<576x64xbf16, #tpu.memory_space<vmem>>, vector<64x64xbf16>
    %cst_259 = arith.constant dense<0.000000e+00> : vector<1x64xf32>
    %302 = tpu.matmul %300, %301, %cst_259 {dimension_numbers = #tpu.dot_dimension_numbers<[1], [0], [0], [1], [0, 0, 1, 1], [], []>} : vector<1x64xbf16>, vector<64x64xbf16>, vector<1x64xf32> -> vector<1x64xf32>
    %303 = arith.addf %298, %302 : vector<1x64xf32>
    %c5 = arith.constant 5 : index
    %c0_260 = arith.constant 0 : index
    %304 = vector.load %arg12[%c5, %c0_260] : memref<9x64xf32, #tpu.memory_space<vmem>>, vector<1x64xf32>
    %305 = arith.truncf %304 : vector<1x64xf32> to vector<1x64xbf16>
    %c320_261 = arith.constant 320 : index
    %c0_262 = arith.constant 0 : index
    %306 = vector.load %arg6[%c320_261, %c0_262] : memref<576x64xbf16, #tpu.memory_space<vmem>>, vector<64x64xbf16>
    %cst_263 = arith.constant dense<0.000000e+00> : vector<1x64xf32>
    %307 = tpu.matmul %305, %306, %cst_263 {dimension_numbers = #tpu.dot_dimension_numbers<[1], [0], [0], [1], [0, 0, 1, 1], [], []>} : vector<1x64xbf16>, vector<64x64xbf16>, vector<1x64xf32> -> vector<1x64xf32>
    %308 = arith.addf %303, %307 : vector<1x64xf32>
    %c6_264 = arith.constant 6 : index
    %c0_265 = arith.constant 0 : index
    %309 = vector.load %arg12[%c6_264, %c0_265] : memref<9x64xf32, #tpu.memory_space<vmem>>, vector<1x64xf32>
    %310 = arith.truncf %309 : vector<1x64xf32> to vector<1x64xbf16>
    %c384_266 = arith.constant 384 : index
    %c0_267 = arith.constant 0 : index
    %311 = vector.load %arg6[%c384_266, %c0_267] : memref<576x64xbf16, #tpu.memory_space<vmem>>, vector<64x64xbf16>
    %cst_268 = arith.constant dense<0.000000e+00> : vector<1x64xf32>
    %312 = tpu.matmul %310, %311, %cst_268 {dimension_numbers = #tpu.dot_dimension_numbers<[1], [0], [0], [1], [0, 0, 1, 1], [], []>} : vector<1x64xbf16>, vector<64x64xbf16>, vector<1x64xf32> -> vector<1x64xf32>
    %313 = arith.addf %308, %312 : vector<1x64xf32>
    %c7 = arith.constant 7 : index
    %c0_269 = arith.constant 0 : index
    %314 = vector.load %arg12[%c7, %c0_269] : memref<9x64xf32, #tpu.memory_space<vmem>>, vector<1x64xf32>
    %315 = arith.truncf %314 : vector<1x64xf32> to vector<1x64xbf16>
    %c448_270 = arith.constant 448 : index
    %c0_271 = arith.constant 0 : index
    %316 = vector.load %arg6[%c448_270, %c0_271] : memref<576x64xbf16, #tpu.memory_space<vmem>>, vector<64x64xbf16>
    %cst_272 = arith.constant dense<0.000000e+00> : vector<1x64xf32>
    %317 = tpu.matmul %315, %316, %cst_272 {dimension_numbers = #tpu.dot_dimension_numbers<[1], [0], [0], [1], [0, 0, 1, 1], [], []>} : vector<1x64xbf16>, vector<64x64xbf16>, vector<1x64xf32> -> vector<1x64xf32>
    %318 = arith.addf %313, %317 : vector<1x64xf32>
    %c8 = arith.constant 8 : index
    %c0_273 = arith.constant 0 : index
    %319 = vector.load %arg12[%c8, %c0_273] : memref<9x64xf32, #tpu.memory_space<vmem>>, vector<1x64xf32>
    %320 = arith.truncf %319 : vector<1x64xf32> to vector<1x64xbf16>
    %c512 = arith.constant 512 : index
    %c0_274 = arith.constant 0 : index
    %321 = vector.load %arg6[%c512, %c0_274] : memref<576x64xbf16, #tpu.memory_space<vmem>>, vector<64x64xbf16>
    %cst_275 = arith.constant dense<0.000000e+00> : vector<1x64xf32>
    %322 = tpu.matmul %320, %321, %cst_275 {dimension_numbers = #tpu.dot_dimension_numbers<[1], [0], [0], [1], [0, 0, 1, 1], [], []>} : vector<1x64xbf16>, vector<64x64xbf16>, vector<1x64xf32> -> vector<1x64xf32>
    %323 = arith.addf %318, %322 : vector<1x64xf32>
    %c0_276 = arith.constant 0 : index
    %c0_277 = arith.constant 0 : index
    %324 = vector.load %arg7[%c0_276, %c0_277] : memref<1x64xf32, #tpu.memory_space<vmem>>, vector<1x64xf32>
    %325 = arith.addf %323, %324 : vector<1x64xf32>
    %cst_278 = arith.constant 0.000000e+00 : f32
    %326 = vector.broadcast %cst_278 : f32 to vector<1x64xf32>
    %327 = arith.maximumf %325, %326 : vector<1x64xf32>
    %328 = arith.truncf %327 : vector<1x64xf32> to vector<1x64xbf16>
    %c0_279 = arith.constant 0 : index
    %c0_280 = arith.constant 0 : index
    %329 = vector.load %arg13[%c0_279, %c0_280] : memref<2x64xbf16, #tpu.memory_space<vmem>>, vector<1x64xbf16>
    tpu.vector_store %arg13[%c0_279, %c0_280], %328 {strides = array<i32>} : memref<2x64xbf16, #tpu.memory_space<vmem>>, vector<1x64xbf16>,
    %c1_281 = arith.constant 1 : index
    %c0_282 = arith.constant 0 : index
    %c0_283 = arith.constant 0 : index
    %330 = vector.load %arg1[%c1_281, %c0_282, %c0_283] : memref<2x81x64xbf16, #tpu.memory_space<vmem>>, vector<1x71x64xbf16>
    %331 = vector.shape_cast %330 : vector<1x71x64xbf16> to vector<71x64xbf16>
    %c0_284 = arith.constant 0 : index
    %c0_285 = arith.constant 0 : index
    %332 = vector.load %arg2[%c0_284, %c0_285] : memref<256x32xbf16, #tpu.memory_space<vmem>>, vector<64x32xbf16>
    %cst_286 = arith.constant dense<0.000000e+00> : vector<71x32xf32>
    %333 = tpu.matmul %331, %332, %cst_286 {dimension_numbers = #tpu.dot_dimension_numbers<[1], [0], [0], [1], [0, 0, 1, 1], [], []>} : vector<71x64xbf16>, vector<64x32xbf16>, vector<71x32xf32> -> vector<71x32xf32>
    %c1_287 = arith.constant 1 : index
    %c1_288 = arith.constant 1 : index
    %c0_289 = arith.constant 0 : index
    %334 = vector.load %arg1[%c1_287, %c1_288, %c0_289] : memref<2x81x64xbf16, #tpu.memory_space<vmem>>, vector<1x71x64xbf16>
    %335 = vector.shape_cast %334 : vector<1x71x64xbf16> to vector<71x64xbf16>
    %c64_290 = arith.constant 64 : index
    %c0_291 = arith.constant 0 : index
    %336 = vector.load %arg2[%c64_290, %c0_291] : memref<256x32xbf16, #tpu.memory_space<vmem>>, vector<64x32xbf16>
    %cst_292 = arith.constant dense<0.000000e+00> : vector<71x32xf32>
    %337 = tpu.matmul %335, %336, %cst_292 {dimension_numbers = #tpu.dot_dimension_numbers<[1], [0], [0], [1], [0, 0, 1, 1], [], []>} : vector<71x64xbf16>, vector<64x32xbf16>, vector<71x32xf32> -> vector<71x32xf32>
    %338 = arith.addf %333, %337 : vector<71x32xf32>
    %c1_293 = arith.constant 1 : index
    %c9_294 = arith.constant 9 : index
    %c0_295 = arith.constant 0 : index
    %339 = vector.load %arg1[%c1_293, %c9_294, %c0_295] : memref<2x81x64xbf16, #tpu.memory_space<vmem>>, vector<1x71x64xbf16>
    %340 = vector.shape_cast %339 : vector<1x71x64xbf16> to vector<71x64xbf16>
    %c128_296 = arith.constant 128 : index
    %c0_297 = arith.constant 0 : index
    %341 = vector.load %arg2[%c128_296, %c0_297] : memref<256x32xbf16, #tpu.memory_space<vmem>>, vector<64x32xbf16>
    %cst_298 = arith.constant dense<0.000000e+00> : vector<71x32xf32>
    %342 = tpu.matmul %340, %341, %cst_298 {dimension_numbers = #tpu.dot_dimension_numbers<[1], [0], [0], [1], [0, 0, 1, 1], [], []>} : vector<71x64xbf16>, vector<64x32xbf16>, vector<71x32xf32> -> vector<71x32xf32>
    %343 = arith.addf %338, %342 : vector<71x32xf32>
    %c1_299 = arith.constant 1 : index
    %c10_300 = arith.constant 10 : index
    %c0_301 = arith.constant 0 : index
    %344 = vector.load %arg1[%c1_299, %c10_300, %c0_301] : memref<2x81x64xbf16, #tpu.memory_space<vmem>>, vector<1x71x64xbf16>
    %345 = vector.shape_cast %344 : vector<1x71x64xbf16> to vector<71x64xbf16>
    %c192_302 = arith.constant 192 : index
    %c0_303 = arith.constant 0 : index
    %346 = vector.load %arg2[%c192_302, %c0_303] : memref<256x32xbf16, #tpu.memory_space<vmem>>, vector<64x32xbf16>
    %cst_304 = arith.constant dense<0.000000e+00> : vector<71x32xf32>
    %347 = tpu.matmul %345, %346, %cst_304 {dimension_numbers = #tpu.dot_dimension_numbers<[1], [0], [0], [1], [0, 0, 1, 1], [], []>} : vector<71x64xbf16>, vector<64x32xbf16>, vector<71x32xf32> -> vector<71x32xf32>
    %348 = arith.addf %343, %347 : vector<71x32xf32>
    %c0_305 = arith.constant 0 : index
    %c0_306 = arith.constant 0 : index
    %349 = vector.load %arg3[%c0_305, %c0_306] : memref<1x32xf32, #tpu.memory_space<vmem>>, vector<1x32xf32>
    %350 = vector.broadcast %349 : vector<1x32xf32> to vector<71x32xf32>
    %351 = arith.addf %348, %350 : vector<71x32xf32>
    %cst_307 = arith.constant 0.000000e+00 : f32
    %352 = vector.broadcast %cst_307 : f32 to vector<71x32xf32>
    %353 = arith.maximumf %351, %352 : vector<71x32xf32>
    %c0_308 = arith.constant 0 : index
    %c0_309 = arith.constant 0 : index
    %354 = vector.load %arg11[%c0_308, %c0_309] : memref<71x32xf32, #tpu.memory_space<vmem>>, vector<71x32xf32>
    tpu.vector_store %arg11[%c0_308, %c0_309], %353 {strides = array<i32>} : memref<71x32xf32, #tpu.memory_space<vmem>>, vector<71x32xf32>,
    %c0_310 = arith.constant 0 : index
    %c0_311 = arith.constant 0 : index
    %355 = tpu.strided_load %arg11[%c0_310, %c0_311] {strides = array<i32: 2, 1>} : memref<71x32xf32, #tpu.memory_space<vmem>>, vector<3x32xf32>
    %356 = arith.truncf %355 : vector<3x32xf32> to vector<3x32xbf16>
    %c0_312 = arith.constant 0 : index
    %c0_313 = arith.constant 0 : index
    %357 = vector.load %arg4[%c0_312, %c0_313] : memref<512x64xbf16, #tpu.memory_space<vmem>>, vector<32x64xbf16>
    %cst_314 = arith.constant dense<0.000000e+00> : vector<3x64xf32>
    %358 = tpu.matmul %356, %357, %cst_314 {dimension_numbers = #tpu.dot_dimension_numbers<[1], [0], [0], [1], [0, 0, 1, 1], [], []>} : vector<3x32xbf16>, vector<32x64xbf16>, vector<3x64xf32> -> vector<3x64xf32>
    %c1_315 = arith.constant 1 : index
    %c0_316 = arith.constant 0 : index
    %359 = tpu.strided_load %arg11[%c1_315, %c0_316] {strides = array<i32: 2, 1>} : memref<71x32xf32, #tpu.memory_space<vmem>>, vector<3x32xf32>
    %360 = arith.truncf %359 : vector<3x32xf32> to vector<3x32xbf16>
    %c32_317 = arith.constant 32 : index
    %c0_318 = arith.constant 0 : index
    %361 = vector.load %arg4[%c32_317, %c0_318] : memref<512x64xbf16, #tpu.memory_space<vmem>>, vector<32x64xbf16>
    %cst_319 = arith.constant dense<0.000000e+00> : vector<3x64xf32>
    %362 = tpu.matmul %360, %361, %cst_319 {dimension_numbers = #tpu.dot_dimension_numbers<[1], [0], [0], [1], [0, 0, 1, 1], [], []>} : vector<3x32xbf16>, vector<32x64xbf16>, vector<3x64xf32> -> vector<3x64xf32>
    %363 = arith.addf %358, %362 : vector<3x64xf32>
    %c2_320 = arith.constant 2 : index
    %c0_321 = arith.constant 0 : index
    %364 = tpu.strided_load %arg11[%c2_320, %c0_321] {strides = array<i32: 2, 1>} : memref<71x32xf32, #tpu.memory_space<vmem>>, vector<3x32xf32>
    %365 = arith.truncf %364 : vector<3x32xf32> to vector<3x32xbf16>
    %c64_322 = arith.constant 64 : index
    %c0_323 = arith.constant 0 : index
    %366 = vector.load %arg4[%c64_322, %c0_323] : memref<512x64xbf16, #tpu.memory_space<vmem>>, vector<32x64xbf16>
    %cst_324 = arith.constant dense<0.000000e+00> : vector<3x64xf32>
    %367 = tpu.matmul %365, %366, %cst_324 {dimension_numbers = #tpu.dot_dimension_numbers<[1], [0], [0], [1], [0, 0, 1, 1], [], []>} : vector<3x32xbf16>, vector<32x64xbf16>, vector<3x64xf32> -> vector<3x64xf32>
    %368 = arith.addf %363, %367 : vector<3x64xf32>
    %c3_325 = arith.constant 3 : index
    %c0_326 = arith.constant 0 : index
    %369 = tpu.strided_load %arg11[%c3_325, %c0_326] {strides = array<i32: 2, 1>} : memref<71x32xf32, #tpu.memory_space<vmem>>, vector<3x32xf32>
    %370 = arith.truncf %369 : vector<3x32xf32> to vector<3x32xbf16>
    %c96_327 = arith.constant 96 : index
    %c0_328 = arith.constant 0 : index
    %371 = vector.load %arg4[%c96_327, %c0_328] : memref<512x64xbf16, #tpu.memory_space<vmem>>, vector<32x64xbf16>
    %cst_329 = arith.constant dense<0.000000e+00> : vector<3x64xf32>
    %372 = tpu.matmul %370, %371, %cst_329 {dimension_numbers = #tpu.dot_dimension_numbers<[1], [0], [0], [1], [0, 0, 1, 1], [], []>} : vector<3x32xbf16>, vector<32x64xbf16>, vector<3x64xf32> -> vector<3x64xf32>
    %373 = arith.addf %368, %372 : vector<3x64xf32>
    %c9_330 = arith.constant 9 : index
    %c0_331 = arith.constant 0 : index
    %374 = tpu.strided_load %arg11[%c9_330, %c0_331] {strides = array<i32: 2, 1>} : memref<71x32xf32, #tpu.memory_space<vmem>>, vector<3x32xf32>
    %375 = arith.truncf %374 : vector<3x32xf32> to vector<3x32xbf16>
    %c128_332 = arith.constant 128 : index
    %c0_333 = arith.constant 0 : index
    %376 = vector.load %arg4[%c128_332, %c0_333] : memref<512x64xbf16, #tpu.memory_space<vmem>>, vector<32x64xbf16>
    %cst_334 = arith.constant dense<0.000000e+00> : vector<3x64xf32>
    %377 = tpu.matmul %375, %376, %cst_334 {dimension_numbers = #tpu.dot_dimension_numbers<[1], [0], [0], [1], [0, 0, 1, 1], [], []>} : vector<3x32xbf16>, vector<32x64xbf16>, vector<3x64xf32> -> vector<3x64xf32>
    %378 = arith.addf %373, %377 : vector<3x64xf32>
    %c10_335 = arith.constant 10 : index
    %c0_336 = arith.constant 0 : index
    %379 = tpu.strided_load %arg11[%c10_335, %c0_336] {strides = array<i32: 2, 1>} : memref<71x32xf32, #tpu.memory_space<vmem>>, vector<3x32xf32>
    %380 = arith.truncf %379 : vector<3x32xf32> to vector<3x32xbf16>
    %c160_337 = arith.constant 160 : index
    %c0_338 = arith.constant 0 : index
    %381 = vector.load %arg4[%c160_337, %c0_338] : memref<512x64xbf16, #tpu.memory_space<vmem>>, vector<32x64xbf16>
    %cst_339 = arith.constant dense<0.000000e+00> : vector<3x64xf32>
    %382 = tpu.matmul %380, %381, %cst_339 {dimension_numbers = #tpu.dot_dimension_numbers<[1], [0], [0], [1], [0, 0, 1, 1], [], []>} : vector<3x32xbf16>, vector<32x64xbf16>, vector<3x64xf32> -> vector<3x64xf32>
    %383 = arith.addf %378, %382 : vector<3x64xf32>
    %c11_340 = arith.constant 11 : index
    %c0_341 = arith.constant 0 : index
    %384 = tpu.strided_load %arg11[%c11_340, %c0_341] {strides = array<i32: 2, 1>} : memref<71x32xf32, #tpu.memory_space<vmem>>, vector<3x32xf32>
    %385 = arith.truncf %384 : vector<3x32xf32> to vector<3x32xbf16>
    %c192_342 = arith.constant 192 : index
    %c0_343 = arith.constant 0 : index
    %386 = vector.load %arg4[%c192_342, %c0_343] : memref<512x64xbf16, #tpu.memory_space<vmem>>, vector<32x64xbf16>
    %cst_344 = arith.constant dense<0.000000e+00> : vector<3x64xf32>
    %387 = tpu.matmul %385, %386, %cst_344 {dimension_numbers = #tpu.dot_dimension_numbers<[1], [0], [0], [1], [0, 0, 1, 1], [], []>} : vector<3x32xbf16>, vector<32x64xbf16>, vector<3x64xf32> -> vector<3x64xf32>
    %388 = arith.addf %383, %387 : vector<3x64xf32>
    %c12_345 = arith.constant 12 : index
    %c0_346 = arith.constant 0 : index
    %389 = tpu.strided_load %arg11[%c12_345, %c0_346] {strides = array<i32: 2, 1>} : memref<71x32xf32, #tpu.memory_space<vmem>>, vector<3x32xf32>
    %390 = arith.truncf %389 : vector<3x32xf32> to vector<3x32xbf16>
    %c224_347 = arith.constant 224 : index
    %c0_348 = arith.constant 0 : index
    %391 = vector.load %arg4[%c224_347, %c0_348] : memref<512x64xbf16, #tpu.memory_space<vmem>>, vector<32x64xbf16>
    %cst_349 = arith.constant dense<0.000000e+00> : vector<3x64xf32>
    %392 = tpu.matmul %390, %391, %cst_349 {dimension_numbers = #tpu.dot_dimension_numbers<[1], [0], [0], [1], [0, 0, 1, 1], [], []>} : vector<3x32xbf16>, vector<32x64xbf16>, vector<3x64xf32> -> vector<3x64xf32>
    %393 = arith.addf %388, %392 : vector<3x64xf32>
    %c18_350 = arith.constant 18 : index
    %c0_351 = arith.constant 0 : index
    %394 = tpu.strided_load %arg11[%c18_350, %c0_351] {strides = array<i32: 2, 1>} : memref<71x32xf32, #tpu.memory_space<vmem>>, vector<3x32xf32>
    %395 = arith.truncf %394 : vector<3x32xf32> to vector<3x32xbf16>
    %c256_352 = arith.constant 256 : index
    %c0_353 = arith.constant 0 : index
    %396 = vector.load %arg4[%c256_352, %c0_353] : memref<512x64xbf16, #tpu.memory_space<vmem>>, vector<32x64xbf16>
    %cst_354 = arith.constant dense<0.000000e+00> : vector<3x64xf32>
    %397 = tpu.matmul %395, %396, %cst_354 {dimension_numbers = #tpu.dot_dimension_numbers<[1], [0], [0], [1], [0, 0, 1, 1], [], []>} : vector<3x32xbf16>, vector<32x64xbf16>, vector<3x64xf32> -> vector<3x64xf32>
    %398 = arith.addf %393, %397 : vector<3x64xf32>
    %c19_355 = arith.constant 19 : index
    %c0_356 = arith.constant 0 : index
    %399 = tpu.strided_load %arg11[%c19_355, %c0_356] {strides = array<i32: 2, 1>} : memref<71x32xf32, #tpu.memory_space<vmem>>, vector<3x32xf32>
    %400 = arith.truncf %399 : vector<3x32xf32> to vector<3x32xbf16>
    %c288_357 = arith.constant 288 : index
    %c0_358 = arith.constant 0 : index
    %401 = vector.load %arg4[%c288_357, %c0_358] : memref<512x64xbf16, #tpu.memory_space<vmem>>, vector<32x64xbf16>
    %cst_359 = arith.constant dense<0.000000e+00> : vector<3x64xf32>
    %402 = tpu.matmul %400, %401, %cst_359 {dimension_numbers = #tpu.dot_dimension_numbers<[1], [0], [0], [1], [0, 0, 1, 1], [], []>} : vector<3x32xbf16>, vector<32x64xbf16>, vector<3x64xf32> -> vector<3x64xf32>
    %403 = arith.addf %398, %402 : vector<3x64xf32>
    %c20_360 = arith.constant 20 : index
    %c0_361 = arith.constant 0 : index
    %404 = tpu.strided_load %arg11[%c20_360, %c0_361] {strides = array<i32: 2, 1>} : memref<71x32xf32, #tpu.memory_space<vmem>>, vector<3x32xf32>
    %405 = arith.truncf %404 : vector<3x32xf32> to vector<3x32xbf16>
    %c320_362 = arith.constant 320 : index
    %c0_363 = arith.constant 0 : index
    %406 = vector.load %arg4[%c320_362, %c0_363] : memref<512x64xbf16, #tpu.memory_space<vmem>>, vector<32x64xbf16>
    %cst_364 = arith.constant dense<0.000000e+00> : vector<3x64xf32>
    %407 = tpu.matmul %405, %406, %cst_364 {dimension_numbers = #tpu.dot_dimension_numbers<[1], [0], [0], [1], [0, 0, 1, 1], [], []>} : vector<3x32xbf16>, vector<32x64xbf16>, vector<3x64xf32> -> vector<3x64xf32>
    %408 = arith.addf %403, %407 : vector<3x64xf32>
    %c21_365 = arith.constant 21 : index
    %c0_366 = arith.constant 0 : index
    %409 = tpu.strided_load %arg11[%c21_365, %c0_366] {strides = array<i32: 2, 1>} : memref<71x32xf32, #tpu.memory_space<vmem>>, vector<3x32xf32>
    %410 = arith.truncf %409 : vector<3x32xf32> to vector<3x32xbf16>
    %c352_367 = arith.constant 352 : index
    %c0_368 = arith.constant 0 : index
    %411 = vector.load %arg4[%c352_367, %c0_368] : memref<512x64xbf16, #tpu.memory_space<vmem>>, vector<32x64xbf16>
    %cst_369 = arith.constant dense<0.000000e+00> : vector<3x64xf32>
    %412 = tpu.matmul %410, %411, %cst_369 {dimension_numbers = #tpu.dot_dimension_numbers<[1], [0], [0], [1], [0, 0, 1, 1], [], []>} : vector<3x32xbf16>, vector<32x64xbf16>, vector<3x64xf32> -> vector<3x64xf32>
    %413 = arith.addf %408, %412 : vector<3x64xf32>
    %c27_370 = arith.constant 27 : index
    %c0_371 = arith.constant 0 : index
    %414 = tpu.strided_load %arg11[%c27_370, %c0_371] {strides = array<i32: 2, 1>} : memref<71x32xf32, #tpu.memory_space<vmem>>, vector<3x32xf32>
    %415 = arith.truncf %414 : vector<3x32xf32> to vector<3x32xbf16>
    %c384_372 = arith.constant 384 : index
    %c0_373 = arith.constant 0 : index
    %416 = vector.load %arg4[%c384_372, %c0_373] : memref<512x64xbf16, #tpu.memory_space<vmem>>, vector<32x64xbf16>
    %cst_374 = arith.constant dense<0.000000e+00> : vector<3x64xf32>
    %417 = tpu.matmul %415, %416, %cst_374 {dimension_numbers = #tpu.dot_dimension_numbers<[1], [0], [0], [1], [0, 0, 1, 1], [], []>} : vector<3x32xbf16>, vector<32x64xbf16>, vector<3x64xf32> -> vector<3x64xf32>
    %418 = arith.addf %413, %417 : vector<3x64xf32>
    %c28_375 = arith.constant 28 : index
    %c0_376 = arith.constant 0 : index
    %419 = tpu.strided_load %arg11[%c28_375, %c0_376] {strides = array<i32: 2, 1>} : memref<71x32xf32, #tpu.memory_space<vmem>>, vector<3x32xf32>
    %420 = arith.truncf %419 : vector<3x32xf32> to vector<3x32xbf16>
    %c416_377 = arith.constant 416 : index
    %c0_378 = arith.constant 0 : index
    %421 = vector.load %arg4[%c416_377, %c0_378] : memref<512x64xbf16, #tpu.memory_space<vmem>>, vector<32x64xbf16>
    %cst_379 = arith.constant dense<0.000000e+00> : vector<3x64xf32>
    %422 = tpu.matmul %420, %421, %cst_379 {dimension_numbers = #tpu.dot_dimension_numbers<[1], [0], [0], [1], [0, 0, 1, 1], [], []>} : vector<3x32xbf16>, vector<32x64xbf16>, vector<3x64xf32> -> vector<3x64xf32>
    %423 = arith.addf %418, %422 : vector<3x64xf32>
    %c29_380 = arith.constant 29 : index
    %c0_381 = arith.constant 0 : index
    %424 = tpu.strided_load %arg11[%c29_380, %c0_381] {strides = array<i32: 2, 1>} : memref<71x32xf32, #tpu.memory_space<vmem>>, vector<3x32xf32>
    %425 = arith.truncf %424 : vector<3x32xf32> to vector<3x32xbf16>
    %c448_382 = arith.constant 448 : index
    %c0_383 = arith.constant 0 : index
    %426 = vector.load %arg4[%c448_382, %c0_383] : memref<512x64xbf16, #tpu.memory_space<vmem>>, vector<32x64xbf16>
    %cst_384 = arith.constant dense<0.000000e+00> : vector<3x64xf32>
    %427 = tpu.matmul %425, %426, %cst_384 {dimension_numbers = #tpu.dot_dimension_numbers<[1], [0], [0], [1], [0, 0, 1, 1], [], []>} : vector<3x32xbf16>, vector<32x64xbf16>, vector<3x64xf32> -> vector<3x64xf32>
    %428 = arith.addf %423, %427 : vector<3x64xf32>
    %c30_385 = arith.constant 30 : index
    %c0_386 = arith.constant 0 : index
    %429 = tpu.strided_load %arg11[%c30_385, %c0_386] {strides = array<i32: 2, 1>} : memref<71x32xf32, #tpu.memory_space<vmem>>, vector<3x32xf32>
    %430 = arith.truncf %429 : vector<3x32xf32> to vector<3x32xbf16>
    %c480_387 = arith.constant 480 : index
    %c0_388 = arith.constant 0 : index
    %431 = vector.load %arg4[%c480_387, %c0_388] : memref<512x64xbf16, #tpu.memory_space<vmem>>, vector<32x64xbf16>
    %cst_389 = arith.constant dense<0.000000e+00> : vector<3x64xf32>
    %432 = tpu.matmul %430, %431, %cst_389 {dimension_numbers = #tpu.dot_dimension_numbers<[1], [0], [0], [1], [0, 0, 1, 1], [], []>} : vector<3x32xbf16>, vector<32x64xbf16>, vector<3x64xf32> -> vector<3x64xf32>
    %433 = arith.addf %428, %432 : vector<3x64xf32>
    %c0_390 = arith.constant 0 : index
    %c0_391 = arith.constant 0 : index
    %434 = vector.load %arg5[%c0_390, %c0_391] : memref<1x64xf32, #tpu.memory_space<vmem>>, vector<1x64xf32>
    %435 = vector.broadcast %434 : vector<1x64xf32> to vector<3x64xf32>
    %436 = arith.addf %433, %435 : vector<3x64xf32>
    %cst_392 = arith.constant 0.000000e+00 : f32
    %437 = vector.broadcast %cst_392 : f32 to vector<3x64xf32>
    %438 = arith.maximumf %436, %437 : vector<3x64xf32>
    %c0_393 = arith.constant 0 : index
    %c0_394 = arith.constant 0 : index
    %439 = vector.load %arg12[%c0_393, %c0_394] : memref<9x64xf32, #tpu.memory_space<vmem>>, vector<3x64xf32>
    tpu.vector_store %arg12[%c0_393, %c0_394], %438 {strides = array<i32>} : memref<9x64xf32, #tpu.memory_space<vmem>>, vector<3x64xf32>,
    %c18_395 = arith.constant 18 : index
    %c0_396 = arith.constant 0 : index
    %440 = tpu.strided_load %arg11[%c18_395, %c0_396] {strides = array<i32: 2, 1>} : memref<71x32xf32, #tpu.memory_space<vmem>>, vector<3x32xf32>
    %441 = arith.truncf %440 : vector<3x32xf32> to vector<3x32xbf16>
    %c0_397 = arith.constant 0 : index
    %c0_398 = arith.constant 0 : index
    %442 = vector.load %arg4[%c0_397, %c0_398] : memref<512x64xbf16, #tpu.memory_space<vmem>>, vector<32x64xbf16>
    %cst_399 = arith.constant dense<0.000000e+00> : vector<3x64xf32>
    %443 = tpu.matmul %441, %442, %cst_399 {dimension_numbers = #tpu.dot_dimension_numbers<[1], [0], [0], [1], [0, 0, 1, 1], [], []>} : vector<3x32xbf16>, vector<32x64xbf16>, vector<3x64xf32> -> vector<3x64xf32>
    %c19_400 = arith.constant 19 : index
    %c0_401 = arith.constant 0 : index
    %444 = tpu.strided_load %arg11[%c19_400, %c0_401] {strides = array<i32: 2, 1>} : memref<71x32xf32, #tpu.memory_space<vmem>>, vector<3x32xf32>
    %445 = arith.truncf %444 : vector<3x32xf32> to vector<3x32xbf16>
    %c32_402 = arith.constant 32 : index
    %c0_403 = arith.constant 0 : index
    %446 = vector.load %arg4[%c32_402, %c0_403] : memref<512x64xbf16, #tpu.memory_space<vmem>>, vector<32x64xbf16>
    %cst_404 = arith.constant dense<0.000000e+00> : vector<3x64xf32>
    %447 = tpu.matmul %445, %446, %cst_404 {dimension_numbers = #tpu.dot_dimension_numbers<[1], [0], [0], [1], [0, 0, 1, 1], [], []>} : vector<3x32xbf16>, vector<32x64xbf16>, vector<3x64xf32> -> vector<3x64xf32>
    %448 = arith.addf %443, %447 : vector<3x64xf32>
    %c20_405 = arith.constant 20 : index
    %c0_406 = arith.constant 0 : index
    %449 = tpu.strided_load %arg11[%c20_405, %c0_406] {strides = array<i32: 2, 1>} : memref<71x32xf32, #tpu.memory_space<vmem>>, vector<3x32xf32>
    %450 = arith.truncf %449 : vector<3x32xf32> to vector<3x32xbf16>
    %c64_407 = arith.constant 64 : index
    %c0_408 = arith.constant 0 : index
    %451 = vector.load %arg4[%c64_407, %c0_408] : memref<512x64xbf16, #tpu.memory_space<vmem>>, vector<32x64xbf16>
    %cst_409 = arith.constant dense<0.000000e+00> : vector<3x64xf32>
    %452 = tpu.matmul %450, %451, %cst_409 {dimension_numbers = #tpu.dot_dimension_numbers<[1], [0], [0], [1], [0, 0, 1, 1], [], []>} : vector<3x32xbf16>, vector<32x64xbf16>, vector<3x64xf32> -> vector<3x64xf32>
    %453 = arith.addf %448, %452 : vector<3x64xf32>
    %c21_410 = arith.constant 21 : index
    %c0_411 = arith.constant 0 : index
    %454 = tpu.strided_load %arg11[%c21_410, %c0_411] {strides = array<i32: 2, 1>} : memref<71x32xf32, #tpu.memory_space<vmem>>, vector<3x32xf32>
    %455 = arith.truncf %454 : vector<3x32xf32> to vector<3x32xbf16>
    %c96_412 = arith.constant 96 : index
    %c0_413 = arith.constant 0 : index
    %456 = vector.load %arg4[%c96_412, %c0_413] : memref<512x64xbf16, #tpu.memory_space<vmem>>, vector<32x64xbf16>
    %cst_414 = arith.constant dense<0.000000e+00> : vector<3x64xf32>
    %457 = tpu.matmul %455, %456, %cst_414 {dimension_numbers = #tpu.dot_dimension_numbers<[1], [0], [0], [1], [0, 0, 1, 1], [], []>} : vector<3x32xbf16>, vector<32x64xbf16>, vector<3x64xf32> -> vector<3x64xf32>
    %458 = arith.addf %453, %457 : vector<3x64xf32>
    %c27_415 = arith.constant 27 : index
    %c0_416 = arith.constant 0 : index
    %459 = tpu.strided_load %arg11[%c27_415, %c0_416] {strides = array<i32: 2, 1>} : memref<71x32xf32, #tpu.memory_space<vmem>>, vector<3x32xf32>
    %460 = arith.truncf %459 : vector<3x32xf32> to vector<3x32xbf16>
    %c128_417 = arith.constant 128 : index
    %c0_418 = arith.constant 0 : index
    %461 = vector.load %arg4[%c128_417, %c0_418] : memref<512x64xbf16, #tpu.memory_space<vmem>>, vector<32x64xbf16>
    %cst_419 = arith.constant dense<0.000000e+00> : vector<3x64xf32>
    %462 = tpu.matmul %460, %461, %cst_419 {dimension_numbers = #tpu.dot_dimension_numbers<[1], [0], [0], [1], [0, 0, 1, 1], [], []>} : vector<3x32xbf16>, vector<32x64xbf16>, vector<3x64xf32> -> vector<3x64xf32>
    %463 = arith.addf %458, %462 : vector<3x64xf32>
    %c28_420 = arith.constant 28 : index
    %c0_421 = arith.constant 0 : index
    %464 = tpu.strided_load %arg11[%c28_420, %c0_421] {strides = array<i32: 2, 1>} : memref<71x32xf32, #tpu.memory_space<vmem>>, vector<3x32xf32>
    %465 = arith.truncf %464 : vector<3x32xf32> to vector<3x32xbf16>
    %c160_422 = arith.constant 160 : index
    %c0_423 = arith.constant 0 : index
    %466 = vector.load %arg4[%c160_422, %c0_423] : memref<512x64xbf16, #tpu.memory_space<vmem>>, vector<32x64xbf16>
    %cst_424 = arith.constant dense<0.000000e+00> : vector<3x64xf32>
    %467 = tpu.matmul %465, %466, %cst_424 {dimension_numbers = #tpu.dot_dimension_numbers<[1], [0], [0], [1], [0, 0, 1, 1], [], []>} : vector<3x32xbf16>, vector<32x64xbf16>, vector<3x64xf32> -> vector<3x64xf32>
    %468 = arith.addf %463, %467 : vector<3x64xf32>
    %c29_425 = arith.constant 29 : index
    %c0_426 = arith.constant 0 : index
    %469 = tpu.strided_load %arg11[%c29_425, %c0_426] {strides = array<i32: 2, 1>} : memref<71x32xf32, #tpu.memory_space<vmem>>, vector<3x32xf32>
    %470 = arith.truncf %469 : vector<3x32xf32> to vector<3x32xbf16>
    %c192_427 = arith.constant 192 : index
    %c0_428 = arith.constant 0 : index
    %471 = vector.load %arg4[%c192_427, %c0_428] : memref<512x64xbf16, #tpu.memory_space<vmem>>, vector<32x64xbf16>
    %cst_429 = arith.constant dense<0.000000e+00> : vector<3x64xf32>
    %472 = tpu.matmul %470, %471, %cst_429 {dimension_numbers = #tpu.dot_dimension_numbers<[1], [0], [0], [1], [0, 0, 1, 1], [], []>} : vector<3x32xbf16>, vector<32x64xbf16>, vector<3x64xf32> -> vector<3x64xf32>
    %473 = arith.addf %468, %472 : vector<3x64xf32>
    %c30_430 = arith.constant 30 : index
    %c0_431 = arith.constant 0 : index
    %474 = tpu.strided_load %arg11[%c30_430, %c0_431] {strides = array<i32: 2, 1>} : memref<71x32xf32, #tpu.memory_space<vmem>>, vector<3x32xf32>
    %475 = arith.truncf %474 : vector<3x32xf32> to vector<3x32xbf16>
    %c224_432 = arith.constant 224 : index
    %c0_433 = arith.constant 0 : index
    %476 = vector.load %arg4[%c224_432, %c0_433] : memref<512x64xbf16, #tpu.memory_space<vmem>>, vector<32x64xbf16>
    %cst_434 = arith.constant dense<0.000000e+00> : vector<3x64xf32>
    %477 = tpu.matmul %475, %476, %cst_434 {dimension_numbers = #tpu.dot_dimension_numbers<[1], [0], [0], [1], [0, 0, 1, 1], [], []>} : vector<3x32xbf16>, vector<32x64xbf16>, vector<3x64xf32> -> vector<3x64xf32>
    %478 = arith.addf %473, %477 : vector<3x64xf32>
    %c36_435 = arith.constant 36 : index
    %c0_436 = arith.constant 0 : index
    %479 = tpu.strided_load %arg11[%c36_435, %c0_436] {strides = array<i32: 2, 1>} : memref<71x32xf32, #tpu.memory_space<vmem>>, vector<3x32xf32>
    %480 = arith.truncf %479 : vector<3x32xf32> to vector<3x32xbf16>
    %c256_437 = arith.constant 256 : index
    %c0_438 = arith.constant 0 : index
    %481 = vector.load %arg4[%c256_437, %c0_438] : memref<512x64xbf16, #tpu.memory_space<vmem>>, vector<32x64xbf16>
    %cst_439 = arith.constant dense<0.000000e+00> : vector<3x64xf32>
    %482 = tpu.matmul %480, %481, %cst_439 {dimension_numbers = #tpu.dot_dimension_numbers<[1], [0], [0], [1], [0, 0, 1, 1], [], []>} : vector<3x32xbf16>, vector<32x64xbf16>, vector<3x64xf32> -> vector<3x64xf32>
    %483 = arith.addf %478, %482 : vector<3x64xf32>
    %c37_440 = arith.constant 37 : index
    %c0_441 = arith.constant 0 : index
    %484 = tpu.strided_load %arg11[%c37_440, %c0_441] {strides = array<i32: 2, 1>} : memref<71x32xf32, #tpu.memory_space<vmem>>, vector<3x32xf32>
    %485 = arith.truncf %484 : vector<3x32xf32> to vector<3x32xbf16>
    %c288_442 = arith.constant 288 : index
    %c0_443 = arith.constant 0 : index
    %486 = vector.load %arg4[%c288_442, %c0_443] : memref<512x64xbf16, #tpu.memory_space<vmem>>, vector<32x64xbf16>
    %cst_444 = arith.constant dense<0.000000e+00> : vector<3x64xf32>
    %487 = tpu.matmul %485, %486, %cst_444 {dimension_numbers = #tpu.dot_dimension_numbers<[1], [0], [0], [1], [0, 0, 1, 1], [], []>} : vector<3x32xbf16>, vector<32x64xbf16>, vector<3x64xf32> -> vector<3x64xf32>
    %488 = arith.addf %483, %487 : vector<3x64xf32>
    %c38_445 = arith.constant 38 : index
    %c0_446 = arith.constant 0 : index
    %489 = tpu.strided_load %arg11[%c38_445, %c0_446] {strides = array<i32: 2, 1>} : memref<71x32xf32, #tpu.memory_space<vmem>>, vector<3x32xf32>
    %490 = arith.truncf %489 : vector<3x32xf32> to vector<3x32xbf16>
    %c320_447 = arith.constant 320 : index
    %c0_448 = arith.constant 0 : index
    %491 = vector.load %arg4[%c320_447, %c0_448] : memref<512x64xbf16, #tpu.memory_space<vmem>>, vector<32x64xbf16>
    %cst_449 = arith.constant dense<0.000000e+00> : vector<3x64xf32>
    %492 = tpu.matmul %490, %491, %cst_449 {dimension_numbers = #tpu.dot_dimension_numbers<[1], [0], [0], [1], [0, 0, 1, 1], [], []>} : vector<3x32xbf16>, vector<32x64xbf16>, vector<3x64xf32> -> vector<3x64xf32>
    %493 = arith.addf %488, %492 : vector<3x64xf32>
    %c39_450 = arith.constant 39 : index
    %c0_451 = arith.constant 0 : index
    %494 = tpu.strided_load %arg11[%c39_450, %c0_451] {strides = array<i32: 2, 1>} : memref<71x32xf32, #tpu.memory_space<vmem>>, vector<3x32xf32>
    %495 = arith.truncf %494 : vector<3x32xf32> to vector<3x32xbf16>
    %c352_452 = arith.constant 352 : index
    %c0_453 = arith.constant 0 : index
    %496 = vector.load %arg4[%c352_452, %c0_453] : memref<512x64xbf16, #tpu.memory_space<vmem>>, vector<32x64xbf16>
    %cst_454 = arith.constant dense<0.000000e+00> : vector<3x64xf32>
    %497 = tpu.matmul %495, %496, %cst_454 {dimension_numbers = #tpu.dot_dimension_numbers<[1], [0], [0], [1], [0, 0, 1, 1], [], []>} : vector<3x32xbf16>, vector<32x64xbf16>, vector<3x64xf32> -> vector<3x64xf32>
    %498 = arith.addf %493, %497 : vector<3x64xf32>
    %c45_455 = arith.constant 45 : index
    %c0_456 = arith.constant 0 : index
    %499 = tpu.strided_load %arg11[%c45_455, %c0_456] {strides = array<i32: 2, 1>} : memref<71x32xf32, #tpu.memory_space<vmem>>, vector<3x32xf32>
    %500 = arith.truncf %499 : vector<3x32xf32> to vector<3x32xbf16>
    %c384_457 = arith.constant 384 : index
    %c0_458 = arith.constant 0 : index
    %501 = vector.load %arg4[%c384_457, %c0_458] : memref<512x64xbf16, #tpu.memory_space<vmem>>, vector<32x64xbf16>
    %cst_459 = arith.constant dense<0.000000e+00> : vector<3x64xf32>
    %502 = tpu.matmul %500, %501, %cst_459 {dimension_numbers = #tpu.dot_dimension_numbers<[1], [0], [0], [1], [0, 0, 1, 1], [], []>} : vector<3x32xbf16>, vector<32x64xbf16>, vector<3x64xf32> -> vector<3x64xf32>
    %503 = arith.addf %498, %502 : vector<3x64xf32>
    %c46_460 = arith.constant 46 : index
    %c0_461 = arith.constant 0 : index
    %504 = tpu.strided_load %arg11[%c46_460, %c0_461] {strides = array<i32: 2, 1>} : memref<71x32xf32, #tpu.memory_space<vmem>>, vector<3x32xf32>
    %505 = arith.truncf %504 : vector<3x32xf32> to vector<3x32xbf16>
    %c416_462 = arith.constant 416 : index
    %c0_463 = arith.constant 0 : index
    %506 = vector.load %arg4[%c416_462, %c0_463] : memref<512x64xbf16, #tpu.memory_space<vmem>>, vector<32x64xbf16>
    %cst_464 = arith.constant dense<0.000000e+00> : vector<3x64xf32>
    %507 = tpu.matmul %505, %506, %cst_464 {dimension_numbers = #tpu.dot_dimension_numbers<[1], [0], [0], [1], [0, 0, 1, 1], [], []>} : vector<3x32xbf16>, vector<32x64xbf16>, vector<3x64xf32> -> vector<3x64xf32>
    %508 = arith.addf %503, %507 : vector<3x64xf32>
    %c47_465 = arith.constant 47 : index
    %c0_466 = arith.constant 0 : index
    %509 = tpu.strided_load %arg11[%c47_465, %c0_466] {strides = array<i32: 2, 1>} : memref<71x32xf32, #tpu.memory_space<vmem>>, vector<3x32xf32>
    %510 = arith.truncf %509 : vector<3x32xf32> to vector<3x32xbf16>
    %c448_467 = arith.constant 448 : index
    %c0_468 = arith.constant 0 : index
    %511 = vector.load %arg4[%c448_467, %c0_468] : memref<512x64xbf16, #tpu.memory_space<vmem>>, vector<32x64xbf16>
    %cst_469 = arith.constant dense<0.000000e+00> : vector<3x64xf32>
    %512 = tpu.matmul %510, %511, %cst_469 {dimension_numbers = #tpu.dot_dimension_numbers<[1], [0], [0], [1], [0, 0, 1, 1], [], []>} : vector<3x32xbf16>, vector<32x64xbf16>, vector<3x64xf32> -> vector<3x64xf32>
    %513 = arith.addf %508, %512 : vector<3x64xf32>
    %c48_470 = arith.constant 48 : index
    %c0_471 = arith.constant 0 : index
    %514 = tpu.strided_load %arg11[%c48_470, %c0_471] {strides = array<i32: 2, 1>} : memref<71x32xf32, #tpu.memory_space<vmem>>, vector<3x32xf32>
    %515 = arith.truncf %514 : vector<3x32xf32> to vector<3x32xbf16>
    %c480_472 = arith.constant 480 : index
    %c0_473 = arith.constant 0 : index
    %516 = vector.load %arg4[%c480_472, %c0_473] : memref<512x64xbf16, #tpu.memory_space<vmem>>, vector<32x64xbf16>
    %cst_474 = arith.constant dense<0.000000e+00> : vector<3x64xf32>
    %517 = tpu.matmul %515, %516, %cst_474 {dimension_numbers = #tpu.dot_dimension_numbers<[1], [0], [0], [1], [0, 0, 1, 1], [], []>} : vector<3x32xbf16>, vector<32x64xbf16>, vector<3x64xf32> -> vector<3x64xf32>
    %518 = arith.addf %513, %517 : vector<3x64xf32>
    %c0_475 = arith.constant 0 : index
    %c0_476 = arith.constant 0 : index
    %519 = vector.load %arg5[%c0_475, %c0_476] : memref<1x64xf32, #tpu.memory_space<vmem>>, vector<1x64xf32>
    %520 = vector.broadcast %519 : vector<1x64xf32> to vector<3x64xf32>
    %521 = arith.addf %518, %520 : vector<3x64xf32>
    %cst_477 = arith.constant 0.000000e+00 : f32
    %522 = vector.broadcast %cst_477 : f32 to vector<3x64xf32>
    %523 = arith.maximumf %521, %522 : vector<3x64xf32>
    %c3_478 = arith.constant 3 : index
    %c0_479 = arith.constant 0 : index
    %524 = vector.load %arg12[%c3_478, %c0_479] : memref<9x64xf32, #tpu.memory_space<vmem>>, vector<3x64xf32>
    tpu.vector_store %arg12[%c3_478, %c0_479], %523 {strides = array<i32>} : memref<9x64xf32, #tpu.memory_space<vmem>>, vector<3x64xf32>,
    %c36_480 = arith.constant 36 : index
    %c0_481 = arith.constant 0 : index
    %525 = tpu.strided_load %arg11[%c36_480, %c0_481] {strides = array<i32: 2, 1>} : memref<71x32xf32, #tpu.memory_space<vmem>>, vector<3x32xf32>
    %526 = arith.truncf %525 : vector<3x32xf32> to vector<3x32xbf16>
    %c0_482 = arith.constant 0 : index
    %c0_483 = arith.constant 0 : index
    %527 = vector.load %arg4[%c0_482, %c0_483] : memref<512x64xbf16, #tpu.memory_space<vmem>>, vector<32x64xbf16>
    %cst_484 = arith.constant dense<0.000000e+00> : vector<3x64xf32>
    %528 = tpu.matmul %526, %527, %cst_484 {dimension_numbers = #tpu.dot_dimension_numbers<[1], [0], [0], [1], [0, 0, 1, 1], [], []>} : vector<3x32xbf16>, vector<32x64xbf16>, vector<3x64xf32> -> vector<3x64xf32>
    %c37_485 = arith.constant 37 : index
    %c0_486 = arith.constant 0 : index
    %529 = tpu.strided_load %arg11[%c37_485, %c0_486] {strides = array<i32: 2, 1>} : memref<71x32xf32, #tpu.memory_space<vmem>>, vector<3x32xf32>
    %530 = arith.truncf %529 : vector<3x32xf32> to vector<3x32xbf16>
    %c32_487 = arith.constant 32 : index
    %c0_488 = arith.constant 0 : index
    %531 = vector.load %arg4[%c32_487, %c0_488] : memref<512x64xbf16, #tpu.memory_space<vmem>>, vector<32x64xbf16>
    %cst_489 = arith.constant dense<0.000000e+00> : vector<3x64xf32>
    %532 = tpu.matmul %530, %531, %cst_489 {dimension_numbers = #tpu.dot_dimension_numbers<[1], [0], [0], [1], [0, 0, 1, 1], [], []>} : vector<3x32xbf16>, vector<32x64xbf16>, vector<3x64xf32> -> vector<3x64xf32>
    %533 = arith.addf %528, %532 : vector<3x64xf32>
    %c38_490 = arith.constant 38 : index
    %c0_491 = arith.constant 0 : index
    %534 = tpu.strided_load %arg11[%c38_490, %c0_491] {strides = array<i32: 2, 1>} : memref<71x32xf32, #tpu.memory_space<vmem>>, vector<3x32xf32>
    %535 = arith.truncf %534 : vector<3x32xf32> to vector<3x32xbf16>
    %c64_492 = arith.constant 64 : index
    %c0_493 = arith.constant 0 : index
    %536 = vector.load %arg4[%c64_492, %c0_493] : memref<512x64xbf16, #tpu.memory_space<vmem>>, vector<32x64xbf16>
    %cst_494 = arith.constant dense<0.000000e+00> : vector<3x64xf32>
    %537 = tpu.matmul %535, %536, %cst_494 {dimension_numbers = #tpu.dot_dimension_numbers<[1], [0], [0], [1], [0, 0, 1, 1], [], []>} : vector<3x32xbf16>, vector<32x64xbf16>, vector<3x64xf32> -> vector<3x64xf32>
    %538 = arith.addf %533, %537 : vector<3x64xf32>
    %c39_495 = arith.constant 39 : index
    %c0_496 = arith.constant 0 : index
    %539 = tpu.strided_load %arg11[%c39_495, %c0_496] {strides = array<i32: 2, 1>} : memref<71x32xf32, #tpu.memory_space<vmem>>, vector<3x32xf32>
    %540 = arith.truncf %539 : vector<3x32xf32> to vector<3x32xbf16>
    %c96_497 = arith.constant 96 : index
    %c0_498 = arith.constant 0 : index
    %541 = vector.load %arg4[%c96_497, %c0_498] : memref<512x64xbf16, #tpu.memory_space<vmem>>, vector<32x64xbf16>
    %cst_499 = arith.constant dense<0.000000e+00> : vector<3x64xf32>
    %542 = tpu.matmul %540, %541, %cst_499 {dimension_numbers = #tpu.dot_dimension_numbers<[1], [0], [0], [1], [0, 0, 1, 1], [], []>} : vector<3x32xbf16>, vector<32x64xbf16>, vector<3x64xf32> -> vector<3x64xf32>
    %543 = arith.addf %538, %542 : vector<3x64xf32>
    %c45_500 = arith.constant 45 : index
    %c0_501 = arith.constant 0 : index
    %544 = tpu.strided_load %arg11[%c45_500, %c0_501] {strides = array<i32: 2, 1>} : memref<71x32xf32, #tpu.memory_space<vmem>>, vector<3x32xf32>
    %545 = arith.truncf %544 : vector<3x32xf32> to vector<3x32xbf16>
    %c128_502 = arith.constant 128 : index
    %c0_503 = arith.constant 0 : index
    %546 = vector.load %arg4[%c128_502, %c0_503] : memref<512x64xbf16, #tpu.memory_space<vmem>>, vector<32x64xbf16>
    %cst_504 = arith.constant dense<0.000000e+00> : vector<3x64xf32>
    %547 = tpu.matmul %545, %546, %cst_504 {dimension_numbers = #tpu.dot_dimension_numbers<[1], [0], [0], [1], [0, 0, 1, 1], [], []>} : vector<3x32xbf16>, vector<32x64xbf16>, vector<3x64xf32> -> vector<3x64xf32>
    %548 = arith.addf %543, %547 : vector<3x64xf32>
    %c46_505 = arith.constant 46 : index
    %c0_506 = arith.constant 0 : index
    %549 = tpu.strided_load %arg11[%c46_505, %c0_506] {strides = array<i32: 2, 1>} : memref<71x32xf32, #tpu.memory_space<vmem>>, vector<3x32xf32>
    %550 = arith.truncf %549 : vector<3x32xf32> to vector<3x32xbf16>
    %c160_507 = arith.constant 160 : index
    %c0_508 = arith.constant 0 : index
    %551 = vector.load %arg4[%c160_507, %c0_508] : memref<512x64xbf16, #tpu.memory_space<vmem>>, vector<32x64xbf16>
    %cst_509 = arith.constant dense<0.000000e+00> : vector<3x64xf32>
    %552 = tpu.matmul %550, %551, %cst_509 {dimension_numbers = #tpu.dot_dimension_numbers<[1], [0], [0], [1], [0, 0, 1, 1], [], []>} : vector<3x32xbf16>, vector<32x64xbf16>, vector<3x64xf32> -> vector<3x64xf32>
    %553 = arith.addf %548, %552 : vector<3x64xf32>
    %c47_510 = arith.constant 47 : index
    %c0_511 = arith.constant 0 : index
    %554 = tpu.strided_load %arg11[%c47_510, %c0_511] {strides = array<i32: 2, 1>} : memref<71x32xf32, #tpu.memory_space<vmem>>, vector<3x32xf32>
    %555 = arith.truncf %554 : vector<3x32xf32> to vector<3x32xbf16>
    %c192_512 = arith.constant 192 : index
    %c0_513 = arith.constant 0 : index
    %556 = vector.load %arg4[%c192_512, %c0_513] : memref<512x64xbf16, #tpu.memory_space<vmem>>, vector<32x64xbf16>
    %cst_514 = arith.constant dense<0.000000e+00> : vector<3x64xf32>
    %557 = tpu.matmul %555, %556, %cst_514 {dimension_numbers = #tpu.dot_dimension_numbers<[1], [0], [0], [1], [0, 0, 1, 1], [], []>} : vector<3x32xbf16>, vector<32x64xbf16>, vector<3x64xf32> -> vector<3x64xf32>
    %558 = arith.addf %553, %557 : vector<3x64xf32>
    %c48_515 = arith.constant 48 : index
    %c0_516 = arith.constant 0 : index
    %559 = tpu.strided_load %arg11[%c48_515, %c0_516] {strides = array<i32: 2, 1>} : memref<71x32xf32, #tpu.memory_space<vmem>>, vector<3x32xf32>
    %560 = arith.truncf %559 : vector<3x32xf32> to vector<3x32xbf16>
    %c224_517 = arith.constant 224 : index
    %c0_518 = arith.constant 0 : index
    %561 = vector.load %arg4[%c224_517, %c0_518] : memref<512x64xbf16, #tpu.memory_space<vmem>>, vector<32x64xbf16>
    %cst_519 = arith.constant dense<0.000000e+00> : vector<3x64xf32>
    %562 = tpu.matmul %560, %561, %cst_519 {dimension_numbers = #tpu.dot_dimension_numbers<[1], [0], [0], [1], [0, 0, 1, 1], [], []>} : vector<3x32xbf16>, vector<32x64xbf16>, vector<3x64xf32> -> vector<3x64xf32>
    %563 = arith.addf %558, %562 : vector<3x64xf32>
    %c54_520 = arith.constant 54 : index
    %c0_521 = arith.constant 0 : index
    %564 = tpu.strided_load %arg11[%c54_520, %c0_521] {strides = array<i32: 2, 1>} : memref<71x32xf32, #tpu.memory_space<vmem>>, vector<3x32xf32>
    %565 = arith.truncf %564 : vector<3x32xf32> to vector<3x32xbf16>
    %c256_522 = arith.constant 256 : index
    %c0_523 = arith.constant 0 : index
    %566 = vector.load %arg4[%c256_522, %c0_523] : memref<512x64xbf16, #tpu.memory_space<vmem>>, vector<32x64xbf16>
    %cst_524 = arith.constant dense<0.000000e+00> : vector<3x64xf32>
    %567 = tpu.matmul %565, %566, %cst_524 {dimension_numbers = #tpu.dot_dimension_numbers<[1], [0], [0], [1], [0, 0, 1, 1], [], []>} : vector<3x32xbf16>, vector<32x64xbf16>, vector<3x64xf32> -> vector<3x64xf32>
    %568 = arith.addf %563, %567 : vector<3x64xf32>
    %c55_525 = arith.constant 55 : index
    %c0_526 = arith.constant 0 : index
    %569 = tpu.strided_load %arg11[%c55_525, %c0_526] {strides = array<i32: 2, 1>} : memref<71x32xf32, #tpu.memory_space<vmem>>, vector<3x32xf32>
    %570 = arith.truncf %569 : vector<3x32xf32> to vector<3x32xbf16>
    %c288_527 = arith.constant 288 : index
    %c0_528 = arith.constant 0 : index
    %571 = vector.load %arg4[%c288_527, %c0_528] : memref<512x64xbf16, #tpu.memory_space<vmem>>, vector<32x64xbf16>
    %cst_529 = arith.constant dense<0.000000e+00> : vector<3x64xf32>
    %572 = tpu.matmul %570, %571, %cst_529 {dimension_numbers = #tpu.dot_dimension_numbers<[1], [0], [0], [1], [0, 0, 1, 1], [], []>} : vector<3x32xbf16>, vector<32x64xbf16>, vector<3x64xf32> -> vector<3x64xf32>
    %573 = arith.addf %568, %572 : vector<3x64xf32>
    %c56_530 = arith.constant 56 : index
    %c0_531 = arith.constant 0 : index
    %574 = tpu.strided_load %arg11[%c56_530, %c0_531] {strides = array<i32: 2, 1>} : memref<71x32xf32, #tpu.memory_space<vmem>>, vector<3x32xf32>
    %575 = arith.truncf %574 : vector<3x32xf32> to vector<3x32xbf16>
    %c320_532 = arith.constant 320 : index
    %c0_533 = arith.constant 0 : index
    %576 = vector.load %arg4[%c320_532, %c0_533] : memref<512x64xbf16, #tpu.memory_space<vmem>>, vector<32x64xbf16>
    %cst_534 = arith.constant dense<0.000000e+00> : vector<3x64xf32>
    %577 = tpu.matmul %575, %576, %cst_534 {dimension_numbers = #tpu.dot_dimension_numbers<[1], [0], [0], [1], [0, 0, 1, 1], [], []>} : vector<3x32xbf16>, vector<32x64xbf16>, vector<3x64xf32> -> vector<3x64xf32>
    %578 = arith.addf %573, %577 : vector<3x64xf32>
    %c57_535 = arith.constant 57 : index
    %c0_536 = arith.constant 0 : index
    %579 = tpu.strided_load %arg11[%c57_535, %c0_536] {strides = array<i32: 2, 1>} : memref<71x32xf32, #tpu.memory_space<vmem>>, vector<3x32xf32>
    %580 = arith.truncf %579 : vector<3x32xf32> to vector<3x32xbf16>
    %c352_537 = arith.constant 352 : index
    %c0_538 = arith.constant 0 : index
    %581 = vector.load %arg4[%c352_537, %c0_538] : memref<512x64xbf16, #tpu.memory_space<vmem>>, vector<32x64xbf16>
    %cst_539 = arith.constant dense<0.000000e+00> : vector<3x64xf32>
    %582 = tpu.matmul %580, %581, %cst_539 {dimension_numbers = #tpu.dot_dimension_numbers<[1], [0], [0], [1], [0, 0, 1, 1], [], []>} : vector<3x32xbf16>, vector<32x64xbf16>, vector<3x64xf32> -> vector<3x64xf32>
    %583 = arith.addf %578, %582 : vector<3x64xf32>
    %c63_540 = arith.constant 63 : index
    %c0_541 = arith.constant 0 : index
    %584 = tpu.strided_load %arg11[%c63_540, %c0_541] {strides = array<i32: 2, 1>} : memref<71x32xf32, #tpu.memory_space<vmem>>, vector<3x32xf32>
    %585 = arith.truncf %584 : vector<3x32xf32> to vector<3x32xbf16>
    %c384_542 = arith.constant 384 : index
    %c0_543 = arith.constant 0 : index
    %586 = vector.load %arg4[%c384_542, %c0_543] : memref<512x64xbf16, #tpu.memory_space<vmem>>, vector<32x64xbf16>
    %cst_544 = arith.constant dense<0.000000e+00> : vector<3x64xf32>
    %587 = tpu.matmul %585, %586, %cst_544 {dimension_numbers = #tpu.dot_dimension_numbers<[1], [0], [0], [1], [0, 0, 1, 1], [], []>} : vector<3x32xbf16>, vector<32x64xbf16>, vector<3x64xf32> -> vector<3x64xf32>
    %588 = arith.addf %583, %587 : vector<3x64xf32>
    %c64_545 = arith.constant 64 : index
    %c0_546 = arith.constant 0 : index
    %589 = tpu.strided_load %arg11[%c64_545, %c0_546] {strides = array<i32: 2, 1>} : memref<71x32xf32, #tpu.memory_space<vmem>>, vector<3x32xf32>
    %590 = arith.truncf %589 : vector<3x32xf32> to vector<3x32xbf16>
    %c416_547 = arith.constant 416 : index
    %c0_548 = arith.constant 0 : index
    %591 = vector.load %arg4[%c416_547, %c0_548] : memref<512x64xbf16, #tpu.memory_space<vmem>>, vector<32x64xbf16>
    %cst_549 = arith.constant dense<0.000000e+00> : vector<3x64xf32>
    %592 = tpu.matmul %590, %591, %cst_549 {dimension_numbers = #tpu.dot_dimension_numbers<[1], [0], [0], [1], [0, 0, 1, 1], [], []>} : vector<3x32xbf16>, vector<32x64xbf16>, vector<3x64xf32> -> vector<3x64xf32>
    %593 = arith.addf %588, %592 : vector<3x64xf32>
    %c65_550 = arith.constant 65 : index
    %c0_551 = arith.constant 0 : index
    %594 = tpu.strided_load %arg11[%c65_550, %c0_551] {strides = array<i32: 2, 1>} : memref<71x32xf32, #tpu.memory_space<vmem>>, vector<3x32xf32>
    %595 = arith.truncf %594 : vector<3x32xf32> to vector<3x32xbf16>
    %c448_552 = arith.constant 448 : index
    %c0_553 = arith.constant 0 : index
    %596 = vector.load %arg4[%c448_552, %c0_553] : memref<512x64xbf16, #tpu.memory_space<vmem>>, vector<32x64xbf16>
    %cst_554 = arith.constant dense<0.000000e+00> : vector<3x64xf32>
    %597 = tpu.matmul %595, %596, %cst_554 {dimension_numbers = #tpu.dot_dimension_numbers<[1], [0], [0], [1], [0, 0, 1, 1], [], []>} : vector<3x32xbf16>, vector<32x64xbf16>, vector<3x64xf32> -> vector<3x64xf32>
    %598 = arith.addf %593, %597 : vector<3x64xf32>
    %c66_555 = arith.constant 66 : index
    %c0_556 = arith.constant 0 : index
    %599 = tpu.strided_load %arg11[%c66_555, %c0_556] {strides = array<i32: 2, 1>} : memref<71x32xf32, #tpu.memory_space<vmem>>, vector<3x32xf32>
    %600 = arith.truncf %599 : vector<3x32xf32> to vector<3x32xbf16>
    %c480_557 = arith.constant 480 : index
    %c0_558 = arith.constant 0 : index
    %601 = vector.load %arg4[%c480_557, %c0_558] : memref<512x64xbf16, #tpu.memory_space<vmem>>, vector<32x64xbf16>
    %cst_559 = arith.constant dense<0.000000e+00> : vector<3x64xf32>
    %602 = tpu.matmul %600, %601, %cst_559 {dimension_numbers = #tpu.dot_dimension_numbers<[1], [0], [0], [1], [0, 0, 1, 1], [], []>} : vector<3x32xbf16>, vector<32x64xbf16>, vector<3x64xf32> -> vector<3x64xf32>
    %603 = arith.addf %598, %602 : vector<3x64xf32>
    %c0_560 = arith.constant 0 : index
    %c0_561 = arith.constant 0 : index
    %604 = vector.load %arg5[%c0_560, %c0_561] : memref<1x64xf32, #tpu.memory_space<vmem>>, vector<1x64xf32>
    %605 = vector.broadcast %604 : vector<1x64xf32> to vector<3x64xf32>
    %606 = arith.addf %603, %605 : vector<3x64xf32>
    %cst_562 = arith.constant 0.000000e+00 : f32
    %607 = vector.broadcast %cst_562 : f32 to vector<3x64xf32>
    %608 = arith.maximumf %606, %607 : vector<3x64xf32>
    %c6_563 = arith.constant 6 : index
    %c0_564 = arith.constant 0 : index
    %609 = vector.load %arg12[%c6_563, %c0_564] : memref<9x64xf32, #tpu.memory_space<vmem>>, vector<3x64xf32>
    tpu.vector_store %arg12[%c6_563, %c0_564], %608 {strides = array<i32>} : memref<9x64xf32, #tpu.memory_space<vmem>>, vector<3x64xf32>,
    %c0_565 = arith.constant 0 : index
    %c0_566 = arith.constant 0 : index
    %610 = vector.load %arg12[%c0_565, %c0_566] : memref<9x64xf32, #tpu.memory_space<vmem>>, vector<1x64xf32>
    %611 = arith.truncf %610 : vector<1x64xf32> to vector<1x64xbf16>
    %c0_567 = arith.constant 0 : index
    %c0_568 = arith.constant 0 : index
    %612 = vector.load %arg6[%c0_567, %c0_568] : memref<576x64xbf16, #tpu.memory_space<vmem>>, vector<64x64xbf16>
    %cst_569 = arith.constant dense<0.000000e+00> : vector<1x64xf32>
    %613 = tpu.matmul %611, %612, %cst_569 {dimension_numbers = #tpu.dot_dimension_numbers<[1], [0], [0], [1], [0, 0, 1, 1], [], []>} : vector<1x64xbf16>, vector<64x64xbf16>, vector<1x64xf32> -> vector<1x64xf32>
    %c1_570 = arith.constant 1 : index
    %c0_571 = arith.constant 0 : index
    %614 = vector.load %arg12[%c1_570, %c0_571] : memref<9x64xf32, #tpu.memory_space<vmem>>, vector<1x64xf32>
    %615 = arith.truncf %614 : vector<1x64xf32> to vector<1x64xbf16>
    %c64_572 = arith.constant 64 : index
    %c0_573 = arith.constant 0 : index
    %616 = vector.load %arg6[%c64_572, %c0_573] : memref<576x64xbf16, #tpu.memory_space<vmem>>, vector<64x64xbf16>
    %cst_574 = arith.constant dense<0.000000e+00> : vector<1x64xf32>
    %617 = tpu.matmul %615, %616, %cst_574 {dimension_numbers = #tpu.dot_dimension_numbers<[1], [0], [0], [1], [0, 0, 1, 1], [], []>} : vector<1x64xbf16>, vector<64x64xbf16>, vector<1x64xf32> -> vector<1x64xf32>
    %618 = arith.addf %613, %617 : vector<1x64xf32>
    %c2_575 = arith.constant 2 : index
    %c0_576 = arith.constant 0 : index
    %619 = vector.load %arg12[%c2_575, %c0_576] : memref<9x64xf32, #tpu.memory_space<vmem>>, vector<1x64xf32>
    %620 = arith.truncf %619 : vector<1x64xf32> to vector<1x64xbf16>
    %c128_577 = arith.constant 128 : index
    %c0_578 = arith.constant 0 : index
    %621 = vector.load %arg6[%c128_577, %c0_578] : memref<576x64xbf16, #tpu.memory_space<vmem>>, vector<64x64xbf16>
    %cst_579 = arith.constant dense<0.000000e+00> : vector<1x64xf32>
    %622 = tpu.matmul %620, %621, %cst_579 {dimension_numbers = #tpu.dot_dimension_numbers<[1], [0], [0], [1], [0, 0, 1, 1], [], []>} : vector<1x64xbf16>, vector<64x64xbf16>, vector<1x64xf32> -> vector<1x64xf32>
    %623 = arith.addf %618, %622 : vector<1x64xf32>
    %c3_580 = arith.constant 3 : index
    %c0_581 = arith.constant 0 : index
    %624 = vector.load %arg12[%c3_580, %c0_581] : memref<9x64xf32, #tpu.memory_space<vmem>>, vector<1x64xf32>
    %625 = arith.truncf %624 : vector<1x64xf32> to vector<1x64xbf16>
    %c192_582 = arith.constant 192 : index
    %c0_583 = arith.constant 0 : index
    %626 = vector.load %arg6[%c192_582, %c0_583] : memref<576x64xbf16, #tpu.memory_space<vmem>>, vector<64x64xbf16>
    %cst_584 = arith.constant dense<0.000000e+00> : vector<1x64xf32>
    %627 = tpu.matmul %625, %626, %cst_584 {dimension_numbers = #tpu.dot_dimension_numbers<[1], [0], [0], [1], [0, 0, 1, 1], [], []>} : vector<1x64xbf16>, vector<64x64xbf16>, vector<1x64xf32> -> vector<1x64xf32>
    %628 = arith.addf %623, %627 : vector<1x64xf32>
    %c4_585 = arith.constant 4 : index
    %c0_586 = arith.constant 0 : index
    %629 = vector.load %arg12[%c4_585, %c0_586] : memref<9x64xf32, #tpu.memory_space<vmem>>, vector<1x64xf32>
    %630 = arith.truncf %629 : vector<1x64xf32> to vector<1x64xbf16>
    %c256_587 = arith.constant 256 : index
    %c0_588 = arith.constant 0 : index
    %631 = vector.load %arg6[%c256_587, %c0_588] : memref<576x64xbf16, #tpu.memory_space<vmem>>, vector<64x64xbf16>
    %cst_589 = arith.constant dense<0.000000e+00> : vector<1x64xf32>
    %632 = tpu.matmul %630, %631, %cst_589 {dimension_numbers = #tpu.dot_dimension_numbers<[1], [0], [0], [1], [0, 0, 1, 1], [], []>} : vector<1x64xbf16>, vector<64x64xbf16>, vector<1x64xf32> -> vector<1x64xf32>
    %633 = arith.addf %628, %632 : vector<1x64xf32>
    %c5_590 = arith.constant 5 : index
    %c0_591 = arith.constant 0 : index
    %634 = vector.load %arg12[%c5_590, %c0_591] : memref<9x64xf32, #tpu.memory_space<vmem>>, vector<1x64xf32>
    %635 = arith.truncf %634 : vector<1x64xf32> to vector<1x64xbf16>
    %c320_592 = arith.constant 320 : index
    %c0_593 = arith.constant 0 : index
    %636 = vector.load %arg6[%c320_592, %c0_593] : memref<576x64xbf16, #tpu.memory_space<vmem>>, vector<64x64xbf16>
    %cst_594 = arith.constant dense<0.000000e+00> : vector<1x64xf32>
    %637 = tpu.matmul %635, %636, %cst_594 {dimension_numbers = #tpu.dot_dimension_numbers<[1], [0], [0], [1], [0, 0, 1, 1], [], []>} : vector<1x64xbf16>, vector<64x64xbf16>, vector<1x64xf32> -> vector<1x64xf32>
    %638 = arith.addf %633, %637 : vector<1x64xf32>
    %c6_595 = arith.constant 6 : index
    %c0_596 = arith.constant 0 : index
    %639 = vector.load %arg12[%c6_595, %c0_596] : memref<9x64xf32, #tpu.memory_space<vmem>>, vector<1x64xf32>
    %640 = arith.truncf %639 : vector<1x64xf32> to vector<1x64xbf16>
    %c384_597 = arith.constant 384 : index
    %c0_598 = arith.constant 0 : index
    %641 = vector.load %arg6[%c384_597, %c0_598] : memref<576x64xbf16, #tpu.memory_space<vmem>>, vector<64x64xbf16>
    %cst_599 = arith.constant dense<0.000000e+00> : vector<1x64xf32>
    %642 = tpu.matmul %640, %641, %cst_599 {dimension_numbers = #tpu.dot_dimension_numbers<[1], [0], [0], [1], [0, 0, 1, 1], [], []>} : vector<1x64xbf16>, vector<64x64xbf16>, vector<1x64xf32> -> vector<1x64xf32>
    %643 = arith.addf %638, %642 : vector<1x64xf32>
    %c7_600 = arith.constant 7 : index
    %c0_601 = arith.constant 0 : index
    %644 = vector.load %arg12[%c7_600, %c0_601] : memref<9x64xf32, #tpu.memory_space<vmem>>, vector<1x64xf32>
    %645 = arith.truncf %644 : vector<1x64xf32> to vector<1x64xbf16>
    %c448_602 = arith.constant 448 : index
    %c0_603 = arith.constant 0 : index
    %646 = vector.load %arg6[%c448_602, %c0_603] : memref<576x64xbf16, #tpu.memory_space<vmem>>, vector<64x64xbf16>
    %cst_604 = arith.constant dense<0.000000e+00> : vector<1x64xf32>
    %647 = tpu.matmul %645, %646, %cst_604 {dimension_numbers = #tpu.dot_dimension_numbers<[1], [0], [0], [1], [0, 0, 1, 1], [], []>} : vector<1x64xbf16>, vector<64x64xbf16>, vector<1x64xf32> -> vector<1x64xf32>
    %648 = arith.addf %643, %647 : vector<1x64xf32>
    %c8_605 = arith.constant 8 : index
    %c0_606 = arith.constant 0 : index
    %649 = vector.load %arg12[%c8_605, %c0_606] : memref<9x64xf32, #tpu.memory_space<vmem>>, vector<1x64xf32>
    %650 = arith.truncf %649 : vector<1x64xf32> to vector<1x64xbf16>
    %c512_607 = arith.constant 512 : index
    %c0_608 = arith.constant 0 : index
    %651 = vector.load %arg6[%c512_607, %c0_608] : memref<576x64xbf16, #tpu.memory_space<vmem>>, vector<64x64xbf16>
    %cst_609 = arith.constant dense<0.000000e+00> : vector<1x64xf32>
    %652 = tpu.matmul %650, %651, %cst_609 {dimension_numbers = #tpu.dot_dimension_numbers<[1], [0], [0], [1], [0, 0, 1, 1], [], []>} : vector<1x64xbf16>, vector<64x64xbf16>, vector<1x64xf32> -> vector<1x64xf32>
    %653 = arith.addf %648, %652 : vector<1x64xf32>
    %c0_610 = arith.constant 0 : index
    %c0_611 = arith.constant 0 : index
    %654 = vector.load %arg7[%c0_610, %c0_611] : memref<1x64xf32, #tpu.memory_space<vmem>>, vector<1x64xf32>
    %655 = arith.addf %653, %654 : vector<1x64xf32>
    %cst_612 = arith.constant 0.000000e+00 : f32
    %656 = vector.broadcast %cst_612 : f32 to vector<1x64xf32>
    %657 = arith.maximumf %655, %656 : vector<1x64xf32>
    %658 = arith.truncf %657 : vector<1x64xf32> to vector<1x64xbf16>
    %c1_613 = arith.constant 1 : index
    %c0_614 = arith.constant 0 : index
    %659 = vector.load %arg13[%c1_613, %c0_614] : memref<2x64xbf16, #tpu.memory_space<vmem>>, vector<1x64xbf16>
    tpu.vector_store %arg13[%c1_613, %c0_614], %658 {strides = array<i32>} : memref<2x64xbf16, #tpu.memory_space<vmem>>, vector<1x64xbf16>,
    %c0_615 = arith.constant 0 : index
    %c0_616 = arith.constant 0 : index
    %660 = vector.load %arg13[%c0_615, %c0_616] : memref<2x64xbf16, #tpu.memory_space<vmem>>, vector<2x64xbf16>
    %c0_617 = arith.constant 0 : index
    %c0_618 = arith.constant 0 : index
    %661 = vector.load %arg8[%c0_617, %c0_618] : memref<64x16xbf16, #tpu.memory_space<vmem>>, vector<64x16xbf16>
    %cst_619 = arith.constant dense<0.000000e+00> : vector<2x16xf32>
    %662 = tpu.matmul %660, %661, %cst_619 {dimension_numbers = #tpu.dot_dimension_numbers<[1], [0], [0], [1], [0, 0, 1, 1], [], []>} : vector<2x64xbf16>, vector<64x16xbf16>, vector<2x16xf32> -> vector<2x16xf32>
    %c0_620 = arith.constant 0 : index
    %c0_621 = arith.constant 0 : index
    %663 = vector.load %arg9[%c0_620, %c0_621] : memref<1x16xf32, #tpu.memory_space<vmem>>, vector<1x16xf32>
    %664 = vector.broadcast %663 : vector<1x16xf32> to vector<2x16xf32>
    %665 = arith.addf %662, %664 : vector<2x16xf32>
    %cst_622 = arith.constant 0.000000e+00 : f32
    %666 = vector.broadcast %cst_622 : f32 to vector<2x16xf32>
    %667 = arith.maximumf %665, %666 : vector<2x16xf32>
    %c0_623 = arith.constant 0 : index
    %c0_624 = arith.constant 0 : index
    %c0_625 = arith.constant 0 : index
    %668 = vector.load %arg10[%c0_623, %c0_624, %c0_625] : memref<1x2x16xf32, #tpu.memory_space<vmem>>, vector<1x2x16xf32>
    %669 = vector.shape_cast %668 : vector<1x2x16xf32> to vector<2x16xf32>
    %670 = vector.shape_cast %667 : vector<2x16xf32> to vector<1x2x16xf32>
    tpu.vector_store %arg10[%c0_623, %c0_624, %c0_625], %670 {strides = array<i32>} : memref<1x2x16xf32, #tpu.memory_space<vmem>>, vector<1x2x16xf32>,
    return
  }
  func.func @transform_0(%arg0: i32) -> (i32, i32, i32) {
    %c0_i32 = arith.constant 0 : i32
    %c0_i32_0 = arith.constant 0 : i32
    %c0_i32_1 = arith.constant 0 : i32
    return %arg0, %c0_i32, %c0_i32_0 : i32, i32, i32
  }
  func.func @transform_1(%arg0: i32) -> (i32, i32) {
    %c0_i32 = arith.constant 0 : i32
    %c0_i32_0 = arith.constant 0 : i32
    %c0_i32_1 = arith.constant 0 : i32
    return %c0_i32, %c0_i32_0 : i32, i32
  }
  func.func @transform_2(%arg0: i32) -> (i32, i32) {
    %c0_i32 = arith.constant 0 : i32
    %c0_i32_0 = arith.constant 0 : i32
    %c0_i32_1 = arith.constant 0 : i32
    return %c0_i32, %c0_i32_0 : i32, i32
  }
  func.func @transform_3(%arg0: i32) -> (i32, i32) {
    %c0_i32 = arith.constant 0 : i32
    %c0_i32_0 = arith.constant 0 : i32
    %c0_i32_1 = arith.constant 0 : i32
    return %c0_i32, %c0_i32_0 : i32, i32
  }
  func.func @transform_4(%arg0: i32) -> (i32, i32) {
    %c0_i32 = arith.constant 0 : i32
    %c0_i32_0 = arith.constant 0 : i32
    %c0_i32_1 = arith.constant 0 : i32
    return %c0_i32, %c0_i32_0 : i32, i32
  }
  func.func @transform_5(%arg0: i32) -> (i32, i32) {
    %c0_i32 = arith.constant 0 : i32
    %c0_i32_0 = arith.constant 0 : i32
    %c0_i32_1 = arith.constant 0 : i32
    return %c0_i32, %c0_i32_0 : i32, i32
  }
  func.func @transform_6(%arg0: i32) -> (i32, i32) {
    %c0_i32 = arith.constant 0 : i32
    %c0_i32_0 = arith.constant 0 : i32
    %c0_i32_1 = arith.constant 0 : i32
    return %c0_i32, %c0_i32_0 : i32, i32
  }
  func.func @transform_7(%arg0: i32) -> (i32, i32) {
    %c0_i32 = arith.constant 0 : i32
    %c0_i32_0 = arith.constant 0 : i32
    %c0_i32_1 = arith.constant 0 : i32
    return %c0_i32, %c0_i32_0 : i32, i32
  }
  func.func @transform_8(%arg0: i32) -> (i32, i32) {
    %c0_i32 = arith.constant 0 : i32
    %c0_i32_0 = arith.constant 0 : i32
    %c0_i32_1 = arith.constant 0 : i32
    return %c0_i32, %c0_i32_0 : i32, i32
  }
  func.func @transform_9(%arg0: i32) -> (i32, i32, i32) {
    %c0_i32 = arith.constant 0 : i32
    %c0_i32_0 = arith.constant 0 : i32
    %c0_i32_1 = arith.constant 0 : i32
    return %arg0, %c0_i32, %c0_i32_0 : i32, i32, i32
  }
}

</mosaic_0001>

<llo_original>
// kernel: forward.1
$region0: #{forward.1}
  #allocation0 [shape = 'u32[]', space=smem, size = 0x4, offset = 0x4, fixed_abs, tag = 'smem constant byte address 0x4 - core index']
  #allocation1 [shape = 'u32[144,128]{1,0:T(1,128)}', space=vmem, size = 0x12000, scoped, tag = 'internal scratch']
  #allocation2 [shape = 'f32[71,32]{1,0:T(8,128)}', space=vmem, size = 0x9000, scoped, tag = 'scratch operand']
  #allocation3 [shape = 'f32[9,64]{1,0:T(8,128)}', space=vmem, size = 0x2000, scoped, tag = 'scratch operand']
  #allocation4 [shape = 'bf16[2,64]{1,0:T(2,128)(2,1)}', space=vmem, size = 0x200, scoped, tag = 'scratch operand']
  %s0 = inlined_call_operand.vmem [shape: bf16[4,81,64], index: 0, kind: input, shape index: {}]
  %s1 = inlined_call_operand.vmem [shape: bf16[256,32], index: 1, kind: input, shape index: {}]
  %s2 = inlined_call_operand.vmem [shape: f32[1,32], index: 2, kind: input, shape index: {}]
  %s3 = inlined_call_operand.vmem [shape: bf16[512,64], index: 3, kind: input, shape index: {}]
  %s4 = inlined_call_operand.vmem [shape: f32[1,64], index: 4, kind: input, shape index: {}]
  %s5 = inlined_call_operand.vmem [shape: bf16[576,64], index: 5, kind: input, shape index: {}]
  %s6 = inlined_call_operand.vmem [shape: f32[1,64], index: 6, kind: input, shape index: {}]
  %s7 = inlined_call_operand.vmem [shape: bf16[64,16], index: 7, kind: input, shape index: {}]
  %s8 = inlined_call_operand.vmem [shape: f32[1,16], index: 8, kind: input, shape index: {}]
  %s9 = inlined_call_operand.hbm [shape: f32[2,2,16], index: 9, kind: output, shape index: {}]
  %s10 = sld [smem:[#allocation0]]
  $region69: #{forward.1} parent=0
    _
  %s12 = ssub.s32 1, %s10
  %s13 = scalar_select 0, %s12, %s10
  $region1: #{forward.1} parent=0
    #allocation5 [shape = 'u8[2048]{0}', space=vmem, size = 0x800, scoped, tag = 'output window, operand 0']
    #allocation6 [shape = 's32[2]{0}', space=sflag, size = 0x8, scoped, tag = 'scoped memory for forward.1']
    %14 = vsyncpa [#allocation6], 0
    %s15 = scalar_lea.sflag [#allocation6], 1
    %16 = vsyncpa %s15, 0
    loop: start=0, step=1, limit=4
    $region2: #{forward.1} parent=1 // loop_pre_header
      _
    $region3: #{forward.1} parent=1 // loop_header
      %s18 = sphi 0, %s22
      %p19 = scmp.ge.s32.totalorder %s18, 4
      %s28 = sphi 0, %s30
      %s31 = sphi 0, %s28
      %s32 = sphi 0, %s31
      %s48 = sphi 0, %s32
      %s52 = sphi 0, %s52
      %s54 = sphi 0, %s52
      %s55 = sphi 0, %s54
      %s69 = sphi 0, %s55
      %s73 = sphi 0, %s73
      %s75 = sphi 0, %s73
      %s76 = sphi 0, %s75
      %s90 = sphi 0, %s76
      %s94 = sphi 0, %s94
      %s96 = sphi 0, %s94
      %s97 = sphi 0, %s96
      %s111 = sphi 0, %s97
      %s115 = sphi 0, %s115
      %s117 = sphi 0, %s115
      %s118 = sphi 0, %s117
      %s132 = sphi 0, %s118
      %s136 = sphi 0, %s136
      %s138 = sphi 0, %s136
      %s139 = sphi 0, %s138
      %s153 = sphi 0, %s139
      %s157 = sphi 0, %s157
      %s159 = sphi 0, %s157
      %s160 = sphi 0, %s159
      %s174 = sphi 0, %s160
      %s178 = sphi 0, %s178
      %s180 = sphi 0, %s178
      %s181 = sphi 0, %s180
      %s195 = sphi 0, %s181
      %s199 = sphi 0, %s199
      %s201 = sphi 0, %s199
      %s202 = sphi 0, %s201
      %s216 = sphi 0, %s202
      %s222 = sphi 0, %s224
      %s225 = sphi 0, %s222
      %s226 = sphi 0, %s225
      %s242 = sphi 0, %s226
    $region4: #{forward.1} parent=1 // loop_header_branch
      %21 = sbr.rel (%p19) target = $region8
    $region5: #{forward.1} parent=1 // loop_body
      %s23 = ssub.s32 %s18, 1
      %s24 = ssub.s32 %s18, 2
      %s25 = sadd.s32 %s18, 1
      %s26 = ssub.s32 %s18, %s25
      %p27 = scmp.eq.s32.totalorder %s26, 0
      %s29 = sadd.s32 %s28, 1
      %s30 = scalar_select %p27, %s28, %s29
      %p33 = pneg %p27
      %p34 = scmp.eq.s32.totalorder %s18, 1
      %p35 = por %p33, %p34
      %p36 = scmp.ne.s32.totalorder %s28, %s31
      %p37 = scmp.eq.s32.totalorder %s18, 0
      %p38 = por %p36, %p37
      %p39 = scmp.ne.s32.totalorder %s28, %s31
      %p40 = scmp.eq.s32.totalorder %s23, 1
      %p41 = por %p39, %p40
      %p42 = scmp.ne.s32.totalorder %s31, %s32
      %p43 = scmp.eq.s32.totalorder %s23, 0
      %p44 = por %p42, %p43
      %p45 = scmp.ne.s32.totalorder %s31, %s32
      %p46 = scmp.eq.s32.totalorder %s24, 1
      %p47 = por %p45, %p46
      %p49 = scmp.ne.s32.totalorder %s32, %s48
      %p50 = scmp.eq.s32.totalorder %s24, 0
      %p51 = por %p49, %p50
      %s53 = sadd.s32 %s52, 1
      %p56 = scmp.eq.s32.totalorder %s18, 1
      %p57 = scmp.ne.s32.totalorder %s52, %s54
      %p58 = scmp.eq.s32.totalorder %s18, 0
      %p59 = por %p57, %p58
      %p60 = scmp.ne.s32.totalorder %s52, %s54
      %p61 = scmp.eq.s32.totalorder %s23, 1
      %p62 = por %p60, %p61
      %p63 = scmp.ne.s32.totalorder %s54, %s55
      %p64 = scmp.eq.s32.totalorder %s23, 0
      %p65 = por %p63, %p64
      %p66 = scmp.ne.s32.totalorder %s54, %s55
      %p67 = scmp.eq.s32.totalorder %s24, 1
      %p68 = por %p66, %p67
      %p70 = scmp.ne.s32.totalorder %s55, %s69
      %p71 = scmp.eq.s32.totalorder %s24, 0
      %p72 = por %p70, %p71
      %s74 = sadd.s32 %s73, 1
      %p77 = scmp.eq.s32.totalorder %s18, 1
      %p78 = scmp.ne.s32.totalorder %s73, %s75
      %p79 = scmp.eq.s32.totalorder %s18, 0
      %p80 = por %p78, %p79
      %p81 = scmp.ne.s32.totalorder %s73, %s75
      %p82 = scmp.eq.s32.totalorder %s23, 1
      %p83 = por %p81, %p82
      %p84 = scmp.ne.s32.totalorder %s75, %s76
      %p85 = scmp.eq.s32.totalorder %s23, 0
      %p86 = por %p84, %p85
      %p87 = scmp.ne.s32.totalorder %s75, %s76
      %p88 = scmp.eq.s32.totalorder %s24, 1
      %p89 = por %p87, %p88
      %p91 = scmp.ne.s32.totalorder %s76, %s90
      %p92 = scmp.eq.s32.totalorder %s24, 0
      %p93 = por %p91, %p92
      %s95 = sadd.s32 %s94, 1
      %p98 = scmp.eq.s32.totalorder %s18, 1
      %p99 = scmp.ne.s32.totalorder %s94, %s96
      %p100 = scmp.eq.s32.totalorder %s18, 0
      %p101 = por %p99, %p100
      %p102 = scmp.ne.s32.totalorder %s94, %s96
      %p103 = scmp.eq.s32.totalorder %s23, 1
      %p104 = por %p102, %p103
      %p105 = scmp.ne.s32.totalorder %s96, %s97
      %p106 = scmp.eq.s32.totalorder %s23, 0
      %p107 = por %p105, %p106
      %p108 = scmp.ne.s32.totalorder %s96, %s97
      %p109 = scmp.eq.s32.totalorder %s24, 1
      %p110 = por %p108, %p109
      %p112 = scmp.ne.s32.totalorder %s97, %s111
      %p113 = scmp.eq.s32.totalorder %s24, 0
      %p114 = por %p112, %p113
      %s116 = sadd.s32 %s115, 1
      %p119 = scmp.eq.s32.totalorder %s18, 1
      %p120 = scmp.ne.s32.totalorder %s115, %s117
      %p121 = scmp.eq.s32.totalorder %s18, 0
      %p122 = por %p120, %p121
      %p123 = scmp.ne.s32.totalorder %s115, %s117
      %p124 = scmp.eq.s32.totalorder %s23, 1
      %p125 = por %p123, %p124
      %p126 = scmp.ne.s32.totalorder %s117, %s118
      %p127 = scmp.eq.s32.totalorder %s23, 0
      %p128 = por %p126, %p127
      %p129 = scmp.ne.s32.totalorder %s117, %s118
      %p130 = scmp.eq.s32.totalorder %s24, 1
      %p131 = por %p129, %p130
      %p133 = scmp.ne.s32.totalorder %s118, %s132
      %p134 = scmp.eq.s32.totalorder %s24, 0
      %p135 = por %p133, %p134
      %s137 = sadd.s32 %s136, 1
      %p140 = scmp.eq.s32.totalorder %s18, 1
      %p141 = scmp.ne.s32.totalorder %s136, %s138
      %p142 = scmp.eq.s32.totalorder %s18, 0
      %p143 = por %p141, %p142
      %p144 = scmp.ne.s32.totalorder %s136, %s138
      %p145 = scmp.eq.s32.totalorder %s23, 1
      %p146 = por %p144, %p145
      %p147 = scmp.ne.s32.totalorder %s138, %s139
      %p148 = scmp.eq.s32.totalorder %s23, 0
      %p149 = por %p147, %p148
      %p150 = scmp.ne.s32.totalorder %s138, %s139
      %p151 = scmp.eq.s32.totalorder %s24, 1
      %p152 = por %p150, %p151
      %p154 = scmp.ne.s32.totalorder %s139, %s153
      %p155 = scmp.eq.s32.totalorder %s24, 0
      %p156 = por %p154, %p155
      %s158 = sadd.s32 %s157, 1
      %p161 = scmp.eq.s32.totalorder %s18, 1
      %p162 = scmp.ne.s32.totalorder %s157, %s159
      %p163 = scmp.eq.s32.totalorder %s18, 0
      %p164 = por %p162, %p163
      %p165 = scmp.ne.s32.totalorder %s157, %s159
      %p166 = scmp.eq.s32.totalorder %s23, 1
      %p167 = por %p165, %p166
      %p168 = scmp.ne.s32.totalorder %s159, %s160
      %p169 = scmp.eq.s32.totalorder %s23, 0
      %p170 = por %p168, %p169
      %p171 = scmp.ne.s32.totalorder %s159, %s160
      %p172 = scmp.eq.s32.totalorder %s24, 1
      %p173 = por %p171, %p172
      %p175 = scmp.ne.s32.totalorder %s160, %s174
      %p176 = scmp.eq.s32.totalorder %s24, 0
      %p177 = por %p175, %p176
      %s179 = sadd.s32 %s178, 1
      %p182 = scmp.eq.s32.totalorder %s18, 1
      %p183 = scmp.ne.s32.totalorder %s178, %s180
      %p184 = scmp.eq.s32.totalorder %s18, 0
      %p185 = por %p183, %p184
      %p186 = scmp.ne.s32.totalorder %s178, %s180
      %p187 = scmp.eq.s32.totalorder %s23, 1
      %p188 = por %p186, %p187
      %p189 = scmp.ne.s32.totalorder %s180, %s181
      %p190 = scmp.eq.s32.totalorder %s23, 0
      %p191 = por %p189, %p190
      %p192 = scmp.ne.s32.totalorder %s180, %s181
      %p193 = scmp.eq.s32.totalorder %s24, 1
      %p194 = por %p192, %p193
      %p196 = scmp.ne.s32.totalorder %s181, %s195
      %p197 = scmp.eq.s32.totalorder %s24, 0
      %p198 = por %p196, %p197
      %s200 = sadd.s32 %s199, 1
      %p203 = scmp.eq.s32.totalorder %s18, 1
      %p204 = scmp.ne.s32.totalorder %s199, %s201
      %p205 = scmp.eq.s32.totalorder %s18, 0
      %p206 = por %p204, %p205
      %p207 = scmp.ne.s32.totalorder %s199, %s201
      %p208 = scmp.eq.s32.totalorder %s23, 1
      %p209 = por %p207, %p208
      %p210 = scmp.ne.s32.totalorder %s201, %s202
      %p211 = scmp.eq.s32.totalorder %s23, 0
      %p212 = por %p210, %p211
      %p213 = scmp.ne.s32.totalorder %s201, %s202
      %p214 = scmp.eq.s32.totalorder %s24, 1
      %p215 = por %p213, %p214
      %p217 = scmp.ne.s32.totalorder %s202, %s216
      %p218 = scmp.eq.s32.totalorder %s24, 0
      %p219 = por %p217, %p218
      %s220 = ssub.s32 %s18, %s25
      %p221 = scmp.eq.s32.totalorder %s220, 0
      %s223 = sadd.s32 %s222, 1
      %s224 = scalar_select %p221, %s222, %s223
      %p227 = pneg %p221
      %p228 = scmp.eq.s32.totalorder %s18, 1
      %p229 = por %p227, %p228
      %p230 = scmp.ne.s32.totalorder %s222, %s225
      %p231 = scmp.eq.s32.totalorder %s18, 0
      %p232 = por %p230, %p231
      %p233 = scmp.ne.s32.totalorder %s222, %s225
      %p234 = scmp.eq.s32.totalorder %s23, 1
      %p235 = por %p233, %p234
      %p236 = scmp.ne.s32.totalorder %s225, %s226
      %p237 = scmp.eq.s32.totalorder %s23, 0
      %p238 = por %p236, %p237
      %p239 = scmp.ne.s32.totalorder %s225, %s226
      %p240 = scmp.eq.s32.totalorder %s24, 1
      %p241 = por %p239, %p240
      %p243 = scmp.ne.s32.totalorder %s226, %s242
      %p244 = scmp.eq.s32.totalorder %s24, 0
      %p245 = por %p243, %p244
      %p246 = scmp.le.s32.totalorder 1, %s18
      %p247 = scmp.lt.s32.totalorder %s18, 3
      %p248 = pnand %p246, %p247
      %p249 = pneg %p248
      // Predicated region
      $region9: #{forward.1} parent=5 // pred_check
        _
      $region10: #{forward.1} parent=5 // pred_check_branch
        %251 = sbr.rel (%p248) target = $region12
      $region11: #{forward.1} parent=5 // pred_region
        %s252 = ssub.s32 %s18, 1
        // Predicated region
        $region13: #{forward.1} parent=11 // pred_check
          %p253 = pneg %p65
        $region14: #{forward.1} parent=11 // pred_check_branch
          %255 = sbr.rel (%p253) target = $region16
        $region15: #{forward.1} parent=11 // pred_region
          _
        $region16: #{forward.1} parent=11 // pred_fallthru
          _
        // Predicated region
        $region17: #{forward.1} parent=11 // pred_check
          %p256 = pneg %p86
        $region18: #{forward.1} parent=11 // pred_check_branch
          %258 = sbr.rel (%p256) target = $region20
        $region19: #{forward.1} parent=11 // pred_region
          _
        $region20: #{forward.1} parent=11 // pred_fallthru
          _
        // Predicated region
        $region21: #{forward.1} parent=11 // pred_check
          %p259 = pneg %p107
        $region22: #{forward.1} parent=11 // pred_check_branch
          %261 = sbr.rel (%p259) target = $region24
        $region23: #{forward.1} parent=11 // pred_region
          _
        $region24: #{forward.1} parent=11 // pred_fallthru
          _
        // Predicated region
        $region25: #{forward.1} parent=11 // pred_check
          %p262 = pneg %p128
        $region26: #{forward.1} parent=11 // pred_check_branch
          %264 = sbr.rel (%p262) target = $region28
        $region27: #{forward.1} parent=11 // pred_region
          _
        $region28: #{forward.1} parent=11 // pred_fallthru
          _
        // Predicated region
        $region29: #{forward.1} parent=11 // pred_check
          %p265 = pneg %p149
        $region30: #{forward.1} parent=11 // pred_check_branch
          %267 = sbr.rel (%p265) target = $region32
        $region31: #{forward.1} parent=11 // pred_region
          _
        $region32: #{forward.1} parent=11 // pred_fallthru
          _
        // Predicated region
        $region33: #{forward.1} parent=11 // pred_check
          %p268 = pneg %p170
        $region34: #{forward.1} parent=11 // pred_check_branch
          %270 = sbr.rel (%p268) target = $region36
        $region35: #{forward.1} parent=11 // pred_region
          _
        $region36: #{forward.1} parent=11 // pred_fallthru
          _
        // Predicated region
        $region37: #{forward.1} parent=11 // pred_check
          %p271 = pneg %p191
        $region38: #{forward.1} parent=11 // pred_check_branch
          %273 = sbr.rel (%p271) target = $region40
        $region39: #{forward.1} parent=11 // pred_region
          _
        $region40: #{forward.1} parent=11 // pred_fallthru
          _
        // Predicated region
        $region41: #{forward.1} parent=11 // pred_check
          %p274 = pneg %p212
        $region42: #{forward.1} parent=11 // pred_check_branch
          %276 = sbr.rel (%p274) target = $region44
        $region43: #{forward.1} parent=11 // pred_region
          _
        $region44: #{forward.1} parent=11 // pred_fallthru
          _
      $region12: #{forward.1} parent=5 // pred_fallthru
        _
      %p277 = scmp.lt.s32.totalorder %s18, 2
      // Predicated region
      $region45: #{forward.1} parent=5 // pred_check
        %p278 = pneg %p277
      $region46: #{forward.1} parent=5 // pred_check_branch
        %280 = sbr.rel (%p278) target = $region48
      $region47: #{forward.1} parent=5 // pred_region
        // Predicated region
        $region49: #{forward.1} parent=47 // pred_check
          %p281 = pneg %p38
        $region50: #{forward.1} parent=47 // pred_check_branch
          %283 = sbr.rel (%p281) target = $region52
        $region51: #{forward.1} parent=47 // pred_region
          %s284 = smul.u32 2, %s18
          %p285 = scmp.lt.s32.totalorder %s284, 3
          %s286 = scalar_select %p285, %s284, 3
          %s287 = smul.addr %s286, 11
          %s288 = smul.addr %s287, 4
          %s289 = scalar_lea.vmem %s0, %s288
          %s290 = smul.u32 2, %s18
        $region52: #{forward.1} parent=47 // pred_fallthru
          _
      $region48: #{forward.1} parent=5 // pred_fallthru
        _
      %p291 = scmp.le.s32.totalorder 1, %s18
      %p292 = scmp.lt.s32.totalorder %s18, 3
      %p293 = pnand %p291, %p292
      %p294 = pneg %p293
      // Predicated region
      $region53: #{forward.1} parent=5 // pred_check
        _
      $region54: #{forward.1} parent=5 // pred_check_branch
        %296 = sbr.rel (%p293) target = $region56
      $region55: #{forward.1} parent=5 // pred_region
        %s297 = ssub.s32 %s18, 1
        %s298 = smul.u32 2, %s23
        %p299 = scmp.lt.s32.totalorder %s298, 3
        %s300 = scalar_select %p299, %s298, 3
        %s301 = smul.addr %s300, 11
        %s302 = smul.addr %s301, 4
        %s303 = scalar_lea.vmem %s0, %s302
        %p304 = pneg %p44
        %p305 = pneg %p41
        %p306 = pneg %p65
        %p307 = pneg %p62
        %p308 = pneg %p86
        %p309 = pneg %p83
        %p310 = pneg %p107
        %p311 = pneg %p104
        %p312 = pneg %p128
        %p313 = pneg %p125
        %p314 = pneg %p149
        %p315 = pneg %p146
        %p316 = pneg %p170
        %p317 = pneg %p167
        %p318 = pneg %p191
        %p319 = pneg %p188
        %p320 = pneg %p212
        %p321 = pneg %p209
        %p322 = pneg %p238
        %p323 = pneg %p235
        %s324 = sand.u32 %s225, 1
        %s325 = scalar_lea.sflag [#allocation6], %s324
        %s326 = sand.u32 %s225, 1
        %s327 = smul.addr %s326, 2
        %s328 = scalar_lea.vmem [#allocation5], %s327
        %s329 = smul.u32 2, %s23
        %p330 = scmp.lt.s32.totalorder %s329, 3
        %s331 = scalar_select %p330, %s329, 3
        %s332 = smul.addr %s331, 11
        %s333 = smul.addr %s332, 4
        %s334 = scalar_lea.vmem %s0, %s333
        %s335 = smul.u32 2, %s23
        %v337 = vld [vmem:[%s334] sm:$0xf]
        %v338 = vld [vmem:[%s334 + $0x4] sm:$0xf]
        %v339 = vld [vmem:[%s334 + $0x8] sm:$0xf]
        %v340 = vld [vmem:[%s334 + $0xc] sm:$0xf]
        %v341 = vld [vmem:[%s334 + $0x10] sm:$0xf]
        %v342 = vld [vmem:[%s334 + $0x14] sm:$0xf]
        %v343 = vld [vmem:[%s334 + $0x18] sm:$0xf]
        %v344 = vld [vmem:[%s334 + $0x1c] sm:$0xf]
        %v345 = vld [vmem:[%s334 + $0x20] sm:$0xf]
        %v346 = vld [vmem:[%s1] sm:$0xf]
        %v347 = vld [vmem:[%s1 + $0x4] sm:$0xf]
        %v348 = vld [vmem:[%s1 + $0x8] sm:$0xf]
        %v349 = vld [vmem:[%s1 + $0xc] sm:$0xf]
        %v350 = vld [vmem:[%s1 + $0x10] sm:$0xf]
        %v351 = vld [vmem:[%s1 + $0x14] sm:$0xf]
        %v352 = vld [vmem:[%s1 + $0x18] sm:$0xf]
        %v353 = vld [vmem:[%s1 + $0x1c] sm:$0xf]
        %v354 = vld [vmem:[%s1 + $0x20] sm:$0xf]
        %v355 = vld [vmem:[%s1 + $0x24] sm:$0xf]
        %v356 = vld [vmem:[%s1 + $0x28] sm:$0xf]
        %v357 = vld [vmem:[%s1 + $0x2c] sm:$0xf]
        %v358 = vld [vmem:[%s1 + $0x30] sm:$0xf]
        %v359 = vld [vmem:[%s1 + $0x34] sm:$0xf]
        %v360 = vld [vmem:[%s1 + $0x38] sm:$0xf]
        %v361 = vld [vmem:[%s1 + $0x3c] sm:$0xf]
        %v371 = vunpack.c.l.b16 %v337
        %v372 = vunpack.c.l.b16 %v338
        %v373 = vunpack.c.l.b16 %v339
        %v374 = vunpack.c.l.b16 %v340
        %v375 = vunpack.c.l.b16 %v341
        %v376 = vunpack.c.l.b16 %v342
        %v377 = vunpack.c.l.b16 %v343
        %v378 = vunpack.c.l.b16 %v344
        %v379 = vunpack.c.l.b16 %v345
        %v380 = vpack.c.b16 %v372, %v371
        %v381 = vpack.c.b16 %v374, %v373
        %v382 = vpack.c.b16 %v376, %v375
        %v383 = vpack.c.b16 %v378, %v377
        %v384 = vpack.c.b16 %v379, %v379
        %vm385 = vsmask.f32 7424
        %v387 = vshrl.u32 %v380, 16
        %v389 = vshll.u32 %v380, 16
        %v391 = vrot.slane %v389, 1
        %v392 = vor.u32 %v387, %v391
        %v394 = vshll.u32 %v381, 16
        %v396 = vrot.slane %v394, 1
        %v397 = vsel %vm385, %v392, %v396
        %v398 = vshrl.u32 %v381, 16
        %v400 = vor.u32 %v398, %v396
        %v402 = vshll.u32 %v382, 16
        %v404 = vrot.slane %v402, 1
        %v405 = vsel %vm385, %v400, %v404
        %v406 = vshrl.u32 %v382, 16
        %v408 = vor.u32 %v406, %v404
        %v410 = vshll.u32 %v383, 16
        %v412 = vrot.slane %v410, 1
        %v413 = vsel %vm385, %v408, %v412
        %v414 = vshrl.u32 %v383, 16
        %v416 = vor.u32 %v414, %v412
        %v418 = vshll.u32 %v384, 16
        %v420 = vrot.slane %v418, 1
        %v421 = vsel %vm385, %v416, %v420
        %v422 = vshrl.u32 %v384, 16
        %v424 = vor.u32 %v422, %v420
        %v433 = vunpack.c.l.b16 %v354
        %v434 = vunpack.c.l.b16 %v355
        %v435 = vunpack.c.l.b16 %v356
        %v436 = vunpack.c.l.b16 %v357
        %v437 = vunpack.c.l.b16 %v358
        %v438 = vunpack.c.l.b16 %v359
        %v439 = vunpack.c.l.b16 %v360
        %v440 = vunpack.c.l.b16 %v361
        %v441 = vpack.c.b16 %v434, %v433
        %v442 = vpack.c.b16 %v436, %v435
        %v443 = vpack.c.b16 %v438, %v437
        %v444 = vpack.c.b16 %v440, %v439
        %vm449 = vcmask 523264
        %v451 = vsel %vm449, %v397, 0
        %v454 = vsel %vm449, %v405, 0
        %v457 = vsel %vm449, %v413, 0
        %v460 = vsel %vm449, %v421, 0
        %v463 = vsel %vm449, %v424, 0
        %465 = vmatprep.subr.bf16.mxu0 0
        %466 = vmatpush1.bf16.msra.mxu0 %v441
        %467 = vmatprep.subr.bf16.mxu0 0
        %468 = vmatpush1.bf16.msra.mxu0 %v442
        %469 = vmatprep.subr.bf16.mxu0 0
        %470 = vmatpush1.bf16.msra.mxu0 %v443
        %471 = vmatprep.subr.bf16.mxu0 0
        %472 = vmatpush1.bf16.msra.mxu0 %v444
        %473 = vmatprep.subr.bf16.mxu0 0
        %474 = vmatpush1.bf16.msra.mxu0 0
        %475 = vmatprep.subr.bf16.mxu0 0
        %476 = vmatpush1.bf16.msra.mxu0 0
        %477 = vmatprep.subr.bf16.mxu0 0
        %478 = vmatpush1.bf16.msra.mxu0 0
        %479 = vmatprep.subr.bf16.mxu0 0
        %480 = vmatpush1.bf16.msra.mxu0 0
        %481 = vmatprep.subr.bf16.mxu0 0
        %482 = vmatpush1.bf16.msra.mxu0 0
        %483 = vmatprep.subr.bf16.mxu0 0
        %484 = vmatpush1.bf16.msra.mxu0 0
        %485 = vmatprep.subr.bf16.mxu0 0
        %486 = vmatpush1.bf16.msra.mxu0 0
        %487 = vmatprep.subr.bf16.mxu0 0
        %488 = vmatpush1.bf16.msra.mxu0 0
        %489 = vmatprep.subr.bf16.mxu0 0
        %490 = vmatpush1.bf16.msra.mxu0 0
        %491 = vmatprep.subr.bf16.mxu0 0
        %492 = vmatpush1.bf16.msra.mxu0 0
        %493 = vmatprep.subr.bf16.mxu0 0
        %494 = vmatpush1.bf16.msra.mxu0 0
        %495 = vmatprep.subr.bf16.mxu0 0
        %496 = vmatpush1.bf16.msra.mxu0 0
        %497 = vmatprep.mubr.bf16.mxu0 0
        %498 = vmatmul.mubr.bf16.gmra.mrb[0].mxu0 %v451
        %v499 = vpop.f32.mrb[0].mxu0
        %v500 = vadd.f32 0.0, %v499
        %v501 = vpop.f32.mrb[0].mxu0
        %v502 = vpop.f32.mrb[0].mxu0
        %v503 = vadd.f32 0.0, %v502
        %v504 = vpop.f32.mrb[0].mxu0
        %505 = vmatprep.mubr.bf16.mxu0 0
        %506 = vmatmul.mubr.bf16.gmra.mrb[0].mxu0 %v454
        %v507 = vpop.f32.mrb[0].mxu0
        %v508 = vadd.f32 0.0, %v507
        %v509 = vpop.f32.mrb[0].mxu0
        %v510 = vpop.f32.mrb[0].mxu0
        %v511 = vadd.f32 0.0, %v510
        %v512 = vpop.f32.mrb[0].mxu0
        %513 = vmatprep.mubr.bf16.mxu0 0
        %514 = vmatmul.mubr.bf16.gmra.mrb[0].mxu0 %v457
        %v515 = vpop.f32.mrb[0].mxu0
        %v516 = vadd.f32 0.0, %v515
        %v517 = vpop.f32.mrb[0].mxu0
        %v518 = vpop.f32.mrb[0].mxu0
        %v519 = vadd.f32 0.0, %v518
        %v520 = vpop.f32.mrb[0].mxu0
        %521 = vmatprep.mubr.bf16.mxu0 0
        %522 = vmatmul.mubr.bf16.gmra.mrb[0].mxu0 %v460
        %v523 = vpop.f32.mrb[0].mxu0
        %v524 = vadd.f32 0.0, %v523
        %v525 = vpop.f32.mrb[0].mxu0
        %v526 = vpop.f32.mrb[0].mxu0
        %v527 = vadd.f32 0.0, %v526
        %v528 = vpop.f32.mrb[0].mxu0
        %529 = vmatprep.mubr.bf16.mxu0 0
        %530 = vmatmul.mubr.bf16.gmra.mrb[0].mxu0 %v463
        %v531 = vpop.f32.mrb[0].mxu0
        %v532 = vadd.f32 0.0, %v531
        %v533 = vpop.f32.mrb[0].mxu0
        %v534 = vpop.f32.mrb[0].mxu0
        %v535 = vpop.f32.mrb[0].mxu0
        %536 = vdwg.mxu0
        %v545 = vunpack.c.l.b16 %v346
        %v546 = vunpack.c.l.b16 %v347
        %v547 = vunpack.c.l.b16 %v348
        %v548 = vunpack.c.l.b16 %v349
        %v549 = vunpack.c.l.b16 %v350
        %v550 = vunpack.c.l.b16 %v351
        %v551 = vunpack.c.l.b16 %v352
        %v552 = vunpack.c.l.b16 %v353
        %v553 = vpack.c.b16 %v546, %v545
        %v554 = vpack.c.b16 %v548, %v547
        %v555 = vpack.c.b16 %v550, %v549
        %v556 = vpack.c.b16 %v552, %v551
        %v561 = vsel %vm449, %v380, 0
        %v563 = vsel %vm449, %v381, 0
        %v565 = vsel %vm449, %v382, 0
        %v567 = vsel %vm449, %v383, 0
        %v569 = vsel %vm449, %v384, 0
        %571 = vmatprep.subr.bf16.mxu0 0
        %572 = vmatpush1.bf16.msra.mxu0 %v553
        %573 = vmatprep.subr.bf16.mxu0 0
        %574 = vmatpush1.bf16.msra.mxu0 %v554
        %575 = vmatprep.subr.bf16.mxu0 0
        %576 = vmatpush1.bf16.msra.mxu0 %v555
        %577 = vmatprep.subr.bf16.mxu0 0
        %578 = vmatpush1.bf16.msra.mxu0 %v556
        %579 = vmatprep.subr.bf16.mxu0 0
        %580 = vmatpush1.bf16.msra.mxu0 0
        %581 = vmatprep.subr.bf16.mxu0 0
        %582 = vmatpush1.bf16.msra.mxu0 0
        %583 = vmatprep.subr.bf16.mxu0 0
        %584 = vmatpush1.bf16.msra.mxu0 0
        %585 = vmatprep.subr.bf16.mxu0 0
        %586 = vmatpush1.bf16.msra.mxu0 0
        %587 = vmatprep.subr.bf16.mxu0 0
        %588 = vmatpush1.bf16.msra.mxu0 0
        %589 = vmatprep.subr.bf16.mxu0 0
        %590 = vmatpush1.bf16.msra.mxu0 0
        %591 = vmatprep.subr.bf16.mxu0 0
        %592 = vmatpush1.bf16.msra.mxu0 0
        %593 = vmatprep.subr.bf16.mxu0 0
        %594 = vmatpush1.bf16.msra.mxu0 0
        %595 = vmatprep.subr.bf16.mxu0 0
        %596 = vmatpush1.bf16.msra.mxu0 0
        %597 = vmatprep.subr.bf16.mxu0 0
        %598 = vmatpush1.bf16.msra.mxu0 0
        %599 = vmatprep.subr.bf16.mxu0 0
        %600 = vmatpush1.bf16.msra.mxu0 0
        %601 = vmatprep.subr.bf16.mxu0 0
        %602 = vmatpush1.bf16.msra.mxu0 0
        %603 = vmatprep.mubr.bf16.mxu0 0
        %604 = vmatmul.mubr.bf16.gmra.mrb[0].mxu0 %v561
        %v605 = vpop.f32.mrb[0].mxu0
        %v606 = vadd.f32 %v500, %v605
        %v607 = vpop.f32.mrb[0].mxu0
        %v608 = vpop.f32.mrb[0].mxu0
        %v609 = vadd.f32 %v503, %v608
        %v610 = vpop.f32.mrb[0].mxu0
        %611 = vmatprep.mubr.bf16.mxu0 0
        %612 = vmatmul.mubr.bf16.gmra.mrb[0].mxu0 %v563
        %v613 = vpop.f32.mrb[0].mxu0
        %v614 = vadd.f32 %v508, %v613
        %v615 = vpop.f32.mrb[0].mxu0
        %v616 = vpop.f32.mrb[0].mxu0
        %v617 = vadd.f32 %v511, %v616
        %v618 = vpop.f32.mrb[0].mxu0
        %619 = vmatprep.mubr.bf16.mxu0 0
        %620 = vmatmul.mubr.bf16.gmra.mrb[0].mxu0 %v565
        %v621 = vpop.f32.mrb[0].mxu0
        %v622 = vadd.f32 %v516, %v621
        %v623 = vpop.f32.mrb[0].mxu0
        %v624 = vpop.f32.mrb[0].mxu0
        %v625 = vadd.f32 %v519, %v624
        %v626 = vpop.f32.mrb[0].mxu0
        %627 = vmatprep.mubr.bf16.mxu0 0
        %628 = vmatmul.mubr.bf16.gmra.mrb[0].mxu0 %v567
        %v629 = vpop.f32.mrb[0].mxu0
        %v630 = vadd.f32 %v524, %v629
        %v631 = vpop.f32.mrb[0].mxu0
        %v632 = vpop.f32.mrb[0].mxu0
        %v633 = vadd.f32 %v527, %v632
        %v634 = vpop.f32.mrb[0].mxu0
        %635 = vmatprep.mubr.bf16.mxu0 0
        %636 = vmatmul.mubr.bf16.gmra.mrb[0].mxu0 %v569
        %v637 = vpop.f32.mrb[0].mxu0
        %v638 = vadd.f32 %v532, %v637
        %v639 = vpop.f32.mrb[0].mxu0
        %v640 = vpop.f32.mrb[0].mxu0
        %v641 = vpop.f32.mrb[0].mxu0
        %642 = vdwg.mxu0
        %v643 = vld [vmem:[%s334 + $0x4] sm:$0xf]
        %v644 = vld [vmem:[%s334 + $0x8] sm:$0xf]
        %v645 = vld [vmem:[%s334 + $0xc] sm:$0xf]
        %v646 = vld [vmem:[%s334 + $0x10] sm:$0xf]
        %v647 = vld [vmem:[%s334 + $0x14] sm:$0xf]
        %v648 = vld [vmem:[%s334 + $0x18] sm:$0xf]
        %v649 = vld [vmem:[%s334 + $0x1c] sm:$0xf]
        %v650 = vld [vmem:[%s334 + $0x20] sm:$0xf]
        %v651 = vld [vmem:[%s334 + $0x24] sm:$0xf]
        %v652 = vld [vmem:[%s1 + $0x40] sm:$0xf]
        %v653 = vld [vmem:[%s1 + $0x44] sm:$0xf]
        %v654 = vld [vmem:[%s1 + $0x48] sm:$0xf]
        %v655 = vld [vmem:[%s1 + $0x4c] sm:$0xf]
        %v656 = vld [vmem:[%s1 + $0x50] sm:$0xf]
        %v657 = vld [vmem:[%s1 + $0x54] sm:$0xf]
        %v658 = vld [vmem:[%s1 + $0x58] sm:$0xf]
        %v659 = vld [vmem:[%s1 + $0x5c] sm:$0xf]
        %v669 = vunpack.c.l.b16 %v643
        %v670 = vunpack.c.l.b16 %v644
        %v671 = vunpack.c.l.b16 %v645
        %v672 = vunpack.c.l.b16 %v646
        %v673 = vunpack.c.l.b16 %v647
        %v674 = vunpack.c.l.b16 %v648
        %v675 = vunpack.c.l.b16 %v649
        %v676 = vunpack.c.l.b16 %v650
        %v677 = vunpack.c.l.b16 %v651
        %v678 = vpack.c.b16 %v670, %v669
        %v679 = vpack.c.b16 %v672, %v671
        %v680 = vpack.c.b16 %v674, %v673
        %v681 = vpack.c.b16 %v676, %v675
        %v682 = vpack.c.b16 %v677, %v677
        %v684 = vshrl.u32 %v678, 16
        %v686 = vshll.u32 %v678, 16
        %v688 = vrot.slane %v686, 1
        %v689 = vor.u32 %v684, %v688
        %v691 = vshll.u32 %v679, 16
        %v693 = vrot.slane %v691, 1
        %v694 = vsel %vm385, %v689, %v693
        %v695 = vshrl.u32 %v679, 16
        %v697 = vor.u32 %v695, %v693
        %v699 = vshll.u32 %v680, 16
        %v701 = vrot.slane %v699, 1
        %v702 = vsel %vm385, %v697, %v701
        %v703 = vshrl.u32 %v680, 16
        %v705 = vor.u32 %v703, %v701
        %v707 = vshll.u32 %v681, 16
        %v709 = vrot.slane %v707, 1
        %v710 = vsel %vm385, %v705, %v709
        %v711 = vshrl.u32 %v681, 16
        %v713 = vor.u32 %v711, %v709
        %v715 = vshll.u32 %v682, 16
        %v717 = vrot.slane %v715, 1
        %v718 = vsel %vm385, %v713, %v717
        %v719 = vshrl.u32 %v682, 16
        %v721 = vor.u32 %v719, %v717
        %v730 = vunpack.c.l.b16 %v652
        %v731 = vunpack.c.l.b16 %v653
        %v732 = vunpack.c.l.b16 %v654
        %v733 = vunpack.c.l.b16 %v655
        %v734 = vunpack.c.l.b16 %v656
        %v735 = vunpack.c.l.b16 %v657
        %v736 = vunpack.c.l.b16 %v658
        %v737 = vunpack.c.l.b16 %v659
        %v738 = vpack.c.b16 %v731, %v730
        %v739 = vpack.c.b16 %v733, %v732
        %v740 = vpack.c.b16 %v735, %v734
        %v741 = vpack.c.b16 %v737, %v736
        %v747 = vsel %vm449, %v694, 0
        %v750 = vsel %vm449, %v702, 0
        %v753 = vsel %vm449, %v710, 0
        %v756 = vsel %vm449, %v718, 0
        %v759 = vsel %vm449, %v721, 0
        %761 = vmatprep.subr.bf16.mxu0 0
        %762 = vmatpush1.bf16.msra.mxu0 %v738
        %763 = vmatprep.subr.bf16.mxu0 0
        %764 = vmatpush1.bf16.msra.mxu0 %v739
        %765 = vmatprep.subr.bf16.mxu0 0
        %766 = vmatpush1.bf16.msra.mxu0 %v740
        %767 = vmatprep.subr.bf16.mxu0 0
        %768 = vmatpush1.bf16.msra.mxu0 %v741
        %769 = vmatprep.subr.bf16.mxu0 0
        %770 = vmatpush1.bf16.msra.mxu0 0
        %771 = vmatprep.subr.bf16.mxu0 0
        %772 = vmatpush1.bf16.msra.mxu0 0
        %773 = vmatprep.subr.bf16.mxu0 0
        %774 = vmatpush1.bf16.msra.mxu0 0
        %775 = vmatprep.subr.bf16.mxu0 0
        %776 = vmatpush1.bf16.msra.mxu0 0
        %777 = vmatprep.subr.bf16.mxu0 0
        %778 = vmatpush1.bf16.msra.mxu0 0
        %779 = vmatprep.subr.bf16.mxu0 0
        %780 = vmatpush1.bf16.msra.mxu0 0
        %781 = vmatprep.subr.bf16.mxu0 0
        %782 = vmatpush1.bf16.msra.mxu0 0
        %783 = vmatprep.subr.bf16.mxu0 0
        %784 = vmatpush1.bf16.msra.mxu0 0
        %785 = vmatprep.subr.bf16.mxu0 0
        %786 = vmatpush1.bf16.msra.mxu0 0
        %787 = vmatprep.subr.bf16.mxu0 0
        %788 = vmatpush1.bf16.msra.mxu0 0
        %789 = vmatprep.subr.bf16.mxu0 0
        %790 = vmatpush1.bf16.msra.mxu0 0
        %791 = vmatprep.subr.bf16.mxu0 0
        %792 = vmatpush1.bf16.msra.mxu0 0
        %793 = vmatprep.mubr.bf16.mxu0 0
        %794 = vmatmul.mubr.bf16.gmra.mrb[0].mxu0 %v747
        %v795 = vpop.f32.mrb[0].mxu0
        %v796 = vadd.f32 0.0, %v795
        %v797 = vpop.f32.mrb[0].mxu0
        %v798 = vpop.f32.mrb[0].mxu0
        %v799 = vadd.f32 0.0, %v798
        %v800 = vpop.f32.mrb[0].mxu0
        %801 = vmatprep.mubr.bf16.mxu0 0
        %802 = vmatmul.mubr.bf16.gmra.mrb[0].mxu0 %v750
        %v803 = vpop.f32.mrb[0].mxu0
        %v804 = vadd.f32 0.0, %v803
        %v805 = vpop.f32.mrb[0].mxu0
        %v806 = vpop.f32.mrb[0].mxu0
        %v807 = vadd.f32 0.0, %v806
        %v808 = vpop.f32.mrb[0].mxu0
        %809 = vmatprep.mubr.bf16.mxu0 0
        %810 = vmatmul.mubr.bf16.gmra.mrb[0].mxu0 %v753
        %v811 = vpop.f32.mrb[0].mxu0
        %v812 = vadd.f32 0.0, %v811
        %v813 = vpop.f32.mrb[0].mxu0
        %v814 = vpop.f32.mrb[0].mxu0
        %v815 = vadd.f32 0.0, %v814
        %v816 = vpop.f32.mrb[0].mxu0
        %817 = vmatprep.mubr.bf16.mxu0 0
        %818 = vmatmul.mubr.bf16.gmra.mrb[0].mxu0 %v756
        %v819 = vpop.f32.mrb[0].mxu0
        %v820 = vadd.f32 0.0, %v819
        %v821 = vpop.f32.mrb[0].mxu0
        %v822 = vpop.f32.mrb[0].mxu0
        %v823 = vadd.f32 0.0, %v822
        %v824 = vpop.f32.mrb[0].mxu0
        %825 = vmatprep.mubr.bf16.mxu0 0
        %826 = vmatmul.mubr.bf16.gmra.mrb[0].mxu0 %v759
        %v827 = vpop.f32.mrb[0].mxu0
        %v828 = vadd.f32 0.0, %v827
        %v829 = vpop.f32.mrb[0].mxu0
        %v830 = vpop.f32.mrb[0].mxu0
        %v831 = vpop.f32.mrb[0].mxu0
        %832 = vdwg.mxu0
        %v833 = vadd.f32 %v606, %v796
        %v834 = vadd.f32 %v609, %v799
        %v835 = vadd.f32 %v614, %v804
        %v836 = vadd.f32 %v617, %v807
        %v837 = vadd.f32 %v622, %v812
        %v838 = vadd.f32 %v625, %v815
        %v839 = vadd.f32 %v630, %v820
        %v840 = vadd.f32 %v633, %v823
        %v841 = vadd.f32 %v638, %v828
        %v842 = vld [vmem:[%s334 + $0x4] sm:$0xe]
        %v843 = vld [vmem:[%s334 + $0x8] sm:$0xf]
        %v844 = vld [vmem:[%s334 + $0xc] sm:$0xf]
        %v845 = vld [vmem:[%s334 + $0x10] sm:$0xf]
        %v846 = vld [vmem:[%s334 + $0x14] sm:$0xf]
        %v847 = vld [vmem:[%s334 + $0x18] sm:$0xf]
        %v848 = vld [vmem:[%s334 + $0x1c] sm:$0xf]
        %v849 = vld [vmem:[%s334 + $0x20] sm:$0xf]
        %v850 = vld [vmem:[%s334 + $0x24] sm:$0xf]
        %v851 = vld [vmem:[%s334 + $0x28] sm:$0x1]
        %v852 = vld [vmem:[%s1 + $0x60] sm:$0xf]
        %v853 = vld [vmem:[%s1 + $0x64] sm:$0xf]
        %v854 = vld [vmem:[%s1 + $0x68] sm:$0xf]
        %v855 = vld [vmem:[%s1 + $0x6c] sm:$0xf]
        %v856 = vld [vmem:[%s1 + $0x70] sm:$0xf]
        %v857 = vld [vmem:[%s1 + $0x74] sm:$0xf]
        %v858 = vld [vmem:[%s1 + $0x78] sm:$0xf]
        %v859 = vld [vmem:[%s1 + $0x7c] sm:$0xf]
        %v870 = vunpack.c.l.b16 %v842
        %v871 = vunpack.c.l.b16 %v843
        %v872 = vunpack.c.l.b16 %v844
        %v873 = vunpack.c.l.b16 %v845
        %v874 = vunpack.c.l.b16 %v846
        %v875 = vunpack.c.l.b16 %v847
        %v876 = vunpack.c.l.b16 %v848
        %v877 = vunpack.c.l.b16 %v849
        %v878 = vunpack.c.l.b16 %v850
        %v879 = vunpack.c.l.b16 %v851
        %v880 = vpack.c.b16 %v871, %v870
        %v881 = vpack.c.b16 %v873, %v872
        %v882 = vpack.c.b16 %v875, %v874
        %v883 = vpack.c.b16 %v877, %v876
        %v884 = vpack.c.b16 %v879, %v878
        %vm885 = vcmask 1046528
        %v886 = vrot.slane %v880, 1
        %v887 = vrot.slane %v881, 1
        %v888 = vsel %vm885, %v886, %v887
        %v889 = vrot.slane %v882, 1
        %v890 = vsel %vm885, %v887, %v889
        %v891 = vrot.slane %v883, 1
        %v892 = vsel %vm885, %v889, %v891
        %v893 = vrot.slane %v884, 1
        %v894 = vsel %vm885, %v891, %v893
        %v903 = vunpack.c.l.b16 %v852
        %v904 = vunpack.c.l.b16 %v853
        %v905 = vunpack.c.l.b16 %v854
        %v906 = vunpack.c.l.b16 %v855
        %v907 = vunpack.c.l.b16 %v856
        %v908 = vunpack.c.l.b16 %v857
        %v909 = vunpack.c.l.b16 %v858
        %v910 = vunpack.c.l.b16 %v859
        %v911 = vpack.c.b16 %v904, %v903
        %v912 = vpack.c.b16 %v906, %v905
        %v913 = vpack.c.b16 %v908, %v907
        %v914 = vpack.c.b16 %v910, %v909
        %v920 = vsel %vm449, %v888, 0
        %v923 = vsel %vm449, %v890, 0
        %v926 = vsel %vm449, %v892, 0
        %v929 = vsel %vm449, %v894, 0
        %v932 = vsel %vm449, %v893, 0
        %934 = vmatprep.subr.bf16.mxu0 0
        %935 = vmatpush1.bf16.msra.mxu0 %v911
        %936 = vmatprep.subr.bf16.mxu0 0
        %937 = vmatpush1.bf16.msra.mxu0 %v912
        %938 = vmatprep.subr.bf16.mxu0 0
        %939 = vmatpush1.bf16.msra.mxu0 %v913
        %940 = vmatprep.subr.bf16.mxu0 0
        %941 = vmatpush1.bf16.msra.mxu0 %v914
        %942 = vmatprep.subr.bf16.mxu0 0
        %943 = vmatpush1.bf16.msra.mxu0 0
        %944 = vmatprep.subr.bf16.mxu0 0
        %945 = vmatpush1.bf16.msra.mxu0 0
        %946 = vmatprep.subr.bf16.mxu0 0
        %947 = vmatpush1.bf16.msra.mxu0 0
        %948 = vmatprep.subr.bf16.mxu0 0
        %949 = vmatpush1.bf16.msra.mxu0 0
        %950 = vmatprep.subr.bf16.mxu0 0
        %951 = vmatpush1.bf16.msra.mxu0 0
        %952 = vmatprep.subr.bf16.mxu0 0
        %953 = vmatpush1.bf16.msra.mxu0 0
        %954 = vmatprep.subr.bf16.mxu0 0
        %955 = vmatpush1.bf16.msra.mxu0 0
        %956 = vmatprep.subr.bf16.mxu0 0
        %957 = vmatpush1.bf16.msra.mxu0 0
        %958 = vmatprep.subr.bf16.mxu0 0
        %959 = vmatpush1.bf16.msra.mxu0 0
        %960 = vmatprep.subr.bf16.mxu0 0
        %961 = vmatpush1.bf16.msra.mxu0 0
        %962 = vmatprep.subr.bf16.mxu0 0
        %963 = vmatpush1.bf16.msra.mxu0 0
        %964 = vmatprep.subr.bf16.mxu0 0
        %965 = vmatpush1.bf16.msra.mxu0 0
        %966 = vmatprep.mubr.bf16.mxu0 0
        %967 = vmatmul.mubr.bf16.gmra.mrb[0].mxu0 %v920
        %v968 = vpop.f32.mrb[0].mxu0
        %v969 = vadd.f32 0.0, %v968
        %v970 = vpop.f32.mrb[0].mxu0
        %v971 = vpop.f32.mrb[0].mxu0
        %v972 = vadd.f32 0.0, %v971
        %v973 = vpop.f32.mrb[0].mxu0
        %974 = vmatprep.mubr.bf16.mxu0 0
        %975 = vmatmul.mubr.bf16.gmra.mrb[0].mxu0 %v923
        %v976 = vpop.f32.mrb[0].mxu0
        %v977 = vadd.f32 0.0, %v976
        %v978 = vpop.f32.mrb[0].mxu0
        %v979 = vpop.f32.mrb[0].mxu0
        %v980 = vadd.f32 0.0, %v979
        %v981 = vpop.f32.mrb[0].mxu0
        %982 = vmatprep.mubr.bf16.mxu0 0
        %983 = vmatmul.mubr.bf16.gmra.mrb[0].mxu0 %v926
        %v984 = vpop.f32.mrb[0].mxu0
        %v985 = vadd.f32 0.0, %v984
        %v986 = vpop.f32.mrb[0].mxu0
        %v987 = vpop.f32.mrb[0].mxu0
        %v988 = vadd.f32 0.0, %v987
        %v989 = vpop.f32.mrb[0].mxu0
        %990 = vmatprep.mubr.bf16.mxu0 0
        %991 = vmatmul.mubr.bf16.gmra.mrb[0].mxu0 %v929
        %v992 = vpop.f32.mrb[0].mxu0
        %v993 = vadd.f32 0.0, %v992
        %v994 = vpop.f32.mrb[0].mxu0
        %v995 = vpop.f32.mrb[0].mxu0
        %v996 = vadd.f32 0.0, %v995
        %v997 = vpop.f32.mrb[0].mxu0
        %998 = vmatprep.mubr.bf16.mxu0 0
        %999 = vmatmul.mubr.bf16.gmra.mrb[0].mxu0 %v932
        %v1000 = vpop.f32.mrb[0].mxu0
        %v1001 = vadd.f32 0.0, %v1000
        %v1002 = vpop.f32.mrb[0].mxu0
        %v1003 = vpop.f32.mrb[0].mxu0
        %v1004 = vpop.f32.mrb[0].mxu0
        %1005 = vdwg.mxu0
        %v1006 = vadd.f32 %v833, %v969
        %v1007 = vadd.f32 %v834, %v972
        %v1008 = vadd.f32 %v835, %v977
        %v1009 = vadd.f32 %v836, %v980
        %v1010 = vadd.f32 %v837, %v985
        %v1011 = vadd.f32 %v838, %v988
        %v1012 = vadd.f32 %v839, %v993
        %v1013 = vadd.f32 %v840, %v996
        %v1014 = vadd.f32 %v841, %v1001
        %v1015 = vld [vmem:[%s2] sm:$0x1]
        %v1017 = vlaneseq
        %v1018 = vshrl.u32 %v1017, 7
        %v1019 = vsub.s32 0, %v1018
        %v1020 = vrot.slane %v1015, %v1019
        %v1022 = vadd.f32 %v1006, %v1020
        %v1023 = vadd.f32 %v1007, %v1020
        %v1024 = vadd.f32 %v1008, %v1020
        %v1025 = vadd.f32 %v1009, %v1020
        %v1026 = vadd.f32 %v1010, %v1020
        %v1027 = vadd.f32 %v1011, %v1020
        %v1028 = vadd.f32 %v1012, %v1020
        %v1029 = vadd.f32 %v1013, %v1020
        %v1030 = vadd.f32 %v1014, %v1020
        %v1031 = vmax.f32 %v1022, 0.0
        %v1032 = vmax.f32 %v1023, 0.0
        %v1033 = vmax.f32 %v1024, 0.0
        %v1034 = vmax.f32 %v1025, 0.0
        %v1035 = vmax.f32 %v1026, 0.0
        %v1036 = vmax.f32 %v1027, 0.0
        %v1037 = vmax.f32 %v1028, 0.0
        %v1038 = vmax.f32 %v1029, 0.0
        %v1039 = vmax.f32 %v1030, 0.0
        %vm1040 = vcmask 261120
        %1041 = vst.msk [vmem:[#allocation2] sm:$0xff] %vm1040, %v1031
        %1042 = vst.msk [vmem:[#allocation2 + $0x8] sm:$0xff] %vm1040, %v1032
        %1043 = vst.msk [vmem:[#allocation2 + $0x10] sm:$0xff] %vm1040, %v1033
        %1044 = vst.msk [vmem:[#allocation2 + $0x18] sm:$0xff] %vm1040, %v1034
        %1045 = vst.msk [vmem:[#allocation2 + $0x20] sm:$0xff] %vm1040, %v1035
        %1046 = vst.msk [vmem:[#allocation2 + $0x28] sm:$0xff] %vm1040, %v1036
        %1047 = vst.msk [vmem:[#allocation2 + $0x30] sm:$0xff] %vm1040, %v1037
        %1048 = vst.msk [vmem:[#allocation2 + $0x38] sm:$0xff] %vm1040, %v1038
        %vm1049 = vcmask 260096
        %1050 = vst.msk [vmem:[#allocation2 + $0x40] sm:$0x7f] %vm1049, %v1039
        %v1051 = vld [vmem:[#allocation2] ss:$2 sm:$0x7]
        %v1052 = vpack.c.bf16 %v1051, %v1051
        %v1053 = vld [vmem:[%s3] sm:$0xf]
        %v1054 = vld [vmem:[%s3 + $0x4] sm:$0xf]
        %v1055 = vld [vmem:[%s3 + $0x8] sm:$0xf]
        %v1056 = vld [vmem:[%s3 + $0xc] sm:$0xf]
        %s1057 = scalar_lea.vmem [#allocation2], 1
        %v1058 = vld [vmem:[%s1057] ss:$2 sm:$0x7]
        %v1059 = vpack.c.bf16 %v1058, %v1058
        %v1060 = vld [vmem:[%s3 + $0x10] sm:$0xf]
        %v1061 = vld [vmem:[%s3 + $0x14] sm:$0xf]
        %v1062 = vld [vmem:[%s3 + $0x18] sm:$0xf]
        %v1063 = vld [vmem:[%s3 + $0x1c] sm:$0xf]
        %v1068 = vunpack.c.l.b16 %v1060
        %v1069 = vunpack.c.l.b16 %v1061
        %v1070 = vunpack.c.l.b16 %v1062
        %v1071 = vunpack.c.l.b16 %v1063
        %v1072 = vpack.c.b16 %v1069, %v1068
        %v1073 = vpack.c.b16 %v1071, %v1070
        %v1077 = vsel %vm1040, %v1059, 0
        %1079 = vmatprep.subr.bf16.mxu0 0
        %1080 = vmatpush1.bf16.msra.mxu0 %v1072
        %1081 = vmatprep.subr.bf16.mxu0 0
        %1082 = vmatpush1.bf16.msra.mxu0 %v1073
        %1083 = vmatprep.subr.bf16.mxu0 0
        %1084 = vmatpush1.bf16.msra.mxu0 0
        %1085 = vmatprep.subr.bf16.mxu0 0
        %1086 = vmatpush1.bf16.msra.mxu0 0
        %1087 = vmatprep.subr.bf16.mxu0 0
        %1088 = vmatpush1.bf16.msra.mxu0 0
        %1089 = vmatprep.subr.bf16.mxu0 0
        %1090 = vmatpush1.bf16.msra.mxu0 0
        %1091 = vmatprep.subr.bf16.mxu0 0
        %1092 = vmatpush1.bf16.msra.mxu0 0
        %1093 = vmatprep.subr.bf16.mxu0 0
        %1094 = vmatpush1.bf16.msra.mxu0 0
        %1095 = vmatprep.subr.bf16.mxu0 0
        %1096 = vmatpush1.bf16.msra.mxu0 0
        %1097 = vmatprep.subr.bf16.mxu0 0
        %1098 = vmatpush1.bf16.msra.mxu0 0
        %1099 = vmatprep.subr.bf16.mxu0 0
        %1100 = vmatpush1.bf16.msra.mxu0 0
        %1101 = vmatprep.subr.bf16.mxu0 0
        %1102 = vmatpush1.bf16.msra.mxu0 0
        %1103 = vmatprep.subr.bf16.mxu0 0
        %1104 = vmatpush1.bf16.msra.mxu0 0
        %1105 = vmatprep.subr.bf16.mxu0 0
        %1106 = vmatpush1.bf16.msra.mxu0 0
        %1107 = vmatprep.subr.bf16.mxu0 0
        %1108 = vmatpush1.bf16.msra.mxu0 0
        %1109 = vmatprep.subr.bf16.mxu0 0
        %1110 = vmatpush1.bf16.msra.mxu0 0
        %1111 = vmatprep.mubr.bf16.mxu0 0
        %1112 = vmatmul.mubr.bf16.gmra.mrb[0].mxu0 %v1077
        %v1113 = vpop.f32.mrb[0].mxu0
        %v1114 = vadd.f32 0.0, %v1113
        %v1115 = vpop.f32.mrb[0].mxu0
        %v1116 = vpop.f32.mrb[0].mxu0
        %v1117 = vpop.f32.mrb[0].mxu0
        %1118 = vdwg.mxu0
        %v1123 = vunpack.c.l.b16 %v1053
        %v1124 = vunpack.c.l.b16 %v1054
        %v1125 = vunpack.c.l.b16 %v1055
        %v1126 = vunpack.c.l.b16 %v1056
        %v1127 = vpack.c.b16 %v1124, %v1123
        %v1128 = vpack.c.b16 %v1126, %v1125
        %v1132 = vsel %vm1040, %v1052, 0
        %1134 = vmatprep.subr.bf16.mxu0 0
        %1135 = vmatpush1.bf16.msra.mxu0 %v1127
        %1136 = vmatprep.subr.bf16.mxu0 0
        %1137 = vmatpush1.bf16.msra.mxu0 %v1128
        %1138 = vmatprep.subr.bf16.mxu0 0
        %1139 = vmatpush1.bf16.msra.mxu0 0
        %1140 = vmatprep.subr.bf16.mxu0 0
        %1141 = vmatpush1.bf16.msra.mxu0 0
        %1142 = vmatprep.subr.bf16.mxu0 0
        %1143 = vmatpush1.bf16.msra.mxu0 0
        %1144 = vmatprep.subr.bf16.mxu0 0
        %1145 = vmatpush1.bf16.msra.mxu0 0
        %1146 = vmatprep.subr.bf16.mxu0 0
        %1147 = vmatpush1.bf16.msra.mxu0 0
        %1148 = vmatprep.subr.bf16.mxu0 0
        %1149 = vmatpush1.bf16.msra.mxu0 0
        %1150 = vmatprep.subr.bf16.mxu0 0
        %1151 = vmatpush1.bf16.msra.mxu0 0
        %1152 = vmatprep.subr.bf16.mxu0 0
        %1153 = vmatpush1.bf16.msra.mxu0 0
        %1154 = vmatprep.subr.bf16.mxu0 0
        %1155 = vmatpush1.bf16.msra.mxu0 0
        %1156 = vmatprep.subr.bf16.mxu0 0
        %1157 = vmatpush1.bf16.msra.mxu0 0
        %1158 = vmatprep.subr.bf16.mxu0 0
        %1159 = vmatpush1.bf16.msra.mxu0 0
        %1160 = vmatprep.subr.bf16.mxu0 0
        %1161 = vmatpush1.bf16.msra.mxu0 0
        %1162 = vmatprep.subr.bf16.mxu0 0
        %1163 = vmatpush1.bf16.msra.mxu0 0
        %1164 = vmatprep.subr.bf16.mxu0 0
        %1165 = vmatpush1.bf16.msra.mxu0 0
        %1166 = vmatprep.mubr.bf16.mxu0 0
        %1167 = vmatmul.mubr.bf16.gmra.mrb[0].mxu0 %v1132
        %v1168 = vpop.f32.mrb[0].mxu0
        %v1169 = vadd.f32 %v1114, %v1168
        %v1170 = vpop.f32.mrb[0].mxu0
        %v1171 = vpop.f32.mrb[0].mxu0
        %v1172 = vpop.f32.mrb[0].mxu0
        %1173 = vdwg.mxu0
        %s1174 = scalar_lea.vmem [#allocation2], 2
        %v1175 = vld [vmem:[%s1174] ss:$2 sm:$0x7]
        %v1176 = vpack.c.bf16 %v1175, %v1175
        %v1177 = vld [vmem:[%s3 + $0x20] sm:$0xf]
        %v1178 = vld [vmem:[%s3 + $0x24] sm:$0xf]
        %v1179 = vld [vmem:[%s3 + $0x28] sm:$0xf]
        %v1180 = vld [vmem:[%s3 + $0x2c] sm:$0xf]
        %v1185 = vunpack.c.l.b16 %v1177
        %v1186 = vunpack.c.l.b16 %v1178
        %v1187 = vunpack.c.l.b16 %v1179
        %v1188 = vunpack.c.l.b16 %v1180
        %v1189 = vpack.c.b16 %v1186, %v1185
        %v1190 = vpack.c.b16 %v1188, %v1187
        %v1194 = vsel %vm1040, %v1176, 0
        %1196 = vmatprep.subr.bf16.mxu0 0
        %1197 = vmatpush1.bf16.msra.mxu0 %v1189
        %1198 = vmatprep.subr.bf16.mxu0 0
        %1199 = vmatpush1.bf16.msra.mxu0 %v1190
        %1200 = vmatprep.subr.bf16.mxu0 0
        %1201 = vmatpush1.bf16.msra.mxu0 0
        %1202 = vmatprep.subr.bf16.mxu0 0
        %1203 = vmatpush1.bf16.msra.mxu0 0
        %1204 = vmatprep.subr.bf16.mxu0 0
        %1205 = vmatpush1.bf16.msra.mxu0 0
        %1206 = vmatprep.subr.bf16.mxu0 0
        %1207 = vmatpush1.bf16.msra.mxu0 0
        %1208 = vmatprep.subr.bf16.mxu0 0
        %1209 = vmatpush1.bf16.msra.mxu0 0
        %1210 = vmatprep.subr.bf16.mxu0 0
        %1211 = vmatpush1.bf16.msra.mxu0 0
        %1212 = vmatprep.subr.bf16.mxu0 0
        %1213 = vmatpush1.bf16.msra.mxu0 0
        %1214 = vmatprep.subr.bf16.mxu0 0
        %1215 = vmatpush1.bf16.msra.mxu0 0
        %1216 = vmatprep.subr.bf16.mxu0 0
        %1217 = vmatpush1.bf16.msra.mxu0 0
        %1218 = vmatprep.subr.bf16.mxu0 0
        %1219 = vmatpush1.bf16.msra.mxu0 0
        %1220 = vmatprep.subr.bf16.mxu0 0
        %1221 = vmatpush1.bf16.msra.mxu0 0
        %1222 = vmatprep.subr.bf16.mxu0 0
        %1223 = vmatpush1.bf16.msra.mxu0 0
        %1224 = vmatprep.subr.bf16.mxu0 0
        %1225 = vmatpush1.bf16.msra.mxu0 0
        %1226 = vmatprep.subr.bf16.mxu0 0
        %1227 = vmatpush1.bf16.msra.mxu0 0
        %1228 = vmatprep.mubr.bf16.mxu0 0
        %1229 = vmatmul.mubr.bf16.gmra.mrb[0].mxu0 %v1194
        %v1230 = vpop.f32.mrb[0].mxu0
        %v1231 = vadd.f32 0.0, %v1230
        %v1232 = vpop.f32.mrb[0].mxu0
        %v1233 = vpop.f32.mrb[0].mxu0
        %v1234 = vpop.f32.mrb[0].mxu0
        %1235 = vdwg.mxu0
        %v1236 = vadd.f32 %v1169, %v1231
        %s1237 = scalar_lea.vmem [#allocation2], 3
        %v1238 = vld [vmem:[%s1237] ss:$2 sm:$0x7]
        %v1239 = vpack.c.bf16 %v1238, %v1238
        %v1240 = vld [vmem:[%s3 + $0x30] sm:$0xf]
        %v1241 = vld [vmem:[%s3 + $0x34] sm:$0xf]
        %v1242 = vld [vmem:[%s3 + $0x38] sm:$0xf]
        %v1243 = vld [vmem:[%s3 + $0x3c] sm:$0xf]
        %v1248 = vunpack.c.l.b16 %v1240
        %v1249 = vunpack.c.l.b16 %v1241
        %v1250 = vunpack.c.l.b16 %v1242
        %v1251 = vunpack.c.l.b16 %v1243
        %v1252 = vpack.c.b16 %v1249, %v1248
        %v1253 = vpack.c.b16 %v1251, %v1250
        %v1257 = vsel %vm1040, %v1239, 0
        %1259 = vmatprep.subr.bf16.mxu0 0
        %1260 = vmatpush1.bf16.msra.mxu0 %v1252
        %1261 = vmatprep.subr.bf16.mxu0 0
        %1262 = vmatpush1.bf16.msra.mxu0 %v1253
        %1263 = vmatprep.subr.bf16.mxu0 0
        %1264 = vmatpush1.bf16.msra.mxu0 0
        %1265 = vmatprep.subr.bf16.mxu0 0
        %1266 = vmatpush1.bf16.msra.mxu0 0
        %1267 = vmatprep.subr.bf16.mxu0 0
        %1268 = vmatpush1.bf16.msra.mxu0 0
        %1269 = vmatprep.subr.bf16.mxu0 0
        %1270 = vmatpush1.bf16.msra.mxu0 0
        %1271 = vmatprep.subr.bf16.mxu0 0
        %1272 = vmatpush1.bf16.msra.mxu0 0
        %1273 = vmatprep.subr.bf16.mxu0 0
        %1274 = vmatpush1.bf16.msra.mxu0 0
        %1275 = vmatprep.subr.bf16.mxu0 0
        %1276 = vmatpush1.bf16.msra.mxu0 0
        %1277 = vmatprep.subr.bf16.mxu0 0
        %1278 = vmatpush1.bf16.msra.mxu0 0
        %1279 = vmatprep.subr.bf16.mxu0 0
        %1280 = vmatpush1.bf16.msra.mxu0 0
        %1281 = vmatprep.subr.bf16.mxu0 0
        %1282 = vmatpush1.bf16.msra.mxu0 0
        %1283 = vmatprep.subr.bf16.mxu0 0
        %1284 = vmatpush1.bf16.msra.mxu0 0
        %1285 = vmatprep.subr.bf16.mxu0 0
        %1286 = vmatpush1.bf16.msra.mxu0 0
        %1287 = vmatprep.subr.bf16.mxu0 0
        %1288 = vmatpush1.bf16.msra.mxu0 0
        %1289 = vmatprep.subr.bf16.mxu0 0
        %1290 = vmatpush1.bf16.msra.mxu0 0
        %1291 = vmatprep.mubr.bf16.mxu0 0
        %1292 = vmatmul.mubr.bf16.gmra.mrb[0].mxu0 %v1257
        %v1293 = vpop.f32.mrb[0].mxu0
        %v1294 = vadd.f32 0.0, %v1293
        %v1295 = vpop.f32.mrb[0].mxu0
        %v1296 = vpop.f32.mrb[0].mxu0
        %v1297 = vpop.f32.mrb[0].mxu0
        %1298 = vdwg.mxu0
        %v1299 = vadd.f32 %v1236, %v1294
        %s1300 = scalar_lea.vmem [#allocation2], 9
        %v1301 = vld [vmem:[%s1300] ss:$2 sm:$0x7]
        %v1302 = vpack.c.bf16 %v1301, %v1301
        %v1303 = vld [vmem:[%s3 + $0x40] sm:$0xf]
        %v1304 = vld [vmem:[%s3 + $0x44] sm:$0xf]
        %v1305 = vld [vmem:[%s3 + $0x48] sm:$0xf]
        %v1306 = vld [vmem:[%s3 + $0x4c] sm:$0xf]
        %v1311 = vunpack.c.l.b16 %v1303
        %v1312 = vunpack.c.l.b16 %v1304
        %v1313 = vunpack.c.l.b16 %v1305
        %v1314 = vunpack.c.l.b16 %v1306
        %v1315 = vpack.c.b16 %v1312, %v1311
        %v1316 = vpack.c.b16 %v1314, %v1313
        %v1320 = vsel %vm1040, %v1302, 0
        %1322 = vmatprep.subr.bf16.mxu0 0
        %1323 = vmatpush1.bf16.msra.mxu0 %v1315
        %1324 = vmatprep.subr.bf16.mxu0 0
        %1325 = vmatpush1.bf16.msra.mxu0 %v1316
        %1326 = vmatprep.subr.bf16.mxu0 0
        %1327 = vmatpush1.bf16.msra.mxu0 0
        %1328 = vmatprep.subr.bf16.mxu0 0
        %1329 = vmatpush1.bf16.msra.mxu0 0
        %1330 = vmatprep.subr.bf16.mxu0 0
        %1331 = vmatpush1.bf16.msra.mxu0 0
        %1332 = vmatprep.subr.bf16.mxu0 0
        %1333 = vmatpush1.bf16.msra.mxu0 0
        %1334 = vmatprep.subr.bf16.mxu0 0
        %1335 = vmatpush1.bf16.msra.mxu0 0
        %1336 = vmatprep.subr.bf16.mxu0 0
        %1337 = vmatpush1.bf16.msra.mxu0 0
        %1338 = vmatprep.subr.bf16.mxu0 0
        %1339 = vmatpush1.bf16.msra.mxu0 0
        %1340 = vmatprep.subr.bf16.mxu0 0
        %1341 = vmatpush1.bf16.msra.mxu0 0
        %1342 = vmatprep.subr.bf16.mxu0 0
        %1343 = vmatpush1.bf16.msra.mxu0 0
        %1344 = vmatprep.subr.bf16.mxu0 0
        %1345 = vmatpush1.bf16.msra.mxu0 0
        %1346 = vmatprep.subr.bf16.mxu0 0
        %1347 = vmatpush1.bf16.msra.mxu0 0
        %1348 = vmatprep.subr.bf16.mxu0 0
        %1349 = vmatpush1.bf16.msra.mxu0 0
        %1350 = vmatprep.subr.bf16.mxu0 0
        %1351 = vmatpush1.bf16.msra.mxu0 0
        %1352 = vmatprep.subr.bf16.mxu0 0
        %1353 = vmatpush1.bf16.msra.mxu0 0
        %1354 = vmatprep.mubr.bf16.mxu0 0
        %1355 = vmatmul.mubr.bf16.gmra.mrb[0].mxu0 %v1320
        %v1356 = vpop.f32.mrb[0].mxu0
        %v1357 = vadd.f32 0.0, %v1356
        %v1358 = vpop.f32.mrb[0].mxu0
        %v1359 = vpop.f32.mrb[0].mxu0
        %v1360 = vpop.f32.mrb[0].mxu0
        %1361 = vdwg.mxu0
        %v1362 = vadd.f32 %v1299, %v1357
        %s1363 = scalar_lea.vmem [#allocation2], 10
        %v1364 = vld [vmem:[%s1363] ss:$2 sm:$0x7]
        %v1365 = vpack.c.bf16 %v1364, %v1364
        %v1366 = vld [vmem:[%s3 + $0x50] sm:$0xf]
        %v1367 = vld [vmem:[%s3 + $0x54] sm:$0xf]
        %v1368 = vld [vmem:[%s3 + $0x58] sm:$0xf]
        %v1369 = vld [vmem:[%s3 + $0x5c] sm:$0xf]
        %v1374 = vunpack.c.l.b16 %v1366
        %v1375 = vunpack.c.l.b16 %v1367
        %v1376 = vunpack.c.l.b16 %v1368
        %v1377 = vunpack.c.l.b16 %v1369
        %v1378 = vpack.c.b16 %v1375, %v1374
        %v1379 = vpack.c.b16 %v1377, %v1376
        %v1383 = vsel %vm1040, %v1365, 0
        %1385 = vmatprep.subr.bf16.mxu0 0
        %1386 = vmatpush1.bf16.msra.mxu0 %v1378
        %1387 = vmatprep.subr.bf16.mxu0 0
        %1388 = vmatpush1.bf16.msra.mxu0 %v1379
        %1389 = vmatprep.subr.bf16.mxu0 0
        %1390 = vmatpush1.bf16.msra.mxu0 0
        %1391 = vmatprep.subr.bf16.mxu0 0
        %1392 = vmatpush1.bf16.msra.mxu0 0
        %1393 = vmatprep.subr.bf16.mxu0 0
        %1394 = vmatpush1.bf16.msra.mxu0 0
        %1395 = vmatprep.subr.bf16.mxu0 0
        %1396 = vmatpush1.bf16.msra.mxu0 0
        %1397 = vmatprep.subr.bf16.mxu0 0
        %1398 = vmatpush1.bf16.msra.mxu0 0
        %1399 = vmatprep.subr.bf16.mxu0 0
        %1400 = vmatpush1.bf16.msra.mxu0 0
        %1401 = vmatprep.subr.bf16.mxu0 0
        %1402 = vmatpush1.bf16.msra.mxu0 0
        %1403 = vmatprep.subr.bf16.mxu0 0
        %1404 = vmatpush1.bf16.msra.mxu0 0
        %1405 = vmatprep.subr.bf16.mxu0 0
        %1406 = vmatpush1.bf16.msra.mxu0 0
        %1407 = vmatprep.subr.bf16.mxu0 0
        %1408 = vmatpush1.bf16.msra.mxu0 0
        %1409 = vmatprep.subr.bf16.mxu0 0
        %1410 = vmatpush1.bf16.msra.mxu0 0
        %1411 = vmatprep.subr.bf16.mxu0 0
        %1412 = vmatpush1.bf16.msra.mxu0 0
        %1413 = vmatprep.subr.bf16.mxu0 0
        %1414 = vmatpush1.bf16.msra.mxu0 0
        %1415 = vmatprep.subr.bf16.mxu0 0
        %1416 = vmatpush1.bf16.msra.mxu0 0
        %1417 = vmatprep.mubr.bf16.mxu0 0
        %1418 = vmatmul.mubr.bf16.gmra.mrb[0].mxu0 %v1383
        %v1419 = vpop.f32.mrb[0].mxu0
        %v1420 = vadd.f32 0.0, %v1419
        %v1421 = vpop.f32.mrb[0].mxu0
        %v1422 = vpop.f32.mrb[0].mxu0
        %v1423 = vpop.f32.mrb[0].mxu0
        %1424 = vdwg.mxu0
        %v1425 = vadd.f32 %v1362, %v1420
        %s1426 = scalar_lea.vmem [#allocation2], 11
        %v1427 = vld [vmem:[%s1426] ss:$2 sm:$0x7]
        %v1428 = vpack.c.bf16 %v1427, %v1427
        %v1429 = vld [vmem:[%s3 + $0x60] sm:$0xf]
        %v1430 = vld [vmem:[%s3 + $0x64] sm:$0xf]
        %v1431 = vld [vmem:[%s3 + $0x68] sm:$0xf]
        %v1432 = vld [vmem:[%s3 + $0x6c] sm:$0xf]
        %v1437 = vunpack.c.l.b16 %v1429
        %v1438 = vunpack.c.l.b16 %v1430
        %v1439 = vunpack.c.l.b16 %v1431
        %v1440 = vunpack.c.l.b16 %v1432
        %v1441 = vpack.c.b16 %v1438, %v1437
        %v1442 = vpack.c.b16 %v1440, %v1439
        %v1446 = vsel %vm1040, %v1428, 0
        %1448 = vmatprep.subr.bf16.mxu0 0
        %1449 = vmatpush1.bf16.msra.mxu0 %v1441
        %1450 = vmatprep.subr.bf16.mxu0 0
        %1451 = vmatpush1.bf16.msra.mxu0 %v1442
        %1452 = vmatprep.subr.bf16.mxu0 0
        %1453 = vmatpush1.bf16.msra.mxu0 0
        %1454 = vmatprep.subr.bf16.mxu0 0
        %1455 = vmatpush1.bf16.msra.mxu0 0
        %1456 = vmatprep.subr.bf16.mxu0 0
        %1457 = vmatpush1.bf16.msra.mxu0 0
        %1458 = vmatprep.subr.bf16.mxu0 0
        %1459 = vmatpush1.bf16.msra.mxu0 0
        %1460 = vmatprep.subr.bf16.mxu0 0
        %1461 = vmatpush1.bf16.msra.mxu0 0
        %1462 = vmatprep.subr.bf16.mxu0 0
        %1463 = vmatpush1.bf16.msra.mxu0 0
        %1464 = vmatprep.subr.bf16.mxu0 0
        %1465 = vmatpush1.bf16.msra.mxu0 0
        %1466 = vmatprep.subr.bf16.mxu0 0
        %1467 = vmatpush1.bf16.msra.mxu0 0
        %1468 = vmatprep.subr.bf16.mxu0 0
        %1469 = vmatpush1.bf16.msra.mxu0 0
        %1470 = vmatprep.subr.bf16.mxu0 0
        %1471 = vmatpush1.bf16.msra.mxu0 0
        %1472 = vmatprep.subr.bf16.mxu0 0
        %1473 = vmatpush1.bf16.msra.mxu0 0
        %1474 = vmatprep.subr.bf16.mxu0 0
        %1475 = vmatpush1.bf16.msra.mxu0 0
        %1476 = vmatprep.subr.bf16.mxu0 0
        %1477 = vmatpush1.bf16.msra.mxu0 0
        %1478 = vmatprep.subr.bf16.mxu0 0
        %1479 = vmatpush1.bf16.msra.mxu0 0
        %1480 = vmatprep.mubr.bf16.mxu0 0
        %1481 = vmatmul.mubr.bf16.gmra.mrb[0].mxu0 %v1446
        %v1482 = vpop.f32.mrb[0].mxu0
        %v1483 = vadd.f32 0.0, %v1482
        %v1484 = vpop.f32.mrb[0].mxu0
        %v1485 = vpop.f32.mrb[0].mxu0
        %v1486 = vpop.f32.mrb[0].mxu0
        %1487 = vdwg.mxu0
        %v1488 = vadd.f32 %v1425, %v1483
        %s1489 = scalar_lea.vmem [#allocation2], 12
        %v1490 = vld [vmem:[%s1489] ss:$2 sm:$0x7]
        %v1491 = vpack.c.bf16 %v1490, %v1490
        %v1492 = vld [vmem:[%s3 + $0x70] sm:$0xf]
        %v1493 = vld [vmem:[%s3 + $0x74] sm:$0xf]
        %v1494 = vld [vmem:[%s3 + $0x78] sm:$0xf]
        %v1495 = vld [vmem:[%s3 + $0x7c] sm:$0xf]
        %v1500 = vunpack.c.l.b16 %v1492
        %v1501 = vunpack.c.l.b16 %v1493
        %v1502 = vunpack.c.l.b16 %v1494
        %v1503 = vunpack.c.l.b16 %v1495
        %v1504 = vpack.c.b16 %v1501, %v1500
        %v1505 = vpack.c.b16 %v1503, %v1502
        %v1509 = vsel %vm1040, %v1491, 0
        %1511 = vmatprep.subr.bf16.mxu0 0
        %1512 = vmatpush1.bf16.msra.mxu0 %v1504
        %1513 = vmatprep.subr.bf16.mxu0 0
        %1514 = vmatpush1.bf16.msra.mxu0 %v1505
        %1515 = vmatprep.subr.bf16.mxu0 0
        %1516 = vmatpush1.bf16.msra.mxu0 0
        %1517 = vmatprep.subr.bf16.mxu0 0
        %1518 = vmatpush1.bf16.msra.mxu0 0
        %1519 = vmatprep.subr.bf16.mxu0 0
        %1520 = vmatpush1.bf16.msra.mxu0 0
        %1521 = vmatprep.subr.bf16.mxu0 0
        %1522 = vmatpush1.bf16.msra.mxu0 0
        %1523 = vmatprep.subr.bf16.mxu0 0
        %1524 = vmatpush1.bf16.msra.mxu0 0
        %1525 = vmatprep.subr.bf16.mxu0 0
        %1526 = vmatpush1.bf16.msra.mxu0 0
        %1527 = vmatprep.subr.bf16.mxu0 0
        %1528 = vmatpush1.bf16.msra.mxu0 0
        %1529 = vmatprep.subr.bf16.mxu0 0
        %1530 = vmatpush1.bf16.msra.mxu0 0
        %1531 = vmatprep.subr.bf16.mxu0 0
        %1532 = vmatpush1.bf16.msra.mxu0 0
        %1533 = vmatprep.subr.bf16.mxu0 0
        %1534 = vmatpush1.bf16.msra.mxu0 0
        %1535 = vmatprep.subr.bf16.mxu0 0
        %1536 = vmatpush1.bf16.msra.mxu0 0
        %1537 = vmatprep.subr.bf16.mxu0 0
        %1538 = vmatpush1.bf16.msra.mxu0 0
        %1539 = vmatprep.subr.bf16.mxu0 0
        %1540 = vmatpush1.bf16.msra.mxu0 0
        %1541 = vmatprep.subr.bf16.mxu0 0
        %1542 = vmatpush1.bf16.msra.mxu0 0
        %1543 = vmatprep.mubr.bf16.mxu0 0
        %1544 = vmatmul.mubr.bf16.gmra.mrb[0].mxu0 %v1509
        %v1545 = vpop.f32.mrb[0].mxu0
        %v1546 = vadd.f32 0.0, %v1545
        %v1547 = vpop.f32.mrb[0].mxu0
        %v1548 = vpop.f32.mrb[0].mxu0
        %v1549 = vpop.f32.mrb[0].mxu0
        %1550 = vdwg.mxu0
        %v1551 = vadd.f32 %v1488, %v1546
        %s1552 = scalar_lea.vmem [#allocation2], 18
        %v1553 = vld [vmem:[%s1552] ss:$2 sm:$0x7]
        %v1554 = vpack.c.bf16 %v1553, %v1553
        %v1555 = vld [vmem:[%s3 + $0x80] sm:$0xf]
        %v1556 = vld [vmem:[%s3 + $0x84] sm:$0xf]
        %v1557 = vld [vmem:[%s3 + $0x88] sm:$0xf]
        %v1558 = vld [vmem:[%s3 + $0x8c] sm:$0xf]
        %v1563 = vunpack.c.l.b16 %v1555
        %v1564 = vunpack.c.l.b16 %v1556
        %v1565 = vunpack.c.l.b16 %v1557
        %v1566 = vunpack.c.l.b16 %v1558
        %v1567 = vpack.c.b16 %v1564, %v1563
        %v1568 = vpack.c.b16 %v1566, %v1565
        %v1572 = vsel %vm1040, %v1554, 0
        %1574 = vmatprep.subr.bf16.mxu0 0
        %1575 = vmatpush1.bf16.msra.mxu0 %v1567
        %1576 = vmatprep.subr.bf16.mxu0 0
        %1577 = vmatpush1.bf16.msra.mxu0 %v1568
        %1578 = vmatprep.subr.bf16.mxu0 0
        %1579 = vmatpush1.bf16.msra.mxu0 0
        %1580 = vmatprep.subr.bf16.mxu0 0
        %1581 = vmatpush1.bf16.msra.mxu0 0
        %1582 = vmatprep.subr.bf16.mxu0 0
        %1583 = vmatpush1.bf16.msra.mxu0 0
        %1584 = vmatprep.subr.bf16.mxu0 0
        %1585 = vmatpush1.bf16.msra.mxu0 0
        %1586 = vmatprep.subr.bf16.mxu0 0
        %1587 = vmatpush1.bf16.msra.mxu0 0
        %1588 = vmatprep.subr.bf16.mxu0 0
        %1589 = vmatpush1.bf16.msra.mxu0 0
        %1590 = vmatprep.subr.bf16.mxu0 0
        %1591 = vmatpush1.bf16.msra.mxu0 0
        %1592 = vmatprep.subr.bf16.mxu0 0
        %1593 = vmatpush1.bf16.msra.mxu0 0
        %1594 = vmatprep.subr.bf16.mxu0 0
        %1595 = vmatpush1.bf16.msra.mxu0 0
        %1596 = vmatprep.subr.bf16.mxu0 0
        %1597 = vmatpush1.bf16.msra.mxu0 0
        %1598 = vmatprep.subr.bf16.mxu0 0
        %1599 = vmatpush1.bf16.msra.mxu0 0
        %1600 = vmatprep.subr.bf16.mxu0 0
        %1601 = vmatpush1.bf16.msra.mxu0 0
        %1602 = vmatprep.subr.bf16.mxu0 0
        %1603 = vmatpush1.bf16.msra.mxu0 0
        %1604 = vmatprep.subr.bf16.mxu0 0
        %1605 = vmatpush1.bf16.msra.mxu0 0
        %1606 = vmatprep.mubr.bf16.mxu0 0
        %1607 = vmatmul.mubr.bf16.gmra.mrb[0].mxu0 %v1572
        %v1608 = vpop.f32.mrb[0].mxu0
        %v1609 = vadd.f32 0.0, %v1608
        %v1610 = vpop.f32.mrb[0].mxu0
        %v1611 = vpop.f32.mrb[0].mxu0
        %v1612 = vpop.f32.mrb[0].mxu0
        %1613 = vdwg.mxu0
        %v1614 = vadd.f32 %v1551, %v1609
        %s1615 = scalar_lea.vmem [#allocation2], 19
        %v1616 = vld [vmem:[%s1615] ss:$2 sm:$0x7]
        %v1617 = vpack.c.bf16 %v1616, %v1616
        %v1618 = vld [vmem:[%s3 + $0x90] sm:$0xf]
        %v1619 = vld [vmem:[%s3 + $0x94] sm:$0xf]
        %v1620 = vld [vmem:[%s3 + $0x98] sm:$0xf]
        %v1621 = vld [vmem:[%s3 + $0x9c] sm:$0xf]
        %v1626 = vunpack.c.l.b16 %v1618
        %v1627 = vunpack.c.l.b16 %v1619
        %v1628 = vunpack.c.l.b16 %v1620
        %v1629 = vunpack.c.l.b16 %v1621
        %v1630 = vpack.c.b16 %v1627, %v1626
        %v1631 = vpack.c.b16 %v1629, %v1628
        %v1635 = vsel %vm1040, %v1617, 0
        %1637 = vmatprep.subr.bf16.mxu0 0
        %1638 = vmatpush1.bf16.msra.mxu0 %v1630
        %1639 = vmatprep.subr.bf16.mxu0 0
        %1640 = vmatpush1.bf16.msra.mxu0 %v1631
        %1641 = vmatprep.subr.bf16.mxu0 0
        %1642 = vmatpush1.bf16.msra.mxu0 0
        %1643 = vmatprep.subr.bf16.mxu0 0
        %1644 = vmatpush1.bf16.msra.mxu0 0
        %1645 = vmatprep.subr.bf16.mxu0 0
        %1646 = vmatpush1.bf16.msra.mxu0 0
        %1647 = vmatprep.subr.bf16.mxu0 0
        %1648 = vmatpush1.bf16.msra.mxu0 0
        %1649 = vmatprep.subr.bf16.mxu0 0
        %1650 = vmatpush1.bf16.msra.mxu0 0
        %1651 = vmatprep.subr.bf16.mxu0 0
        %1652 = vmatpush1.bf16.msra.mxu0 0
        %1653 = vmatprep.subr.bf16.mxu0 0
        %1654 = vmatpush1.bf16.msra.mxu0 0
        %1655 = vmatprep.subr.bf16.mxu0 0
        %1656 = vmatpush1.bf16.msra.mxu0 0
        %1657 = vmatprep.subr.bf16.mxu0 0
        %1658 = vmatpush1.bf16.msra.mxu0 0
        %1659 = vmatprep.subr.bf16.mxu0 0
        %1660 = vmatpush1.bf16.msra.mxu0 0
        %1661 = vmatprep.subr.bf16.mxu0 0
        %1662 = vmatpush1.bf16.msra.mxu0 0
        %1663 = vmatprep.subr.bf16.mxu0 0
        %1664 = vmatpush1.bf16.msra.mxu0 0
        %1665 = vmatprep.subr.bf16.mxu0 0
        %1666 = vmatpush1.bf16.msra.mxu0 0
        %1667 = vmatprep.subr.bf16.mxu0 0
        %1668 = vmatpush1.bf16.msra.mxu0 0
        %1669 = vmatprep.mubr.bf16.mxu0 0
        %1670 = vmatmul.mubr.bf16.gmra.mrb[0].mxu0 %v1635
        %v1671 = vpop.f32.mrb[0].mxu0
        %v1672 = vadd.f32 0.0, %v1671
        %v1673 = vpop.f32.mrb[0].mxu0
        %v1674 = vpop.f32.mrb[0].mxu0
        %v1675 = vpop.f32.mrb[0].mxu0
        %1676 = vdwg.mxu0
        %v1677 = vadd.f32 %v1614, %v1672
        %s1678 = scalar_lea.vmem [#allocation2], 20
        %v1679 = vld [vmem:[%s1678] ss:$2 sm:$0x7]
        %v1680 = vpack.c.bf16 %v1679, %v1679
        %v1681 = vld [vmem:[%s3 + $0xa0] sm:$0xf]
        %v1682 = vld [vmem:[%s3 + $0xa4] sm:$0xf]
        %v1683 = vld [vmem:[%s3 + $0xa8] sm:$0xf]
        %v1684 = vld [vmem:[%s3 + $0xac] sm:$0xf]
        %v1689 = vunpack.c.l.b16 %v1681
        %v1690 = vunpack.c.l.b16 %v1682
        %v1691 = vunpack.c.l.b16 %v1683
        %v1692 = vunpack.c.l.b16 %v1684
        %v1693 = vpack.c.b16 %v1690, %v1689
        %v1694 = vpack.c.b16 %v1692, %v1691
        %v1698 = vsel %vm1040, %v1680, 0
        %1700 = vmatprep.subr.bf16.mxu0 0
        %1701 = vmatpush1.bf16.msra.mxu0 %v1693
        %1702 = vmatprep.subr.bf16.mxu0 0
        %1703 = vmatpush1.bf16.msra.mxu0 %v1694
        %1704 = vmatprep.subr.bf16.mxu0 0
        %1705 = vmatpush1.bf16.msra.mxu0 0
        %1706 = vmatprep.subr.bf16.mxu0 0
        %1707 = vmatpush1.bf16.msra.mxu0 0
        %1708 = vmatprep.subr.bf16.mxu0 0
        %1709 = vmatpush1.bf16.msra.mxu0 0
        %1710 = vmatprep.subr.bf16.mxu0 0
        %1711 = vmatpush1.bf16.msra.mxu0 0
        %1712 = vmatprep.subr.bf16.mxu0 0
        %1713 = vmatpush1.bf16.msra.mxu0 0
        %1714 = vmatprep.subr.bf16.mxu0 0
        %1715 = vmatpush1.bf16.msra.mxu0 0
        %1716 = vmatprep.subr.bf16.mxu0 0
        %1717 = vmatpush1.bf16.msra.mxu0 0
        %1718 = vmatprep.subr.bf16.mxu0 0
        %1719 = vmatpush1.bf16.msra.mxu0 0
        %1720 = vmatprep.subr.bf16.mxu0 0
        %1721 = vmatpush1.bf16.msra.mxu0 0
        %1722 = vmatprep.subr.bf16.mxu0 0
        %1723 = vmatpush1.bf16.msra.mxu0 0
        %1724 = vmatprep.subr.bf16.mxu0 0
        %1725 = vmatpush1.bf16.msra.mxu0 0
        %1726 = vmatprep.subr.bf16.mxu0 0
        %1727 = vmatpush1.bf16.msra.mxu0 0
        %1728 = vmatprep.subr.bf16.mxu0 0
        %1729 = vmatpush1.bf16.msra.mxu0 0
        %1730 = vmatprep.subr.bf16.mxu0 0
        %1731 = vmatpush1.bf16.msra.mxu0 0
        %1732 = vmatprep.mubr.bf16.mxu0 0
        %1733 = vmatmul.mubr.bf16.gmra.mrb[0].mxu0 %v1698
        %v1734 = vpop.f32.mrb[0].mxu0
        %v1735 = vadd.f32 0.0, %v1734
        %v1736 = vpop.f32.mrb[0].mxu0
        %v1737 = vpop.f32.mrb[0].mxu0
        %v1738 = vpop.f32.mrb[0].mxu0
        %1739 = vdwg.mxu0
        %v1740 = vadd.f32 %v1677, %v1735
        %s1741 = scalar_lea.vmem [#allocation2], 21
        %v1742 = vld [vmem:[%s1741] ss:$2 sm:$0x7]
        %v1743 = vpack.c.bf16 %v1742, %v1742
        %v1744 = vld [vmem:[%s3 + $0xb0] sm:$0xf]
        %v1745 = vld [vmem:[%s3 + $0xb4] sm:$0xf]
        %v1746 = vld [vmem:[%s3 + $0xb8] sm:$0xf]
        %v1747 = vld [vmem:[%s3 + $0xbc] sm:$0xf]
        %v1752 = vunpack.c.l.b16 %v1744
        %v1753 = vunpack.c.l.b16 %v1745
        %v1754 = vunpack.c.l.b16 %v1746
        %v1755 = vunpack.c.l.b16 %v1747
        %v1756 = vpack.c.b16 %v1753, %v1752
        %v1757 = vpack.c.b16 %v1755, %v1754
        %v1761 = vsel %vm1040, %v1743, 0
        %1763 = vmatprep.subr.bf16.mxu0 0
        %1764 = vmatpush1.bf16.msra.mxu0 %v1756
        %1765 = vmatprep.subr.bf16.mxu0 0
        %1766 = vmatpush1.bf16.msra.mxu0 %v1757
        %1767 = vmatprep.subr.bf16.mxu0 0
        %1768 = vmatpush1.bf16.msra.mxu0 0
        %1769 = vmatprep.subr.bf16.mxu0 0
        %1770 = vmatpush1.bf16.msra.mxu0 0
        %1771 = vmatprep.subr.bf16.mxu0 0
        %1772 = vmatpush1.bf16.msra.mxu0 0
        %1773 = vmatprep.subr.bf16.mxu0 0
        %1774 = vmatpush1.bf16.msra.mxu0 0
        %1775 = vmatprep.subr.bf16.mxu0 0
        %1776 = vmatpush1.bf16.msra.mxu0 0
        %1777 = vmatprep.subr.bf16.mxu0 0
        %1778 = vmatpush1.bf16.msra.mxu0 0
        %1779 = vmatprep.subr.bf16.mxu0 0
        %1780 = vmatpush1.bf16.msra.mxu0 0
        %1781 = vmatprep.subr.bf16.mxu0 0
        %1782 = vmatpush1.bf16.msra.mxu0 0
        %1783 = vmatprep.subr.bf16.mxu0 0
        %1784 = vmatpush1.bf16.msra.mxu0 0
        %1785 = vmatprep.subr.bf16.mxu0 0
        %1786 = vmatpush1.bf16.msra.mxu0 0
        %1787 = vmatprep.subr.bf16.mxu0 0
        %1788 = vmatpush1.bf16.msra.mxu0 0
        %1789 = vmatprep.subr.bf16.mxu0 0
        %1790 = vmatpush1.bf16.msra.mxu0 0
        %1791 = vmatprep.subr.bf16.mxu0 0
        %1792 = vmatpush1.bf16.msra.mxu0 0
        %1793 = vmatprep.subr.bf16.mxu0 0
        %1794 = vmatpush1.bf16.msra.mxu0 0
        %1795 = vmatprep.mubr.bf16.mxu0 0
        %1796 = vmatmul.mubr.bf16.gmra.mrb[0].mxu0 %v1761
        %v1797 = vpop.f32.mrb[0].mxu0
        %v1798 = vadd.f32 0.0, %v1797
        %v1799 = vpop.f32.mrb[0].mxu0
        %v1800 = vpop.f32.mrb[0].mxu0
        %v1801 = vpop.f32.mrb[0].mxu0
        %1802 = vdwg.mxu0
        %v1803 = vadd.f32 %v1740, %v1798
        %s1804 = scalar_lea.vmem [#allocation2], 27
        %v1805 = vld [vmem:[%s1804] ss:$2 sm:$0x7]
        %v1806 = vpack.c.bf16 %v1805, %v1805
        %v1807 = vld [vmem:[%s3 + $0xc0] sm:$0xf]
        %v1808 = vld [vmem:[%s3 + $0xc4] sm:$0xf]
        %v1809 = vld [vmem:[%s3 + $0xc8] sm:$0xf]
        %v1810 = vld [vmem:[%s3 + $0xcc] sm:$0xf]
        %v1815 = vunpack.c.l.b16 %v1807
        %v1816 = vunpack.c.l.b16 %v1808
        %v1817 = vunpack.c.l.b16 %v1809
        %v1818 = vunpack.c.l.b16 %v1810
        %v1819 = vpack.c.b16 %v1816, %v1815
        %v1820 = vpack.c.b16 %v1818, %v1817
        %v1824 = vsel %vm1040, %v1806, 0
        %1826 = vmatprep.subr.bf16.mxu0 0
        %1827 = vmatpush1.bf16.msra.mxu0 %v1819
        %1828 = vmatprep.subr.bf16.mxu0 0
        %1829 = vmatpush1.bf16.msra.mxu0 %v1820
        %1830 = vmatprep.subr.bf16.mxu0 0
        %1831 = vmatpush1.bf16.msra.mxu0 0
        %1832 = vmatprep.subr.bf16.mxu0 0
        %1833 = vmatpush1.bf16.msra.mxu0 0
        %1834 = vmatprep.subr.bf16.mxu0 0
        %1835 = vmatpush1.bf16.msra.mxu0 0
        %1836 = vmatprep.subr.bf16.mxu0 0
        %1837 = vmatpush1.bf16.msra.mxu0 0
        %1838 = vmatprep.subr.bf16.mxu0 0
        %1839 = vmatpush1.bf16.msra.mxu0 0
        %1840 = vmatprep.subr.bf16.mxu0 0
        %1841 = vmatpush1.bf16.msra.mxu0 0
        %1842 = vmatprep.subr.bf16.mxu0 0
        %1843 = vmatpush1.bf16.msra.mxu0 0
        %1844 = vmatprep.subr.bf16.mxu0 0
        %1845 = vmatpush1.bf16.msra.mxu0 0
        %1846 = vmatprep.subr.bf16.mxu0 0
        %1847 = vmatpush1.bf16.msra.mxu0 0
        %1848 = vmatprep.subr.bf16.mxu0 0
        %1849 = vmatpush1.bf16.msra.mxu0 0
        %1850 = vmatprep.subr.bf16.mxu0 0
        %1851 = vmatpush1.bf16.msra.mxu0 0
        %1852 = vmatprep.subr.bf16.mxu0 0
        %1853 = vmatpush1.bf16.msra.mxu0 0
        %1854 = vmatprep.subr.bf16.mxu0 0
        %1855 = vmatpush1.bf16.msra.mxu0 0
        %1856 = vmatprep.subr.bf16.mxu0 0
        %1857 = vmatpush1.bf16.msra.mxu0 0
        %1858 = vmatprep.mubr.bf16.mxu0 0
        %1859 = vmatmul.mubr.bf16.gmra.mrb[0].mxu0 %v1824
        %v1860 = vpop.f32.mrb[0].mxu0
        %v1861 = vadd.f32 0.0, %v1860
        %v1862 = vpop.f32.mrb[0].mxu0
        %v1863 = vpop.f32.mrb[0].mxu0
        %v1864 = vpop.f32.mrb[0].mxu0
        %1865 = vdwg.mxu0
        %v1866 = vadd.f32 %v1803, %v1861
        %s1867 = scalar_lea.vmem [#allocation2], 28
        %v1868 = vld [vmem:[%s1867] ss:$2 sm:$0x7]
        %v1869 = vpack.c.bf16 %v1868, %v1868
        %v1870 = vld [vmem:[%s3 + $0xd0] sm:$0xf]
        %v1871 = vld [vmem:[%s3 + $0xd4] sm:$0xf]
        %v1872 = vld [vmem:[%s3 + $0xd8] sm:$0xf]
        %v1873 = vld [vmem:[%s3 + $0xdc] sm:$0xf]
        %v1878 = vunpack.c.l.b16 %v1870
        %v1879 = vunpack.c.l.b16 %v1871
        %v1880 = vunpack.c.l.b16 %v1872
        %v1881 = vunpack.c.l.b16 %v1873
        %v1882 = vpack.c.b16 %v1879, %v1878
        %v1883 = vpack.c.b16 %v1881, %v1880
        %v1887 = vsel %vm1040, %v1869, 0
        %1889 = vmatprep.subr.bf16.mxu0 0
        %1890 = vmatpush1.bf16.msra.mxu0 %v1882
        %1891 = vmatprep.subr.bf16.mxu0 0
        %1892 = vmatpush1.bf16.msra.mxu0 %v1883
        %1893 = vmatprep.subr.bf16.mxu0 0
        %1894 = vmatpush1.bf16.msra.mxu0 0
        %1895 = vmatprep.subr.bf16.mxu0 0
        %1896 = vmatpush1.bf16.msra.mxu0 0
        %1897 = vmatprep.subr.bf16.mxu0 0
        %1898 = vmatpush1.bf16.msra.mxu0 0
        %1899 = vmatprep.subr.bf16.mxu0 0
        %1900 = vmatpush1.bf16.msra.mxu0 0
        %1901 = vmatprep.subr.bf16.mxu0 0
        %1902 = vmatpush1.bf16.msra.mxu0 0
        %1903 = vmatprep.subr.bf16.mxu0 0
        %1904 = vmatpush1.bf16.msra.mxu0 0
        %1905 = vmatprep.subr.bf16.mxu0 0
        %1906 = vmatpush1.bf16.msra.mxu0 0
        %1907 = vmatprep.subr.bf16.mxu0 0
        %1908 = vmatpush1.bf16.msra.mxu0 0
        %1909 = vmatprep.subr.bf16.mxu0 0
        %1910 = vmatpush1.bf16.msra.mxu0 0
        %1911 = vmatprep.subr.bf16.mxu0 0
        %1912 = vmatpush1.bf16.msra.mxu0 0
        %1913 = vmatprep.subr.bf16.mxu0 0
        %1914 = vmatpush1.bf16.msra.mxu0 0
        %1915 = vmatprep.subr.bf16.mxu0 0
        %1916 = vmatpush1.bf16.msra.mxu0 0
        %1917 = vmatprep.subr.bf16.mxu0 0
        %1918 = vmatpush1.bf16.msra.mxu0 0
        %1919 = vmatprep.subr.bf16.mxu0 0
        %1920 = vmatpush1.bf16.msra.mxu0 0
        %1921 = vmatprep.mubr.bf16.mxu0 0
        %1922 = vmatmul.mubr.bf16.gmra.mrb[0].mxu0 %v1887
        %v1923 = vpop.f32.mrb[0].mxu0
        %v1924 = vadd.f32 0.0, %v1923
        %v1925 = vpop.f32.mrb[0].mxu0
        %v1926 = vpop.f32.mrb[0].mxu0
        %v1927 = vpop.f32.mrb[0].mxu0
        %1928 = vdwg.mxu0
        %v1929 = vadd.f32 %v1866, %v1924
        %s1930 = scalar_lea.vmem [#allocation2], 29
        %v1931 = vld [vmem:[%s1930] ss:$2 sm:$0x7]
        %v1932 = vpack.c.bf16 %v1931, %v1931
        %v1933 = vld [vmem:[%s3 + $0xe0] sm:$0xf]
        %v1934 = vld [vmem:[%s3 + $0xe4] sm:$0xf]
        %v1935 = vld [vmem:[%s3 + $0xe8] sm:$0xf]
        %v1936 = vld [vmem:[%s3 + $0xec] sm:$0xf]
        %v1941 = vunpack.c.l.b16 %v1933
        %v1942 = vunpack.c.l.b16 %v1934
        %v1943 = vunpack.c.l.b16 %v1935
        %v1944 = vunpack.c.l.b16 %v1936
        %v1945 = vpack.c.b16 %v1942, %v1941
        %v1946 = vpack.c.b16 %v1944, %v1943
        %v1950 = vsel %vm1040, %v1932, 0
        %1952 = vmatprep.subr.bf16.mxu0 0
        %1953 = vmatpush1.bf16.msra.mxu0 %v1945
        %1954 = vmatprep.subr.bf16.mxu0 0
        %1955 = vmatpush1.bf16.msra.mxu0 %v1946
        %1956 = vmatprep.subr.bf16.mxu0 0
        %1957 = vmatpush1.bf16.msra.mxu0 0
        %1958 = vmatprep.subr.bf16.mxu0 0
        %1959 = vmatpush1.bf16.msra.mxu0 0
        %1960 = vmatprep.subr.bf16.mxu0 0
        %1961 = vmatpush1.bf16.msra.mxu0 0
        %1962 = vmatprep.subr.bf16.mxu0 0
        %1963 = vmatpush1.bf16.msra.mxu0 0
        %1964 = vmatprep.subr.bf16.mxu0 0
        %1965 = vmatpush1.bf16.msra.mxu0 0
        %1966 = vmatprep.subr.bf16.mxu0 0
        %1967 = vmatpush1.bf16.msra.mxu0 0
        %1968 = vmatprep.subr.bf16.mxu0 0
        %1969 = vmatpush1.bf16.msra.mxu0 0
        %1970 = vmatprep.subr.bf16.mxu0 0
        %1971 = vmatpush1.bf16.msra.mxu0 0
        %1972 = vmatprep.subr.bf16.mxu0 0
        %1973 = vmatpush1.bf16.msra.mxu0 0
        %1974 = vmatprep.subr.bf16.mxu0 0
        %1975 = vmatpush1.bf16.msra.mxu0 0
        %1976 = vmatprep.subr.bf16.mxu0 0
        %1977 = vmatpush1.bf16.msra.mxu0 0
        %1978 = vmatprep.subr.bf16.mxu0 0
        %1979 = vmatpush1.bf16.msra.mxu0 0
        %1980 = vmatprep.subr.bf16.mxu0 0
        %1981 = vmatpush1.bf16.msra.mxu0 0
        %1982 = vmatprep.subr.bf16.mxu0 0
        %1983 = vmatpush1.bf16.msra.mxu0 0
        %1984 = vmatprep.mubr.bf16.mxu0 0
        %1985 = vmatmul.mubr.bf16.gmra.mrb[0].mxu0 %v1950
        %v1986 = vpop.f32.mrb[0].mxu0
        %v1987 = vadd.f32 0.0, %v1986
        %v1988 = vpop.f32.mrb[0].mxu0
        %v1989 = vpop.f32.mrb[0].mxu0
        %v1990 = vpop.f32.mrb[0].mxu0
        %1991 = vdwg.mxu0
        %v1992 = vadd.f32 %v1929, %v1987
        %s1993 = scalar_lea.vmem [#allocation2], 30
        %v1994 = vld [vmem:[%s1993] ss:$2 sm:$0x7]
        %v1995 = vpack.c.bf16 %v1994, %v1994
        %v1996 = vld [vmem:[%s3 + $0xf0] sm:$0xf]
        %v1997 = vld [vmem:[%s3 + $0xf4] sm:$0xf]
        %v1998 = vld [vmem:[%s3 + $0xf8] sm:$0xf]
        %v1999 = vld [vmem:[%s3 + $0xfc] sm:$0xf]
        %v2004 = vunpack.c.l.b16 %v1996
        %v2005 = vunpack.c.l.b16 %v1997
        %v2006 = vunpack.c.l.b16 %v1998
        %v2007 = vunpack.c.l.b16 %v1999
        %v2008 = vpack.c.b16 %v2005, %v2004
        %v2009 = vpack.c.b16 %v2007, %v2006
        %v2013 = vsel %vm1040, %v1995, 0
        %2015 = vmatprep.subr.bf16.mxu0 0
        %2016 = vmatpush1.bf16.msra.mxu0 %v2008
        %2017 = vmatprep.subr.bf16.mxu0 0
        %2018 = vmatpush1.bf16.msra.mxu0 %v2009
        %2019 = vmatprep.subr.bf16.mxu0 0
        %2020 = vmatpush1.bf16.msra.mxu0 0
        %2021 = vmatprep.subr.bf16.mxu0 0
        %2022 = vmatpush1.bf16.msra.mxu0 0
        %2023 = vmatprep.subr.bf16.mxu0 0
        %2024 = vmatpush1.bf16.msra.mxu0 0
        %2025 = vmatprep.subr.bf16.mxu0 0
        %2026 = vmatpush1.bf16.msra.mxu0 0
        %2027 = vmatprep.subr.bf16.mxu0 0
        %2028 = vmatpush1.bf16.msra.mxu0 0
        %2029 = vmatprep.subr.bf16.mxu0 0
        %2030 = vmatpush1.bf16.msra.mxu0 0
        %2031 = vmatprep.subr.bf16.mxu0 0
        %2032 = vmatpush1.bf16.msra.mxu0 0
        %2033 = vmatprep.subr.bf16.mxu0 0
        %2034 = vmatpush1.bf16.msra.mxu0 0
        %2035 = vmatprep.subr.bf16.mxu0 0
        %2036 = vmatpush1.bf16.msra.mxu0 0
        %2037 = vmatprep.subr.bf16.mxu0 0
        %2038 = vmatpush1.bf16.msra.mxu0 0
        %2039 = vmatprep.subr.bf16.mxu0 0
        %2040 = vmatpush1.bf16.msra.mxu0 0
        %2041 = vmatprep.subr.bf16.mxu0 0
        %2042 = vmatpush1.bf16.msra.mxu0 0
        %2043 = vmatprep.subr.bf16.mxu0 0
        %2044 = vmatpush1.bf16.msra.mxu0 0
        %2045 = vmatprep.subr.bf16.mxu0 0
        %2046 = vmatpush1.bf16.msra.mxu0 0
        %2047 = vmatprep.mubr.bf16.mxu0 0
        %2048 = vmatmul.mubr.bf16.gmra.mrb[0].mxu0 %v2013
        %v2049 = vpop.f32.mrb[0].mxu0
        %v2050 = vadd.f32 0.0, %v2049
        %v2051 = vpop.f32.mrb[0].mxu0
        %v2052 = vpop.f32.mrb[0].mxu0
        %v2053 = vpop.f32.mrb[0].mxu0
        %2054 = vdwg.mxu0
        %v2055 = vadd.f32 %v1992, %v2050
        %v2056 = vld [vmem:[%s4] sm:$0x1]
        %v2058 = vlaneseq
        %v2059 = vshrl.u32 %v2058, 7
        %v2060 = vsub.s32 0, %v2059
        %v2061 = vrot.slane %v2056, %v2060
        %v2063 = vadd.f32 %v2055, %v2061
        %v2064 = vmax.f32 %v2063, 0.0
        %vm2065 = vcmask 518144
        %2066 = vst.msk [vmem:[#allocation3] sm:$0x7] %vm2065, %v2064
        %v2067 = vld [vmem:[%s1552] ss:$2 sm:$0x7]
        %v2068 = vpack.c.bf16 %v2067, %v2067
        %v2069 = vld [vmem:[%s3] sm:$0xf]
        %v2070 = vld [vmem:[%s3 + $0x4] sm:$0xf]
        %v2071 = vld [vmem:[%s3 + $0x8] sm:$0xf]
        %v2072 = vld [vmem:[%s3 + $0xc] sm:$0xf]
        %v2073 = vld [vmem:[%s1615] ss:$2 sm:$0x7]
        %v2074 = vpack.c.bf16 %v2073, %v2073
        %v2075 = vld [vmem:[%s3 + $0x10] sm:$0xf]
        %v2076 = vld [vmem:[%s3 + $0x14] sm:$0xf]
        %v2077 = vld [vmem:[%s3 + $0x18] sm:$0xf]
        %v2078 = vld [vmem:[%s3 + $0x1c] sm:$0xf]
        %v2083 = vunpack.c.l.b16 %v2075
        %v2084 = vunpack.c.l.b16 %v2076
        %v2085 = vunpack.c.l.b16 %v2077
        %v2086 = vunpack.c.l.b16 %v2078
        %v2087 = vpack.c.b16 %v2084, %v2083
        %v2088 = vpack.c.b16 %v2086, %v2085
        %v2092 = vsel %vm1040, %v2074, 0
        %2094 = vmatprep.subr.bf16.mxu0 0
        %2095 = vmatpush1.bf16.msra.mxu0 %v2087
        %2096 = vmatprep.subr.bf16.mxu0 0
        %2097 = vmatpush1.bf16.msra.mxu0 %v2088
        %2098 = vmatprep.subr.bf16.mxu0 0
        %2099 = vmatpush1.bf16.msra.mxu0 0
        %2100 = vmatprep.subr.bf16.mxu0 0
        %2101 = vmatpush1.bf16.msra.mxu0 0
        %2102 = vmatprep.subr.bf16.mxu0 0
        %2103 = vmatpush1.bf16.msra.mxu0 0
        %2104 = vmatprep.subr.bf16.mxu0 0
        %2105 = vmatpush1.bf16.msra.mxu0 0
        %2106 = vmatprep.subr.bf16.mxu0 0
        %2107 = vmatpush1.bf16.msra.mxu0 0
        %2108 = vmatprep.subr.bf16.mxu0 0
        %2109 = vmatpush1.bf16.msra.mxu0 0
        %2110 = vmatprep.subr.bf16.mxu0 0
        %2111 = vmatpush1.bf16.msra.mxu0 0
        %2112 = vmatprep.subr.bf16.mxu0 0
        %2113 = vmatpush1.bf16.msra.mxu0 0
        %2114 = vmatprep.subr.bf16.mxu0 0
        %2115 = vmatpush1.bf16.msra.mxu0 0
        %2116 = vmatprep.subr.bf16.mxu0 0
        %2117 = vmatpush1.bf16.msra.mxu0 0
        %2118 = vmatprep.subr.bf16.mxu0 0
        %2119 = vmatpush1.bf16.msra.mxu0 0
        %2120 = vmatprep.subr.bf16.mxu0 0
        %2121 = vmatpush1.bf16.msra.mxu0 0
        %2122 = vmatprep.subr.bf16.mxu0 0
        %2123 = vmatpush1.bf16.msra.mxu0 0
        %2124 = vmatprep.subr.bf16.mxu0 0
        %2125 = vmatpush1.bf16.msra.mxu0 0
        %2126 = vmatprep.mubr.bf16.mxu0 0
        %2127 = vmatmul.mubr.bf16.gmra.mrb[0].mxu0 %v2092
        %v2128 = vpop.f32.mrb[0].mxu0
        %v2129 = vadd.f32 0.0, %v2128
        %v2130 = vpop.f32.mrb[0].mxu0
        %v2131 = vpop.f32.mrb[0].mxu0
        %v2132 = vpop.f32.mrb[0].mxu0
        %2133 = vdwg.mxu0
        %v2138 = vunpack.c.l.b16 %v2069
        %v2139 = vunpack.c.l.b16 %v2070
        %v2140 = vunpack.c.l.b16 %v2071
        %v2141 = vunpack.c.l.b16 %v2072
        %v2142 = vpack.c.b16 %v2139, %v2138
        %v2143 = vpack.c.b16 %v2141, %v2140
        %v2147 = vsel %vm1040, %v2068, 0
        %2149 = vmatprep.subr.bf16.mxu0 0
        %2150 = vmatpush1.bf16.msra.mxu0 %v2142
        %2151 = vmatprep.subr.bf16.mxu0 0
        %2152 = vmatpush1.bf16.msra.mxu0 %v2143
        %2153 = vmatprep.subr.bf16.mxu0 0
        %2154 = vmatpush1.bf16.msra.mxu0 0
        %2155 = vmatprep.subr.bf16.mxu0 0
        %2156 = vmatpush1.bf16.msra.mxu0 0
        %2157 = vmatprep.subr.bf16.mxu0 0
        %2158 = vmatpush1.bf16.msra.mxu0 0
        %2159 = vmatprep.subr.bf16.mxu0 0
        %2160 = vmatpush1.bf16.msra.mxu0 0
        %2161 = vmatprep.subr.bf16.mxu0 0
        %2162 = vmatpush1.bf16.msra.mxu0 0
        %2163 = vmatprep.subr.bf16.mxu0 0
        %2164 = vmatpush1.bf16.msra.mxu0 0
        %2165 = vmatprep.subr.bf16.mxu0 0
        %2166 = vmatpush1.bf16.msra.mxu0 0
        %2167 = vmatprep.subr.bf16.mxu0 0
        %2168 = vmatpush1.bf16.msra.mxu0 0
        %2169 = vmatprep.subr.bf16.mxu0 0
        %2170 = vmatpush1.bf16.msra.mxu0 0
        %2171 = vmatprep.subr.bf16.mxu0 0
        %2172 = vmatpush1.bf16.msra.mxu0 0
        %2173 = vmatprep.subr.bf16.mxu0 0
        %2174 = vmatpush1.bf16.msra.mxu0 0
        %2175 = vmatprep.subr.bf16.mxu0 0
        %2176 = vmatpush1.bf16.msra.mxu0 0
        %2177 = vmatprep.subr.bf16.mxu0 0
        %2178 = vmatpush1.bf16.msra.mxu0 0
        %2179 = vmatprep.subr.bf16.mxu0 0
        %2180 = vmatpush1.bf16.msra.mxu0 0
        %2181 = vmatprep.mubr.bf16.mxu0 0
        %2182 = vmatmul.mubr.bf16.gmra.mrb[0].mxu0 %v2147
        %v2183 = vpop.f32.mrb[0].mxu0
        %v2184 = vadd.f32 %v2129, %v2183
        %v2185 = vpop.f32.mrb[0].mxu0
        %v2186 = vpop.f32.mrb[0].mxu0
        %v2187 = vpop.f32.mrb[0].mxu0
        %2188 = vdwg.mxu0
        %v2189 = vld [vmem:[%s1678] ss:$2 sm:$0x7]
        %v2190 = vpack.c.bf16 %v2189, %v2189
        %v2191 = vld [vmem:[%s3 + $0x20] sm:$0xf]
        %v2192 = vld [vmem:[%s3 + $0x24] sm:$0xf]
        %v2193 = vld [vmem:[%s3 + $0x28] sm:$0xf]
        %v2194 = vld [vmem:[%s3 + $0x2c] sm:$0xf]
        %v2199 = vunpack.c.l.b16 %v2191
        %v2200 = vunpack.c.l.b16 %v2192
        %v2201 = vunpack.c.l.b16 %v2193
        %v2202 = vunpack.c.l.b16 %v2194
        %v2203 = vpack.c.b16 %v2200, %v2199
        %v2204 = vpack.c.b16 %v2202, %v2201
        %v2208 = vsel %vm1040, %v2190, 0
        %2210 = vmatprep.subr.bf16.mxu0 0
        %2211 = vmatpush1.bf16.msra.mxu0 %v2203
        %2212 = vmatprep.subr.bf16.mxu0 0
        %2213 = vmatpush1.bf16.msra.mxu0 %v2204
        %2214 = vmatprep.subr.bf16.mxu0 0
        %2215 = vmatpush1.bf16.msra.mxu0 0
        %2216 = vmatprep.subr.bf16.mxu0 0
        %2217 = vmatpush1.bf16.msra.mxu0 0
        %2218 = vmatprep.subr.bf16.mxu0 0
        %2219 = vmatpush1.bf16.msra.mxu0 0
        %2220 = vmatprep.subr.bf16.mxu0 0
        %2221 = vmatpush1.bf16.msra.mxu0 0
        %2222 = vmatprep.subr.bf16.mxu0 0
        %2223 = vmatpush1.bf16.msra.mxu0 0
        %2224 = vmatprep.subr.bf16.mxu0 0
        %2225 = vmatpush1.bf16.msra.mxu0 0
        %2226 = vmatprep.subr.bf16.mxu0 0
        %2227 = vmatpush1.bf16.msra.mxu0 0
        %2228 = vmatprep.subr.bf16.mxu0 0
        %2229 = vmatpush1.bf16.msra.mxu0 0
        %2230 = vmatprep.subr.bf16.mxu0 0
        %2231 = vmatpush1.bf16.msra.mxu0 0
        %2232 = vmatprep.subr.bf16.mxu0 0
        %2233 = vmatpush1.bf16.msra.mxu0 0
        %2234 = vmatprep.subr.bf16.mxu0 0
        %2235 = vmatpush1.bf16.msra.mxu0 0
        %2236 = vmatprep.subr.bf16.mxu0 0
        %2237 = vmatpush1.bf16.msra.mxu0 0
        %2238 = vmatprep.subr.bf16.mxu0 0
        %2239 = vmatpush1.bf16.msra.mxu0 0
        %2240 = vmatprep.subr.bf16.mxu0 0
        %2241 = vmatpush1.bf16.msra.mxu0 0
        %2242 = vmatprep.mubr.bf16.mxu0 0
        %2243 = vmatmul.mubr.bf16.gmra.mrb[0].mxu0 %v2208
        %v2244 = vpop.f32.mrb[0].mxu0
        %v2245 = vadd.f32 0.0, %v2244
        %v2246 = vpop.f32.mrb[0].mxu0
        %v2247 = vpop.f32.mrb[0].mxu0
        %v2248 = vpop.f32.mrb[0].mxu0
        %2249 = vdwg.mxu0
        %v2250 = vadd.f32 %v2184, %v2245
        %v2251 = vld [vmem:[%s1741] ss:$2 sm:$0x7]
        %v2252 = vpack.c.bf16 %v2251, %v2251
        %v2253 = vld [vmem:[%s3 + $0x30] sm:$0xf]
        %v2254 = vld [vmem:[%s3 + $0x34] sm:$0xf]
        %v2255 = vld [vmem:[%s3 + $0x38] sm:$0xf]
        %v2256 = vld [vmem:[%s3 + $0x3c] sm:$0xf]
        %v2261 = vunpack.c.l.b16 %v2253
        %v2262 = vunpack.c.l.b16 %v2254
        %v2263 = vunpack.c.l.b16 %v2255
        %v2264 = vunpack.c.l.b16 %v2256
        %v2265 = vpack.c.b16 %v2262, %v2261
        %v2266 = vpack.c.b16 %v2264, %v2263
        %v2270 = vsel %vm1040, %v2252, 0
        %2272 = vmatprep.subr.bf16.mxu0 0
        %2273 = vmatpush1.bf16.msra.mxu0 %v2265
        %2274 = vmatprep.subr.bf16.mxu0 0
        %2275 = vmatpush1.bf16.msra.mxu0 %v2266
        %2276 = vmatprep.subr.bf16.mxu0 0
        %2277 = vmatpush1.bf16.msra.mxu0 0
        %2278 = vmatprep.subr.bf16.mxu0 0
        %2279 = vmatpush1.bf16.msra.mxu0 0
        %2280 = vmatprep.subr.bf16.mxu0 0
        %2281 = vmatpush1.bf16.msra.mxu0 0
        %2282 = vmatprep.subr.bf16.mxu0 0
        %2283 = vmatpush1.bf16.msra.mxu0 0
        %2284 = vmatprep.subr.bf16.mxu0 0
        %2285 = vmatpush1.bf16.msra.mxu0 0
        %2286 = vmatprep.subr.bf16.mxu0 0
        %2287 = vmatpush1.bf16.msra.mxu0 0
        %2288 = vmatprep.subr.bf16.mxu0 0
        %2289 = vmatpush1.bf16.msra.mxu0 0
        %2290 = vmatprep.subr.bf16.mxu0 0
        %2291 = vmatpush1.bf16.msra.mxu0 0
        %2292 = vmatprep.subr.bf16.mxu0 0
        %2293 = vmatpush1.bf16.msra.mxu0 0
        %2294 = vmatprep.subr.bf16.mxu0 0
        %2295 = vmatpush1.bf16.msra.mxu0 0
        %2296 = vmatprep.subr.bf16.mxu0 0
        %2297 = vmatpush1.bf16.msra.mxu0 0
        %2298 = vmatprep.subr.bf16.mxu0 0
        %2299 = vmatpush1.bf16.msra.mxu0 0
        %2300 = vmatprep.subr.bf16.mxu0 0
        %2301 = vmatpush1.bf16.msra.mxu0 0
        %2302 = vmatprep.subr.bf16.mxu0 0
        %2303 = vmatpush1.bf16.msra.mxu0 0
        %2304 = vmatprep.mubr.bf16.mxu0 0
        %2305 = vmatmul.mubr.bf16.gmra.mrb[0].mxu0 %v2270
        %v2306 = vpop.f32.mrb[0].mxu0
        %v2307 = vadd.f32 0.0, %v2306
        %v2308 = vpop.f32.mrb[0].mxu0
        %v2309 = vpop.f32.mrb[0].mxu0
        %v2310 = vpop.f32.mrb[0].mxu0
        %2311 = vdwg.mxu0
        %v2312 = vadd.f32 %v2250, %v2307
        %v2313 = vld [vmem:[%s1804] ss:$2 sm:$0x7]
        %v2314 = vpack.c.bf16 %v2313, %v2313
        %v2315 = vld [vmem:[%s3 + $0x40] sm:$0xf]
        %v2316 = vld [vmem:[%s3 + $0x44] sm:$0xf]
        %v2317 = vld [vmem:[%s3 + $0x48] sm:$0xf]
        %v2318 = vld [vmem:[%s3 + $0x4c] sm:$0xf]
        %v2323 = vunpack.c.l.b16 %v2315
        %v2324 = vunpack.c.l.b16 %v2316
        %v2325 = vunpack.c.l.b16 %v2317
        %v2326 = vunpack.c.l.b16 %v2318
        %v2327 = vpack.c.b16 %v2324, %v2323
        %v2328 = vpack.c.b16 %v2326, %v2325
        %v2332 = vsel %vm1040, %v2314, 0
        %2334 = vmatprep.subr.bf16.mxu0 0
        %2335 = vmatpush1.bf16.msra.mxu0 %v2327
        %2336 = vmatprep.subr.bf16.mxu0 0
        %2337 = vmatpush1.bf16.msra.mxu0 %v2328
        %2338 = vmatprep.subr.bf16.mxu0 0
        %2339 = vmatpush1.bf16.msra.mxu0 0
        %2340 = vmatprep.subr.bf16.mxu0 0
        %2341 = vmatpush1.bf16.msra.mxu0 0
        %2342 = vmatprep.subr.bf16.mxu0 0
        %2343 = vmatpush1.bf16.msra.mxu0 0
        %2344 = vmatprep.subr.bf16.mxu0 0
        %2345 = vmatpush1.bf16.msra.mxu0 0
        %2346 = vmatprep.subr.bf16.mxu0 0
        %2347 = vmatpush1.bf16.msra.mxu0 0
        %2348 = vmatprep.subr.bf16.mxu0 0
        %2349 = vmatpush1.bf16.msra.mxu0 0
        %2350 = vmatprep.subr.bf16.mxu0 0
        %2351 = vmatpush1.bf16.msra.mxu0 0
        %2352 = vmatprep.subr.bf16.mxu0 0
        %2353 = vmatpush1.bf16.msra.mxu0 0
        %2354 = vmatprep.subr.bf16.mxu0 0
        %2355 = vmatpush1.bf16.msra.mxu0 0
        %2356 = vmatprep.subr.bf16.mxu0 0
        %2357 = vmatpush1.bf16.msra.mxu0 0
        %2358 = vmatprep.subr.bf16.mxu0 0
        %2359 = vmatpush1.bf16.msra.mxu0 0
        %2360 = vmatprep.subr.bf16.mxu0 0
        %2361 = vmatpush1.bf16.msra.mxu0 0
        %2362 = vmatprep.subr.bf16.mxu0 0
        %2363 = vmatpush1.bf16.msra.mxu0 0
        %2364 = vmatprep.subr.bf16.mxu0 0
        %2365 = vmatpush1.bf16.msra.mxu0 0
        %2366 = vmatprep.mubr.bf16.mxu0 0
        %2367 = vmatmul.mubr.bf16.gmra.mrb[0].mxu0 %v2332
        %v2368 = vpop.f32.mrb[0].mxu0
        %v2369 = vadd.f32 0.0, %v2368
        %v2370 = vpop.f32.mrb[0].mxu0
        %v2371 = vpop.f32.mrb[0].mxu0
        %v2372 = vpop.f32.mrb[0].mxu0
        %2373 = vdwg.mxu0
        %v2374 = vadd.f32 %v2312, %v2369
        %v2375 = vld [vmem:[%s1867] ss:$2 sm:$0x7]
        %v2376 = vpack.c.bf16 %v2375, %v2375
        %v2377 = vld [vmem:[%s3 + $0x50] sm:$0xf]
        %v2378 = vld [vmem:[%s3 + $0x54] sm:$0xf]
        %v2379 = vld [vmem:[%s3 + $0x58] sm:$0xf]
        %v2380 = vld [vmem:[%s3 + $0x5c] sm:$0xf]
        %v2385 = vunpack.c.l.b16 %v2377
        %v2386 = vunpack.c.l.b16 %v2378
        %v2387 = vunpack.c.l.b16 %v2379
        %v2388 = vunpack.c.l.b16 %v2380
        %v2389 = vpack.c.b16 %v2386, %v2385
        %v2390 = vpack.c.b16 %v2388, %v2387
        %v2394 = vsel %vm1040, %v2376, 0
        %2396 = vmatprep.subr.bf16.mxu0 0
        %2397 = vmatpush1.bf16.msra.mxu0 %v2389
        %2398 = vmatprep.subr.bf16.mxu0 0
        %2399 = vmatpush1.bf16.msra.mxu0 %v2390
        %2400 = vmatprep.subr.bf16.mxu0 0
        %2401 = vmatpush1.bf16.msra.mxu0 0
        %2402 = vmatprep.subr.bf16.mxu0 0
        %2403 = vmatpush1.bf16.msra.mxu0 0
        %2404 = vmatprep.subr.bf16.mxu0 0
        %2405 = vmatpush1.bf16.msra.mxu0 0
        %2406 = vmatprep.subr.bf16.mxu0 0
        %2407 = vmatpush1.bf16.msra.mxu0 0
        %2408 = vmatprep.subr.bf16.mxu0 0
        %2409 = vmatpush1.bf16.msra.mxu0 0
        %2410 = vmatprep.subr.bf16.mxu0 0
        %2411 = vmatpush1.bf16.msra.mxu0 0
        %2412 = vmatprep.subr.bf16.mxu0 0
        %2413 = vmatpush1.bf16.msra.mxu0 0
        %2414 = vmatprep.subr.bf16.mxu0 0
        %2415 = vmatpush1.bf16.msra.mxu0 0
        %2416 = vmatprep.subr.bf16.mxu0 0
        %2417 = vmatpush1.bf16.msra.mxu0 0
        %2418 = vmatprep.subr.bf16.mxu0 0
        %2419 = vmatpush1.bf16.msra.mxu0 0
        %2420 = vmatprep.subr.bf16.mxu0 0
        %2421 = vmatpush1.bf16.msra.mxu0 0
        %2422 = vmatprep.subr.bf16.mxu0 0
        %2423 = vmatpush1.bf16.msra.mxu0 0
        %2424 = vmatprep.subr.bf16.mxu0 0
        %2425 = vmatpush1.bf16.msra.mxu0 0
        %2426 = vmatprep.subr.bf16.mxu0 0
        %2427 = vmatpush1.bf16.msra.mxu0 0
        %2428 = vmatprep.mubr.bf16.mxu0 0
        %2429 = vmatmul.mubr.bf16.gmra.mrb[0].mxu0 %v2394
        %v2430 = vpop.f32.mrb[0].mxu0
        %v2431 = vadd.f32 0.0, %v2430
        %v2432 = vpop.f32.mrb[0].mxu0
        %v2433 = vpop.f32.mrb[0].mxu0
        %v2434 = vpop.f32.mrb[0].mxu0
        %2435 = vdwg.mxu0
        %v2436 = vadd.f32 %v2374, %v2431
        %v2437 = vld [vmem:[%s1930] ss:$2 sm:$0x7]
        %v2438 = vpack.c.bf16 %v2437, %v2437
        %v2439 = vld [vmem:[%s3 + $0x60] sm:$0xf]
        %v2440 = vld [vmem:[%s3 + $0x64] sm:$0xf]
        %v2441 = vld [vmem:[%s3 + $0x68] sm:$0xf]
        %v2442 = vld [vmem:[%s3 + $0x6c] sm:$0xf]
        %v2447 = vunpack.c.l.b16 %v2439
        %v2448 = vunpack.c.l.b16 %v2440
        %v2449 = vunpack.c.l.b16 %v2441
        %v2450 = vunpack.c.l.b16 %v2442
        %v2451 = vpack.c.b16 %v2448, %v2447
        %v2452 = vpack.c.b16 %v2450, %v2449
        %v2456 = vsel %vm1040, %v2438, 0
        %2458 = vmatprep.subr.bf16.mxu0 0
        %2459 = vmatpush1.bf16.msra.mxu0 %v2451
        %2460 = vmatprep.subr.bf16.mxu0 0
        %2461 = vmatpush1.bf16.msra.mxu0 %v2452
        %2462 = vmatprep.subr.bf16.mxu0 0
        %2463 = vmatpush1.bf16.msra.mxu0 0
        %2464 = vmatprep.subr.bf16.mxu0 0
        %2465 = vmatpush1.bf16.msra.mxu0 0
        %2466 = vmatprep.subr.bf16.mxu0 0
        %2467 = vmatpush1.bf16.msra.mxu0 0
        %2468 = vmatprep.subr.bf16.mxu0 0
        %2469 = vmatpush1.bf16.msra.mxu0 0
        %2470 = vmatprep.subr.bf16.mxu0 0
        %2471 = vmatpush1.bf16.msra.mxu0 0
        %2472 = vmatprep.subr.bf16.mxu0 0
        %2473 = vmatpush1.bf16.msra.mxu0 0
        %2474 = vmatprep.subr.bf16.mxu0 0
        %2475 = vmatpush1.bf16.msra.mxu0 0
        %2476 = vmatprep.subr.bf16.mxu0 0
        %2477 = vmatpush1.bf16.msra.mxu0 0
        %2478 = vmatprep.subr.bf16.mxu0 0
        %2479 = vmatpush1.bf16.msra.mxu0 0
        %2480 = vmatprep.subr.bf16.mxu0 0
        %2481 = vmatpush1.bf16.msra.mxu0 0
        %2482 = vmatprep.subr.bf16.mxu0 0
        %2483 = vmatpush1.bf16.msra.mxu0 0
        %2484 = vmatprep.subr.bf16.mxu0 0
        %2485 = vmatpush1.bf16.msra.mxu0 0
        %2486 = vmatprep.subr.bf16.mxu0 0
        %2487 = vmatpush1.bf16.msra.mxu0 0
        %2488 = vmatprep.subr.bf16.mxu0 0
        %2489 = vmatpush1.bf16.msra.mxu0 0
        %2490 = vmatprep.mubr.bf16.mxu0 0
        %2491 = vmatmul.mubr.bf16.gmra.mrb[0].mxu0 %v2456
        %v2492 = vpop.f32.mrb[0].mxu0
        %v2493 = vadd.f32 0.0, %v2492
        %v2494 = vpop.f32.mrb[0].mxu0
        %v2495 = vpop.f32.mrb[0].mxu0
        %v2496 = vpop.f32.mrb[0].mxu0
        %2497 = vdwg.mxu0
        %v2498 = vadd.f32 %v2436, %v2493
        %v2499 = vld [vmem:[%s1993] ss:$2 sm:$0x7]
        %v2500 = vpack.c.bf16 %v2499, %v2499
        %v2501 = vld [vmem:[%s3 + $0x70] sm:$0xf]
        %v2502 = vld [vmem:[%s3 + $0x74] sm:$0xf]
        %v2503 = vld [vmem:[%s3 + $0x78] sm:$0xf]
        %v2504 = vld [vmem:[%s3 + $0x7c] sm:$0xf]
        %v2509 = vunpack.c.l.b16 %v2501
        %v2510 = vunpack.c.l.b16 %v2502
        %v2511 = vunpack.c.l.b16 %v2503
        %v2512 = vunpack.c.l.b16 %v2504
        %v2513 = vpack.c.b16 %v2510, %v2509
        %v2514 = vpack.c.b16 %v2512, %v2511
        %v2518 = vsel %vm1040, %v2500, 0
        %2520 = vmatprep.subr.bf16.mxu0 0
        %2521 = vmatpush1.bf16.msra.mxu0 %v2513
        %2522 = vmatprep.subr.bf16.mxu0 0
        %2523 = vmatpush1.bf16.msra.mxu0 %v2514
        %2524 = vmatprep.subr.bf16.mxu0 0
        %2525 = vmatpush1.bf16.msra.mxu0 0
        %2526 = vmatprep.subr.bf16.mxu0 0
        %2527 = vmatpush1.bf16.msra.mxu0 0
        %2528 = vmatprep.subr.bf16.mxu0 0
        %2529 = vmatpush1.bf16.msra.mxu0 0
        %2530 = vmatprep.subr.bf16.mxu0 0
        %2531 = vmatpush1.bf16.msra.mxu0 0
        %2532 = vmatprep.subr.bf16.mxu0 0
        %2533 = vmatpush1.bf16.msra.mxu0 0
        %2534 = vmatprep.subr.bf16.mxu0 0
        %2535 = vmatpush1.bf16.msra.mxu0 0
        %2536 = vmatprep.subr.bf16.mxu0 0
        %2537 = vmatpush1.bf16.msra.mxu0 0
        %2538 = vmatprep.subr.bf16.mxu0 0
        %2539 = vmatpush1.bf16.msra.mxu0 0
        %2540 = vmatprep.subr.bf16.mxu0 0
        %2541 = vmatpush1.bf16.msra.mxu0 0
        %2542 = vmatprep.subr.bf16.mxu0 0
        %2543 = vmatpush1.bf16.msra.mxu0 0
        %2544 = vmatprep.subr.bf16.mxu0 0
        %2545 = vmatpush1.bf16.msra.mxu0 0
        %2546 = vmatprep.subr.bf16.mxu0 0
        %2547 = vmatpush1.bf16.msra.mxu0 0
        %2548 = vmatprep.subr.bf16.mxu0 0
        %2549 = vmatpush1.bf16.msra.mxu0 0
        %2550 = vmatprep.subr.bf16.mxu0 0
        %2551 = vmatpush1.bf16.msra.mxu0 0
        %2552 = vmatprep.mubr.bf16.mxu0 0
        %2553 = vmatmul.mubr.bf16.gmra.mrb[0].mxu0 %v2518
        %v2554 = vpop.f32.mrb[0].mxu0
        %v2555 = vadd.f32 0.0, %v2554
        %v2556 = vpop.f32.mrb[0].mxu0
        %v2557 = vpop.f32.mrb[0].mxu0
        %v2558 = vpop.f32.mrb[0].mxu0
        %2559 = vdwg.mxu0
        %v2560 = vadd.f32 %v2498, %v2555
        %s2561 = scalar_lea.vmem [#allocation2], 36
        %v2562 = vld [vmem:[%s2561] ss:$2 sm:$0x7]
        %v2563 = vpack.c.bf16 %v2562, %v2562
        %v2564 = vld [vmem:[%s3 + $0x80] sm:$0xf]
        %v2565 = vld [vmem:[%s3 + $0x84] sm:$0xf]
        %v2566 = vld [vmem:[%s3 + $0x88] sm:$0xf]
        %v2567 = vld [vmem:[%s3 + $0x8c] sm:$0xf]
        %v2572 = vunpack.c.l.b16 %v2564
        %v2573 = vunpack.c.l.b16 %v2565
        %v2574 = vunpack.c.l.b16 %v2566
        %v2575 = vunpack.c.l.b16 %v2567
        %v2576 = vpack.c.b16 %v2573, %v2572
        %v2577 = vpack.c.b16 %v2575, %v2574
        %v2581 = vsel %vm1040, %v2563, 0
        %2583 = vmatprep.subr.bf16.mxu0 0
        %2584 = vmatpush1.bf16.msra.mxu0 %v2576
        %2585 = vmatprep.subr.bf16.mxu0 0
        %2586 = vmatpush1.bf16.msra.mxu0 %v2577
        %2587 = vmatprep.subr.bf16.mxu0 0
        %2588 = vmatpush1.bf16.msra.mxu0 0
        %2589 = vmatprep.subr.bf16.mxu0 0
        %2590 = vmatpush1.bf16.msra.mxu0 0
        %2591 = vmatprep.subr.bf16.mxu0 0
        %2592 = vmatpush1.bf16.msra.mxu0 0
        %2593 = vmatprep.subr.bf16.mxu0 0
        %2594 = vmatpush1.bf16.msra.mxu0 0
        %2595 = vmatprep.subr.bf16.mxu0 0
        %2596 = vmatpush1.bf16.msra.mxu0 0
        %2597 = vmatprep.subr.bf16.mxu0 0
        %2598 = vmatpush1.bf16.msra.mxu0 0
        %2599 = vmatprep.subr.bf16.mxu0 0
        %2600 = vmatpush1.bf16.msra.mxu0 0
        %2601 = vmatprep.subr.bf16.mxu0 0
        %2602 = vmatpush1.bf16.msra.mxu0 0
        %2603 = vmatprep.subr.bf16.mxu0 0
        %2604 = vmatpush1.bf16.msra.mxu0 0
        %2605 = vmatprep.subr.bf16.mxu0 0
        %2606 = vmatpush1.bf16.msra.mxu0 0
        %2607 = vmatprep.subr.bf16.mxu0 0
        %2608 = vmatpush1.bf16.msra.mxu0 0
        %2609 = vmatprep.subr.bf16.mxu0 0
        %2610 = vmatpush1.bf16.msra.mxu0 0
        %2611 = vmatprep.subr.bf16.mxu0 0
        %2612 = vmatpush1.bf16.msra.mxu0 0
        %2613 = vmatprep.subr.bf16.mxu0 0
        %2614 = vmatpush1.bf16.msra.mxu0 0
        %2615 = vmatprep.mubr.bf16.mxu0 0
        %2616 = vmatmul.mubr.bf16.gmra.mrb[0].mxu0 %v2581
        %v2617 = vpop.f32.mrb[0].mxu0
        %v2618 = vadd.f32 0.0, %v2617
        %v2619 = vpop.f32.mrb[0].mxu0
        %v2620 = vpop.f32.mrb[0].mxu0
        %v2621 = vpop.f32.mrb[0].mxu0
        %2622 = vdwg.mxu0
        %v2623 = vadd.f32 %v2560, %v2618
        %s2624 = scalar_lea.vmem [#allocation2], 37
        %v2625 = vld [vmem:[%s2624] ss:$2 sm:$0x7]
        %v2626 = vpack.c.bf16 %v2625, %v2625
        %v2627 = vld [vmem:[%s3 + $0x90] sm:$0xf]
        %v2628 = vld [vmem:[%s3 + $0x94] sm:$0xf]
        %v2629 = vld [vmem:[%s3 + $0x98] sm:$0xf]
        %v2630 = vld [vmem:[%s3 + $0x9c] sm:$0xf]
        %v2635 = vunpack.c.l.b16 %v2627
        %v2636 = vunpack.c.l.b16 %v2628
        %v2637 = vunpack.c.l.b16 %v2629
        %v2638 = vunpack.c.l.b16 %v2630
        %v2639 = vpack.c.b16 %v2636, %v2635
        %v2640 = vpack.c.b16 %v2638, %v2637
        %v2644 = vsel %vm1040, %v2626, 0
        %2646 = vmatprep.subr.bf16.mxu0 0
        %2647 = vmatpush1.bf16.msra.mxu0 %v2639
        %2648 = vmatprep.subr.bf16.mxu0 0
        %2649 = vmatpush1.bf16.msra.mxu0 %v2640
        %2650 = vmatprep.subr.bf16.mxu0 0
        %2651 = vmatpush1.bf16.msra.mxu0 0
        %2652 = vmatprep.subr.bf16.mxu0 0
        %2653 = vmatpush1.bf16.msra.mxu0 0
        %2654 = vmatprep.subr.bf16.mxu0 0
        %2655 = vmatpush1.bf16.msra.mxu0 0
        %2656 = vmatprep.subr.bf16.mxu0 0
        %2657 = vmatpush1.bf16.msra.mxu0 0
        %2658 = vmatprep.subr.bf16.mxu0 0
        %2659 = vmatpush1.bf16.msra.mxu0 0
        %2660 = vmatprep.subr.bf16.mxu0 0
        %2661 = vmatpush1.bf16.msra.mxu0 0
        %2662 = vmatprep.subr.bf16.mxu0 0
        %2663 = vmatpush1.bf16.msra.mxu0 0
        %2664 = vmatprep.subr.bf16.mxu0 0
        %2665 = vmatpush1.bf16.msra.mxu0 0
        %2666 = vmatprep.subr.bf16.mxu0 0
        %2667 = vmatpush1.bf16.msra.mxu0 0
        %2668 = vmatprep.subr.bf16.mxu0 0
        %2669 = vmatpush1.bf16.msra.mxu0 0
        %2670 = vmatprep.subr.bf16.mxu0 0
        %2671 = vmatpush1.bf16.msra.mxu0 0
        %2672 = vmatprep.subr.bf16.mxu0 0
        %2673 = vmatpush1.bf16.msra.mxu0 0
        %2674 = vmatprep.subr.bf16.mxu0 0
        %2675 = vmatpush1.bf16.msra.mxu0 0
        %2676 = vmatprep.subr.bf16.mxu0 0
        %2677 = vmatpush1.bf16.msra.mxu0 0
        %2678 = vmatprep.mubr.bf16.mxu0 0
        %2679 = vmatmul.mubr.bf16.gmra.mrb[0].mxu0 %v2644
        %v2680 = vpop.f32.mrb[0].mxu0
        %v2681 = vadd.f32 0.0, %v2680
        %v2682 = vpop.f32.mrb[0].mxu0
        %v2683 = vpop.f32.mrb[0].mxu0
        %v2684 = vpop.f32.mrb[0].mxu0
        %2685 = vdwg.mxu0
        %v2686 = vadd.f32 %v2623, %v2681
        %s2687 = scalar_lea.vmem [#allocation2], 38
        %v2688 = vld [vmem:[%s2687] ss:$2 sm:$0x7]
        %v2689 = vpack.c.bf16 %v2688, %v2688
        %v2690 = vld [vmem:[%s3 + $0xa0] sm:$0xf]
        %v2691 = vld [vmem:[%s3 + $0xa4] sm:$0xf]
        %v2692 = vld [vmem:[%s3 + $0xa8] sm:$0xf]
        %v2693 = vld [vmem:[%s3 + $0xac] sm:$0xf]
        %v2698 = vunpack.c.l.b16 %v2690
        %v2699 = vunpack.c.l.b16 %v2691
        %v2700 = vunpack.c.l.b16 %v2692
        %v2701 = vunpack.c.l.b16 %v2693
        %v2702 = vpack.c.b16 %v2699, %v2698
        %v2703 = vpack.c.b16 %v2701, %v2700
        %v2707 = vsel %vm1040, %v2689, 0
        %2709 = vmatprep.subr.bf16.mxu0 0
        %2710 = vmatpush1.bf16.msra.mxu0 %v2702
        %2711 = vmatprep.subr.bf16.mxu0 0
        %2712 = vmatpush1.bf16.msra.mxu0 %v2703
        %2713 = vmatprep.subr.bf16.mxu0 0
        %2714 = vmatpush1.bf16.msra.mxu0 0
        %2715 = vmatprep.subr.bf16.mxu0 0
        %2716 = vmatpush1.bf16.msra.mxu0 0
        %2717 = vmatprep.subr.bf16.mxu0 0
        %2718 = vmatpush1.bf16.msra.mxu0 0
        %2719 = vmatprep.subr.bf16.mxu0 0
        %2720 = vmatpush1.bf16.msra.mxu0 0
        %2721 = vmatprep.subr.bf16.mxu0 0
        %2722 = vmatpush1.bf16.msra.mxu0 0
        %2723 = vmatprep.subr.bf16.mxu0 0
        %2724 = vmatpush1.bf16.msra.mxu0 0
        %2725 = vmatprep.subr.bf16.mxu0 0
        %2726 = vmatpush1.bf16.msra.mxu0 0
        %2727 = vmatprep.subr.bf16.mxu0 0
        %2728 = vmatpush1.bf16.msra.mxu0 0
        %2729 = vmatprep.subr.bf16.mxu0 0
        %2730 = vmatpush1.bf16.msra.mxu0 0
        %2731 = vmatprep.subr.bf16.mxu0 0
        %2732 = vmatpush1.bf16.msra.mxu0 0
        %2733 = vmatprep.subr.bf16.mxu0 0
        %2734 = vmatpush1.bf16.msra.mxu0 0
        %2735 = vmatprep.subr.bf16.mxu0 0
        %2736 = vmatpush1.bf16.msra.mxu0 0
        %2737 = vmatprep.subr.bf16.mxu0 0
        %2738 = vmatpush1.bf16.msra.mxu0 0
        %2739 = vmatprep.subr.bf16.mxu0 0
        %2740 = vmatpush1.bf16.msra.mxu0 0
        %2741 = vmatprep.mubr.bf16.mxu0 0
        %2742 = vmatmul.mubr.bf16.gmra.mrb[0].mxu0 %v2707
        %v2743 = vpop.f32.mrb[0].mxu0
        %v2744 = vadd.f32 0.0, %v2743
        %v2745 = vpop.f32.mrb[0].mxu0
        %v2746 = vpop.f32.mrb[0].mxu0
        %v2747 = vpop.f32.mrb[0].mxu0
        %2748 = vdwg.mxu0
        %v2749 = vadd.f32 %v2686, %v2744
        %s2750 = scalar_lea.vmem [#allocation2], 39
        %v2751 = vld [vmem:[%s2750] ss:$2 sm:$0x7]
        %v2752 = vpack.c.bf16 %v2751, %v2751
        %v2753 = vld [vmem:[%s3 + $0xb0] sm:$0xf]
        %v2754 = vld [vmem:[%s3 + $0xb4] sm:$0xf]
        %v2755 = vld [vmem:[%s3 + $0xb8] sm:$0xf]
        %v2756 = vld [vmem:[%s3 + $0xbc] sm:$0xf]
        %v2761 = vunpack.c.l.b16 %v2753
        %v2762 = vunpack.c.l.b16 %v2754
        %v2763 = vunpack.c.l.b16 %v2755
        %v2764 = vunpack.c.l.b16 %v2756
        %v2765 = vpack.c.b16 %v2762, %v2761
        %v2766 = vpack.c.b16 %v2764, %v2763
        %v2770 = vsel %vm1040, %v2752, 0
        %2772 = vmatprep.subr.bf16.mxu0 0
        %2773 = vmatpush1.bf16.msra.mxu0 %v2765
        %2774 = vmatprep.subr.bf16.mxu0 0
        %2775 = vmatpush1.bf16.msra.mxu0 %v2766
        %2776 = vmatprep.subr.bf16.mxu0 0
        %2777 = vmatpush1.bf16.msra.mxu0 0
        %2778 = vmatprep.subr.bf16.mxu0 0
        %2779 = vmatpush1.bf16.msra.mxu0 0
        %2780 = vmatprep.subr.bf16.mxu0 0
        %2781 = vmatpush1.bf16.msra.mxu0 0
        %2782 = vmatprep.subr.bf16.mxu0 0
        %2783 = vmatpush1.bf16.msra.mxu0 0
        %2784 = vmatprep.subr.bf16.mxu0 0
        %2785 = vmatpush1.bf16.msra.mxu0 0
        %2786 = vmatprep.subr.bf16.mxu0 0
        %2787 = vmatpush1.bf16.msra.mxu0 0
        %2788 = vmatprep.subr.bf16.mxu0 0
        %2789 = vmatpush1.bf16.msra.mxu0 0
        %2790 = vmatprep.subr.bf16.mxu0 0
        %2791 = vmatpush1.bf16.msra.mxu0 0
        %2792 = vmatprep.subr.bf16.mxu0 0
        %2793 = vmatpush1.bf16.msra.mxu0 0
        %2794 = vmatprep.subr.bf16.mxu0 0
        %2795 = vmatpush1.bf16.msra.mxu0 0
        %2796 = vmatprep.subr.bf16.mxu0 0
        %2797 = vmatpush1.bf16.msra.mxu0 0
        %2798 = vmatprep.subr.bf16.mxu0 0
        %2799 = vmatpush1.bf16.msra.mxu0 0
        %2800 = vmatprep.subr.bf16.mxu0 0
        %2801 = vmatpush1.bf16.msra.mxu0 0
        %2802 = vmatprep.subr.bf16.mxu0 0
        %2803 = vmatpush1.bf16.msra.mxu0 0
        %2804 = vmatprep.mubr.bf16.mxu0 0
        %2805 = vmatmul.mubr.bf16.gmra.mrb[0].mxu0 %v2770
        %v2806 = vpop.f32.mrb[0].mxu0
        %v2807 = vadd.f32 0.0, %v2806
        %v2808 = vpop.f32.mrb[0].mxu0
        %v2809 = vpop.f32.mrb[0].mxu0
        %v2810 = vpop.f32.mrb[0].mxu0
        %2811 = vdwg.mxu0
        %v2812 = vadd.f32 %v2749, %v2807
        %s2813 = scalar_lea.vmem [#allocation2], 45
        %v2814 = vld [vmem:[%s2813] ss:$2 sm:$0x7]
        %v2815 = vpack.c.bf16 %v2814, %v2814
        %v2816 = vld [vmem:[%s3 + $0xc0] sm:$0xf]
        %v2817 = vld [vmem:[%s3 + $0xc4] sm:$0xf]
        %v2818 = vld [vmem:[%s3 + $0xc8] sm:$0xf]
        %v2819 = vld [vmem:[%s3 + $0xcc] sm:$0xf]
        %v2824 = vunpack.c.l.b16 %v2816
        %v2825 = vunpack.c.l.b16 %v2817
        %v2826 = vunpack.c.l.b16 %v2818
        %v2827 = vunpack.c.l.b16 %v2819
        %v2828 = vpack.c.b16 %v2825, %v2824
        %v2829 = vpack.c.b16 %v2827, %v2826
        %v2833 = vsel %vm1040, %v2815, 0
        %2835 = vmatprep.subr.bf16.mxu0 0
        %2836 = vmatpush1.bf16.msra.mxu0 %v2828
        %2837 = vmatprep.subr.bf16.mxu0 0
        %2838 = vmatpush1.bf16.msra.mxu0 %v2829
        %2839 = vmatprep.subr.bf16.mxu0 0
        %2840 = vmatpush1.bf16.msra.mxu0 0
        %2841 = vmatprep.subr.bf16.mxu0 0
        %2842 = vmatpush1.bf16.msra.mxu0 0
        %2843 = vmatprep.subr.bf16.mxu0 0
        %2844 = vmatpush1.bf16.msra.mxu0 0
        %2845 = vmatprep.subr.bf16.mxu0 0
        %2846 = vmatpush1.bf16.msra.mxu0 0
        %2847 = vmatprep.subr.bf16.mxu0 0
        %2848 = vmatpush1.bf16.msra.mxu0 0
        %2849 = vmatprep.subr.bf16.mxu0 0
        %2850 = vmatpush1.bf16.msra.mxu0 0
        %2851 = vmatprep.subr.bf16.mxu0 0
        %2852 = vmatpush1.bf16.msra.mxu0 0
        %2853 = vmatprep.subr.bf16.mxu0 0
        %2854 = vmatpush1.bf16.msra.mxu0 0
        %2855 = vmatprep.subr.bf16.mxu0 0
        %2856 = vmatpush1.bf16.msra.mxu0 0
        %2857 = vmatprep.subr.bf16.mxu0 0
        %2858 = vmatpush1.bf16.msra.mxu0 0
        %2859 = vmatprep.subr.bf16.mxu0 0
        %2860 = vmatpush1.bf16.msra.mxu0 0
        %2861 = vmatprep.subr.bf16.mxu0 0
        %2862 = vmatpush1.bf16.msra.mxu0 0
        %2863 = vmatprep.subr.bf16.mxu0 0
        %2864 = vmatpush1.bf16.msra.mxu0 0
        %2865 = vmatprep.subr.bf16.mxu0 0
        %2866 = vmatpush1.bf16.msra.mxu0 0
        %2867 = vmatprep.mubr.bf16.mxu0 0
        %2868 = vmatmul.mubr.bf16.gmra.mrb[0].mxu0 %v2833
        %v2869 = vpop.f32.mrb[0].mxu0
        %v2870 = vadd.f32 0.0, %v2869
        %v2871 = vpop.f32.mrb[0].mxu0
        %v2872 = vpop.f32.mrb[0].mxu0
        %v2873 = vpop.f32.mrb[0].mxu0
        %2874 = vdwg.mxu0
        %v2875 = vadd.f32 %v2812, %v2870
        %s2876 = scalar_lea.vmem [#allocation2], 46
        %v2877 = vld [vmem:[%s2876] ss:$2 sm:$0x7]
        %v2878 = vpack.c.bf16 %v2877, %v2877
        %v2879 = vld [vmem:[%s3 + $0xd0] sm:$0xf]
        %v2880 = vld [vmem:[%s3 + $0xd4] sm:$0xf]
        %v2881 = vld [vmem:[%s3 + $0xd8] sm:$0xf]
        %v2882 = vld [vmem:[%s3 + $0xdc] sm:$0xf]
        %v2887 = vunpack.c.l.b16 %v2879
        %v2888 = vunpack.c.l.b16 %v2880
        %v2889 = vunpack.c.l.b16 %v2881
        %v2890 = vunpack.c.l.b16 %v2882
        %v2891 = vpack.c.b16 %v2888, %v2887
        %v2892 = vpack.c.b16 %v2890, %v2889
        %v2896 = vsel %vm1040, %v2878, 0
        %2898 = vmatprep.subr.bf16.mxu0 0
        %2899 = vmatpush1.bf16.msra.mxu0 %v2891
        %2900 = vmatprep.subr.bf16.mxu0 0
        %2901 = vmatpush1.bf16.msra.mxu0 %v2892
        %2902 = vmatprep.subr.bf16.mxu0 0
        %2903 = vmatpush1.bf16.msra.mxu0 0
        %2904 = vmatprep.subr.bf16.mxu0 0
        %2905 = vmatpush1.bf16.msra.mxu0 0
        %2906 = vmatprep.subr.bf16.mxu0 0
        %2907 = vmatpush1.bf16.msra.mxu0 0
        %2908 = vmatprep.subr.bf16.mxu0 0
        %2909 = vmatpush1.bf16.msra.mxu0 0
        %2910 = vmatprep.subr.bf16.mxu0 0
        %2911 = vmatpush1.bf16.msra.mxu0 0
        %2912 = vmatprep.subr.bf16.mxu0 0
        %2913 = vmatpush1.bf16.msra.mxu0 0
        %2914 = vmatprep.subr.bf16.mxu0 0
        %2915 = vmatpush1.bf16.msra.mxu0 0
        %2916 = vmatprep.subr.bf16.mxu0 0
        %2917 = vmatpush1.bf16.msra.mxu0 0
        %2918 = vmatprep.subr.bf16.mxu0 0
        %2919 = vmatpush1.bf16.msra.mxu0 0
        %2920 = vmatprep.subr.bf16.mxu0 0
        %2921 = vmatpush1.bf16.msra.mxu0 0
        %2922 = vmatprep.subr.bf16.mxu0 0
        %2923 = vmatpush1.bf16.msra.mxu0 0
        %2924 = vmatprep.subr.bf16.mxu0 0
        %2925 = vmatpush1.bf16.msra.mxu0 0
        %2926 = vmatprep.subr.bf16.mxu0 0
        %2927 = vmatpush1.bf16.msra.mxu0 0
        %2928 = vmatprep.subr.bf16.mxu0 0
        %2929 = vmatpush1.bf16.msra.mxu0 0
        %2930 = vmatprep.mubr.bf16.mxu0 0
        %2931 = vmatmul.mubr.bf16.gmra.mrb[0].mxu0 %v2896
        %v2932 = vpop.f32.mrb[0].mxu0
        %v2933 = vadd.f32 0.0, %v2932
        %v2934 = vpop.f32.mrb[0].mxu0
        %v2935 = vpop.f32.mrb[0].mxu0
        %v2936 = vpop.f32.mrb[0].mxu0
        %2937 = vdwg.mxu0
        %v2938 = vadd.f32 %v2875, %v2933
        %s2939 = scalar_lea.vmem [#allocation2], 47
        %v2940 = vld [vmem:[%s2939] ss:$2 sm:$0x7]
        %v2941 = vpack.c.bf16 %v2940, %v2940
        %v2942 = vld [vmem:[%s3 + $0xe0] sm:$0xf]
        %v2943 = vld [vmem:[%s3 + $0xe4] sm:$0xf]
        %v2944 = vld [vmem:[%s3 + $0xe8] sm:$0xf]
        %v2945 = vld [vmem:[%s3 + $0xec] sm:$0xf]
        %v2950 = vunpack.c.l.b16 %v2942
        %v2951 = vunpack.c.l.b16 %v2943
        %v2952 = vunpack.c.l.b16 %v2944
        %v2953 = vunpack.c.l.b16 %v2945
        %v2954 = vpack.c.b16 %v2951, %v2950
        %v2955 = vpack.c.b16 %v2953, %v2952
        %v2959 = vsel %vm1040, %v2941, 0
        %2961 = vmatprep.subr.bf16.mxu0 0
        %2962 = vmatpush1.bf16.msra.mxu0 %v2954
        %2963 = vmatprep.subr.bf16.mxu0 0
        %2964 = vmatpush1.bf16.msra.mxu0 %v2955
        %2965 = vmatprep.subr.bf16.mxu0 0
        %2966 = vmatpush1.bf16.msra.mxu0 0
        %2967 = vmatprep.subr.bf16.mxu0 0
        %2968 = vmatpush1.bf16.msra.mxu0 0
        %2969 = vmatprep.subr.bf16.mxu0 0
        %2970 = vmatpush1.bf16.msra.mxu0 0
        %2971 = vmatprep.subr.bf16.mxu0 0
        %2972 = vmatpush1.bf16.msra.mxu0 0
        %2973 = vmatprep.subr.bf16.mxu0 0
        %2974 = vmatpush1.bf16.msra.mxu0 0
        %2975 = vmatprep.subr.bf16.mxu0 0
        %2976 = vmatpush1.bf16.msra.mxu0 0
        %2977 = vmatprep.subr.bf16.mxu0 0
        %2978 = vmatpush1.bf16.msra.mxu0 0
        %2979 = vmatprep.subr.bf16.mxu0 0
        %2980 = vmatpush1.bf16.msra.mxu0 0
        %2981 = vmatprep.subr.bf16.mxu0 0
        %2982 = vmatpush1.bf16.msra.mxu0 0
        %2983 = vmatprep.subr.bf16.mxu0 0
        %2984 = vmatpush1.bf16.msra.mxu0 0
        %2985 = vmatprep.subr.bf16.mxu0 0
        %2986 = vmatpush1.bf16.msra.mxu0 0
        %2987 = vmatprep.subr.bf16.mxu0 0
        %2988 = vmatpush1.bf16.msra.mxu0 0
        %2989 = vmatprep.subr.bf16.mxu0 0
        %2990 = vmatpush1.bf16.msra.mxu0 0
        %2991 = vmatprep.subr.bf16.mxu0 0
        %2992 = vmatpush1.bf16.msra.mxu0 0
        %2993 = vmatprep.mubr.bf16.mxu0 0
        %2994 = vmatmul.mubr.bf16.gmra.mrb[0].mxu0 %v2959
        %v2995 = vpop.f32.mrb[0].mxu0
        %v2996 = vadd.f32 0.0, %v2995
        %v2997 = vpop.f32.mrb[0].mxu0
        %v2998 = vpop.f32.mrb[0].mxu0
        %v2999 = vpop.f32.mrb[0].mxu0
        %3000 = vdwg.mxu0
        %v3001 = vadd.f32 %v2938, %v2996
        %s3002 = scalar_lea.vmem [#allocation2], 48
        %v3003 = vld [vmem:[%s3002] ss:$2 sm:$0x7]
        %v3004 = vpack.c.bf16 %v3003, %v3003
        %v3005 = vld [vmem:[%s3 + $0xf0] sm:$0xf]
        %v3006 = vld [vmem:[%s3 + $0xf4] sm:$0xf]
        %v3007 = vld [vmem:[%s3 + $0xf8] sm:$0xf]
        %v3008 = vld [vmem:[%s3 + $0xfc] sm:$0xf]
        %v3013 = vunpack.c.l.b16 %v3005
        %v3014 = vunpack.c.l.b16 %v3006
        %v3015 = vunpack.c.l.b16 %v3007
        %v3016 = vunpack.c.l.b16 %v3008
        %v3017 = vpack.c.b16 %v3014, %v3013
        %v3018 = vpack.c.b16 %v3016, %v3015
        %v3022 = vsel %vm1040, %v3004, 0
        %3024 = vmatprep.subr.bf16.mxu0 0
        %3025 = vmatpush1.bf16.msra.mxu0 %v3017
        %3026 = vmatprep.subr.bf16.mxu0 0
        %3027 = vmatpush1.bf16.msra.mxu0 %v3018
        %3028 = vmatprep.subr.bf16.mxu0 0
        %3029 = vmatpush1.bf16.msra.mxu0 0
        %3030 = vmatprep.subr.bf16.mxu0 0
        %3031 = vmatpush1.bf16.msra.mxu0 0
        %3032 = vmatprep.subr.bf16.mxu0 0
        %3033 = vmatpush1.bf16.msra.mxu0 0
        %3034 = vmatprep.subr.bf16.mxu0 0
        %3035 = vmatpush1.bf16.msra.mxu0 0
        %3036 = vmatprep.subr.bf16.mxu0 0
        %3037 = vmatpush1.bf16.msra.mxu0 0
        %3038 = vmatprep.subr.bf16.mxu0 0
        %3039 = vmatpush1.bf16.msra.mxu0 0
        %3040 = vmatprep.subr.bf16.mxu0 0
        %3041 = vmatpush1.bf16.msra.mxu0 0
        %3042 = vmatprep.subr.bf16.mxu0 0
        %3043 = vmatpush1.bf16.msra.mxu0 0
        %3044 = vmatprep.subr.bf16.mxu0 0
        %3045 = vmatpush1.bf16.msra.mxu0 0
        %3046 = vmatprep.subr.bf16.mxu0 0
        %3047 = vmatpush1.bf16.msra.mxu0 0
        %3048 = vmatprep.subr.bf16.mxu0 0
        %3049 = vmatpush1.bf16.msra.mxu0 0
        %3050 = vmatprep.subr.bf16.mxu0 0
        %3051 = vmatpush1.bf16.msra.mxu0 0
        %3052 = vmatprep.subr.bf16.mxu0 0
        %3053 = vmatpush1.bf16.msra.mxu0 0
        %3054 = vmatprep.subr.bf16.mxu0 0
        %3055 = vmatpush1.bf16.msra.mxu0 0
        %3056 = vmatprep.mubr.bf16.mxu0 0
        %3057 = vmatmul.mubr.bf16.gmra.mrb[0].mxu0 %v3022
        %v3058 = vpop.f32.mrb[0].mxu0
        %v3059 = vadd.f32 0.0, %v3058
        %v3060 = vpop.f32.mrb[0].mxu0
        %v3061 = vpop.f32.mrb[0].mxu0
        %v3062 = vpop.f32.mrb[0].mxu0
        %3063 = vdwg.mxu0
        %v3064 = vadd.f32 %v3001, %v3059
        %v3065 = vld [vmem:[%s4] sm:$0x1]
        %v3067 = vlaneseq
        %v3068 = vshrl.u32 %v3067, 7
        %v3069 = vsub.s32 0, %v3068
        %v3070 = vrot.slane %v3065, %v3069
        %v3072 = vadd.f32 %v3064, %v3070
        %v3073 = vmax.f32 %v3072, 0.0
        %3074 = vst.msk [vmem:[#allocation3 + $0x3] sm:$0x7] %vm2065, %v3073
        %v3075 = vld [vmem:[%s2561] ss:$2 sm:$0x7]
        %v3076 = vpack.c.bf16 %v3075, %v3075
        %v3077 = vld [vmem:[%s3] sm:$0xf]
        %v3078 = vld [vmem:[%s3 + $0x4] sm:$0xf]
        %v3079 = vld [vmem:[%s3 + $0x8] sm:$0xf]
        %v3080 = vld [vmem:[%s3 + $0xc] sm:$0xf]
        %v3081 = vld [vmem:[%s2624] ss:$2 sm:$0x7]
        %v3082 = vpack.c.bf16 %v3081, %v3081
        %v3083 = vld [vmem:[%s3 + $0x10] sm:$0xf]
        %v3084 = vld [vmem:[%s3 + $0x14] sm:$0xf]
        %v3085 = vld [vmem:[%s3 + $0x18] sm:$0xf]
        %v3086 = vld [vmem:[%s3 + $0x1c] sm:$0xf]
        %v3091 = vunpack.c.l.b16 %v3083
        %v3092 = vunpack.c.l.b16 %v3084
        %v3093 = vunpack.c.l.b16 %v3085
        %v3094 = vunpack.c.l.b16 %v3086
        %v3095 = vpack.c.b16 %v3092, %v3091
        %v3096 = vpack.c.b16 %v3094, %v3093
        %v3100 = vsel %vm1040, %v3082, 0
        %3102 = vmatprep.subr.bf16.mxu0 0
        %3103 = vmatpush1.bf16.msra.mxu0 %v3095
        %3104 = vmatprep.subr.bf16.mxu0 0
        %3105 = vmatpush1.bf16.msra.mxu0 %v3096
        %3106 = vmatprep.subr.bf16.mxu0 0
        %3107 = vmatpush1.bf16.msra.mxu0 0
        %3108 = vmatprep.subr.bf16.mxu0 0
        %3109 = vmatpush1.bf16.msra.mxu0 0
        %3110 = vmatprep.subr.bf16.mxu0 0
        %3111 = vmatpush1.bf16.msra.mxu0 0
        %3112 = vmatprep.subr.bf16.mxu0 0
        %3113 = vmatpush1.bf16.msra.mxu0 0
        %3114 = vmatprep.subr.bf16.mxu0 0
        %3115 = vmatpush1.bf16.msra.mxu0 0
        %3116 = vmatprep.subr.bf16.mxu0 0
        %3117 = vmatpush1.bf16.msra.mxu0 0
        %3118 = vmatprep.subr.bf16.mxu0 0
        %3119 = vmatpush1.bf16.msra.mxu0 0
        %3120 = vmatprep.subr.bf16.mxu0 0
        %3121 = vmatpush1.bf16.msra.mxu0 0
        %3122 = vmatprep.subr.bf16.mxu0 0
        %3123 = vmatpush1.bf16.msra.mxu0 0
        %3124 = vmatprep.subr.bf16.mxu0 0
        %3125 = vmatpush1.bf16.msra.mxu0 0
        %3126 = vmatprep.subr.bf16.mxu0 0
        %3127 = vmatpush1.bf16.msra.mxu0 0
        %3128 = vmatprep.subr.bf16.mxu0 0
        %3129 = vmatpush1.bf16.msra.mxu0 0
        %3130 = vmatprep.subr.bf16.mxu0 0
        %3131 = vmatpush1.bf16.msra.mxu0 0
        %3132 = vmatprep.subr.bf16.mxu0 0
        %3133 = vmatpush1.bf16.msra.mxu0 0
        %3134 = vmatprep.mubr.bf16.mxu0 0
        %3135 = vmatmul.mubr.bf16.gmra.mrb[0].mxu0 %v3100
        %v3136 = vpop.f32.mrb[0].mxu0
        %v3137 = vadd.f32 0.0, %v3136
        %v3138 = vpop.f32.mrb[0].mxu0
        %v3139 = vpop.f32.mrb[0].mxu0
        %v3140 = vpop.f32.mrb[0].mxu0
        %3141 = vdwg.mxu0
        %v3146 = vunpack.c.l.b16 %v3077
        %v3147 = vunpack.c.l.b16 %v3078
        %v3148 = vunpack.c.l.b16 %v3079
        %v3149 = vunpack.c.l.b16 %v3080
        %v3150 = vpack.c.b16 %v3147, %v3146
        %v3151 = vpack.c.b16 %v3149, %v3148
        %v3155 = vsel %vm1040, %v3076, 0
        %3157 = vmatprep.subr.bf16.mxu0 0
        %3158 = vmatpush1.bf16.msra.mxu0 %v3150
        %3159 = vmatprep.subr.bf16.mxu0 0
        %3160 = vmatpush1.bf16.msra.mxu0 %v3151
        %3161 = vmatprep.subr.bf16.mxu0 0
        %3162 = vmatpush1.bf16.msra.mxu0 0
        %3163 = vmatprep.subr.bf16.mxu0 0
        %3164 = vmatpush1.bf16.msra.mxu0 0
        %3165 = vmatprep.subr.bf16.mxu0 0
        %3166 = vmatpush1.bf16.msra.mxu0 0
        %3167 = vmatprep.subr.bf16.mxu0 0
        %3168 = vmatpush1.bf16.msra.mxu0 0
        %3169 = vmatprep.subr.bf16.mxu0 0
        %3170 = vmatpush1.bf16.msra.mxu0 0
        %3171 = vmatprep.subr.bf16.mxu0 0
        %3172 = vmatpush1.bf16.msra.mxu0 0
        %3173 = vmatprep.subr.bf16.mxu0 0
        %3174 = vmatpush1.bf16.msra.mxu0 0
        %3175 = vmatprep.subr.bf16.mxu0 0
        %3176 = vmatpush1.bf16.msra.mxu0 0
        %3177 = vmatprep.subr.bf16.mxu0 0
        %3178 = vmatpush1.bf16.msra.mxu0 0
        %3179 = vmatprep.subr.bf16.mxu0 0
        %3180 = vmatpush1.bf16.msra.mxu0 0
        %3181 = vmatprep.subr.bf16.mxu0 0
        %3182 = vmatpush1.bf16.msra.mxu0 0
        %3183 = vmatprep.subr.bf16.mxu0 0
        %3184 = vmatpush1.bf16.msra.mxu0 0
        %3185 = vmatprep.subr.bf16.mxu0 0
        %3186 = vmatpush1.bf16.msra.mxu0 0
        %3187 = vmatprep.subr.bf16.mxu0 0
        %3188 = vmatpush1.bf16.msra.mxu0 0
        %3189 = vmatprep.mubr.bf16.mxu0 0
        %3190 = vmatmul.mubr.bf16.gmra.mrb[0].mxu0 %v3155
        %v3191 = vpop.f32.mrb[0].mxu0
        %v3192 = vadd.f32 %v3137, %v3191
        %v3193 = vpop.f32.mrb[0].mxu0
        %v3194 = vpop.f32.mrb[0].mxu0
        %v3195 = vpop.f32.mrb[0].mxu0
        %3196 = vdwg.mxu0
        %v3197 = vld [vmem:[%s2687] ss:$2 sm:$0x7]
        %v3198 = vpack.c.bf16 %v3197, %v3197
        %v3199 = vld [vmem:[%s3 + $0x20] sm:$0xf]
        %v3200 = vld [vmem:[%s3 + $0x24] sm:$0xf]
        %v3201 = vld [vmem:[%s3 + $0x28] sm:$0xf]
        %v3202 = vld [vmem:[%s3 + $0x2c] sm:$0xf]
        %v3207 = vunpack.c.l.b16 %v3199
        %v3208 = vunpack.c.l.b16 %v3200
        %v3209 = vunpack.c.l.b16 %v3201
        %v3210 = vunpack.c.l.b16 %v3202
        %v3211 = vpack.c.b16 %v3208, %v3207
        %v3212 = vpack.c.b16 %v3210, %v3209
        %v3216 = vsel %vm1040, %v3198, 0
        %3218 = vmatprep.subr.bf16.mxu0 0
        %3219 = vmatpush1.bf16.msra.mxu0 %v3211
        %3220 = vmatprep.subr.bf16.mxu0 0
        %3221 = vmatpush1.bf16.msra.mxu0 %v3212
        %3222 = vmatprep.subr.bf16.mxu0 0
        %3223 = vmatpush1.bf16.msra.mxu0 0
        %3224 = vmatprep.subr.bf16.mxu0 0
        %3225 = vmatpush1.bf16.msra.mxu0 0
        %3226 = vmatprep.subr.bf16.mxu0 0
        %3227 = vmatpush1.bf16.msra.mxu0 0
        %3228 = vmatprep.subr.bf16.mxu0 0
        %3229 = vmatpush1.bf16.msra.mxu0 0
        %3230 = vmatprep.subr.bf16.mxu0 0
        %3231 = vmatpush1.bf16.msra.mxu0 0
        %3232 = vmatprep.subr.bf16.mxu0 0
        %3233 = vmatpush1.bf16.msra.mxu0 0
        %3234 = vmatprep.subr.bf16.mxu0 0
        %3235 = vmatpush1.bf16.msra.mxu0 0
        %3236 = vmatprep.subr.bf16.mxu0 0
        %3237 = vmatpush1.bf16.msra.mxu0 0
        %3238 = vmatprep.subr.bf16.mxu0 0
        %3239 = vmatpush1.bf16.msra.mxu0 0
        %3240 = vmatprep.subr.bf16.mxu0 0
        %3241 = vmatpush1.bf16.msra.mxu0 0
        %3242 = vmatprep.subr.bf16.mxu0 0
        %3243 = vmatpush1.bf16.msra.mxu0 0
        %3244 = vmatprep.subr.bf16.mxu0 0
        %3245 = vmatpush1.bf16.msra.mxu0 0
        %3246 = vmatprep.subr.bf16.mxu0 0
        %3247 = vmatpush1.bf16.msra.mxu0 0
        %3248 = vmatprep.subr.bf16.mxu0 0
        %3249 = vmatpush1.bf16.msra.mxu0 0
        %3250 = vmatprep.mubr.bf16.mxu0 0
        %3251 = vmatmul.mubr.bf16.gmra.mrb[0].mxu0 %v3216
        %v3252 = vpop.f32.mrb[0].mxu0
        %v3253 = vadd.f32 0.0, %v3252
        %v3254 = vpop.f32.mrb[0].mxu0
        %v3255 = vpop.f32.mrb[0].mxu0
        %v3256 = vpop.f32.mrb[0].mxu0
        %3257 = vdwg.mxu0
        %v3258 = vadd.f32 %v3192, %v3253
        %v3259 = vld [vmem:[%s2750] ss:$2 sm:$0x7]
        %v3260 = vpack.c.bf16 %v3259, %v3259
        %v3261 = vld [vmem:[%s3 + $0x30] sm:$0xf]
        %v3262 = vld [vmem:[%s3 + $0x34] sm:$0xf]
        %v3263 = vld [vmem:[%s3 + $0x38] sm:$0xf]
        %v3264 = vld [vmem:[%s3 + $0x3c] sm:$0xf]
        %v3269 = vunpack.c.l.b16 %v3261
        %v3270 = vunpack.c.l.b16 %v3262
        %v3271 = vunpack.c.l.b16 %v3263
        %v3272 = vunpack.c.l.b16 %v3264
        %v3273 = vpack.c.b16 %v3270, %v3269
        %v3274 = vpack.c.b16 %v3272, %v3271
        %v3278 = vsel %vm1040, %v3260, 0
        %3280 = vmatprep.subr.bf16.mxu0 0
        %3281 = vmatpush1.bf16.msra.mxu0 %v3273
        %3282 = vmatprep.subr.bf16.mxu0 0
        %3283 = vmatpush1.bf16.msra.mxu0 %v3274
        %3284 = vmatprep.subr.bf16.mxu0 0
        %3285 = vmatpush1.bf16.msra.mxu0 0
        %3286 = vmatprep.subr.bf16.mxu0 0
        %3287 = vmatpush1.bf16.msra.mxu0 0
        %3288 = vmatprep.subr.bf16.mxu0 0
        %3289 = vmatpush1.bf16.msra.mxu0 0
        %3290 = vmatprep.subr.bf16.mxu0 0
        %3291 = vmatpush1.bf16.msra.mxu0 0
        %3292 = vmatprep.subr.bf16.mxu0 0
        %3293 = vmatpush1.bf16.msra.mxu0 0
        %3294 = vmatprep.subr.bf16.mxu0 0
        %3295 = vmatpush1.bf16.msra.mxu0 0
        %3296 = vmatprep.subr.bf16.mxu0 0
        %3297 = vmatpush1.bf16.msra.mxu0 0
        %3298 = vmatprep.subr.bf16.mxu0 0
        %3299 = vmatpush1.bf16.msra.mxu0 0
        %3300 = vmatprep.subr.bf16.mxu0 0
        %3301 = vmatpush1.bf16.msra.mxu0 0
        %3302 = vmatprep.subr.bf16.mxu0 0
        %3303 = vmatpush1.bf16.msra.mxu0 0
        %3304 = vmatprep.subr.bf16.mxu0 0
        %3305 = vmatpush1.bf16.msra.mxu0 0
        %3306 = vmatprep.subr.bf16.mxu0 0
        %3307 = vmatpush1.bf16.msra.mxu0 0
        %3308 = vmatprep.subr.bf16.mxu0 0
        %3309 = vmatpush1.bf16.msra.mxu0 0
        %3310 = vmatprep.subr.bf16.mxu0 0
        %3311 = vmatpush1.bf16.msra.mxu0 0
        %3312 = vmatprep.mubr.bf16.mxu0 0
        %3313 = vmatmul.mubr.bf16.gmra.mrb[0].mxu0 %v3278
        %v3314 = vpop.f32.mrb[0].mxu0
        %v3315 = vadd.f32 0.0, %v3314
        %v3316 = vpop.f32.mrb[0].mxu0
        %v3317 = vpop.f32.mrb[0].mxu0
        %v3318 = vpop.f32.mrb[0].mxu0
        %3319 = vdwg.mxu0
        %v3320 = vadd.f32 %v3258, %v3315
        %v3321 = vld [vmem:[%s2813] ss:$2 sm:$0x7]
        %v3322 = vpack.c.bf16 %v3321, %v3321
        %v3323 = vld [vmem:[%s3 + $0x40] sm:$0xf]
        %v3324 = vld [vmem:[%s3 + $0x44] sm:$0xf]
        %v3325 = vld [vmem:[%s3 + $0x48] sm:$0xf]
        %v3326 = vld [vmem:[%s3 + $0x4c] sm:$0xf]
        %v3331 = vunpack.c.l.b16 %v3323
        %v3332 = vunpack.c.l.b16 %v3324
        %v3333 = vunpack.c.l.b16 %v3325
        %v3334 = vunpack.c.l.b16 %v3326
        %v3335 = vpack.c.b16 %v3332, %v3331
        %v3336 = vpack.c.b16 %v3334, %v3333
        %v3340 = vsel %vm1040, %v3322, 0
        %3342 = vmatprep.subr.bf16.mxu0 0
        %3343 = vmatpush1.bf16.msra.mxu0 %v3335
        %3344 = vmatprep.subr.bf16.mxu0 0
        %3345 = vmatpush1.bf16.msra.mxu0 %v3336
        %3346 = vmatprep.subr.bf16.mxu0 0
        %3347 = vmatpush1.bf16.msra.mxu0 0
        %3348 = vmatprep.subr.bf16.mxu0 0
        %3349 = vmatpush1.bf16.msra.mxu0 0
        %3350 = vmatprep.subr.bf16.mxu0 0
        %3351 = vmatpush1.bf16.msra.mxu0 0
        %3352 = vmatprep.subr.bf16.mxu0 0
        %3353 = vmatpush1.bf16.msra.mxu0 0
        %3354 = vmatprep.subr.bf16.mxu0 0
        %3355 = vmatpush1.bf16.msra.mxu0 0
        %3356 = vmatprep.subr.bf16.mxu0 0
        %3357 = vmatpush1.bf16.msra.mxu0 0
        %3358 = vmatprep.subr.bf16.mxu0 0
        %3359 = vmatpush1.bf16.msra.mxu0 0
        %3360 = vmatprep.subr.bf16.mxu0 0
        %3361 = vmatpush1.bf16.msra.mxu0 0
        %3362 = vmatprep.subr.bf16.mxu0 0
        %3363 = vmatpush1.bf16.msra.mxu0 0
        %3364 = vmatprep.subr.bf16.mxu0 0
        %3365 = vmatpush1.bf16.msra.mxu0 0
        %3366 = vmatprep.subr.bf16.mxu0 0
        %3367 = vmatpush1.bf16.msra.mxu0 0
        %3368 = vmatprep.subr.bf16.mxu0 0
        %3369 = vmatpush1.bf16.msra.mxu0 0
        %3370 = vmatprep.subr.bf16.mxu0 0
        %3371 = vmatpush1.bf16.msra.mxu0 0
        %3372 = vmatprep.subr.bf16.mxu0 0
        %3373 = vmatpush1.bf16.msra.mxu0 0
        %3374 = vmatprep.mubr.bf16.mxu0 0
        %3375 = vmatmul.mubr.bf16.gmra.mrb[0].mxu0 %v3340
        %v3376 = vpop.f32.mrb[0].mxu0
        %v3377 = vadd.f32 0.0, %v3376
        %v3378 = vpop.f32.mrb[0].mxu0
        %v3379 = vpop.f32.mrb[0].mxu0
        %v3380 = vpop.f32.mrb[0].mxu0
        %3381 = vdwg.mxu0
        %v3382 = vadd.f32 %v3320, %v3377
        %v3383 = vld [vmem:[%s2876] ss:$2 sm:$0x7]
        %v3384 = vpack.c.bf16 %v3383, %v3383
        %v3385 = vld [vmem:[%s3 + $0x50] sm:$0xf]
        %v3386 = vld [vmem:[%s3 + $0x54] sm:$0xf]
        %v3387 = vld [vmem:[%s3 + $0x58] sm:$0xf]
        %v3388 = vld [vmem:[%s3 + $0x5c] sm:$0xf]
        %v3393 = vunpack.c.l.b16 %v3385
        %v3394 = vunpack.c.l.b16 %v3386
        %v3395 = vunpack.c.l.b16 %v3387
        %v3396 = vunpack.c.l.b16 %v3388
        %v3397 = vpack.c.b16 %v3394, %v3393
        %v3398 = vpack.c.b16 %v3396, %v3395
        %v3402 = vsel %vm1040, %v3384, 0
        %3404 = vmatprep.subr.bf16.mxu0 0
        %3405 = vmatpush1.bf16.msra.mxu0 %v3397
        %3406 = vmatprep.subr.bf16.mxu0 0
        %3407 = vmatpush1.bf16.msra.mxu0 %v3398
        %3408 = vmatprep.subr.bf16.mxu0 0
        %3409 = vmatpush1.bf16.msra.mxu0 0
        %3410 = vmatprep.subr.bf16.mxu0 0
        %3411 = vmatpush1.bf16.msra.mxu0 0
        %3412 = vmatprep.subr.bf16.mxu0 0
        %3413 = vmatpush1.bf16.msra.mxu0 0
        %3414 = vmatprep.subr.bf16.mxu0 0
        %3415 = vmatpush1.bf16.msra.mxu0 0
        %3416 = vmatprep.subr.bf16.mxu0 0
        %3417 = vmatpush1.bf16.msra.mxu0 0
        %3418 = vmatprep.subr.bf16.mxu0 0
        %3419 = vmatpush1.bf16.msra.mxu0 0
        %3420 = vmatprep.subr.bf16.mxu0 0
        %3421 = vmatpush1.bf16.msra.mxu0 0
        %3422 = vmatprep.subr.bf16.mxu0 0
        %3423 = vmatpush1.bf16.msra.mxu0 0
        %3424 = vmatprep.subr.bf16.mxu0 0
        %3425 = vmatpush1.bf16.msra.mxu0 0
        %3426 = vmatprep.subr.bf16.mxu0 0
        %3427 = vmatpush1.bf16.msra.mxu0 0
        %3428 = vmatprep.subr.bf16.mxu0 0
        %3429 = vmatpush1.bf16.msra.mxu0 0
        %3430 = vmatprep.subr.bf16.mxu0 0
        %3431 = vmatpush1.bf16.msra.mxu0 0
        %3432 = vmatprep.subr.bf16.mxu0 0
        %3433 = vmatpush1.bf16.msra.mxu0 0
        %3434 = vmatprep.subr.bf16.mxu0 0
        %3435 = vmatpush1.bf16.msra.mxu0 0
        %3436 = vmatprep.mubr.bf16.mxu0 0
        %3437 = vmatmul.mubr.bf16.gmra.mrb[0].mxu0 %v3402
        %v3438 = vpop.f32.mrb[0].mxu0
        %v3439 = vadd.f32 0.0, %v3438
        %v3440 = vpop.f32.mrb[0].mxu0
        %v3441 = vpop.f32.mrb[0].mxu0
        %v3442 = vpop.f32.mrb[0].mxu0
        %3443 = vdwg.mxu0
        %v3444 = vadd.f32 %v3382, %v3439
        %v3445 = vld [vmem:[%s2939] ss:$2 sm:$0x7]
        %v3446 = vpack.c.bf16 %v3445, %v3445
        %v3447 = vld [vmem:[%s3 + $0x60] sm:$0xf]
        %v3448 = vld [vmem:[%s3 + $0x64] sm:$0xf]
        %v3449 = vld [vmem:[%s3 + $0x68] sm:$0xf]
        %v3450 = vld [vmem:[%s3 + $0x6c] sm:$0xf]
        %v3455 = vunpack.c.l.b16 %v3447
        %v3456 = vunpack.c.l.b16 %v3448
        %v3457 = vunpack.c.l.b16 %v3449
        %v3458 = vunpack.c.l.b16 %v3450
        %v3459 = vpack.c.b16 %v3456, %v3455
        %v3460 = vpack.c.b16 %v3458, %v3457
        %v3464 = vsel %vm1040, %v3446, 0
        %3466 = vmatprep.subr.bf16.mxu0 0
        %3467 = vmatpush1.bf16.msra.mxu0 %v3459
        %3468 = vmatprep.subr.bf16.mxu0 0
        %3469 = vmatpush1.bf16.msra.mxu0 %v3460
        %3470 = vmatprep.subr.bf16.mxu0 0
        %3471 = vmatpush1.bf16.msra.mxu0 0
        %3472 = vmatprep.subr.bf16.mxu0 0
        %3473 = vmatpush1.bf16.msra.mxu0 0
        %3474 = vmatprep.subr.bf16.mxu0 0
        %3475 = vmatpush1.bf16.msra.mxu0 0
        %3476 = vmatprep.subr.bf16.mxu0 0
        %3477 = vmatpush1.bf16.msra.mxu0 0
        %3478 = vmatprep.subr.bf16.mxu0 0
        %3479 = vmatpush1.bf16.msra.mxu0 0
        %3480 = vmatprep.subr.bf16.mxu0 0
        %3481 = vmatpush1.bf16.msra.mxu0 0
        %3482 = vmatprep.subr.bf16.mxu0 0
        %3483 = vmatpush1.bf16.msra.mxu0 0
        %3484 = vmatprep.subr.bf16.mxu0 0
        %3485 = vmatpush1.bf16.msra.mxu0 0
        %3486 = vmatprep.subr.bf16.mxu0 0
        %3487 = vmatpush1.bf16.msra.mxu0 0
        %3488 = vmatprep.subr.bf16.mxu0 0
        %3489 = vmatpush1.bf16.msra.mxu0 0
        %3490 = vmatprep.subr.bf16.mxu0 0
        %3491 = vmatpush1.bf16.msra.mxu0 0
        %3492 = vmatprep.subr.bf16.mxu0 0
        %3493 = vmatpush1.bf16.msra.mxu0 0
        %3494 = vmatprep.subr.bf16.mxu0 0
        %3495 = vmatpush1.bf16.msra.mxu0 0
        %3496 = vmatprep.subr.bf16.mxu0 0
        %3497 = vmatpush1.bf16.msra.mxu0 0
        %3498 = vmatprep.mubr.bf16.mxu0 0
        %3499 = vmatmul.mubr.bf16.gmra.mrb[0].mxu0 %v3464
        %v3500 = vpop.f32.mrb[0].mxu0
        %v3501 = vadd.f32 0.0, %v3500
        %v3502 = vpop.f32.mrb[0].mxu0
        %v3503 = vpop.f32.mrb[0].mxu0
        %v3504 = vpop.f32.mrb[0].mxu0
        %3505 = vdwg.mxu0
        %v3506 = vadd.f32 %v3444, %v3501
        %v3507 = vld [vmem:[%s3002] ss:$2 sm:$0x7]
        %v3508 = vpack.c.bf16 %v3507, %v3507
        %v3509 = vld [vmem:[%s3 + $0x70] sm:$0xf]
        %v3510 = vld [vmem:[%s3 + $0x74] sm:$0xf]
        %v3511 = vld [vmem:[%s3 + $0x78] sm:$0xf]
        %v3512 = vld [vmem:[%s3 + $0x7c] sm:$0xf]
        %v3517 = vunpack.c.l.b16 %v3509
        %v3518 = vunpack.c.l.b16 %v3510
        %v3519 = vunpack.c.l.b16 %v3511
        %v3520 = vunpack.c.l.b16 %v3512
        %v3521 = vpack.c.b16 %v3518, %v3517
        %v3522 = vpack.c.b16 %v3520, %v3519
        %v3526 = vsel %vm1040, %v3508, 0
        %3528 = vmatprep.subr.bf16.mxu0 0
        %3529 = vmatpush1.bf16.msra.mxu0 %v3521
        %3530 = vmatprep.subr.bf16.mxu0 0
        %3531 = vmatpush1.bf16.msra.mxu0 %v3522
        %3532 = vmatprep.subr.bf16.mxu0 0
        %3533 = vmatpush1.bf16.msra.mxu0 0
        %3534 = vmatprep.subr.bf16.mxu0 0
        %3535 = vmatpush1.bf16.msra.mxu0 0
        %3536 = vmatprep.subr.bf16.mxu0 0
        %3537 = vmatpush1.bf16.msra.mxu0 0
        %3538 = vmatprep.subr.bf16.mxu0 0
        %3539 = vmatpush1.bf16.msra.mxu0 0
        %3540 = vmatprep.subr.bf16.mxu0 0
        %3541 = vmatpush1.bf16.msra.mxu0 0
        %3542 = vmatprep.subr.bf16.mxu0 0
        %3543 = vmatpush1.bf16.msra.mxu0 0
        %3544 = vmatprep.subr.bf16.mxu0 0
        %3545 = vmatpush1.bf16.msra.mxu0 0
        %3546 = vmatprep.subr.bf16.mxu0 0
        %3547 = vmatpush1.bf16.msra.mxu0 0
        %3548 = vmatprep.subr.bf16.mxu0 0
        %3549 = vmatpush1.bf16.msra.mxu0 0
        %3550 = vmatprep.subr.bf16.mxu0 0
        %3551 = vmatpush1.bf16.msra.mxu0 0
        %3552 = vmatprep.subr.bf16.mxu0 0
        %3553 = vmatpush1.bf16.msra.mxu0 0
        %3554 = vmatprep.subr.bf16.mxu0 0
        %3555 = vmatpush1.bf16.msra.mxu0 0
        %3556 = vmatprep.subr.bf16.mxu0 0
        %3557 = vmatpush1.bf16.msra.mxu0 0
        %3558 = vmatprep.subr.bf16.mxu0 0
        %3559 = vmatpush1.bf16.msra.mxu0 0
        %3560 = vmatprep.mubr.bf16.mxu0 0
        %3561 = vmatmul.mubr.bf16.gmra.mrb[0].mxu0 %v3526
        %v3562 = vpop.f32.mrb[0].mxu0
        %v3563 = vadd.f32 0.0, %v3562
        %v3564 = vpop.f32.mrb[0].mxu0
        %v3565 = vpop.f32.mrb[0].mxu0
        %v3566 = vpop.f32.mrb[0].mxu0
        %3567 = vdwg.mxu0
        %v3568 = vadd.f32 %v3506, %v3563
        %s3569 = scalar_lea.vmem [#allocation2], 54
        %v3570 = vld [vmem:[%s3569] ss:$2 sm:$0x7]
        %v3571 = vpack.c.bf16 %v3570, %v3570
        %v3572 = vld [vmem:[%s3 + $0x80] sm:$0xf]
        %v3573 = vld [vmem:[%s3 + $0x84] sm:$0xf]
        %v3574 = vld [vmem:[%s3 + $0x88] sm:$0xf]
        %v3575 = vld [vmem:[%s3 + $0x8c] sm:$0xf]
        %v3580 = vunpack.c.l.b16 %v3572
        %v3581 = vunpack.c.l.b16 %v3573
        %v3582 = vunpack.c.l.b16 %v3574
        %v3583 = vunpack.c.l.b16 %v3575
        %v3584 = vpack.c.b16 %v3581, %v3580
        %v3585 = vpack.c.b16 %v3583, %v3582
        %v3589 = vsel %vm1040, %v3571, 0
        %3591 = vmatprep.subr.bf16.mxu0 0
        %3592 = vmatpush1.bf16.msra.mxu0 %v3584
        %3593 = vmatprep.subr.bf16.mxu0 0
        %3594 = vmatpush1.bf16.msra.mxu0 %v3585
        %3595 = vmatprep.subr.bf16.mxu0 0
        %3596 = vmatpush1.bf16.msra.mxu0 0
        %3597 = vmatprep.subr.bf16.mxu0 0
        %3598 = vmatpush1.bf16.msra.mxu0 0
        %3599 = vmatprep.subr.bf16.mxu0 0
        %3600 = vmatpush1.bf16.msra.mxu0 0
        %3601 = vmatprep.subr.bf16.mxu0 0
        %3602 = vmatpush1.bf16.msra.mxu0 0
        %3603 = vmatprep.subr.bf16.mxu0 0
        %3604 = vmatpush1.bf16.msra.mxu0 0
        %3605 = vmatprep.subr.bf16.mxu0 0
        %3606 = vmatpush1.bf16.msra.mxu0 0
        %3607 = vmatprep.subr.bf16.mxu0 0
        %3608 = vmatpush1.bf16.msra.mxu0 0
        %3609 = vmatprep.subr.bf16.mxu0 0
        %3610 = vmatpush1.bf16.msra.mxu0 0
        %3611 = vmatprep.subr.bf16.mxu0 0
        %3612 = vmatpush1.bf16.msra.mxu0 0
        %3613 = vmatprep.subr.bf16.mxu0 0
        %3614 = vmatpush1.bf16.msra.mxu0 0
        %3615 = vmatprep.subr.bf16.mxu0 0
        %3616 = vmatpush1.bf16.msra.mxu0 0
        %3617 = vmatprep.subr.bf16.mxu0 0
        %3618 = vmatpush1.bf16.msra.mxu0 0
        %3619 = vmatprep.subr.bf16.mxu0 0
        %3620 = vmatpush1.bf16.msra.mxu0 0
        %3621 = vmatprep.subr.bf16.mxu0 0
        %3622 = vmatpush1.bf16.msra.mxu0 0
        %3623 = vmatprep.mubr.bf16.mxu0 0
        %3624 = vmatmul.mubr.bf16.gmra.mrb[0].mxu0 %v3589
        %v3625 = vpop.f32.mrb[0].mxu0
        %v3626 = vadd.f32 0.0, %v3625
        %v3627 = vpop.f32.mrb[0].mxu0
        %v3628 = vpop.f32.mrb[0].mxu0
        %v3629 = vpop.f32.mrb[0].mxu0
        %3630 = vdwg.mxu0
        %v3631 = vadd.f32 %v3568, %v3626
        %s3632 = scalar_lea.vmem [#allocation2], 55
        %v3633 = vld [vmem:[%s3632] ss:$2 sm:$0x7]
        %v3634 = vpack.c.bf16 %v3633, %v3633
        %v3635 = vld [vmem:[%s3 + $0x90] sm:$0xf]
        %v3636 = vld [vmem:[%s3 + $0x94] sm:$0xf]
        %v3637 = vld [vmem:[%s3 + $0x98] sm:$0xf]
        %v3638 = vld [vmem:[%s3 + $0x9c] sm:$0xf]
        %v3643 = vunpack.c.l.b16 %v3635
        %v3644 = vunpack.c.l.b16 %v3636
        %v3645 = vunpack.c.l.b16 %v3637
        %v3646 = vunpack.c.l.b16 %v3638
        %v3647 = vpack.c.b16 %v3644, %v3643
        %v3648 = vpack.c.b16 %v3646, %v3645
        %v3652 = vsel %vm1040, %v3634, 0
        %3654 = vmatprep.subr.bf16.mxu0 0
        %3655 = vmatpush1.bf16.msra.mxu0 %v3647
        %3656 = vmatprep.subr.bf16.mxu0 0
        %3657 = vmatpush1.bf16.msra.mxu0 %v3648
        %3658 = vmatprep.subr.bf16.mxu0 0
        %3659 = vmatpush1.bf16.msra.mxu0 0
        %3660 = vmatprep.subr.bf16.mxu0 0
        %3661 = vmatpush1.bf16.msra.mxu0 0
        %3662 = vmatprep.subr.bf16.mxu0 0
        %3663 = vmatpush1.bf16.msra.mxu0 0
        %3664 = vmatprep.subr.bf16.mxu0 0
        %3665 = vmatpush1.bf16.msra.mxu0 0
        %3666 = vmatprep.subr.bf16.mxu0 0
        %3667 = vmatpush1.bf16.msra.mxu0 0
        %3668 = vmatprep.subr.bf16.mxu0 0
        %3669 = vmatpush1.bf16.msra.mxu0 0
        %3670 = vmatprep.subr.bf16.mxu0 0
        %3671 = vmatpush1.bf16.msra.mxu0 0
        %3672 = vmatprep.subr.bf16.mxu0 0
        %3673 = vmatpush1.bf16.msra.mxu0 0
        %3674 = vmatprep.subr.bf16.mxu0 0
        %3675 = vmatpush1.bf16.msra.mxu0 0
        %3676 = vmatprep.subr.bf16.mxu0 0
        %3677 = vmatpush1.bf16.msra.mxu0 0
        %3678 = vmatprep.subr.bf16.mxu0 0
        %3679 = vmatpush1.bf16.msra.mxu0 0
        %3680 = vmatprep.subr.bf16.mxu0 0
        %3681 = vmatpush1.bf16.msra.mxu0 0
        %3682 = vmatprep.subr.bf16.mxu0 0
        %3683 = vmatpush1.bf16.msra.mxu0 0
        %3684 = vmatprep.subr.bf16.mxu0 0
        %3685 = vmatpush1.bf16.msra.mxu0 0
        %3686 = vmatprep.mubr.bf16.mxu0 0
        %3687 = vmatmul.mubr.bf16.gmra.mrb[0].mxu0 %v3652
        %v3688 = vpop.f32.mrb[0].mxu0
        %v3689 = vadd.f32 0.0, %v3688
        %v3690 = vpop.f32.mrb[0].mxu0
        %v3691 = vpop.f32.mrb[0].mxu0
        %v3692 = vpop.f32.mrb[0].mxu0
        %3693 = vdwg.mxu0
        %v3694 = vadd.f32 %v3631, %v3689
        %s3695 = scalar_lea.vmem [#allocation2], 56
        %v3696 = vld [vmem:[%s3695] ss:$2 sm:$0x7]
        %v3697 = vpack.c.bf16 %v3696, %v3696
        %v3698 = vld [vmem:[%s3 + $0xa0] sm:$0xf]
        %v3699 = vld [vmem:[%s3 + $0xa4] sm:$0xf]
        %v3700 = vld [vmem:[%s3 + $0xa8] sm:$0xf]
        %v3701 = vld [vmem:[%s3 + $0xac] sm:$0xf]
        %v3706 = vunpack.c.l.b16 %v3698
        %v3707 = vunpack.c.l.b16 %v3699
        %v3708 = vunpack.c.l.b16 %v3700
        %v3709 = vunpack.c.l.b16 %v3701
        %v3710 = vpack.c.b16 %v3707, %v3706
        %v3711 = vpack.c.b16 %v3709, %v3708
        %v3715 = vsel %vm1040, %v3697, 0
        %3717 = vmatprep.subr.bf16.mxu0 0
        %3718 = vmatpush1.bf16.msra.mxu0 %v3710
        %3719 = vmatprep.subr.bf16.mxu0 0
        %3720 = vmatpush1.bf16.msra.mxu0 %v3711
        %3721 = vmatprep.subr.bf16.mxu0 0
        %3722 = vmatpush1.bf16.msra.mxu0 0
        %3723 = vmatprep.subr.bf16.mxu0 0
        %3724 = vmatpush1.bf16.msra.mxu0 0
        %3725 = vmatprep.subr.bf16.mxu0 0
        %3726 = vmatpush1.bf16.msra.mxu0 0
        %3727 = vmatprep.subr.bf16.mxu0 0
        %3728 = vmatpush1.bf16.msra.mxu0 0
        %3729 = vmatprep.subr.bf16.mxu0 0
        %3730 = vmatpush1.bf16.msra.mxu0 0
        %3731 = vmatprep.subr.bf16.mxu0 0
        %3732 = vmatpush1.bf16.msra.mxu0 0
        %3733 = vmatprep.subr.bf16.mxu0 0
        %3734 = vmatpush1.bf16.msra.mxu0 0
        %3735 = vmatprep.subr.bf16.mxu0 0
        %3736 = vmatpush1.bf16.msra.mxu0 0
        %3737 = vmatprep.subr.bf16.mxu0 0
        %3738 = vmatpush1.bf16.msra.mxu0 0
        %3739 = vmatprep.subr.bf16.mxu0 0
        %3740 = vmatpush1.bf16.msra.mxu0 0
        %3741 = vmatprep.subr.bf16.mxu0 0
        %3742 = vmatpush1.bf16.msra.mxu0 0
        %3743 = vmatprep.subr.bf16.mxu0 0
        %3744 = vmatpush1.bf16.msra.mxu0 0
        %3745 = vmatprep.subr.bf16.mxu0 0
        %3746 = vmatpush1.bf16.msra.mxu0 0
        %3747 = vmatprep.subr.bf16.mxu0 0
        %3748 = vmatpush1.bf16.msra.mxu0 0
        %3749 = vmatprep.mubr.bf16.mxu0 0
        %3750 = vmatmul.mubr.bf16.gmra.mrb[0].mxu0 %v3715
        %v3751 = vpop.f32.mrb[0].mxu0
        %v3752 = vadd.f32 0.0, %v3751
        %v3753 = vpop.f32.mrb[0].mxu0
        %v3754 = vpop.f32.mrb[0].mxu0
        %v3755 = vpop.f32.mrb[0].mxu0
        %3756 = vdwg.mxu0
        %v3757 = vadd.f32 %v3694, %v3752
        %s3758 = scalar_lea.vmem [#allocation2], 57
        %v3759 = vld [vmem:[%s3758] ss:$2 sm:$0x7]
        %v3760 = vpack.c.bf16 %v3759, %v3759
        %v3761 = vld [vmem:[%s3 + $0xb0] sm:$0xf]
        %v3762 = vld [vmem:[%s3 + $0xb4] sm:$0xf]
        %v3763 = vld [vmem:[%s3 + $0xb8] sm:$0xf]
        %v3764 = vld [vmem:[%s3 + $0xbc] sm:$0xf]
        %v3769 = vunpack.c.l.b16 %v3761
        %v3770 = vunpack.c.l.b16 %v3762
        %v3771 = vunpack.c.l.b16 %v3763
        %v3772 = vunpack.c.l.b16 %v3764
        %v3773 = vpack.c.b16 %v3770, %v3769
        %v3774 = vpack.c.b16 %v3772, %v3771
        %v3778 = vsel %vm1040, %v3760, 0
        %3780 = vmatprep.subr.bf16.mxu0 0
        %3781 = vmatpush1.bf16.msra.mxu0 %v3773
        %3782 = vmatprep.subr.bf16.mxu0 0
        %3783 = vmatpush1.bf16.msra.mxu0 %v3774
        %3784 = vmatprep.subr.bf16.mxu0 0
        %3785 = vmatpush1.bf16.msra.mxu0 0
        %3786 = vmatprep.subr.bf16.mxu0 0
        %3787 = vmatpush1.bf16.msra.mxu0 0
        %3788 = vmatprep.subr.bf16.mxu0 0
        %3789 = vmatpush1.bf16.msra.mxu0 0
        %3790 = vmatprep.subr.bf16.mxu0 0
        %3791 = vmatpush1.bf16.msra.mxu0 0
        %3792 = vmatprep.subr.bf16.mxu0 0
        %3793 = vmatpush1.bf16.msra.mxu0 0
        %3794 = vmatprep.subr.bf16.mxu0 0
        %3795 = vmatpush1.bf16.msra.mxu0 0
        %3796 = vmatprep.subr.bf16.mxu0 0
        %3797 = vmatpush1.bf16.msra.mxu0 0
        %3798 = vmatprep.subr.bf16.mxu0 0
        %3799 = vmatpush1.bf16.msra.mxu0 0
        %3800 = vmatprep.subr.bf16.mxu0 0
        %3801 = vmatpush1.bf16.msra.mxu0 0
        %3802 = vmatprep.subr.bf16.mxu0 0
        %3803 = vmatpush1.bf16.msra.mxu0 0
        %3804 = vmatprep.subr.bf16.mxu0 0
        %3805 = vmatpush1.bf16.msra.mxu0 0
        %3806 = vmatprep.subr.bf16.mxu0 0
        %3807 = vmatpush1.bf16.msra.mxu0 0
        %3808 = vmatprep.subr.bf16.mxu0 0
        %3809 = vmatpush1.bf16.msra.mxu0 0
        %3810 = vmatprep.subr.bf16.mxu0 0
        %3811 = vmatpush1.bf16.msra.mxu0 0
        %3812 = vmatprep.mubr.bf16.mxu0 0
        %3813 = vmatmul.mubr.bf16.gmra.mrb[0].mxu0 %v3778
        %v3814 = vpop.f32.mrb[0].mxu0
        %v3815 = vadd.f32 0.0, %v3814
        %v3816 = vpop.f32.mrb[0].mxu0
        %v3817 = vpop.f32.mrb[0].mxu0
        %v3818 = vpop.f32.mrb[0].mxu0
        %3819 = vdwg.mxu0
        %v3820 = vadd.f32 %v3757, %v3815
        %s3821 = scalar_lea.vmem [#allocation2], 63
        %v3822 = vld [vmem:[%s3821] ss:$2 sm:$0x7]
        %v3823 = vpack.c.bf16 %v3822, %v3822
        %v3824 = vld [vmem:[%s3 + $0xc0] sm:$0xf]
        %v3825 = vld [vmem:[%s3 + $0xc4] sm:$0xf]
        %v3826 = vld [vmem:[%s3 + $0xc8] sm:$0xf]
        %v3827 = vld [vmem:[%s3 + $0xcc] sm:$0xf]
        %v3832 = vunpack.c.l.b16 %v3824
        %v3833 = vunpack.c.l.b16 %v3825
        %v3834 = vunpack.c.l.b16 %v3826
        %v3835 = vunpack.c.l.b16 %v3827
        %v3836 = vpack.c.b16 %v3833, %v3832
        %v3837 = vpack.c.b16 %v3835, %v3834
        %v3841 = vsel %vm1040, %v3823, 0
        %3843 = vmatprep.subr.bf16.mxu0 0
        %3844 = vmatpush1.bf16.msra.mxu0 %v3836
        %3845 = vmatprep.subr.bf16.mxu0 0
        %3846 = vmatpush1.bf16.msra.mxu0 %v3837
        %3847 = vmatprep.subr.bf16.mxu0 0
        %3848 = vmatpush1.bf16.msra.mxu0 0
        %3849 = vmatprep.subr.bf16.mxu0 0
        %3850 = vmatpush1.bf16.msra.mxu0 0
        %3851 = vmatprep.subr.bf16.mxu0 0
        %3852 = vmatpush1.bf16.msra.mxu0 0
        %3853 = vmatprep.subr.bf16.mxu0 0
        %3854 = vmatpush1.bf16.msra.mxu0 0
        %3855 = vmatprep.subr.bf16.mxu0 0
        %3856 = vmatpush1.bf16.msra.mxu0 0
        %3857 = vmatprep.subr.bf16.mxu0 0
        %3858 = vmatpush1.bf16.msra.mxu0 0
        %3859 = vmatprep.subr.bf16.mxu0 0
        %3860 = vmatpush1.bf16.msra.mxu0 0
        %3861 = vmatprep.subr.bf16.mxu0 0
        %3862 = vmatpush1.bf16.msra.mxu0 0
        %3863 = vmatprep.subr.bf16.mxu0 0
        %3864 = vmatpush1.bf16.msra.mxu0 0
        %3865 = vmatprep.subr.bf16.mxu0 0
        %3866 = vmatpush1.bf16.msra.mxu0 0
        %3867 = vmatprep.subr.bf16.mxu0 0
        %3868 = vmatpush1.bf16.msra.mxu0 0
        %3869 = vmatprep.subr.bf16.mxu0 0
        %3870 = vmatpush1.bf16.msra.mxu0 0
        %3871 = vmatprep.subr.bf16.mxu0 0
        %3872 = vmatpush1.bf16.msra.mxu0 0
        %3873 = vmatprep.subr.bf16.mxu0 0
        %3874 = vmatpush1.bf16.msra.mxu0 0
        %3875 = vmatprep.mubr.bf16.mxu0 0
        %3876 = vmatmul.mubr.bf16.gmra.mrb[0].mxu0 %v3841
        %v3877 = vpop.f32.mrb[0].mxu0
        %v3878 = vadd.f32 0.0, %v3877
        %v3879 = vpop.f32.mrb[0].mxu0
        %v3880 = vpop.f32.mrb[0].mxu0
        %v3881 = vpop.f32.mrb[0].mxu0
        %3882 = vdwg.mxu0
        %v3883 = vadd.f32 %v3820, %v3878
        %s3884 = scalar_lea.vmem [#allocation2], 64
        %v3885 = vld [vmem:[%s3884] ss:$2 sm:$0x7]
        %v3886 = vpack.c.bf16 %v3885, %v3885
        %v3887 = vld [vmem:[%s3 + $0xd0] sm:$0xf]
        %v3888 = vld [vmem:[%s3 + $0xd4] sm:$0xf]
        %v3889 = vld [vmem:[%s3 + $0xd8] sm:$0xf]
        %v3890 = vld [vmem:[%s3 + $0xdc] sm:$0xf]
        %v3895 = vunpack.c.l.b16 %v3887
        %v3896 = vunpack.c.l.b16 %v3888
        %v3897 = vunpack.c.l.b16 %v3889
        %v3898 = vunpack.c.l.b16 %v3890
        %v3899 = vpack.c.b16 %v3896, %v3895
        %v3900 = vpack.c.b16 %v3898, %v3897
        %v3904 = vsel %vm1040, %v3886, 0
        %3906 = vmatprep.subr.bf16.mxu0 0
        %3907 = vmatpush1.bf16.msra.mxu0 %v3899
        %3908 = vmatprep.subr.bf16.mxu0 0
        %3909 = vmatpush1.bf16.msra.mxu0 %v3900
        %3910 = vmatprep.subr.bf16.mxu0 0
        %3911 = vmatpush1.bf16.msra.mxu0 0
        %3912 = vmatprep.subr.bf16.mxu0 0
        %3913 = vmatpush1.bf16.msra.mxu0 0
        %3914 = vmatprep.subr.bf16.mxu0 0
        %3915 = vmatpush1.bf16.msra.mxu0 0
        %3916 = vmatprep.subr.bf16.mxu0 0
        %3917 = vmatpush1.bf16.msra.mxu0 0
        %3918 = vmatprep.subr.bf16.mxu0 0
        %3919 = vmatpush1.bf16.msra.mxu0 0
        %3920 = vmatprep.subr.bf16.mxu0 0
        %3921 = vmatpush1.bf16.msra.mxu0 0
        %3922 = vmatprep.subr.bf16.mxu0 0
        %3923 = vmatpush1.bf16.msra.mxu0 0
        %3924 = vmatprep.subr.bf16.mxu0 0
        %3925 = vmatpush1.bf16.msra.mxu0 0
        %3926 = vmatprep.subr.bf16.mxu0 0
        %3927 = vmatpush1.bf16.msra.mxu0 0
        %3928 = vmatprep.subr.bf16.mxu0 0
        %3929 = vmatpush1.bf16.msra.mxu0 0
        %3930 = vmatprep.subr.bf16.mxu0 0
        %3931 = vmatpush1.bf16.msra.mxu0 0
        %3932 = vmatprep.subr.bf16.mxu0 0
        %3933 = vmatpush1.bf16.msra.mxu0 0
        %3934 = vmatprep.subr.bf16.mxu0 0
        %3935 = vmatpush1.bf16.msra.mxu0 0
        %3936 = vmatprep.subr.bf16.mxu0 0
        %3937 = vmatpush1.bf16.msra.mxu0 0
        %3938 = vmatprep.mubr.bf16.mxu0 0
        %3939 = vmatmul.mubr.bf16.gmra.mrb[0].mxu0 %v3904
        %v3940 = vpop.f32.mrb[0].mxu0
        %v3941 = vadd.f32 0.0, %v3940
        %v3942 = vpop.f32.mrb[0].mxu0
        %v3943 = vpop.f32.mrb[0].mxu0
        %v3944 = vpop.f32.mrb[0].mxu0
        %3945 = vdwg.mxu0
        %v3946 = vadd.f32 %v3883, %v3941
        %s3947 = scalar_lea.vmem [#allocation2], 65
        %v3948 = vld [vmem:[%s3947] ss:$2 sm:$0x7]
        %v3949 = vpack.c.bf16 %v3948, %v3948
        %v3950 = vld [vmem:[%s3 + $0xe0] sm:$0xf]
        %v3951 = vld [vmem:[%s3 + $0xe4] sm:$0xf]
        %v3952 = vld [vmem:[%s3 + $0xe8] sm:$0xf]
        %v3953 = vld [vmem:[%s3 + $0xec] sm:$0xf]
        %v3958 = vunpack.c.l.b16 %v3950
        %v3959 = vunpack.c.l.b16 %v3951
        %v3960 = vunpack.c.l.b16 %v3952
        %v3961 = vunpack.c.l.b16 %v3953
        %v3962 = vpack.c.b16 %v3959, %v3958
        %v3963 = vpack.c.b16 %v3961, %v3960
        %v3967 = vsel %vm1040, %v3949, 0
        %3969 = vmatprep.subr.bf16.mxu0 0
        %3970 = vmatpush1.bf16.msra.mxu0 %v3962
        %3971 = vmatprep.subr.bf16.mxu0 0
        %3972 = vmatpush1.bf16.msra.mxu0 %v3963
        %3973 = vmatprep.subr.bf16.mxu0 0
        %3974 = vmatpush1.bf16.msra.mxu0 0
        %3975 = vmatprep.subr.bf16.mxu0 0
        %3976 = vmatpush1.bf16.msra.mxu0 0
        %3977 = vmatprep.subr.bf16.mxu0 0
        %3978 = vmatpush1.bf16.msra.mxu0 0
        %3979 = vmatprep.subr.bf16.mxu0 0
        %3980 = vmatpush1.bf16.msra.mxu0 0
        %3981 = vmatprep.subr.bf16.mxu0 0
        %3982 = vmatpush1.bf16.msra.mxu0 0
        %3983 = vmatprep.subr.bf16.mxu0 0
        %3984 = vmatpush1.bf16.msra.mxu0 0
        %3985 = vmatprep.subr.bf16.mxu0 0
        %3986 = vmatpush1.bf16.msra.mxu0 0
        %3987 = vmatprep.subr.bf16.mxu0 0
        %3988 = vmatpush1.bf16.msra.mxu0 0
        %3989 = vmatprep.subr.bf16.mxu0 0
        %3990 = vmatpush1.bf16.msra.mxu0 0
        %3991 = vmatprep.subr.bf16.mxu0 0
        %3992 = vmatpush1.bf16.msra.mxu0 0
        %3993 = vmatprep.subr.bf16.mxu0 0
        %3994 = vmatpush1.bf16.msra.mxu0 0
        %3995 = vmatprep.subr.bf16.mxu0 0
        %3996 = vmatpush1.bf16.msra.mxu0 0
        %3997 = vmatprep.subr.bf16.mxu0 0
        %3998 = vmatpush1.bf16.msra.mxu0 0
        %3999 = vmatprep.subr.bf16.mxu0 0
        %4000 = vmatpush1.bf16.msra.mxu0 0
        %4001 = vmatprep.mubr.bf16.mxu0 0
        %4002 = vmatmul.mubr.bf16.gmra.mrb[0].mxu0 %v3967
        %v4003 = vpop.f32.mrb[0].mxu0
        %v4004 = vadd.f32 0.0, %v4003
        %v4005 = vpop.f32.mrb[0].mxu0
        %v4006 = vpop.f32.mrb[0].mxu0
        %v4007 = vpop.f32.mrb[0].mxu0
        %4008 = vdwg.mxu0
        %v4009 = vadd.f32 %v3946, %v4004
        %s4010 = scalar_lea.vmem [#allocation2], 66
        %v4011 = vld [vmem:[%s4010] ss:$2 sm:$0x7]
        %v4012 = vpack.c.bf16 %v4011, %v4011
        %v4013 = vld [vmem:[%s3 + $0xf0] sm:$0xf]
        %v4014 = vld [vmem:[%s3 + $0xf4] sm:$0xf]
        %v4015 = vld [vmem:[%s3 + $0xf8] sm:$0xf]
        %v4016 = vld [vmem:[%s3 + $0xfc] sm:$0xf]
        %v4021 = vunpack.c.l.b16 %v4013
        %v4022 = vunpack.c.l.b16 %v4014
        %v4023 = vunpack.c.l.b16 %v4015
        %v4024 = vunpack.c.l.b16 %v4016
        %v4025 = vpack.c.b16 %v4022, %v4021
        %v4026 = vpack.c.b16 %v4024, %v4023
        %v4030 = vsel %vm1040, %v4012, 0
        %4032 = vmatprep.subr.bf16.mxu0 0
        %4033 = vmatpush1.bf16.msra.mxu0 %v4025
        %4034 = vmatprep.subr.bf16.mxu0 0
        %4035 = vmatpush1.bf16.msra.mxu0 %v4026
        %4036 = vmatprep.subr.bf16.mxu0 0
        %4037 = vmatpush1.bf16.msra.mxu0 0
        %4038 = vmatprep.subr.bf16.mxu0 0
        %4039 = vmatpush1.bf16.msra.mxu0 0
        %4040 = vmatprep.subr.bf16.mxu0 0
        %4041 = vmatpush1.bf16.msra.mxu0 0
        %4042 = vmatprep.subr.bf16.mxu0 0
        %4043 = vmatpush1.bf16.msra.mxu0 0
        %4044 = vmatprep.subr.bf16.mxu0 0
        %4045 = vmatpush1.bf16.msra.mxu0 0
        %4046 = vmatprep.subr.bf16.mxu0 0
        %4047 = vmatpush1.bf16.msra.mxu0 0
        %4048 = vmatprep.subr.bf16.mxu0 0
        %4049 = vmatpush1.bf16.msra.mxu0 0
        %4050 = vmatprep.subr.bf16.mxu0 0
        %4051 = vmatpush1.bf16.msra.mxu0 0
        %4052 = vmatprep.subr.bf16.mxu0 0
        %4053 = vmatpush1.bf16.msra.mxu0 0
        %4054 = vmatprep.subr.bf16.mxu0 0
        %4055 = vmatpush1.bf16.msra.mxu0 0
        %4056 = vmatprep.subr.bf16.mxu0 0
        %4057 = vmatpush1.bf16.msra.mxu0 0
        %4058 = vmatprep.subr.bf16.mxu0 0
        %4059 = vmatpush1.bf16.msra.mxu0 0
        %4060 = vmatprep.subr.bf16.mxu0 0
        %4061 = vmatpush1.bf16.msra.mxu0 0
        %4062 = vmatprep.subr.bf16.mxu0 0
        %4063 = vmatpush1.bf16.msra.mxu0 0
        %4064 = vmatprep.mubr.bf16.mxu0 0
        %4065 = vmatmul.mubr.bf16.gmra.mrb[0].mxu0 %v4030
        %v4066 = vpop.f32.mrb[0].mxu0
        %v4067 = vadd.f32 0.0, %v4066
        %v4068 = vpop.f32.mrb[0].mxu0
        %v4069 = vpop.f32.mrb[0].mxu0
        %v4070 = vpop.f32.mrb[0].mxu0
        %4071 = vdwg.mxu0
        %v4072 = vadd.f32 %v4009, %v4067
        %v4073 = vld [vmem:[%s4] sm:$0x1]
        %v4075 = vlaneseq
        %v4076 = vshrl.u32 %v4075, 7
        %v4077 = vsub.s32 0, %v4076
        %v4078 = vrot.slane %v4073, %v4077
        %v4080 = vadd.f32 %v4072, %v4078
        %v4081 = vmax.f32 %v4080, 0.0
        %4082 = vst.msk [vmem:[#allocation3 + $0x6] sm:$0x7] %vm2065, %v4081
        %v4083 = vld [vmem:[#allocation3] sm:$0x1]
        %v4084 = vpack.c.bf16 %v4083, %v4083
        %v4085 = vld [vmem:[%s5] sm:$0xf]
        %v4086 = vld [vmem:[%s5 + $0x4] sm:$0xf]
        %v4087 = vld [vmem:[%s5 + $0x8] sm:$0xf]
        %v4088 = vld [vmem:[%s5 + $0xc] sm:$0xf]
        %v4089 = vld [vmem:[%s5 + $0x10] sm:$0xf]
        %v4090 = vld [vmem:[%s5 + $0x14] sm:$0xf]
        %v4091 = vld [vmem:[%s5 + $0x18] sm:$0xf]
        %v4092 = vld [vmem:[%s5 + $0x1c] sm:$0xf]
        %v4093 = vld [vmem:[#allocation3 + $0x1] sm:$0x1]
        %v4094 = vpack.c.bf16 %v4093, %v4093
        %v4095 = vld [vmem:[%s5 + $0x20] sm:$0xf]
        %v4096 = vld [vmem:[%s5 + $0x24] sm:$0xf]
        %v4097 = vld [vmem:[%s5 + $0x28] sm:$0xf]
        %v4098 = vld [vmem:[%s5 + $0x2c] sm:$0xf]
        %v4099 = vld [vmem:[%s5 + $0x30] sm:$0xf]
        %v4100 = vld [vmem:[%s5 + $0x34] sm:$0xf]
        %v4101 = vld [vmem:[%s5 + $0x38] sm:$0xf]
        %v4102 = vld [vmem:[%s5 + $0x3c] sm:$0xf]
        %v4111 = vunpack.c.l.b16 %v4095
        %v4112 = vunpack.c.l.b16 %v4096
        %v4113 = vunpack.c.l.b16 %v4097
        %v4114 = vunpack.c.l.b16 %v4098
        %v4115 = vunpack.c.l.b16 %v4099
        %v4116 = vunpack.c.l.b16 %v4100
        %v4117 = vunpack.c.l.b16 %v4101
        %v4118 = vunpack.c.l.b16 %v4102
        %v4119 = vpack.c.b16 %v4112, %v4111
        %v4120 = vpack.c.b16 %v4114, %v4113
        %v4121 = vpack.c.b16 %v4116, %v4115
        %v4122 = vpack.c.b16 %v4118, %v4117
        %v4128 = vsel %vm449, %v4094, 0
        %4130 = vmatprep.subr.bf16.mxu0 0
        %4131 = vmatpush1.bf16.msra.mxu0 %v4119
        %4132 = vmatprep.subr.bf16.mxu0 0
        %4133 = vmatpush1.bf16.msra.mxu0 %v4120
        %4134 = vmatprep.subr.bf16.mxu0 0
        %4135 = vmatpush1.bf16.msra.mxu0 %v4121
        %4136 = vmatprep.subr.bf16.mxu0 0
        %4137 = vmatpush1.bf16.msra.mxu0 %v4122
        %4138 = vmatprep.subr.bf16.mxu0 0
        %4139 = vmatpush1.bf16.msra.mxu0 0
        %4140 = vmatprep.subr.bf16.mxu0 0
        %4141 = vmatpush1.bf16.msra.mxu0 0
        %4142 = vmatprep.subr.bf16.mxu0 0
        %4143 = vmatpush1.bf16.msra.mxu0 0
        %4144 = vmatprep.subr.bf16.mxu0 0
        %4145 = vmatpush1.bf16.msra.mxu0 0
        %4146 = vmatprep.subr.bf16.mxu0 0
        %4147 = vmatpush1.bf16.msra.mxu0 0
        %4148 = vmatprep.subr.bf16.mxu0 0
        %4149 = vmatpush1.bf16.msra.mxu0 0
        %4150 = vmatprep.subr.bf16.mxu0 0
        %4151 = vmatpush1.bf16.msra.mxu0 0
        %4152 = vmatprep.subr.bf16.mxu0 0
        %4153 = vmatpush1.bf16.msra.mxu0 0
        %4154 = vmatprep.subr.bf16.mxu0 0
        %4155 = vmatpush1.bf16.msra.mxu0 0
        %4156 = vmatprep.subr.bf16.mxu0 0
        %4157 = vmatpush1.bf16.msra.mxu0 0
        %4158 = vmatprep.subr.bf16.mxu0 0
        %4159 = vmatpush1.bf16.msra.mxu0 0
        %4160 = vmatprep.subr.bf16.mxu0 0
        %4161 = vmatpush1.bf16.msra.mxu0 0
        %4162 = vmatprep.mubr.bf16.mxu0 0
        %4163 = vmatmul.mubr.bf16.gmra.mrb[0].mxu0 %v4128
        %v4164 = vpop.f32.mrb[0].mxu0
        %v4165 = vadd.f32 0.0, %v4164
        %v4166 = vpop.f32.mrb[0].mxu0
        %v4167 = vpop.f32.mrb[0].mxu0
        %v4168 = vpop.f32.mrb[0].mxu0
        %4169 = vdwg.mxu0
        %v4178 = vunpack.c.l.b16 %v4085
        %v4179 = vunpack.c.l.b16 %v4086
        %v4180 = vunpack.c.l.b16 %v4087
        %v4181 = vunpack.c.l.b16 %v4088
        %v4182 = vunpack.c.l.b16 %v4089
        %v4183 = vunpack.c.l.b16 %v4090
        %v4184 = vunpack.c.l.b16 %v4091
        %v4185 = vunpack.c.l.b16 %v4092
        %v4186 = vpack.c.b16 %v4179, %v4178
        %v4187 = vpack.c.b16 %v4181, %v4180
        %v4188 = vpack.c.b16 %v4183, %v4182
        %v4189 = vpack.c.b16 %v4185, %v4184
        %v4195 = vsel %vm449, %v4084, 0
        %4197 = vmatprep.subr.bf16.mxu0 0
        %4198 = vmatpush1.bf16.msra.mxu0 %v4186
        %4199 = vmatprep.subr.bf16.mxu0 0
        %4200 = vmatpush1.bf16.msra.mxu0 %v4187
        %4201 = vmatprep.subr.bf16.mxu0 0
        %4202 = vmatpush1.bf16.msra.mxu0 %v4188
        %4203 = vmatprep.subr.bf16.mxu0 0
        %4204 = vmatpush1.bf16.msra.mxu0 %v4189
        %4205 = vmatprep.subr.bf16.mxu0 0
        %4206 = vmatpush1.bf16.msra.mxu0 0
        %4207 = vmatprep.subr.bf16.mxu0 0
        %4208 = vmatpush1.bf16.msra.mxu0 0
        %4209 = vmatprep.subr.bf16.mxu0 0
        %4210 = vmatpush1.bf16.msra.mxu0 0
        %4211 = vmatprep.subr.bf16.mxu0 0
        %4212 = vmatpush1.bf16.msra.mxu0 0
        %4213 = vmatprep.subr.bf16.mxu0 0
        %4214 = vmatpush1.bf16.msra.mxu0 0
        %4215 = vmatprep.subr.bf16.mxu0 0
        %4216 = vmatpush1.bf16.msra.mxu0 0
        %4217 = vmatprep.subr.bf16.mxu0 0
        %4218 = vmatpush1.bf16.msra.mxu0 0
        %4219 = vmatprep.subr.bf16.mxu0 0
        %4220 = vmatpush1.bf16.msra.mxu0 0
        %4221 = vmatprep.subr.bf16.mxu0 0
        %4222 = vmatpush1.bf16.msra.mxu0 0
        %4223 = vmatprep.subr.bf16.mxu0 0
        %4224 = vmatpush1.bf16.msra.mxu0 0
        %4225 = vmatprep.subr.bf16.mxu0 0
        %4226 = vmatpush1.bf16.msra.mxu0 0
        %4227 = vmatprep.subr.bf16.mxu0 0
        %4228 = vmatpush1.bf16.msra.mxu0 0
        %4229 = vmatprep.mubr.bf16.mxu0 0
        %4230 = vmatmul.mubr.bf16.gmra.mrb[0].mxu0 %v4195
        %v4231 = vpop.f32.mrb[0].mxu0
        %v4232 = vadd.f32 %v4165, %v4231
        %v4233 = vpop.f32.mrb[0].mxu0
        %v4234 = vpop.f32.mrb[0].mxu0
        %v4235 = vpop.f32.mrb[0].mxu0
        %4236 = vdwg.mxu0
        %v4237 = vld [vmem:[#allocation3 + $0x2] sm:$0x1]
        %v4238 = vpack.c.bf16 %v4237, %v4237
        %v4239 = vld [vmem:[%s5 + $0x40] sm:$0xf]
        %v4240 = vld [vmem:[%s5 + $0x44] sm:$0xf]
        %v4241 = vld [vmem:[%s5 + $0x48] sm:$0xf]
        %v4242 = vld [vmem:[%s5 + $0x4c] sm:$0xf]
        %v4243 = vld [vmem:[%s5 + $0x50] sm:$0xf]
        %v4244 = vld [vmem:[%s5 + $0x54] sm:$0xf]
        %v4245 = vld [vmem:[%s5 + $0x58] sm:$0xf]
        %v4246 = vld [vmem:[%s5 + $0x5c] sm:$0xf]
        %v4255 = vunpack.c.l.b16 %v4239
        %v4256 = vunpack.c.l.b16 %v4240
        %v4257 = vunpack.c.l.b16 %v4241
        %v4258 = vunpack.c.l.b16 %v4242
        %v4259 = vunpack.c.l.b16 %v4243
        %v4260 = vunpack.c.l.b16 %v4244
        %v4261 = vunpack.c.l.b16 %v4245
        %v4262 = vunpack.c.l.b16 %v4246
        %v4263 = vpack.c.b16 %v4256, %v4255
        %v4264 = vpack.c.b16 %v4258, %v4257
        %v4265 = vpack.c.b16 %v4260, %v4259
        %v4266 = vpack.c.b16 %v4262, %v4261
        %v4272 = vsel %vm449, %v4238, 0
        %4274 = vmatprep.subr.bf16.mxu0 0
        %4275 = vmatpush1.bf16.msra.mxu0 %v4263
        %4276 = vmatprep.subr.bf16.mxu0 0
        %4277 = vmatpush1.bf16.msra.mxu0 %v4264
        %4278 = vmatprep.subr.bf16.mxu0 0
        %4279 = vmatpush1.bf16.msra.mxu0 %v4265
        %4280 = vmatprep.subr.bf16.mxu0 0
        %4281 = vmatpush1.bf16.msra.mxu0 %v4266
        %4282 = vmatprep.subr.bf16.mxu0 0
        %4283 = vmatpush1.bf16.msra.mxu0 0
        %4284 = vmatprep.subr.bf16.mxu0 0
        %4285 = vmatpush1.bf16.msra.mxu0 0
        %4286 = vmatprep.subr.bf16.mxu0 0
        %4287 = vmatpush1.bf16.msra.mxu0 0
        %4288 = vmatprep.subr.bf16.mxu0 0
        %4289 = vmatpush1.bf16.msra.mxu0 0
        %4290 = vmatprep.subr.bf16.mxu0 0
        %4291 = vmatpush1.bf16.msra.mxu0 0
        %4292 = vmatprep.subr.bf16.mxu0 0
        %4293 = vmatpush1.bf16.msra.mxu0 0
        %4294 = vmatprep.subr.bf16.mxu0 0
        %4295 = vmatpush1.bf16.msra.mxu0 0
        %4296 = vmatprep.subr.bf16.mxu0 0
        %4297 = vmatpush1.bf16.msra.mxu0 0
        %4298 = vmatprep.subr.bf16.mxu0 0
        %4299 = vmatpush1.bf16.msra.mxu0 0
        %4300 = vmatprep.subr.bf16.mxu0 0
        %4301 = vmatpush1.bf16.msra.mxu0 0
        %4302 = vmatprep.subr.bf16.mxu0 0
        %4303 = vmatpush1.bf16.msra.mxu0 0
        %4304 = vmatprep.subr.bf16.mxu0 0
        %4305 = vmatpush1.bf16.msra.mxu0 0
        %4306 = vmatprep.mubr.bf16.mxu0 0
        %4307 = vmatmul.mubr.bf16.gmra.mrb[0].mxu0 %v4272
        %v4308 = vpop.f32.mrb[0].mxu0
        %v4309 = vadd.f32 0.0, %v4308
        %v4310 = vpop.f32.mrb[0].mxu0
        %v4311 = vpop.f32.mrb[0].mxu0
        %v4312 = vpop.f32.mrb[0].mxu0
        %4313 = vdwg.mxu0
        %v4314 = vadd.f32 %v4232, %v4309
        %v4315 = vld [vmem:[#allocation3 + $0x3] sm:$0x1]
        %v4316 = vpack.c.bf16 %v4315, %v4315
        %v4317 = vld [vmem:[%s5 + $0x60] sm:$0xf]
        %v4318 = vld [vmem:[%s5 + $0x64] sm:$0xf]
        %v4319 = vld [vmem:[%s5 + $0x68] sm:$0xf]
        %v4320 = vld [vmem:[%s5 + $0x6c] sm:$0xf]
        %v4321 = vld [vmem:[%s5 + $0x70] sm:$0xf]
        %v4322 = vld [vmem:[%s5 + $0x74] sm:$0xf]
        %v4323 = vld [vmem:[%s5 + $0x78] sm:$0xf]
        %v4324 = vld [vmem:[%s5 + $0x7c] sm:$0xf]
        %v4333 = vunpack.c.l.b16 %v4317
        %v4334 = vunpack.c.l.b16 %v4318
        %v4335 = vunpack.c.l.b16 %v4319
        %v4336 = vunpack.c.l.b16 %v4320
        %v4337 = vunpack.c.l.b16 %v4321
        %v4338 = vunpack.c.l.b16 %v4322
        %v4339 = vunpack.c.l.b16 %v4323
        %v4340 = vunpack.c.l.b16 %v4324
        %v4341 = vpack.c.b16 %v4334, %v4333
        %v4342 = vpack.c.b16 %v4336, %v4335
        %v4343 = vpack.c.b16 %v4338, %v4337
        %v4344 = vpack.c.b16 %v4340, %v4339
        %v4350 = vsel %vm449, %v4316, 0
        %4352 = vmatprep.subr.bf16.mxu0 0
        %4353 = vmatpush1.bf16.msra.mxu0 %v4341
        %4354 = vmatprep.subr.bf16.mxu0 0
        %4355 = vmatpush1.bf16.msra.mxu0 %v4342
        %4356 = vmatprep.subr.bf16.mxu0 0
        %4357 = vmatpush1.bf16.msra.mxu0 %v4343
        %4358 = vmatprep.subr.bf16.mxu0 0
        %4359 = vmatpush1.bf16.msra.mxu0 %v4344
        %4360 = vmatprep.subr.bf16.mxu0 0
        %4361 = vmatpush1.bf16.msra.mxu0 0
        %4362 = vmatprep.subr.bf16.mxu0 0
        %4363 = vmatpush1.bf16.msra.mxu0 0
        %4364 = vmatprep.subr.bf16.mxu0 0
        %4365 = vmatpush1.bf16.msra.mxu0 0
        %4366 = vmatprep.subr.bf16.mxu0 0
        %4367 = vmatpush1.bf16.msra.mxu0 0
        %4368 = vmatprep.subr.bf16.mxu0 0
        %4369 = vmatpush1.bf16.msra.mxu0 0
        %4370 = vmatprep.subr.bf16.mxu0 0
        %4371 = vmatpush1.bf16.msra.mxu0 0
        %4372 = vmatprep.subr.bf16.mxu0 0
        %4373 = vmatpush1.bf16.msra.mxu0 0
        %4374 = vmatprep.subr.bf16.mxu0 0
        %4375 = vmatpush1.bf16.msra.mxu0 0
        %4376 = vmatprep.subr.bf16.mxu0 0
        %4377 = vmatpush1.bf16.msra.mxu0 0
        %4378 = vmatprep.subr.bf16.mxu0 0
        %4379 = vmatpush1.bf16.msra.mxu0 0
        %4380 = vmatprep.subr.bf16.mxu0 0
        %4381 = vmatpush1.bf16.msra.mxu0 0
        %4382 = vmatprep.subr.bf16.mxu0 0
        %4383 = vmatpush1.bf16.msra.mxu0 0
        %4384 = vmatprep.mubr.bf16.mxu0 0
        %4385 = vmatmul.mubr.bf16.gmra.mrb[0].mxu0 %v4350
        %v4386 = vpop.f32.mrb[0].mxu0
        %v4387 = vadd.f32 0.0, %v4386
        %v4388 = vpop.f32.mrb[0].mxu0
        %v4389 = vpop.f32.mrb[0].mxu0
        %v4390 = vpop.f32.mrb[0].mxu0
        %4391 = vdwg.mxu0
        %v4392 = vadd.f32 %v4314, %v4387
        %v4393 = vld [vmem:[#allocation3 + $0x4] sm:$0x1]
        %v4394 = vpack.c.bf16 %v4393, %v4393
        %v4395 = vld [vmem:[%s5 + $0x80] sm:$0xf]
        %v4396 = vld [vmem:[%s5 + $0x84] sm:$0xf]
        %v4397 = vld [vmem:[%s5 + $0x88] sm:$0xf]
        %v4398 = vld [vmem:[%s5 + $0x8c] sm:$0xf]
        %v4399 = vld [vmem:[%s5 + $0x90] sm:$0xf]
        %v4400 = vld [vmem:[%s5 + $0x94] sm:$0xf]
        %v4401 = vld [vmem:[%s5 + $0x98] sm:$0xf]
        %v4402 = vld [vmem:[%s5 + $0x9c] sm:$0xf]
        %v4411 = vunpack.c.l.b16 %v4395
        %v4412 = vunpack.c.l.b16 %v4396
        %v4413 = vunpack.c.l.b16 %v4397
        %v4414 = vunpack.c.l.b16 %v4398
        %v4415 = vunpack.c.l.b16 %v4399
        %v4416 = vunpack.c.l.b16 %v4400
        %v4417 = vunpack.c.l.b16 %v4401
        %v4418 = vunpack.c.l.b16 %v4402
        %v4419 = vpack.c.b16 %v4412, %v4411
        %v4420 = vpack.c.b16 %v4414, %v4413
        %v4421 = vpack.c.b16 %v4416, %v4415
        %v4422 = vpack.c.b16 %v4418, %v4417
        %v4428 = vsel %vm449, %v4394, 0
        %4430 = vmatprep.subr.bf16.mxu0 0
        %4431 = vmatpush1.bf16.msra.mxu0 %v4419
        %4432 = vmatprep.subr.bf16.mxu0 0
        %4433 = vmatpush1.bf16.msra.mxu0 %v4420
        %4434 = vmatprep.subr.bf16.mxu0 0
        %4435 = vmatpush1.bf16.msra.mxu0 %v4421
        %4436 = vmatprep.subr.bf16.mxu0 0
        %4437 = vmatpush1.bf16.msra.mxu0 %v4422
        %4438 = vmatprep.subr.bf16.mxu0 0
        %4439 = vmatpush1.bf16.msra.mxu0 0
        %4440 = vmatprep.subr.bf16.mxu0 0
        %4441 = vmatpush1.bf16.msra.mxu0 0
        %4442 = vmatprep.subr.bf16.mxu0 0
        %4443 = vmatpush1.bf16.msra.mxu0 0
        %4444 = vmatprep.subr.bf16.mxu0 0
        %4445 = vmatpush1.bf16.msra.mxu0 0
        %4446 = vmatprep.subr.bf16.mxu0 0
        %4447 = vmatpush1.bf16.msra.mxu0 0
        %4448 = vmatprep.subr.bf16.mxu0 0
        %4449 = vmatpush1.bf16.msra.mxu0 0
        %4450 = vmatprep.subr.bf16.mxu0 0
        %4451 = vmatpush1.bf16.msra.mxu0 0
        %4452 = vmatprep.subr.bf16.mxu0 0
        %4453 = vmatpush1.bf16.msra.mxu0 0
        %4454 = vmatprep.subr.bf16.mxu0 0
        %4455 = vmatpush1.bf16.msra.mxu0 0
        %4456 = vmatprep.subr.bf16.mxu0 0
        %4457 = vmatpush1.bf16.msra.mxu0 0
        %4458 = vmatprep.subr.bf16.mxu0 0
        %4459 = vmatpush1.bf16.msra.mxu0 0
        %4460 = vmatprep.subr.bf16.mxu0 0
        %4461 = vmatpush1.bf16.msra.mxu0 0
        %4462 = vmatprep.mubr.bf16.mxu0 0
        %4463 = vmatmul.mubr.bf16.gmra.mrb[0].mxu0 %v4428
        %v4464 = vpop.f32.mrb[0].mxu0
        %v4465 = vadd.f32 0.0, %v4464
        %v4466 = vpop.f32.mrb[0].mxu0
        %v4467 = vpop.f32.mrb[0].mxu0
        %v4468 = vpop.f32.mrb[0].mxu0
        %4469 = vdwg.mxu0
        %v4470 = vadd.f32 %v4392, %v4465
        %v4471 = vld [vmem:[#allocation3 + $0x5] sm:$0x1]
        %v4472 = vpack.c.bf16 %v4471, %v4471
        %v4473 = vld [vmem:[%s5 + $0xa0] sm:$0xf]
        %v4474 = vld [vmem:[%s5 + $0xa4] sm:$0xf]
        %v4475 = vld [vmem:[%s5 + $0xa8] sm:$0xf]
        %v4476 = vld [vmem:[%s5 + $0xac] sm:$0xf]
        %v4477 = vld [vmem:[%s5 + $0xb0] sm:$0xf]
        %v4478 = vld [vmem:[%s5 + $0xb4] sm:$0xf]
        %v4479 = vld [vmem:[%s5 + $0xb8] sm:$0xf]
        %v4480 = vld [vmem:[%s5 + $0xbc] sm:$0xf]
        %v4489 = vunpack.c.l.b16 %v4473
        %v4490 = vunpack.c.l.b16 %v4474
        %v4491 = vunpack.c.l.b16 %v4475
        %v4492 = vunpack.c.l.b16 %v4476
        %v4493 = vunpack.c.l.b16 %v4477
        %v4494 = vunpack.c.l.b16 %v4478
        %v4495 = vunpack.c.l.b16 %v4479
        %v4496 = vunpack.c.l.b16 %v4480
        %v4497 = vpack.c.b16 %v4490, %v4489
        %v4498 = vpack.c.b16 %v4492, %v4491
        %v4499 = vpack.c.b16 %v4494, %v4493
        %v4500 = vpack.c.b16 %v4496, %v4495
        %v4506 = vsel %vm449, %v4472, 0
        %4508 = vmatprep.subr.bf16.mxu0 0
        %4509 = vmatpush1.bf16.msra.mxu0 %v4497
        %4510 = vmatprep.subr.bf16.mxu0 0
        %4511 = vmatpush1.bf16.msra.mxu0 %v4498
        %4512 = vmatprep.subr.bf16.mxu0 0
        %4513 = vmatpush1.bf16.msra.mxu0 %v4499
        %4514 = vmatprep.subr.bf16.mxu0 0
        %4515 = vmatpush1.bf16.msra.mxu0 %v4500
        %4516 = vmatprep.subr.bf16.mxu0 0
        %4517 = vmatpush1.bf16.msra.mxu0 0
        %4518 = vmatprep.subr.bf16.mxu0 0
        %4519 = vmatpush1.bf16.msra.mxu0 0
        %4520 = vmatprep.subr.bf16.mxu0 0
        %4521 = vmatpush1.bf16.msra.mxu0 0
        %4522 = vmatprep.subr.bf16.mxu0 0
        %4523 = vmatpush1.bf16.msra.mxu0 0
        %4524 = vmatprep.subr.bf16.mxu0 0
        %4525 = vmatpush1.bf16.msra.mxu0 0
        %4526 = vmatprep.subr.bf16.mxu0 0
        %4527 = vmatpush1.bf16.msra.mxu0 0
        %4528 = vmatprep.subr.bf16.mxu0 0
        %4529 = vmatpush1.bf16.msra.mxu0 0
        %4530 = vmatprep.subr.bf16.mxu0 0
        %4531 = vmatpush1.bf16.msra.mxu0 0
        %4532 = vmatprep.subr.bf16.mxu0 0
        %4533 = vmatpush1.bf16.msra.mxu0 0
        %4534 = vmatprep.subr.bf16.mxu0 0
        %4535 = vmatpush1.bf16.msra.mxu0 0
        %4536 = vmatprep.subr.bf16.mxu0 0
        %4537 = vmatpush1.bf16.msra.mxu0 0
        %4538 = vmatprep.subr.bf16.mxu0 0
        %4539 = vmatpush1.bf16.msra.mxu0 0
        %4540 = vmatprep.mubr.bf16.mxu0 0
        %4541 = vmatmul.mubr.bf16.gmra.mrb[0].mxu0 %v4506
        %v4542 = vpop.f32.mrb[0].mxu0
        %v4543 = vadd.f32 0.0, %v4542
        %v4544 = vpop.f32.mrb[0].mxu0
        %v4545 = vpop.f32.mrb[0].mxu0
        %v4546 = vpop.f32.mrb[0].mxu0
        %4547 = vdwg.mxu0
        %v4548 = vadd.f32 %v4470, %v4543
        %v4549 = vld [vmem:[#allocation3 + $0x6] sm:$0x1]
        %v4550 = vpack.c.bf16 %v4549, %v4549
        %v4551 = vld [vmem:[%s5 + $0xc0] sm:$0xf]
        %v4552 = vld [vmem:[%s5 + $0xc4] sm:$0xf]
        %v4553 = vld [vmem:[%s5 + $0xc8] sm:$0xf]
        %v4554 = vld [vmem:[%s5 + $0xcc] sm:$0xf]
        %v4555 = vld [vmem:[%s5 + $0xd0] sm:$0xf]
        %v4556 = vld [vmem:[%s5 + $0xd4] sm:$0xf]
        %v4557 = vld [vmem:[%s5 + $0xd8] sm:$0xf]
        %v4558 = vld [vmem:[%s5 + $0xdc] sm:$0xf]
        %v4567 = vunpack.c.l.b16 %v4551
        %v4568 = vunpack.c.l.b16 %v4552
        %v4569 = vunpack.c.l.b16 %v4553
        %v4570 = vunpack.c.l.b16 %v4554
        %v4571 = vunpack.c.l.b16 %v4555
        %v4572 = vunpack.c.l.b16 %v4556
        %v4573 = vunpack.c.l.b16 %v4557
        %v4574 = vunpack.c.l.b16 %v4558
        %v4575 = vpack.c.b16 %v4568, %v4567
        %v4576 = vpack.c.b16 %v4570, %v4569
        %v4577 = vpack.c.b16 %v4572, %v4571
        %v4578 = vpack.c.b16 %v4574, %v4573
        %v4584 = vsel %vm449, %v4550, 0
        %4586 = vmatprep.subr.bf16.mxu0 0
        %4587 = vmatpush1.bf16.msra.mxu0 %v4575
        %4588 = vmatprep.subr.bf16.mxu0 0
        %4589 = vmatpush1.bf16.msra.mxu0 %v4576
        %4590 = vmatprep.subr.bf16.mxu0 0
        %4591 = vmatpush1.bf16.msra.mxu0 %v4577
        %4592 = vmatprep.subr.bf16.mxu0 0
        %4593 = vmatpush1.bf16.msra.mxu0 %v4578
        %4594 = vmatprep.subr.bf16.mxu0 0
        %4595 = vmatpush1.bf16.msra.mxu0 0
        %4596 = vmatprep.subr.bf16.mxu0 0
        %4597 = vmatpush1.bf16.msra.mxu0 0
        %4598 = vmatprep.subr.bf16.mxu0 0
        %4599 = vmatpush1.bf16.msra.mxu0 0
        %4600 = vmatprep.subr.bf16.mxu0 0
        %4601 = vmatpush1.bf16.msra.mxu0 0
        %4602 = vmatprep.subr.bf16.mxu0 0
        %4603 = vmatpush1.bf16.msra.mxu0 0
        %4604 = vmatprep.subr.bf16.mxu0 0
        %4605 = vmatpush1.bf16.msra.mxu0 0
        %4606 = vmatprep.subr.bf16.mxu0 0
        %4607 = vmatpush1.bf16.msra.mxu0 0
        %4608 = vmatprep.subr.bf16.mxu0 0
        %4609 = vmatpush1.bf16.msra.mxu0 0
        %4610 = vmatprep.subr.bf16.mxu0 0
        %4611 = vmatpush1.bf16.msra.mxu0 0
        %4612 = vmatprep.subr.bf16.mxu0 0
        %4613 = vmatpush1.bf16.msra.mxu0 0
        %4614 = vmatprep.subr.bf16.mxu0 0
        %4615 = vmatpush1.bf16.msra.mxu0 0
        %4616 = vmatprep.subr.bf16.mxu0 0
        %4617 = vmatpush1.bf16.msra.mxu0 0
        %4618 = vmatprep.mubr.bf16.mxu0 0
        %4619 = vmatmul.mubr.bf16.gmra.mrb[0].mxu0 %v4584
        %v4620 = vpop.f32.mrb[0].mxu0
        %v4621 = vadd.f32 0.0, %v4620
        %v4622 = vpop.f32.mrb[0].mxu0
        %v4623 = vpop.f32.mrb[0].mxu0
        %v4624 = vpop.f32.mrb[0].mxu0
        %4625 = vdwg.mxu0
        %v4626 = vadd.f32 %v4548, %v4621
        %v4627 = vld [vmem:[#allocation3 + $0x7] sm:$0x1]
        %v4628 = vpack.c.bf16 %v4627, %v4627
        %v4629 = vld [vmem:[%s5 + $0xe0] sm:$0xf]
        %v4630 = vld [vmem:[%s5 + $0xe4] sm:$0xf]
        %v4631 = vld [vmem:[%s5 + $0xe8] sm:$0xf]
        %v4632 = vld [vmem:[%s5 + $0xec] sm:$0xf]
        %v4633 = vld [vmem:[%s5 + $0xf0] sm:$0xf]
        %v4634 = vld [vmem:[%s5 + $0xf4] sm:$0xf]
        %v4635 = vld [vmem:[%s5 + $0xf8] sm:$0xf]
        %v4636 = vld [vmem:[%s5 + $0xfc] sm:$0xf]
        %v4645 = vunpack.c.l.b16 %v4629
        %v4646 = vunpack.c.l.b16 %v4630
        %v4647 = vunpack.c.l.b16 %v4631
        %v4648 = vunpack.c.l.b16 %v4632
        %v4649 = vunpack.c.l.b16 %v4633
        %v4650 = vunpack.c.l.b16 %v4634
        %v4651 = vunpack.c.l.b16 %v4635
        %v4652 = vunpack.c.l.b16 %v4636
        %v4653 = vpack.c.b16 %v4646, %v4645
        %v4654 = vpack.c.b16 %v4648, %v4647
        %v4655 = vpack.c.b16 %v4650, %v4649
        %v4656 = vpack.c.b16 %v4652, %v4651
        %v4662 = vsel %vm449, %v4628, 0
        %4664 = vmatprep.subr.bf16.mxu0 0
        %4665 = vmatpush1.bf16.msra.mxu0 %v4653
        %4666 = vmatprep.subr.bf16.mxu0 0
        %4667 = vmatpush1.bf16.msra.mxu0 %v4654
        %4668 = vmatprep.subr.bf16.mxu0 0
        %4669 = vmatpush1.bf16.msra.mxu0 %v4655
        %4670 = vmatprep.subr.bf16.mxu0 0
        %4671 = vmatpush1.bf16.msra.mxu0 %v4656
        %4672 = vmatprep.subr.bf16.mxu0 0
        %4673 = vmatpush1.bf16.msra.mxu0 0
        %4674 = vmatprep.subr.bf16.mxu0 0
        %4675 = vmatpush1.bf16.msra.mxu0 0
        %4676 = vmatprep.subr.bf16.mxu0 0
        %4677 = vmatpush1.bf16.msra.mxu0 0
        %4678 = vmatprep.subr.bf16.mxu0 0
        %4679 = vmatpush1.bf16.msra.mxu0 0
        %4680 = vmatprep.subr.bf16.mxu0 0
        %4681 = vmatpush1.bf16.msra.mxu0 0
        %4682 = vmatprep.subr.bf16.mxu0 0
        %4683 = vmatpush1.bf16.msra.mxu0 0
        %4684 = vmatprep.subr.bf16.mxu0 0
        %4685 = vmatpush1.bf16.msra.mxu0 0
        %4686 = vmatprep.subr.bf16.mxu0 0
        %4687 = vmatpush1.bf16.msra.mxu0 0
        %4688 = vmatprep.subr.bf16.mxu0 0
        %4689 = vmatpush1.bf16.msra.mxu0 0
        %4690 = vmatprep.subr.bf16.mxu0 0
        %4691 = vmatpush1.bf16.msra.mxu0 0
        %4692 = vmatprep.subr.bf16.mxu0 0
        %4693 = vmatpush1.bf16.msra.mxu0 0
        %4694 = vmatprep.subr.bf16.mxu0 0
        %4695 = vmatpush1.bf16.msra.mxu0 0
        %4696 = vmatprep.mubr.bf16.mxu0 0
        %4697 = vmatmul.mubr.bf16.gmra.mrb[0].mxu0 %v4662
        %v4698 = vpop.f32.mrb[0].mxu0
        %v4699 = vadd.f32 0.0, %v4698
        %v4700 = vpop.f32.mrb[0].mxu0
        %v4701 = vpop.f32.mrb[0].mxu0
        %v4702 = vpop.f32.mrb[0].mxu0
        %4703 = vdwg.mxu0
        %v4704 = vadd.f32 %v4626, %v4699
        %v4705 = vld [vmem:[#allocation3 + $0x8] sm:$0x1]
        %v4706 = vpack.c.bf16 %v4705, %v4705
        %v4707 = vld [vmem:[%s5 + $0x100] sm:$0xf]
        %v4708 = vld [vmem:[%s5 + $0x104] sm:$0xf]
        %v4709 = vld [vmem:[%s5 + $0x108] sm:$0xf]
        %v4710 = vld [vmem:[%s5 + $0x10c] sm:$0xf]
        %v4711 = vld [vmem:[%s5 + $0x110] sm:$0xf]
        %v4712 = vld [vmem:[%s5 + $0x114] sm:$0xf]
        %v4713 = vld [vmem:[%s5 + $0x118] sm:$0xf]
        %v4714 = vld [vmem:[%s5 + $0x11c] sm:$0xf]
        %v4723 = vunpack.c.l.b16 %v4707
        %v4724 = vunpack.c.l.b16 %v4708
        %v4725 = vunpack.c.l.b16 %v4709
        %v4726 = vunpack.c.l.b16 %v4710
        %v4727 = vunpack.c.l.b16 %v4711
        %v4728 = vunpack.c.l.b16 %v4712
        %v4729 = vunpack.c.l.b16 %v4713
        %v4730 = vunpack.c.l.b16 %v4714
        %v4731 = vpack.c.b16 %v4724, %v4723
        %v4732 = vpack.c.b16 %v4726, %v4725
        %v4733 = vpack.c.b16 %v4728, %v4727
        %v4734 = vpack.c.b16 %v4730, %v4729
        %v4740 = vsel %vm449, %v4706, 0
        %4742 = vmatprep.subr.bf16.mxu0 0
        %4743 = vmatpush1.bf16.msra.mxu0 %v4731
        %4744 = vmatprep.subr.bf16.mxu0 0
        %4745 = vmatpush1.bf16.msra.mxu0 %v4732
        %4746 = vmatprep.subr.bf16.mxu0 0
        %4747 = vmatpush1.bf16.msra.mxu0 %v4733
        %4748 = vmatprep.subr.bf16.mxu0 0
        %4749 = vmatpush1.bf16.msra.mxu0 %v4734
        %4750 = vmatprep.subr.bf16.mxu0 0
        %4751 = vmatpush1.bf16.msra.mxu0 0
        %4752 = vmatprep.subr.bf16.mxu0 0
        %4753 = vmatpush1.bf16.msra.mxu0 0
        %4754 = vmatprep.subr.bf16.mxu0 0
        %4755 = vmatpush1.bf16.msra.mxu0 0
        %4756 = vmatprep.subr.bf16.mxu0 0
        %4757 = vmatpush1.bf16.msra.mxu0 0
        %4758 = vmatprep.subr.bf16.mxu0 0
        %4759 = vmatpush1.bf16.msra.mxu0 0
        %4760 = vmatprep.subr.bf16.mxu0 0
        %4761 = vmatpush1.bf16.msra.mxu0 0
        %4762 = vmatprep.subr.bf16.mxu0 0
        %4763 = vmatpush1.bf16.msra.mxu0 0
        %4764 = vmatprep.subr.bf16.mxu0 0
        %4765 = vmatpush1.bf16.msra.mxu0 0
        %4766 = vmatprep.subr.bf16.mxu0 0
        %4767 = vmatpush1.bf16.msra.mxu0 0
        %4768 = vmatprep.subr.bf16.mxu0 0
        %4769 = vmatpush1.bf16.msra.mxu0 0
        %4770 = vmatprep.subr.bf16.mxu0 0
        %4771 = vmatpush1.bf16.msra.mxu0 0
        %4772 = vmatprep.subr.bf16.mxu0 0
        %4773 = vmatpush1.bf16.msra.mxu0 0
        %4774 = vmatprep.mubr.bf16.mxu0 0
        %4775 = vmatmul.mubr.bf16.gmra.mrb[0].mxu0 %v4740
        %v4776 = vpop.f32.mrb[0].mxu0
        %v4777 = vadd.f32 0.0, %v4776
        %v4778 = vpop.f32.mrb[0].mxu0
        %v4779 = vpop.f32.mrb[0].mxu0
        %v4780 = vpop.f32.mrb[0].mxu0
        %4781 = vdwg.mxu0
        %v4782 = vadd.f32 %v4704, %v4777
        %v4783 = vld [vmem:[%s6] sm:$0x1]
        %v4784 = vadd.f32 %v4782, %v4783
        %v4785 = vmax.f32 %v4784, 0.0
        %v4786 = vpack.c.bf16 %v4785, %v4785
        %vm4787 = vcmask 516096
        %vm4788 = vsmask.f32 256
        %vm4789 = vmand %vm4787, %vm4788
        %v4790 = vld [vmem:[#allocation4] sm:$0x1]
        %v4791 = vsel %vm4789, %v4786, %v4790
        %4792 = vst [vmem:[#allocation4] sm:$0x1] %v4791
        %s4793 = scalar_lea.vmem %s334, 44
        %v4794 = vld [vmem:[%s4793] sm:$0xf]
        %v4795 = vld [vmem:[%s4793 + $0x4] sm:$0xf]
        %v4796 = vld [vmem:[%s4793 + $0x8] sm:$0xf]
        %v4797 = vld [vmem:[%s4793 + $0xc] sm:$0xf]
        %v4798 = vld [vmem:[%s4793 + $0x10] sm:$0xf]
        %v4799 = vld [vmem:[%s4793 + $0x14] sm:$0xf]
        %v4800 = vld [vmem:[%s4793 + $0x18] sm:$0xf]
        %v4801 = vld [vmem:[%s4793 + $0x1c] sm:$0xf]
        %v4802 = vld [vmem:[%s4793 + $0x20] sm:$0xf]
        %v4803 = vld [vmem:[%s1] sm:$0xf]
        %v4804 = vld [vmem:[%s1 + $0x4] sm:$0xf]
        %v4805 = vld [vmem:[%s1 + $0x8] sm:$0xf]
        %v4806 = vld [vmem:[%s1 + $0xc] sm:$0xf]
        %v4807 = vld [vmem:[%s1 + $0x10] sm:$0xf]
        %v4808 = vld [vmem:[%s1 + $0x14] sm:$0xf]
        %v4809 = vld [vmem:[%s1 + $0x18] sm:$0xf]
        %v4810 = vld [vmem:[%s1 + $0x1c] sm:$0xf]
        %v4811 = vld [vmem:[%s1 + $0x20] sm:$0xf]
        %v4812 = vld [vmem:[%s1 + $0x24] sm:$0xf]
        %v4813 = vld [vmem:[%s1 + $0x28] sm:$0xf]
        %v4814 = vld [vmem:[%s1 + $0x2c] sm:$0xf]
        %v4815 = vld [vmem:[%s1 + $0x30] sm:$0xf]
        %v4816 = vld [vmem:[%s1 + $0x34] sm:$0xf]
        %v4817 = vld [vmem:[%s1 + $0x38] sm:$0xf]
        %v4818 = vld [vmem:[%s1 + $0x3c] sm:$0xf]
        %v4828 = vunpack.c.l.b16 %v4794
        %v4829 = vunpack.c.l.b16 %v4795
        %v4830 = vunpack.c.l.b16 %v4796
        %v4831 = vunpack.c.l.b16 %v4797
        %v4832 = vunpack.c.l.b16 %v4798
        %v4833 = vunpack.c.l.b16 %v4799
        %v4834 = vunpack.c.l.b16 %v4800
        %v4835 = vunpack.c.l.b16 %v4801
        %v4836 = vunpack.c.l.b16 %v4802
        %v4837 = vpack.c.b16 %v4829, %v4828
        %v4838 = vpack.c.b16 %v4831, %v4830
        %v4839 = vpack.c.b16 %v4833, %v4832
        %v4840 = vpack.c.b16 %v4835, %v4834
        %v4841 = vpack.c.b16 %v4836, %v4836
        %v4843 = vshrl.u32 %v4837, 16
        %v4845 = vshll.u32 %v4837, 16
        %v4847 = vrot.slane %v4845, 1
        %v4848 = vor.u32 %v4843, %v4847
        %v4850 = vshll.u32 %v4838, 16
        %v4852 = vrot.slane %v4850, 1
        %v4853 = vsel %vm385, %v4848, %v4852
        %v4854 = vshrl.u32 %v4838, 16
        %v4856 = vor.u32 %v4854, %v4852
        %v4858 = vshll.u32 %v4839, 16
        %v4860 = vrot.slane %v4858, 1
        %v4861 = vsel %vm385, %v4856, %v4860
        %v4862 = vshrl.u32 %v4839, 16
        %v4864 = vor.u32 %v4862, %v4860
        %v4866 = vshll.u32 %v4840, 16
        %v4868 = vrot.slane %v4866, 1
        %v4869 = vsel %vm385, %v4864, %v4868
        %v4870 = vshrl.u32 %v4840, 16
        %v4872 = vor.u32 %v4870, %v4868
        %v4874 = vshll.u32 %v4841, 16
        %v4876 = vrot.slane %v4874, 1
        %v4877 = vsel %vm385, %v4872, %v4876
        %v4878 = vshrl.u32 %v4841, 16
        %v4880 = vor.u32 %v4878, %v4876
        %v4889 = vunpack.c.l.b16 %v4811
        %v4890 = vunpack.c.l.b16 %v4812
        %v4891 = vunpack.c.l.b16 %v4813
        %v4892 = vunpack.c.l.b16 %v4814
        %v4893 = vunpack.c.l.b16 %v4815
        %v4894 = vunpack.c.l.b16 %v4816
        %v4895 = vunpack.c.l.b16 %v4817
        %v4896 = vunpack.c.l.b16 %v4818
        %v4897 = vpack.c.b16 %v4890, %v4889
        %v4898 = vpack.c.b16 %v4892, %v4891
        %v4899 = vpack.c.b16 %v4894, %v4893
        %v4900 = vpack.c.b16 %v4896, %v4895
        %v4906 = vsel %vm449, %v4853, 0
        %v4909 = vsel %vm449, %v4861, 0
        %v4912 = vsel %vm449, %v4869, 0
        %v4915 = vsel %vm449, %v4877, 0
        %v4918 = vsel %vm449, %v4880, 0
        %4920 = vmatprep.subr.bf16.mxu0 0
        %4921 = vmatpush1.bf16.msra.mxu0 %v4897
        %4922 = vmatprep.subr.bf16.mxu0 0
        %4923 = vmatpush1.bf16.msra.mxu0 %v4898
        %4924 = vmatprep.subr.bf16.mxu0 0
        %4925 = vmatpush1.bf16.msra.mxu0 %v4899
        %4926 = vmatprep.subr.bf16.mxu0 0
        %4927 = vmatpush1.bf16.msra.mxu0 %v4900
        %4928 = vmatprep.subr.bf16.mxu0 0
        %4929 = vmatpush1.bf16.msra.mxu0 0
        %4930 = vmatprep.subr.bf16.mxu0 0
        %4931 = vmatpush1.bf16.msra.mxu0 0
        %4932 = vmatprep.subr.bf16.mxu0 0
        %4933 = vmatpush1.bf16.msra.mxu0 0
        %4934 = vmatprep.subr.bf16.mxu0 0
        %4935 = vmatpush1.bf16.msra.mxu0 0
        %4936 = vmatprep.subr.bf16.mxu0 0
        %4937 = vmatpush1.bf16.msra.mxu0 0
        %4938 = vmatprep.subr.bf16.mxu0 0
        %4939 = vmatpush1.bf16.msra.mxu0 0
        %4940 = vmatprep.subr.bf16.mxu0 0
        %4941 = vmatpush1.bf16.msra.mxu0 0
        %4942 = vmatprep.subr.bf16.mxu0 0
        %4943 = vmatpush1.bf16.msra.mxu0 0
        %4944 = vmatprep.subr.bf16.mxu0 0
        %4945 = vmatpush1.bf16.msra.mxu0 0
        %4946 = vmatprep.subr.bf16.mxu0 0
        %4947 = vmatpush1.bf16.msra.mxu0 0
        %4948 = vmatprep.subr.bf16.mxu0 0
        %4949 = vmatpush1.bf16.msra.mxu0 0
        %4950 = vmatprep.subr.bf16.mxu0 0
        %4951 = vmatpush1.bf16.msra.mxu0 0
        %4952 = vmatprep.mubr.bf16.mxu0 0
        %4953 = vmatmul.mubr.bf16.gmra.mrb[0].mxu0 %v4906
        %v4954 = vpop.f32.mrb[0].mxu0
        %v4955 = vadd.f32 0.0, %v4954
        %v4956 = vpop.f32.mrb[0].mxu0
        %v4957 = vpop.f32.mrb[0].mxu0
        %v4958 = vadd.f32 0.0, %v4957
        %v4959 = vpop.f32.mrb[0].mxu0
        %4960 = vmatprep.mubr.bf16.mxu0 0
        %4961 = vmatmul.mubr.bf16.gmra.mrb[0].mxu0 %v4909
        %v4962 = vpop.f32.mrb[0].mxu0
        %v4963 = vadd.f32 0.0, %v4962
        %v4964 = vpop.f32.mrb[0].mxu0
        %v4965 = vpop.f32.mrb[0].mxu0
        %v4966 = vadd.f32 0.0, %v4965
        %v4967 = vpop.f32.mrb[0].mxu0
        %4968 = vmatprep.mubr.bf16.mxu0 0
        %4969 = vmatmul.mubr.bf16.gmra.mrb[0].mxu0 %v4912
        %v4970 = vpop.f32.mrb[0].mxu0
        %v4971 = vadd.f32 0.0, %v4970
        %v4972 = vpop.f32.mrb[0].mxu0
        %v4973 = vpop.f32.mrb[0].mxu0
        %v4974 = vadd.f32 0.0, %v4973
        %v4975 = vpop.f32.mrb[0].mxu0
        %4976 = vmatprep.mubr.bf16.mxu0 0
        %4977 = vmatmul.mubr.bf16.gmra.mrb[0].mxu0 %v4915
        %v4978 = vpop.f32.mrb[0].mxu0
        %v4979 = vadd.f32 0.0, %v4978
        %v4980 = vpop.f32.mrb[0].mxu0
        %v4981 = vpop.f32.mrb[0].mxu0
        %v4982 = vadd.f32 0.0, %v4981
        %v4983 = vpop.f32.mrb[0].mxu0
        %4984 = vmatprep.mubr.bf16.mxu0 0
        %4985 = vmatmul.mubr.bf16.gmra.mrb[0].mxu0 %v4918
        %v4986 = vpop.f32.mrb[0].mxu0
        %v4987 = vadd.f32 0.0, %v4986
        %v4988 = vpop.f32.mrb[0].mxu0
        %v4989 = vpop.f32.mrb[0].mxu0
        %v4990 = vpop.f32.mrb[0].mxu0
        %4991 = vdwg.mxu0
        %v5000 = vunpack.c.l.b16 %v4803
        %v5001 = vunpack.c.l.b16 %v4804
        %v5002 = vunpack.c.l.b16 %v4805
        %v5003 = vunpack.c.l.b16 %v4806
        %v5004 = vunpack.c.l.b16 %v4807
        %v5005 = vunpack.c.l.b16 %v4808
        %v5006 = vunpack.c.l.b16 %v4809
        %v5007 = vunpack.c.l.b16 %v4810
        %v5008 = vpack.c.b16 %v5001, %v5000
        %v5009 = vpack.c.b16 %v5003, %v5002
        %v5010 = vpack.c.b16 %v5005, %v5004
        %v5011 = vpack.c.b16 %v5007, %v5006
        %v5016 = vsel %vm449, %v4837, 0
        %v5018 = vsel %vm449, %v4838, 0
        %v5020 = vsel %vm449, %v4839, 0
        %v5022 = vsel %vm449, %v4840, 0
        %v5024 = vsel %vm449, %v4841, 0
        %5026 = vmatprep.subr.bf16.mxu0 0
        %5027 = vmatpush1.bf16.msra.mxu0 %v5008
        %5028 = vmatprep.subr.bf16.mxu0 0
        %5029 = vmatpush1.bf16.msra.mxu0 %v5009
        %5030 = vmatprep.subr.bf16.mxu0 0
        %5031 = vmatpush1.bf16.msra.mxu0 %v5010
        %5032 = vmatprep.subr.bf16.mxu0 0
        %5033 = vmatpush1.bf16.msra.mxu0 %v5011
        %5034 = vmatprep.subr.bf16.mxu0 0
        %5035 = vmatpush1.bf16.msra.mxu0 0
        %5036 = vmatprep.subr.bf16.mxu0 0
        %5037 = vmatpush1.bf16.msra.mxu0 0
        %5038 = vmatprep.subr.bf16.mxu0 0
        %5039 = vmatpush1.bf16.msra.mxu0 0
        %5040 = vmatprep.subr.bf16.mxu0 0
        %5041 = vmatpush1.bf16.msra.mxu0 0
        %5042 = vmatprep.subr.bf16.mxu0 0
        %5043 = vmatpush1.bf16.msra.mxu0 0
        %5044 = vmatprep.subr.bf16.mxu0 0
        %5045 = vmatpush1.bf16.msra.mxu0 0
        %5046 = vmatprep.subr.bf16.mxu0 0
        %5047 = vmatpush1.bf16.msra.mxu0 0
        %5048 = vmatprep.subr.bf16.mxu0 0
        %5049 = vmatpush1.bf16.msra.mxu0 0
        %5050 = vmatprep.subr.bf16.mxu0 0
        %5051 = vmatpush1.bf16.msra.mxu0 0
        %5052 = vmatprep.subr.bf16.mxu0 0
        %5053 = vmatpush1.bf16.msra.mxu0 0
        %5054 = vmatprep.subr.bf16.mxu0 0
        %5055 = vmatpush1.bf16.msra.mxu0 0
        %5056 = vmatprep.subr.bf16.mxu0 0
        %5057 = vmatpush1.bf16.msra.mxu0 0
        %5058 = vmatprep.mubr.bf16.mxu0 0
        %5059 = vmatmul.mubr.bf16.gmra.mrb[0].mxu0 %v5016
        %v5060 = vpop.f32.mrb[0].mxu0
        %v5061 = vadd.f32 %v4955, %v5060
        %v5062 = vpop.f32.mrb[0].mxu0
        %v5063 = vpop.f32.mrb[0].mxu0
        %v5064 = vadd.f32 %v4958, %v5063
        %v5065 = vpop.f32.mrb[0].mxu0
        %5066 = vmatprep.mubr.bf16.mxu0 0
        %5067 = vmatmul.mubr.bf16.gmra.mrb[0].mxu0 %v5018
        %v5068 = vpop.f32.mrb[0].mxu0
        %v5069 = vadd.f32 %v4963, %v5068
        %v5070 = vpop.f32.mrb[0].mxu0
        %v5071 = vpop.f32.mrb[0].mxu0
        %v5072 = vadd.f32 %v4966, %v5071
        %v5073 = vpop.f32.mrb[0].mxu0
        %5074 = vmatprep.mubr.bf16.mxu0 0
        %5075 = vmatmul.mubr.bf16.gmra.mrb[0].mxu0 %v5020
        %v5076 = vpop.f32.mrb[0].mxu0
        %v5077 = vadd.f32 %v4971, %v5076
        %v5078 = vpop.f32.mrb[0].mxu0
        %v5079 = vpop.f32.mrb[0].mxu0
        %v5080 = vadd.f32 %v4974, %v5079
        %v5081 = vpop.f32.mrb[0].mxu0
        %5082 = vmatprep.mubr.bf16.mxu0 0
        %5083 = vmatmul.mubr.bf16.gmra.mrb[0].mxu0 %v5022
        %v5084 = vpop.f32.mrb[0].mxu0
        %v5085 = vadd.f32 %v4979, %v5084
        %v5086 = vpop.f32.mrb[0].mxu0
        %v5087 = vpop.f32.mrb[0].mxu0
        %v5088 = vadd.f32 %v4982, %v5087
        %v5089 = vpop.f32.mrb[0].mxu0
        %5090 = vmatprep.mubr.bf16.mxu0 0
        %5091 = vmatmul.mubr.bf16.gmra.mrb[0].mxu0 %v5024
        %v5092 = vpop.f32.mrb[0].mxu0
        %v5093 = vadd.f32 %v4987, %v5092
        %v5094 = vpop.f32.mrb[0].mxu0
        %v5095 = vpop.f32.mrb[0].mxu0
        %v5096 = vpop.f32.mrb[0].mxu0
        %5097 = vdwg.mxu0
        %v5098 = vld [vmem:[%s4793 + $0x4] sm:$0xf]
        %v5099 = vld [vmem:[%s4793 + $0x8] sm:$0xf]
        %v5100 = vld [vmem:[%s4793 + $0xc] sm:$0xf]
        %v5101 = vld [vmem:[%s4793 + $0x10] sm:$0xf]
        %v5102 = vld [vmem:[%s4793 + $0x14] sm:$0xf]
        %v5103 = vld [vmem:[%s4793 + $0x18] sm:$0xf]
        %v5104 = vld [vmem:[%s4793 + $0x1c] sm:$0xf]
        %v5105 = vld [vmem:[%s4793 + $0x20] sm:$0xf]
        %v5106 = vld [vmem:[%s4793 + $0x24] sm:$0xf]
        %v5107 = vld [vmem:[%s1 + $0x40] sm:$0xf]
        %v5108 = vld [vmem:[%s1 + $0x44] sm:$0xf]
        %v5109 = vld [vmem:[%s1 + $0x48] sm:$0xf]
        %v5110 = vld [vmem:[%s1 + $0x4c] sm:$0xf]
        %v5111 = vld [vmem:[%s1 + $0x50] sm:$0xf]
        %v5112 = vld [vmem:[%s1 + $0x54] sm:$0xf]
        %v5113 = vld [vmem:[%s1 + $0x58] sm:$0xf]
        %v5114 = vld [vmem:[%s1 + $0x5c] sm:$0xf]
        %v5124 = vunpack.c.l.b16 %v5098
        %v5125 = vunpack.c.l.b16 %v5099
        %v5126 = vunpack.c.l.b16 %v5100
        %v5127 = vunpack.c.l.b16 %v5101
        %v5128 = vunpack.c.l.b16 %v5102
        %v5129 = vunpack.c.l.b16 %v5103
        %v5130 = vunpack.c.l.b16 %v5104
        %v5131 = vunpack.c.l.b16 %v5105
        %v5132 = vunpack.c.l.b16 %v5106
        %v5133 = vpack.c.b16 %v5125, %v5124
        %v5134 = vpack.c.b16 %v5127, %v5126
        %v5135 = vpack.c.b16 %v5129, %v5128
        %v5136 = vpack.c.b16 %v5131, %v5130
        %v5137 = vpack.c.b16 %v5132, %v5132
        %v5139 = vshrl.u32 %v5133, 16
        %v5141 = vshll.u32 %v5133, 16
        %v5143 = vrot.slane %v5141, 1
        %v5144 = vor.u32 %v5139, %v5143
        %v5146 = vshll.u32 %v5134, 16
        %v5148 = vrot.slane %v5146, 1
        %v5149 = vsel %vm385, %v5144, %v5148
        %v5150 = vshrl.u32 %v5134, 16
        %v5152 = vor.u32 %v5150, %v5148
        %v5154 = vshll.u32 %v5135, 16
        %v5156 = vrot.slane %v5154, 1
        %v5157 = vsel %vm385, %v5152, %v5156
        %v5158 = vshrl.u32 %v5135, 16
        %v5160 = vor.u32 %v5158, %v5156
        %v5162 = vshll.u32 %v5136, 16
        %v5164 = vrot.slane %v5162, 1
        %v5165 = vsel %vm385, %v5160, %v5164
        %v5166 = vshrl.u32 %v5136, 16
        %v5168 = vor.u32 %v5166, %v5164
        %v5170 = vshll.u32 %v5137, 16
        %v5172 = vrot.slane %v5170, 1
        %v5173 = vsel %vm385, %v5168, %v5172
        %v5174 = vshrl.u32 %v5137, 16
        %v5176 = vor.u32 %v5174, %v5172
        %v5185 = vunpack.c.l.b16 %v5107
        %v5186 = vunpack.c.l.b16 %v5108
        %v5187 = vunpack.c.l.b16 %v5109
        %v5188 = vunpack.c.l.b16 %v5110
        %v5189 = vunpack.c.l.b16 %v5111
        %v5190 = vunpack.c.l.b16 %v5112
        %v5191 = vunpack.c.l.b16 %v5113
        %v5192 = vunpack.c.l.b16 %v5114
        %v5193 = vpack.c.b16 %v5186, %v5185
        %v5194 = vpack.c.b16 %v5188, %v5187
        %v5195 = vpack.c.b16 %v5190, %v5189
        %v5196 = vpack.c.b16 %v5192, %v5191
        %v5202 = vsel %vm449, %v5149, 0
        %v5205 = vsel %vm449, %v5157, 0
        %v5208 = vsel %vm449, %v5165, 0
        %v5211 = vsel %vm449, %v5173, 0
        %v5214 = vsel %vm449, %v5176, 0
        %5216 = vmatprep.subr.bf16.mxu0 0
        %5217 = vmatpush1.bf16.msra.mxu0 %v5193
        %5218 = vmatprep.subr.bf16.mxu0 0
        %5219 = vmatpush1.bf16.msra.mxu0 %v5194
        %5220 = vmatprep.subr.bf16.mxu0 0
        %5221 = vmatpush1.bf16.msra.mxu0 %v5195
        %5222 = vmatprep.subr.bf16.mxu0 0
        %5223 = vmatpush1.bf16.msra.mxu0 %v5196
        %5224 = vmatprep.subr.bf16.mxu0 0
        %5225 = vmatpush1.bf16.msra.mxu0 0
        %5226 = vmatprep.subr.bf16.mxu0 0
        %5227 = vmatpush1.bf16.msra.mxu0 0
        %5228 = vmatprep.subr.bf16.mxu0 0
        %5229 = vmatpush1.bf16.msra.mxu0 0
        %5230 = vmatprep.subr.bf16.mxu0 0
        %5231 = vmatpush1.bf16.msra.mxu0 0
        %5232 = vmatprep.subr.bf16.mxu0 0
        %5233 = vmatpush1.bf16.msra.mxu0 0
        %5234 = vmatprep.subr.bf16.mxu0 0
        %5235 = vmatpush1.bf16.msra.mxu0 0
        %5236 = vmatprep.subr.bf16.mxu0 0
        %5237 = vmatpush1.bf16.msra.mxu0 0
        %5238 = vmatprep.subr.bf16.mxu0 0
        %5239 = vmatpush1.bf16.msra.mxu0 0
        %5240 = vmatprep.subr.bf16.mxu0 0
        %5241 = vmatpush1.bf16.msra.mxu0 0
        %5242 = vmatprep.subr.bf16.mxu0 0
        %5243 = vmatpush1.bf16.msra.mxu0 0
        %5244 = vmatprep.subr.bf16.mxu0 0
        %5245 = vmatpush1.bf16.msra.mxu0 0
        %5246 = vmatprep.subr.bf16.mxu0 0
        %5247 = vmatpush1.bf16.msra.mxu0 0
        %5248 = vmatprep.mubr.bf16.mxu0 0
        %5249 = vmatmul.mubr.bf16.gmra.mrb[0].mxu0 %v5202
        %v5250 = vpop.f32.mrb[0].mxu0
        %v5251 = vadd.f32 0.0, %v5250
        %v5252 = vpop.f32.mrb[0].mxu0
        %v5253 = vpop.f32.mrb[0].mxu0
        %v5254 = vadd.f32 0.0, %v5253
        %v5255 = vpop.f32.mrb[0].mxu0
        %5256 = vmatprep.mubr.bf16.mxu0 0
        %5257 = vmatmul.mubr.bf16.gmra.mrb[0].mxu0 %v5205
        %v5258 = vpop.f32.mrb[0].mxu0
        %v5259 = vadd.f32 0.0, %v5258
        %v5260 = vpop.f32.mrb[0].mxu0
        %v5261 = vpop.f32.mrb[0].mxu0
        %v5262 = vadd.f32 0.0, %v5261
        %v5263 = vpop.f32.mrb[0].mxu0
        %5264 = vmatprep.mubr.bf16.mxu0 0
        %5265 = vmatmul.mubr.bf16.gmra.mrb[0].mxu0 %v5208
        %v5266 = vpop.f32.mrb[0].mxu0
        %v5267 = vadd.f32 0.0, %v5266
        %v5268 = vpop.f32.mrb[0].mxu0
        %v5269 = vpop.f32.mrb[0].mxu0
        %v5270 = vadd.f32 0.0, %v5269
        %v5271 = vpop.f32.mrb[0].mxu0
        %5272 = vmatprep.mubr.bf16.mxu0 0
        %5273 = vmatmul.mubr.bf16.gmra.mrb[0].mxu0 %v5211
        %v5274 = vpop.f32.mrb[0].mxu0
        %v5275 = vadd.f32 0.0, %v5274
        %v5276 = vpop.f32.mrb[0].mxu0
        %v5277 = vpop.f32.mrb[0].mxu0
        %v5278 = vadd.f32 0.0, %v5277
        %v5279 = vpop.f32.mrb[0].mxu0
        %5280 = vmatprep.mubr.bf16.mxu0 0
        %5281 = vmatmul.mubr.bf16.gmra.mrb[0].mxu0 %v5214
        %v5282 = vpop.f32.mrb[0].mxu0
        %v5283 = vadd.f32 0.0, %v5282
        %v5284 = vpop.f32.mrb[0].mxu0
        %v5285 = vpop.f32.mrb[0].mxu0
        %v5286 = vpop.f32.mrb[0].mxu0
        %5287 = vdwg.mxu0
        %v5288 = vadd.f32 %v5061, %v5251
        %v5289 = vadd.f32 %v5064, %v5254
        %v5290 = vadd.f32 %v5069, %v5259
        %v5291 = vadd.f32 %v5072, %v5262
        %v5292 = vadd.f32 %v5077, %v5267
        %v5293 = vadd.f32 %v5080, %v5270
        %v5294 = vadd.f32 %v5085, %v5275
        %v5295 = vadd.f32 %v5088, %v5278
        %v5296 = vadd.f32 %v5093, %v5283
        %v5297 = vld [vmem:[%s4793 + $0x4] sm:$0xe]
        %v5298 = vld [vmem:[%s4793 + $0x8] sm:$0xf]
        %v5299 = vld [vmem:[%s4793 + $0xc] sm:$0xf]
        %v5300 = vld [vmem:[%s4793 + $0x10] sm:$0xf]
        %v5301 = vld [vmem:[%s4793 + $0x14] sm:$0xf]
        %v5302 = vld [vmem:[%s4793 + $0x18] sm:$0xf]
        %v5303 = vld [vmem:[%s4793 + $0x1c] sm:$0xf]
        %v5304 = vld [vmem:[%s4793 + $0x20] sm:$0xf]
        %v5305 = vld [vmem:[%s4793 + $0x24] sm:$0xf]
        %v5306 = vld [vmem:[%s4793 + $0x28] sm:$0x1]
        %v5307 = vld [vmem:[%s1 + $0x60] sm:$0xf]
        %v5308 = vld [vmem:[%s1 + $0x64] sm:$0xf]
        %v5309 = vld [vmem:[%s1 + $0x68] sm:$0xf]
        %v5310 = vld [vmem:[%s1 + $0x6c] sm:$0xf]
        %v5311 = vld [vmem:[%s1 + $0x70] sm:$0xf]
        %v5312 = vld [vmem:[%s1 + $0x74] sm:$0xf]
        %v5313 = vld [vmem:[%s1 + $0x78] sm:$0xf]
        %v5314 = vld [vmem:[%s1 + $0x7c] sm:$0xf]
        %v5325 = vunpack.c.l.b16 %v5297
        %v5326 = vunpack.c.l.b16 %v5298
        %v5327 = vunpack.c.l.b16 %v5299
        %v5328 = vunpack.c.l.b16 %v5300
        %v5329 = vunpack.c.l.b16 %v5301
        %v5330 = vunpack.c.l.b16 %v5302
        %v5331 = vunpack.c.l.b16 %v5303
        %v5332 = vunpack.c.l.b16 %v5304
        %v5333 = vunpack.c.l.b16 %v5305
        %v5334 = vunpack.c.l.b16 %v5306
        %v5335 = vpack.c.b16 %v5326, %v5325
        %v5336 = vpack.c.b16 %v5328, %v5327
        %v5337 = vpack.c.b16 %v5330, %v5329
        %v5338 = vpack.c.b16 %v5332, %v5331
        %v5339 = vpack.c.b16 %v5334, %v5333
        %v5340 = vrot.slane %v5335, 1
        %v5341 = vrot.slane %v5336, 1
        %v5342 = vsel %vm885, %v5340, %v5341
        %v5343 = vrot.slane %v5337, 1
        %v5344 = vsel %vm885, %v5341, %v5343
        %v5345 = vrot.slane %v5338, 1
        %v5346 = vsel %vm885, %v5343, %v5345
        %v5347 = vrot.slane %v5339, 1
        %v5348 = vsel %vm885, %v5345, %v5347
        %v5357 = vunpack.c.l.b16 %v5307
        %v5358 = vunpack.c.l.b16 %v5308
        %v5359 = vunpack.c.l.b16 %v5309
        %v5360 = vunpack.c.l.b16 %v5310
        %v5361 = vunpack.c.l.b16 %v5311
        %v5362 = vunpack.c.l.b16 %v5312
        %v5363 = vunpack.c.l.b16 %v5313
        %v5364 = vunpack.c.l.b16 %v5314
        %v5365 = vpack.c.b16 %v5358, %v5357
        %v5366 = vpack.c.b16 %v5360, %v5359
        %v5367 = vpack.c.b16 %v5362, %v5361
        %v5368 = vpack.c.b16 %v5364, %v5363
        %v5374 = vsel %vm449, %v5342, 0
        %v5377 = vsel %vm449, %v5344, 0
        %v5380 = vsel %vm449, %v5346, 0
        %v5383 = vsel %vm449, %v5348, 0
        %v5386 = vsel %vm449, %v5347, 0
        %5388 = vmatprep.subr.bf16.mxu0 0
        %5389 = vmatpush1.bf16.msra.mxu0 %v5365
        %5390 = vmatprep.subr.bf16.mxu0 0
        %5391 = vmatpush1.bf16.msra.mxu0 %v5366
        %5392 = vmatprep.subr.bf16.mxu0 0
        %5393 = vmatpush1.bf16.msra.mxu0 %v5367
        %5394 = vmatprep.subr.bf16.mxu0 0
        %5395 = vmatpush1.bf16.msra.mxu0 %v5368
        %5396 = vmatprep.subr.bf16.mxu0 0
        %5397 = vmatpush1.bf16.msra.mxu0 0
        %5398 = vmatprep.subr.bf16.mxu0 0
        %5399 = vmatpush1.bf16.msra.mxu0 0
        %5400 = vmatprep.subr.bf16.mxu0 0
        %5401 = vmatpush1.bf16.msra.mxu0 0
        %5402 = vmatprep.subr.bf16.mxu0 0
        %5403 = vmatpush1.bf16.msra.mxu0 0
        %5404 = vmatprep.subr.bf16.mxu0 0
        %5405 = vmatpush1.bf16.msra.mxu0 0
        %5406 = vmatprep.subr.bf16.mxu0 0
        %5407 = vmatpush1.bf16.msra.mxu0 0
        %5408 = vmatprep.subr.bf16.mxu0 0
        %5409 = vmatpush1.bf16.msra.mxu0 0
        %5410 = vmatprep.subr.bf16.mxu0 0
        %5411 = vmatpush1.bf16.msra.mxu0 0
        %5412 = vmatprep.subr.bf16.mxu0 0
        %5413 = vmatpush1.bf16.msra.mxu0 0
        %5414 = vmatprep.subr.bf16.mxu0 0
        %5415 = vmatpush1.bf16.msra.mxu0 0
        %5416 = vmatprep.subr.bf16.mxu0 0
        %5417 = vmatpush1.bf16.msra.mxu0 0
        %5418 = vmatprep.subr.bf16.mxu0 0
        %5419 = vmatpush1.bf16.msra.mxu0 0
        %5420 = vmatprep.mubr.bf16.mxu0 0
        %5421 = vmatmul.mubr.bf16.gmra.mrb[0].mxu0 %v5374
        %v5422 = vpop.f32.mrb[0].mxu0
        %v5423 = vadd.f32 0.0, %v5422
        %v5424 = vpop.f32.mrb[0].mxu0
        %v5425 = vpop.f32.mrb[0].mxu0
        %v5426 = vadd.f32 0.0, %v5425
        %v5427 = vpop.f32.mrb[0].mxu0
        %5428 = vmatprep.mubr.bf16.mxu0 0
        %5429 = vmatmul.mubr.bf16.gmra.mrb[0].mxu0 %v5377
        %v5430 = vpop.f32.mrb[0].mxu0
        %v5431 = vadd.f32 0.0, %v5430
        %v5432 = vpop.f32.mrb[0].mxu0
        %v5433 = vpop.f32.mrb[0].mxu0
        %v5434 = vadd.f32 0.0, %v5433
        %v5435 = vpop.f32.mrb[0].mxu0
        %5436 = vmatprep.mubr.bf16.mxu0 0
        %5437 = vmatmul.mubr.bf16.gmra.mrb[0].mxu0 %v5380
        %v5438 = vpop.f32.mrb[0].mxu0
        %v5439 = vadd.f32 0.0, %v5438
        %v5440 = vpop.f32.mrb[0].mxu0
        %v5441 = vpop.f32.mrb[0].mxu0
        %v5442 = vadd.f32 0.0, %v5441
        %v5443 = vpop.f32.mrb[0].mxu0
        %5444 = vmatprep.mubr.bf16.mxu0 0
        %5445 = vmatmul.mubr.bf16.gmra.mrb[0].mxu0 %v5383
        %v5446 = vpop.f32.mrb[0].mxu0
        %v5447 = vadd.f32 0.0, %v5446
        %v5448 = vpop.f32.mrb[0].mxu0
        %v5449 = vpop.f32.mrb[0].mxu0
        %v5450 = vadd.f32 0.0, %v5449
        %v5451 = vpop.f32.mrb[0].mxu0
        %5452 = vmatprep.mubr.bf16.mxu0 0
        %5453 = vmatmul.mubr.bf16.gmra.mrb[0].mxu0 %v5386
        %v5454 = vpop.f32.mrb[0].mxu0
        %v5455 = vadd.f32 0.0, %v5454
        %v5456 = vpop.f32.mrb[0].mxu0
        %v5457 = vpop.f32.mrb[0].mxu0
        %v5458 = vpop.f32.mrb[0].mxu0
        %5459 = vdwg.mxu0
        %v5460 = vadd.f32 %v5288, %v5423
        %v5461 = vadd.f32 %v5289, %v5426
        %v5462 = vadd.f32 %v5290, %v5431
        %v5463 = vadd.f32 %v5291, %v5434
        %v5464 = vadd.f32 %v5292, %v5439
        %v5465 = vadd.f32 %v5293, %v5442
        %v5466 = vadd.f32 %v5294, %v5447
        %v5467 = vadd.f32 %v5295, %v5450
        %v5468 = vadd.f32 %v5296, %v5455
        %v5469 = vld [vmem:[%s2] sm:$0x1]
        %v5471 = vlaneseq
        %v5472 = vshrl.u32 %v5471, 7
        %v5473 = vsub.s32 0, %v5472
        %v5474 = vrot.slane %v5469, %v5473
        %v5476 = vadd.f32 %v5460, %v5474
        %v5477 = vadd.f32 %v5461, %v5474
        %v5478 = vadd.f32 %v5462, %v5474
        %v5479 = vadd.f32 %v5463, %v5474
        %v5480 = vadd.f32 %v5464, %v5474
        %v5481 = vadd.f32 %v5465, %v5474
        %v5482 = vadd.f32 %v5466, %v5474
        %v5483 = vadd.f32 %v5467, %v5474
        %v5484 = vadd.f32 %v5468, %v5474
        %v5485 = vmax.f32 %v5476, 0.0
        %v5486 = vmax.f32 %v5477, 0.0
        %v5487 = vmax.f32 %v5478, 0.0
        %v5488 = vmax.f32 %v5479, 0.0
        %v5489 = vmax.f32 %v5480, 0.0
        %v5490 = vmax.f32 %v5481, 0.0
        %v5491 = vmax.f32 %v5482, 0.0
        %v5492 = vmax.f32 %v5483, 0.0
        %v5493 = vmax.f32 %v5484, 0.0
        %5494 = vst.msk [vmem:[#allocation2] sm:$0xff] %vm1040, %v5485
        %5495 = vst.msk [vmem:[#allocation2 + $0x8] sm:$0xff] %vm1040, %v5486
        %5496 = vst.msk [vmem:[#allocation2 + $0x10] sm:$0xff] %vm1040, %v5487
        %5497 = vst.msk [vmem:[#allocation2 + $0x18] sm:$0xff] %vm1040, %v5488
        %5498 = vst.msk [vmem:[#allocation2 + $0x20] sm:$0xff] %vm1040, %v5489
        %5499 = vst.msk [vmem:[#allocation2 + $0x28] sm:$0xff] %vm1040, %v5490
        %5500 = vst.msk [vmem:[#allocation2 + $0x30] sm:$0xff] %vm1040, %v5491
        %5501 = vst.msk [vmem:[#allocation2 + $0x38] sm:$0xff] %vm1040, %v5492
        %5502 = vst.msk [vmem:[#allocation2 + $0x40] sm:$0x7f] %vm1049, %v5493
        %v5503 = vld [vmem:[#allocation2] ss:$2 sm:$0x7]
        %v5504 = vpack.c.bf16 %v5503, %v5503
        %v5505 = vld [vmem:[%s3] sm:$0xf]
        %v5506 = vld [vmem:[%s3 + $0x4] sm:$0xf]
        %v5507 = vld [vmem:[%s3 + $0x8] sm:$0xf]
        %v5508 = vld [vmem:[%s3 + $0xc] sm:$0xf]
        %v5509 = vld [vmem:[%s1057] ss:$2 sm:$0x7]
        %v5510 = vpack.c.bf16 %v5509, %v5509
        %v5511 = vld [vmem:[%s3 + $0x10] sm:$0xf]
        %v5512 = vld [vmem:[%s3 + $0x14] sm:$0xf]
        %v5513 = vld [vmem:[%s3 + $0x18] sm:$0xf]
        %v5514 = vld [vmem:[%s3 + $0x1c] sm:$0xf]
        %v5519 = vunpack.c.l.b16 %v5511
        %v5520 = vunpack.c.l.b16 %v5512
        %v5521 = vunpack.c.l.b16 %v5513
        %v5522 = vunpack.c.l.b16 %v5514
        %v5523 = vpack.c.b16 %v5520, %v5519
        %v5524 = vpack.c.b16 %v5522, %v5521
        %v5528 = vsel %vm1040, %v5510, 0
        %5530 = vmatprep.subr.bf16.mxu0 0
        %5531 = vmatpush1.bf16.msra.mxu0 %v5523
        %5532 = vmatprep.subr.bf16.mxu0 0
        %5533 = vmatpush1.bf16.msra.mxu0 %v5524
        %5534 = vmatprep.subr.bf16.mxu0 0
        %5535 = vmatpush1.bf16.msra.mxu0 0
        %5536 = vmatprep.subr.bf16.mxu0 0
        %5537 = vmatpush1.bf16.msra.mxu0 0
        %5538 = vmatprep.subr.bf16.mxu0 0
        %5539 = vmatpush1.bf16.msra.mxu0 0
        %5540 = vmatprep.subr.bf16.mxu0 0
        %5541 = vmatpush1.bf16.msra.mxu0 0
        %5542 = vmatprep.subr.bf16.mxu0 0
        %5543 = vmatpush1.bf16.msra.mxu0 0
        %5544 = vmatprep.subr.bf16.mxu0 0
        %5545 = vmatpush1.bf16.msra.mxu0 0
        %5546 = vmatprep.subr.bf16.mxu0 0
        %5547 = vmatpush1.bf16.msra.mxu0 0
        %5548 = vmatprep.subr.bf16.mxu0 0
        %5549 = vmatpush1.bf16.msra.mxu0 0
        %5550 = vmatprep.subr.bf16.mxu0 0
        %5551 = vmatpush1.bf16.msra.mxu0 0
        %5552 = vmatprep.subr.bf16.mxu0 0
        %5553 = vmatpush1.bf16.msra.mxu0 0
        %5554 = vmatprep.subr.bf16.mxu0 0
        %5555 = vmatpush1.bf16.msra.mxu0 0
        %5556 = vmatprep.subr.bf16.mxu0 0
        %5557 = vmatpush1.bf16.msra.mxu0 0
        %5558 = vmatprep.subr.bf16.mxu0 0
        %5559 = vmatpush1.bf16.msra.mxu0 0
        %5560 = vmatprep.subr.bf16.mxu0 0
        %5561 = vmatpush1.bf16.msra.mxu0 0
        %5562 = vmatprep.mubr.bf16.mxu0 0
        %5563 = vmatmul.mubr.bf16.gmra.mrb[0].mxu0 %v5528
        %v5564 = vpop.f32.mrb[0].mxu0
        %v5565 = vadd.f32 0.0, %v5564
        %v5566 = vpop.f32.mrb[0].mxu0
        %v5567 = vpop.f32.mrb[0].mxu0
        %v5568 = vpop.f32.mrb[0].mxu0
        %5569 = vdwg.mxu0
        %v5574 = vunpack.c.l.b16 %v5505
        %v5575 = vunpack.c.l.b16 %v5506
        %v5576 = vunpack.c.l.b16 %v5507
        %v5577 = vunpack.c.l.b16 %v5508
        %v5578 = vpack.c.b16 %v5575, %v5574
        %v5579 = vpack.c.b16 %v5577, %v5576
        %v5583 = vsel %vm1040, %v5504, 0
        %5585 = vmatprep.subr.bf16.mxu0 0
        %5586 = vmatpush1.bf16.msra.mxu0 %v5578
        %5587 = vmatprep.subr.bf16.mxu0 0
        %5588 = vmatpush1.bf16.msra.mxu0 %v5579
        %5589 = vmatprep.subr.bf16.mxu0 0
        %5590 = vmatpush1.bf16.msra.mxu0 0
        %5591 = vmatprep.subr.bf16.mxu0 0
        %5592 = vmatpush1.bf16.msra.mxu0 0
        %5593 = vmatprep.subr.bf16.mxu0 0
        %5594 = vmatpush1.bf16.msra.mxu0 0
        %5595 = vmatprep.subr.bf16.mxu0 0
        %5596 = vmatpush1.bf16.msra.mxu0 0
        %5597 = vmatprep.subr.bf16.mxu0 0
        %5598 = vmatpush1.bf16.msra.mxu0 0
        %5599 = vmatprep.subr.bf16.mxu0 0
        %5600 = vmatpush1.bf16.msra.mxu0 0
        %5601 = vmatprep.subr.bf16.mxu0 0
        %5602 = vmatpush1.bf16.msra.mxu0 0
        %5603 = vmatprep.subr.bf16.mxu0 0
        %5604 = vmatpush1.bf16.msra.mxu0 0
        %5605 = vmatprep.subr.bf16.mxu0 0
        %5606 = vmatpush1.bf16.msra.mxu0 0
        %5607 = vmatprep.subr.bf16.mxu0 0
        %5608 = vmatpush1.bf16.msra.mxu0 0
        %5609 = vmatprep.subr.bf16.mxu0 0
        %5610 = vmatpush1.bf16.msra.mxu0 0
        %5611 = vmatprep.subr.bf16.mxu0 0
        %5612 = vmatpush1.bf16.msra.mxu0 0
        %5613 = vmatprep.subr.bf16.mxu0 0
        %5614 = vmatpush1.bf16.msra.mxu0 0
        %5615 = vmatprep.subr.bf16.mxu0 0
        %5616 = vmatpush1.bf16.msra.mxu0 0
        %5617 = vmatprep.mubr.bf16.mxu0 0
        %5618 = vmatmul.mubr.bf16.gmra.mrb[0].mxu0 %v5583
        %v5619 = vpop.f32.mrb[0].mxu0
        %v5620 = vadd.f32 %v5565, %v5619
        %v5621 = vpop.f32.mrb[0].mxu0
        %v5622 = vpop.f32.mrb[0].mxu0
        %v5623 = vpop.f32.mrb[0].mxu0
        %5624 = vdwg.mxu0
        %v5625 = vld [vmem:[%s1174] ss:$2 sm:$0x7]
        %v5626 = vpack.c.bf16 %v5625, %v5625
        %v5627 = vld [vmem:[%s3 + $0x20] sm:$0xf]
        %v5628 = vld [vmem:[%s3 + $0x24] sm:$0xf]
        %v5629 = vld [vmem:[%s3 + $0x28] sm:$0xf]
        %v5630 = vld [vmem:[%s3 + $0x2c] sm:$0xf]
        %v5635 = vunpack.c.l.b16 %v5627
        %v5636 = vunpack.c.l.b16 %v5628
        %v5637 = vunpack.c.l.b16 %v5629
        %v5638 = vunpack.c.l.b16 %v5630
        %v5639 = vpack.c.b16 %v5636, %v5635
        %v5640 = vpack.c.b16 %v5638, %v5637
        %v5644 = vsel %vm1040, %v5626, 0
        %5646 = vmatprep.subr.bf16.mxu0 0
        %5647 = vmatpush1.bf16.msra.mxu0 %v5639
        %5648 = vmatprep.subr.bf16.mxu0 0
        %5649 = vmatpush1.bf16.msra.mxu0 %v5640
        %5650 = vmatprep.subr.bf16.mxu0 0
        %5651 = vmatpush1.bf16.msra.mxu0 0
        %5652 = vmatprep.subr.bf16.mxu0 0
        %5653 = vmatpush1.bf16.msra.mxu0 0
        %5654 = vmatprep.subr.bf16.mxu0 0
        %5655 = vmatpush1.bf16.msra.mxu0 0
        %5656 = vmatprep.subr.bf16.mxu0 0
        %5657 = vmatpush1.bf16.msra.mxu0 0
        %5658 = vmatprep.subr.bf16.mxu0 0
        %5659 = vmatpush1.bf16.msra.mxu0 0
        %5660 = vmatprep.subr.bf16.mxu0 0
        %5661 = vmatpush1.bf16.msra.mxu0 0
        %5662 = vmatprep.subr.bf16.mxu0 0
        %5663 = vmatpush1.bf16.msra.mxu0 0
        %5664 = vmatprep.subr.bf16.mxu0 0
        %5665 = vmatpush1.bf16.msra.mxu0 0
        %5666 = vmatprep.subr.bf16.mxu0 0
        %5667 = vmatpush1.bf16.msra.mxu0 0
        %5668 = vmatprep.subr.bf16.mxu0 0
        %5669 = vmatpush1.bf16.msra.mxu0 0
        %5670 = vmatprep.subr.bf16.mxu0 0
        %5671 = vmatpush1.bf16.msra.mxu0 0
        %5672 = vmatprep.subr.bf16.mxu0 0
        %5673 = vmatpush1.bf16.msra.mxu0 0
        %5674 = vmatprep.subr.bf16.mxu0 0
        %5675 = vmatpush1.bf16.msra.mxu0 0
        %5676 = vmatprep.subr.bf16.mxu0 0
        %5677 = vmatpush1.bf16.msra.mxu0 0
        %5678 = vmatprep.mubr.bf16.mxu0 0
        %5679 = vmatmul.mubr.bf16.gmra.mrb[0].mxu0 %v5644
        %v5680 = vpop.f32.mrb[0].mxu0
        %v5681 = vadd.f32 0.0, %v5680
        %v5682 = vpop.f32.mrb[0].mxu0
        %v5683 = vpop.f32.mrb[0].mxu0
        %v5684 = vpop.f32.mrb[0].mxu0
        %5685 = vdwg.mxu0
        %v5686 = vadd.f32 %v5620, %v5681
        %v5687 = vld [vmem:[%s1237] ss:$2 sm:$0x7]
        %v5688 = vpack.c.bf16 %v5687, %v5687
        %v5689 = vld [vmem:[%s3 + $0x30] sm:$0xf]
        %v5690 = vld [vmem:[%s3 + $0x34] sm:$0xf]
        %v5691 = vld [vmem:[%s3 + $0x38] sm:$0xf]
        %v5692 = vld [vmem:[%s3 + $0x3c] sm:$0xf]
        %v5697 = vunpack.c.l.b16 %v5689
        %v5698 = vunpack.c.l.b16 %v5690
        %v5699 = vunpack.c.l.b16 %v5691
        %v5700 = vunpack.c.l.b16 %v5692
        %v5701 = vpack.c.b16 %v5698, %v5697
        %v5702 = vpack.c.b16 %v5700, %v5699
        %v5706 = vsel %vm1040, %v5688, 0
        %5708 = vmatprep.subr.bf16.mxu0 0
        %5709 = vmatpush1.bf16.msra.mxu0 %v5701
        %5710 = vmatprep.subr.bf16.mxu0 0
        %5711 = vmatpush1.bf16.msra.mxu0 %v5702
        %5712 = vmatprep.subr.bf16.mxu0 0
        %5713 = vmatpush1.bf16.msra.mxu0 0
        %5714 = vmatprep.subr.bf16.mxu0 0
        %5715 = vmatpush1.bf16.msra.mxu0 0
        %5716 = vmatprep.subr.bf16.mxu0 0
        %5717 = vmatpush1.bf16.msra.mxu0 0
        %5718 = vmatprep.subr.bf16.mxu0 0
        %5719 = vmatpush1.bf16.msra.mxu0 0
        %5720 = vmatprep.subr.bf16.mxu0 0
        %5721 = vmatpush1.bf16.msra.mxu0 0
        %5722 = vmatprep.subr.bf16.mxu0 0
        %5723 = vmatpush1.bf16.msra.mxu0 0
        %5724 = vmatprep.subr.bf16.mxu0 0
        %5725 = vmatpush1.bf16.msra.mxu0 0
        %5726 = vmatprep.subr.bf16.mxu0 0
        %5727 = vmatpush1.bf16.msra.mxu0 0
        %5728 = vmatprep.subr.bf16.mxu0 0
        %5729 = vmatpush1.bf16.msra.mxu0 0
        %5730 = vmatprep.subr.bf16.mxu0 0
        %5731 = vmatpush1.bf16.msra.mxu0 0
        %5732 = vmatprep.subr.bf16.mxu0 0
        %5733 = vmatpush1.bf16.msra.mxu0 0
        %5734 = vmatprep.subr.bf16.mxu0 0
        %5735 = vmatpush1.bf16.msra.mxu0 0
        %5736 = vmatprep.subr.bf16.mxu0 0
        %5737 = vmatpush1.bf16.msra.mxu0 0
        %5738 = vmatprep.subr.bf16.mxu0 0
        %5739 = vmatpush1.bf16.msra.mxu0 0
        %5740 = vmatprep.mubr.bf16.mxu0 0
        %5741 = vmatmul.mubr.bf16.gmra.mrb[0].mxu0 %v5706
        %v5742 = vpop.f32.mrb[0].mxu0
        %v5743 = vadd.f32 0.0, %v5742
        %v5744 = vpop.f32.mrb[0].mxu0
        %v5745 = vpop.f32.mrb[0].mxu0
        %v5746 = vpop.f32.mrb[0].mxu0
        %5747 = vdwg.mxu0
        %v5748 = vadd.f32 %v5686, %v5743
        %v5749 = vld [vmem:[%s1300] ss:$2 sm:$0x7]
        %v5750 = vpack.c.bf16 %v5749, %v5749
        %v5751 = vld [vmem:[%s3 + $0x40] sm:$0xf]
        %v5752 = vld [vmem:[%s3 + $0x44] sm:$0xf]
        %v5753 = vld [vmem:[%s3 + $0x48] sm:$0xf]
        %v5754 = vld [vmem:[%s3 + $0x4c] sm:$0xf]
        %v5759 = vunpack.c.l.b16 %v5751
        %v5760 = vunpack.c.l.b16 %v5752
        %v5761 = vunpack.c.l.b16 %v5753
        %v5762 = vunpack.c.l.b16 %v5754
        %v5763 = vpack.c.b16 %v5760, %v5759
        %v5764 = vpack.c.b16 %v5762, %v5761
        %v5768 = vsel %vm1040, %v5750, 0
        %5770 = vmatprep.subr.bf16.mxu0 0
        %5771 = vmatpush1.bf16.msra.mxu0 %v5763
        %5772 = vmatprep.subr.bf16.mxu0 0
        %5773 = vmatpush1.bf16.msra.mxu0 %v5764
        %5774 = vmatprep.subr.bf16.mxu0 0
        %5775 = vmatpush1.bf16.msra.mxu0 0
        %5776 = vmatprep.subr.bf16.mxu0 0
        %5777 = vmatpush1.bf16.msra.mxu0 0
        %5778 = vmatprep.subr.bf16.mxu0 0
        %5779 = vmatpush1.bf16.msra.mxu0 0
        %5780 = vmatprep.subr.bf16.mxu0 0
        %5781 = vmatpush1.bf16.msra.mxu0 0
        %5782 = vmatprep.subr.bf16.mxu0 0
        %5783 = vmatpush1.bf16.msra.mxu0 0
        %5784 = vmatprep.subr.bf16.mxu0 0
        %5785 = vmatpush1.bf16.msra.mxu0 0
        %5786 = vmatprep.subr.bf16.mxu0 0
        %5787 = vmatpush1.bf16.msra.mxu0 0
        %5788 = vmatprep.subr.bf16.mxu0 0
        %5789 = vmatpush1.bf16.msra.mxu0 0
        %5790 = vmatprep.subr.bf16.mxu0 0
        %5791 = vmatpush1.bf16.msra.mxu0 0
        %5792 = vmatprep.subr.bf16.mxu0 0
        %5793 = vmatpush1.bf16.msra.mxu0 0
        %5794 = vmatprep.subr.bf16.mxu0 0
        %5795 = vmatpush1.bf16.msra.mxu0 0
        %5796 = vmatprep.subr.bf16.mxu0 0
        %5797 = vmatpush1.bf16.msra.mxu0 0
        %5798 = vmatprep.subr.bf16.mxu0 0
        %5799 = vmatpush1.bf16.msra.mxu0 0
        %5800 = vmatprep.subr.bf16.mxu0 0
        %5801 = vmatpush1.bf16.msra.mxu0 0
        %5802 = vmatprep.mubr.bf16.mxu0 0
        %5803 = vmatmul.mubr.bf16.gmra.mrb[0].mxu0 %v5768
        %v5804 = vpop.f32.mrb[0].mxu0
        %v5805 = vadd.f32 0.0, %v5804
        %v5806 = vpop.f32.mrb[0].mxu0
        %v5807 = vpop.f32.mrb[0].mxu0
        %v5808 = vpop.f32.mrb[0].mxu0
        %5809 = vdwg.mxu0
        %v5810 = vadd.f32 %v5748, %v5805
        %v5811 = vld [vmem:[%s1363] ss:$2 sm:$0x7]
        %v5812 = vpack.c.bf16 %v5811, %v5811
        %v5813 = vld [vmem:[%s3 + $0x50] sm:$0xf]
        %v5814 = vld [vmem:[%s3 + $0x54] sm:$0xf]
        %v5815 = vld [vmem:[%s3 + $0x58] sm:$0xf]
        %v5816 = vld [vmem:[%s3 + $0x5c] sm:$0xf]
        %v5821 = vunpack.c.l.b16 %v5813
        %v5822 = vunpack.c.l.b16 %v5814
        %v5823 = vunpack.c.l.b16 %v5815
        %v5824 = vunpack.c.l.b16 %v5816
        %v5825 = vpack.c.b16 %v5822, %v5821
        %v5826 = vpack.c.b16 %v5824, %v5823
        %v5830 = vsel %vm1040, %v5812, 0
        %5832 = vmatprep.subr.bf16.mxu0 0
        %5833 = vmatpush1.bf16.msra.mxu0 %v5825
        %5834 = vmatprep.subr.bf16.mxu0 0
        %5835 = vmatpush1.bf16.msra.mxu0 %v5826
        %5836 = vmatprep.subr.bf16.mxu0 0
        %5837 = vmatpush1.bf16.msra.mxu0 0
        %5838 = vmatprep.subr.bf16.mxu0 0
        %5839 = vmatpush1.bf16.msra.mxu0 0
        %5840 = vmatprep.subr.bf16.mxu0 0
        %5841 = vmatpush1.bf16.msra.mxu0 0
        %5842 = vmatprep.subr.bf16.mxu0 0
        %5843 = vmatpush1.bf16.msra.mxu0 0
        %5844 = vmatprep.subr.bf16.mxu0 0
        %5845 = vmatpush1.bf16.msra.mxu0 0
        %5846 = vmatprep.subr.bf16.mxu0 0
        %5847 = vmatpush1.bf16.msra.mxu0 0
        %5848 = vmatprep.subr.bf16.mxu0 0
        %5849 = vmatpush1.bf16.msra.mxu0 0
        %5850 = vmatprep.subr.bf16.mxu0 0
        %5851 = vmatpush1.bf16.msra.mxu0 0
        %5852 = vmatprep.subr.bf16.mxu0 0
        %5853 = vmatpush1.bf16.msra.mxu0 0
        %5854 = vmatprep.subr.bf16.mxu0 0
        %5855 = vmatpush1.bf16.msra.mxu0 0
        %5856 = vmatprep.subr.bf16.mxu0 0
        %5857 = vmatpush1.bf16.msra.mxu0 0
        %5858 = vmatprep.subr.bf16.mxu0 0
        %5859 = vmatpush1.bf16.msra.mxu0 0
        %5860 = vmatprep.subr.bf16.mxu0 0
        %5861 = vmatpush1.bf16.msra.mxu0 0
        %5862 = vmatprep.subr.bf16.mxu0 0
        %5863 = vmatpush1.bf16.msra.mxu0 0
        %5864 = vmatprep.mubr.bf16.mxu0 0
        %5865 = vmatmul.mubr.bf16.gmra.mrb[0].mxu0 %v5830
        %v5866 = vpop.f32.mrb[0].mxu0
        %v5867 = vadd.f32 0.0, %v5866
        %v5868 = vpop.f32.mrb[0].mxu0
        %v5869 = vpop.f32.mrb[0].mxu0
        %v5870 = vpop.f32.mrb[0].mxu0
        %5871 = vdwg.mxu0
        %v5872 = vadd.f32 %v5810, %v5867
        %v5873 = vld [vmem:[%s1426] ss:$2 sm:$0x7]
        %v5874 = vpack.c.bf16 %v5873, %v5873
        %v5875 = vld [vmem:[%s3 + $0x60] sm:$0xf]
        %v5876 = vld [vmem:[%s3 + $0x64] sm:$0xf]
        %v5877 = vld [vmem:[%s3 + $0x68] sm:$0xf]
        %v5878 = vld [vmem:[%s3 + $0x6c] sm:$0xf]
        %v5883 = vunpack.c.l.b16 %v5875
        %v5884 = vunpack.c.l.b16 %v5876
        %v5885 = vunpack.c.l.b16 %v5877
        %v5886 = vunpack.c.l.b16 %v5878
        %v5887 = vpack.c.b16 %v5884, %v5883
        %v5888 = vpack.c.b16 %v5886, %v5885
        %v5892 = vsel %vm1040, %v5874, 0
        %5894 = vmatprep.subr.bf16.mxu0 0
        %5895 = vmatpush1.bf16.msra.mxu0 %v5887
        %5896 = vmatprep.subr.bf16.mxu0 0
        %5897 = vmatpush1.bf16.msra.mxu0 %v5888
        %5898 = vmatprep.subr.bf16.mxu0 0
        %5899 = vmatpush1.bf16.msra.mxu0 0
        %5900 = vmatprep.subr.bf16.mxu0 0
        %5901 = vmatpush1.bf16.msra.mxu0 0
        %5902 = vmatprep.subr.bf16.mxu0 0
        %5903 = vmatpush1.bf16.msra.mxu0 0
        %5904 = vmatprep.subr.bf16.mxu0 0
        %5905 = vmatpush1.bf16.msra.mxu0 0
        %5906 = vmatprep.subr.bf16.mxu0 0
        %5907 = vmatpush1.bf16.msra.mxu0 0
        %5908 = vmatprep.subr.bf16.mxu0 0
        %5909 = vmatpush1.bf16.msra.mxu0 0
        %5910 = vmatprep.subr.bf16.mxu0 0
        %5911 = vmatpush1.bf16.msra.mxu0 0
        %5912 = vmatprep.subr.bf16.mxu0 0
        %5913 = vmatpush1.bf16.msra.mxu0 0
        %5914 = vmatprep.subr.bf16.mxu0 0
        %5915 = vmatpush1.bf16.msra.mxu0 0
        %5916 = vmatprep.subr.bf16.mxu0 0
        %5917 = vmatpush1.bf16.msra.mxu0 0
        %5918 = vmatprep.subr.bf16.mxu0 0
        %5919 = vmatpush1.bf16.msra.mxu0 0
        %5920 = vmatprep.subr.bf16.mxu0 0
        %5921 = vmatpush1.bf16.msra.mxu0 0
        %5922 = vmatprep.subr.bf16.mxu0 0
        %5923 = vmatpush1.bf16.msra.mxu0 0
        %5924 = vmatprep.subr.bf16.mxu0 0
        %5925 = vmatpush1.bf16.msra.mxu0 0
        %5926 = vmatprep.mubr.bf16.mxu0 0
        %5927 = vmatmul.mubr.bf16.gmra.mrb[0].mxu0 %v5892
        %v5928 = vpop.f32.mrb[0].mxu0
        %v5929 = vadd.f32 0.0, %v5928
        %v5930 = vpop.f32.mrb[0].mxu0
        %v5931 = vpop.f32.mrb[0].mxu0
        %v5932 = vpop.f32.mrb[0].mxu0
        %5933 = vdwg.mxu0
        %v5934 = vadd.f32 %v5872, %v5929
        %v5935 = vld [vmem:[%s1489] ss:$2 sm:$0x7]
        %v5936 = vpack.c.bf16 %v5935, %v5935
        %v5937 = vld [vmem:[%s3 + $0x70] sm:$0xf]
        %v5938 = vld [vmem:[%s3 + $0x74] sm:$0xf]
        %v5939 = vld [vmem:[%s3 + $0x78] sm:$0xf]
        %v5940 = vld [vmem:[%s3 + $0x7c] sm:$0xf]
        %v5945 = vunpack.c.l.b16 %v5937
        %v5946 = vunpack.c.l.b16 %v5938
        %v5947 = vunpack.c.l.b16 %v5939
        %v5948 = vunpack.c.l.b16 %v5940
        %v5949 = vpack.c.b16 %v5946, %v5945
        %v5950 = vpack.c.b16 %v5948, %v5947
        %v5954 = vsel %vm1040, %v5936, 0
        %5956 = vmatprep.subr.bf16.mxu0 0
        %5957 = vmatpush1.bf16.msra.mxu0 %v5949
        %5958 = vmatprep.subr.bf16.mxu0 0
        %5959 = vmatpush1.bf16.msra.mxu0 %v5950
        %5960 = vmatprep.subr.bf16.mxu0 0
        %5961 = vmatpush1.bf16.msra.mxu0 0
        %5962 = vmatprep.subr.bf16.mxu0 0
        %5963 = vmatpush1.bf16.msra.mxu0 0
        %5964 = vmatprep.subr.bf16.mxu0 0
        %5965 = vmatpush1.bf16.msra.mxu0 0
        %5966 = vmatprep.subr.bf16.mxu0 0
        %5967 = vmatpush1.bf16.msra.mxu0 0
        %5968 = vmatprep.subr.bf16.mxu0 0
        %5969 = vmatpush1.bf16.msra.mxu0 0
        %5970 = vmatprep.subr.bf16.mxu0 0
        %5971 = vmatpush1.bf16.msra.mxu0 0
        %5972 = vmatprep.subr.bf16.mxu0 0
        %5973 = vmatpush1.bf16.msra.mxu0 0
        %5974 = vmatprep.subr.bf16.mxu0 0
        %5975 = vmatpush1.bf16.msra.mxu0 0
        %5976 = vmatprep.subr.bf16.mxu0 0
        %5977 = vmatpush1.bf16.msra.mxu0 0
        %5978 = vmatprep.subr.bf16.mxu0 0
        %5979 = vmatpush1.bf16.msra.mxu0 0
        %5980 = vmatprep.subr.bf16.mxu0 0
        %5981 = vmatpush1.bf16.msra.mxu0 0
        %5982 = vmatprep.subr.bf16.mxu0 0
        %5983 = vmatpush1.bf16.msra.mxu0 0
        %5984 = vmatprep.subr.bf16.mxu0 0
        %5985 = vmatpush1.bf16.msra.mxu0 0
        %5986 = vmatprep.subr.bf16.mxu0 0
        %5987 = vmatpush1.bf16.msra.mxu0 0
        %5988 = vmatprep.mubr.bf16.mxu0 0
        %5989 = vmatmul.mubr.bf16.gmra.mrb[0].mxu0 %v5954
        %v5990 = vpop.f32.mrb[0].mxu0
        %v5991 = vadd.f32 0.0, %v5990
        %v5992 = vpop.f32.mrb[0].mxu0
        %v5993 = vpop.f32.mrb[0].mxu0
        %v5994 = vpop.f32.mrb[0].mxu0
        %5995 = vdwg.mxu0
        %v5996 = vadd.f32 %v5934, %v5991
        %v5997 = vld [vmem:[%s1552] ss:$2 sm:$0x7]
        %v5998 = vpack.c.bf16 %v5997, %v5997
        %v5999 = vld [vmem:[%s3 + $0x80] sm:$0xf]
        %v6000 = vld [vmem:[%s3 + $0x84] sm:$0xf]
        %v6001 = vld [vmem:[%s3 + $0x88] sm:$0xf]
        %v6002 = vld [vmem:[%s3 + $0x8c] sm:$0xf]
        %v6007 = vunpack.c.l.b16 %v5999
        %v6008 = vunpack.c.l.b16 %v6000
        %v6009 = vunpack.c.l.b16 %v6001
        %v6010 = vunpack.c.l.b16 %v6002
        %v6011 = vpack.c.b16 %v6008, %v6007
        %v6012 = vpack.c.b16 %v6010, %v6009
        %v6016 = vsel %vm1040, %v5998, 0
        %6018 = vmatprep.subr.bf16.mxu0 0
        %6019 = vmatpush1.bf16.msra.mxu0 %v6011
        %6020 = vmatprep.subr.bf16.mxu0 0
        %6021 = vmatpush1.bf16.msra.mxu0 %v6012
        %6022 = vmatprep.subr.bf16.mxu0 0
        %6023 = vmatpush1.bf16.msra.mxu0 0
        %6024 = vmatprep.subr.bf16.mxu0 0
        %6025 = vmatpush1.bf16.msra.mxu0 0
        %6026 = vmatprep.subr.bf16.mxu0 0
        %6027 = vmatpush1.bf16.msra.mxu0 0
        %6028 = vmatprep.subr.bf16.mxu0 0
        %6029 = vmatpush1.bf16.msra.mxu0 0
        %6030 = vmatprep.subr.bf16.mxu0 0
        %6031 = vmatpush1.bf16.msra.mxu0 0
        %6032 = vmatprep.subr.bf16.mxu0 0
        %6033 = vmatpush1.bf16.msra.mxu0 0
        %6034 = vmatprep.subr.bf16.mxu0 0
        %6035 = vmatpush1.bf16.msra.mxu0 0
        %6036 = vmatprep.subr.bf16.mxu0 0
        %6037 = vmatpush1.bf16.msra.mxu0 0
        %6038 = vmatprep.subr.bf16.mxu0 0
        %6039 = vmatpush1.bf16.msra.mxu0 0
        %6040 = vmatprep.subr.bf16.mxu0 0
        %6041 = vmatpush1.bf16.msra.mxu0 0
        %6042 = vmatprep.subr.bf16.mxu0 0
        %6043 = vmatpush1.bf16.msra.mxu0 0
        %6044 = vmatprep.subr.bf16.mxu0 0
        %6045 = vmatpush1.bf16.msra.mxu0 0
        %6046 = vmatprep.subr.bf16.mxu0 0
        %6047 = vmatpush1.bf16.msra.mxu0 0
        %6048 = vmatprep.subr.bf16.mxu0 0
        %6049 = vmatpush1.bf16.msra.mxu0 0
        %6050 = vmatprep.mubr.bf16.mxu0 0
        %6051 = vmatmul.mubr.bf16.gmra.mrb[0].mxu0 %v6016
        %v6052 = vpop.f32.mrb[0].mxu0
        %v6053 = vadd.f32 0.0, %v6052
        %v6054 = vpop.f32.mrb[0].mxu0
        %v6055 = vpop.f32.mrb[0].mxu0
        %v6056 = vpop.f32.mrb[0].mxu0
        %6057 = vdwg.mxu0
        %v6058 = vadd.f32 %v5996, %v6053
        %v6059 = vld [vmem:[%s1615] ss:$2 sm:$0x7]
        %v6060 = vpack.c.bf16 %v6059, %v6059
        %v6061 = vld [vmem:[%s3 + $0x90] sm:$0xf]
        %v6062 = vld [vmem:[%s3 + $0x94] sm:$0xf]
        %v6063 = vld [vmem:[%s3 + $0x98] sm:$0xf]
        %v6064 = vld [vmem:[%s3 + $0x9c] sm:$0xf]
        %v6069 = vunpack.c.l.b16 %v6061
        %v6070 = vunpack.c.l.b16 %v6062
        %v6071 = vunpack.c.l.b16 %v6063
        %v6072 = vunpack.c.l.b16 %v6064
        %v6073 = vpack.c.b16 %v6070, %v6069
        %v6074 = vpack.c.b16 %v6072, %v6071
        %v6078 = vsel %vm1040, %v6060, 0
        %6080 = vmatprep.subr.bf16.mxu0 0
        %6081 = vmatpush1.bf16.msra.mxu0 %v6073
        %6082 = vmatprep.subr.bf16.mxu0 0
        %6083 = vmatpush1.bf16.msra.mxu0 %v6074
        %6084 = vmatprep.subr.bf16.mxu0 0
        %6085 = vmatpush1.bf16.msra.mxu0 0
        %6086 = vmatprep.subr.bf16.mxu0 0
        %6087 = vmatpush1.bf16.msra.mxu0 0
        %6088 = vmatprep.subr.bf16.mxu0 0
        %6089 = vmatpush1.bf16.msra.mxu0 0
        %6090 = vmatprep.subr.bf16.mxu0 0
        %6091 = vmatpush1.bf16.msra.mxu0 0
        %6092 = vmatprep.subr.bf16.mxu0 0
        %6093 = vmatpush1.bf16.msra.mxu0 0
        %6094 = vmatprep.subr.bf16.mxu0 0
        %6095 = vmatpush1.bf16.msra.mxu0 0
        %6096 = vmatprep.subr.bf16.mxu0 0
        %6097 = vmatpush1.bf16.msra.mxu0 0
        %6098 = vmatprep.subr.bf16.mxu0 0
        %6099 = vmatpush1.bf16.msra.mxu0 0
        %6100 = vmatprep.subr.bf16.mxu0 0
        %6101 = vmatpush1.bf16.msra.mxu0 0
        %6102 = vmatprep.subr.bf16.mxu0 0
        %6103 = vmatpush1.bf16.msra.mxu0 0
        %6104 = vmatprep.subr.bf16.mxu0 0
        %6105 = vmatpush1.bf16.msra.mxu0 0
        %6106 = vmatprep.subr.bf16.mxu0 0
        %6107 = vmatpush1.bf16.msra.mxu0 0
        %6108 = vmatprep.subr.bf16.mxu0 0
        %6109 = vmatpush1.bf16.msra.mxu0 0
        %6110 = vmatprep.subr.bf16.mxu0 0
        %6111 = vmatpush1.bf16.msra.mxu0 0
        %6112 = vmatprep.mubr.bf16.mxu0 0
        %6113 = vmatmul.mubr.bf16.gmra.mrb[0].mxu0 %v6078
        %v6114 = vpop.f32.mrb[0].mxu0
        %v6115 = vadd.f32 0.0, %v6114
        %v6116 = vpop.f32.mrb[0].mxu0
        %v6117 = vpop.f32.mrb[0].mxu0
        %v6118 = vpop.f32.mrb[0].mxu0
        %6119 = vdwg.mxu0
        %v6120 = vadd.f32 %v6058, %v6115
        %v6121 = vld [vmem:[%s1678] ss:$2 sm:$0x7]
        %v6122 = vpack.c.bf16 %v6121, %v6121
        %v6123 = vld [vmem:[%s3 + $0xa0] sm:$0xf]
        %v6124 = vld [vmem:[%s3 + $0xa4] sm:$0xf]
        %v6125 = vld [vmem:[%s3 + $0xa8] sm:$0xf]
        %v6126 = vld [vmem:[%s3 + $0xac] sm:$0xf]
        %v6131 = vunpack.c.l.b16 %v6123
        %v6132 = vunpack.c.l.b16 %v6124
        %v6133 = vunpack.c.l.b16 %v6125
        %v6134 = vunpack.c.l.b16 %v6126
        %v6135 = vpack.c.b16 %v6132, %v6131
        %v6136 = vpack.c.b16 %v6134, %v6133
        %v6140 = vsel %vm1040, %v6122, 0
        %6142 = vmatprep.subr.bf16.mxu0 0
        %6143 = vmatpush1.bf16.msra.mxu0 %v6135
        %6144 = vmatprep.subr.bf16.mxu0 0
        %6145 = vmatpush1.bf16.msra.mxu0 %v6136
        %6146 = vmatprep.subr.bf16.mxu0 0
        %6147 = vmatpush1.bf16.msra.mxu0 0
        %6148 = vmatprep.subr.bf16.mxu0 0
        %6149 = vmatpush1.bf16.msra.mxu0 0
        %6150 = vmatprep.subr.bf16.mxu0 0
        %6151 = vmatpush1.bf16.msra.mxu0 0
        %6152 = vmatprep.subr.bf16.mxu0 0
        %6153 = vmatpush1.bf16.msra.mxu0 0
        %6154 = vmatprep.subr.bf16.mxu0 0
        %6155 = vmatpush1.bf16.msra.mxu0 0
        %6156 = vmatprep.subr.bf16.mxu0 0
        %6157 = vmatpush1.bf16.msra.mxu0 0
        %6158 = vmatprep.subr.bf16.mxu0 0
        %6159 = vmatpush1.bf16.msra.mxu0 0
        %6160 = vmatprep.subr.bf16.mxu0 0
        %6161 = vmatpush1.bf16.msra.mxu0 0
        %6162 = vmatprep.subr.bf16.mxu0 0
        %6163 = vmatpush1.bf16.msra.mxu0 0
        %6164 = vmatprep.subr.bf16.mxu0 0
        %6165 = vmatpush1.bf16.msra.mxu0 0
        %6166 = vmatprep.subr.bf16.mxu0 0
        %6167 = vmatpush1.bf16.msra.mxu0 0
        %6168 = vmatprep.subr.bf16.mxu0 0
        %6169 = vmatpush1.bf16.msra.mxu0 0
        %6170 = vmatprep.subr.bf16.mxu0 0
        %6171 = vmatpush1.bf16.msra.mxu0 0
        %6172 = vmatprep.subr.bf16.mxu0 0
        %6173 = vmatpush1.bf16.msra.mxu0 0
        %6174 = vmatprep.mubr.bf16.mxu0 0
        %6175 = vmatmul.mubr.bf16.gmra.mrb[0].mxu0 %v6140
        %v6176 = vpop.f32.mrb[0].mxu0
        %v6177 = vadd.f32 0.0, %v6176
        %v6178 = vpop.f32.mrb[0].mxu0
        %v6179 = vpop.f32.mrb[0].mxu0
        %v6180 = vpop.f32.mrb[0].mxu0
        %6181 = vdwg.mxu0
        %v6182 = vadd.f32 %v6120, %v6177
        %v6183 = vld [vmem:[%s1741] ss:$2 sm:$0x7]
        %v6184 = vpack.c.bf16 %v6183, %v6183
        %v6185 = vld [vmem:[%s3 + $0xb0] sm:$0xf]
        %v6186 = vld [vmem:[%s3 + $0xb4] sm:$0xf]
        %v6187 = vld [vmem:[%s3 + $0xb8] sm:$0xf]
        %v6188 = vld [vmem:[%s3 + $0xbc] sm:$0xf]
        %v6193 = vunpack.c.l.b16 %v6185
        %v6194 = vunpack.c.l.b16 %v6186
        %v6195 = vunpack.c.l.b16 %v6187
        %v6196 = vunpack.c.l.b16 %v6188
        %v6197 = vpack.c.b16 %v6194, %v6193
        %v6198 = vpack.c.b16 %v6196, %v6195
        %v6202 = vsel %vm1040, %v6184, 0
        %6204 = vmatprep.subr.bf16.mxu0 0
        %6205 = vmatpush1.bf16.msra.mxu0 %v6197
        %6206 = vmatprep.subr.bf16.mxu0 0
        %6207 = vmatpush1.bf16.msra.mxu0 %v6198
        %6208 = vmatprep.subr.bf16.mxu0 0
        %6209 = vmatpush1.bf16.msra.mxu0 0
        %6210 = vmatprep.subr.bf16.mxu0 0
        %6211 = vmatpush1.bf16.msra.mxu0 0
        %6212 = vmatprep.subr.bf16.mxu0 0
        %6213 = vmatpush1.bf16.msra.mxu0 0
        %6214 = vmatprep.subr.bf16.mxu0 0
        %6215 = vmatpush1.bf16.msra.mxu0 0
        %6216 = vmatprep.subr.bf16.mxu0 0
        %6217 = vmatpush1.bf16.msra.mxu0 0
        %6218 = vmatprep.subr.bf16.mxu0 0
        %6219 = vmatpush1.bf16.msra.mxu0 0
        %6220 = vmatprep.subr.bf16.mxu0 0
        %6221 = vmatpush1.bf16.msra.mxu0 0
        %6222 = vmatprep.subr.bf16.mxu0 0
        %6223 = vmatpush1.bf16.msra.mxu0 0
        %6224 = vmatprep.subr.bf16.mxu0 0
        %6225 = vmatpush1.bf16.msra.mxu0 0
        %6226 = vmatprep.subr.bf16.mxu0 0
        %6227 = vmatpush1.bf16.msra.mxu0 0
        %6228 = vmatprep.subr.bf16.mxu0 0
        %6229 = vmatpush1.bf16.msra.mxu0 0
        %6230 = vmatprep.subr.bf16.mxu0 0
        %6231 = vmatpush1.bf16.msra.mxu0 0
        %6232 = vmatprep.subr.bf16.mxu0 0
        %6233 = vmatpush1.bf16.msra.mxu0 0
        %6234 = vmatprep.subr.bf16.mxu0 0
        %6235 = vmatpush1.bf16.msra.mxu0 0
        %6236 = vmatprep.mubr.bf16.mxu0 0
        %6237 = vmatmul.mubr.bf16.gmra.mrb[0].mxu0 %v6202
        %v6238 = vpop.f32.mrb[0].mxu0
        %v6239 = vadd.f32 0.0, %v6238
        %v6240 = vpop.f32.mrb[0].mxu0
        %v6241 = vpop.f32.mrb[0].mxu0
        %v6242 = vpop.f32.mrb[0].mxu0
        %6243 = vdwg.mxu0
        %v6244 = vadd.f32 %v6182, %v6239
        %v6245 = vld [vmem:[%s1804] ss:$2 sm:$0x7]
        %v6246 = vpack.c.bf16 %v6245, %v6245
        %v6247 = vld [vmem:[%s3 + $0xc0] sm:$0xf]
        %v6248 = vld [vmem:[%s3 + $0xc4] sm:$0xf]
        %v6249 = vld [vmem:[%s3 + $0xc8] sm:$0xf]
        %v6250 = vld [vmem:[%s3 + $0xcc] sm:$0xf]
        %v6255 = vunpack.c.l.b16 %v6247
        %v6256 = vunpack.c.l.b16 %v6248
        %v6257 = vunpack.c.l.b16 %v6249
        %v6258 = vunpack.c.l.b16 %v6250
        %v6259 = vpack.c.b16 %v6256, %v6255
        %v6260 = vpack.c.b16 %v6258, %v6257
        %v6264 = vsel %vm1040, %v6246, 0
        %6266 = vmatprep.subr.bf16.mxu0 0
        %6267 = vmatpush1.bf16.msra.mxu0 %v6259
        %6268 = vmatprep.subr.bf16.mxu0 0
        %6269 = vmatpush1.bf16.msra.mxu0 %v6260
        %6270 = vmatprep.subr.bf16.mxu0 0
        %6271 = vmatpush1.bf16.msra.mxu0 0
        %6272 = vmatprep.subr.bf16.mxu0 0
        %6273 = vmatpush1.bf16.msra.mxu0 0
        %6274 = vmatprep.subr.bf16.mxu0 0
        %6275 = vmatpush1.bf16.msra.mxu0 0
        %6276 = vmatprep.subr.bf16.mxu0 0
        %6277 = vmatpush1.bf16.msra.mxu0 0
        %6278 = vmatprep.subr.bf16.mxu0 0
        %6279 = vmatpush1.bf16.msra.mxu0 0
        %6280 = vmatprep.subr.bf16.mxu0 0
        %6281 = vmatpush1.bf16.msra.mxu0 0
        %6282 = vmatprep.subr.bf16.mxu0 0
        %6283 = vmatpush1.bf16.msra.mxu0 0
        %6284 = vmatprep.subr.bf16.mxu0 0
        %6285 = vmatpush1.bf16.msra.mxu0 0
        %6286 = vmatprep.subr.bf16.mxu0 0
        %6287 = vmatpush1.bf16.msra.mxu0 0
        %6288 = vmatprep.subr.bf16.mxu0 0
        %6289 = vmatpush1.bf16.msra.mxu0 0
        %6290 = vmatprep.subr.bf16.mxu0 0
        %6291 = vmatpush1.bf16.msra.mxu0 0
        %6292 = vmatprep.subr.bf16.mxu0 0
        %6293 = vmatpush1.bf16.msra.mxu0 0
        %6294 = vmatprep.subr.bf16.mxu0 0
        %6295 = vmatpush1.bf16.msra.mxu0 0
        %6296 = vmatprep.subr.bf16.mxu0 0
        %6297 = vmatpush1.bf16.msra.mxu0 0
        %6298 = vmatprep.mubr.bf16.mxu0 0
        %6299 = vmatmul.mubr.bf16.gmra.mrb[0].mxu0 %v6264
        %v6300 = vpop.f32.mrb[0].mxu0
        %v6301 = vadd.f32 0.0, %v6300
        %v6302 = vpop.f32.mrb[0].mxu0
        %v6303 = vpop.f32.mrb[0].mxu0
        %v6304 = vpop.f32.mrb[0].mxu0
        %6305 = vdwg.mxu0
        %v6306 = vadd.f32 %v6244, %v6301
        %v6307 = vld [vmem:[%s1867] ss:$2 sm:$0x7]
        %v6308 = vpack.c.bf16 %v6307, %v6307
        %v6309 = vld [vmem:[%s3 + $0xd0] sm:$0xf]
        %v6310 = vld [vmem:[%s3 + $0xd4] sm:$0xf]
        %v6311 = vld [vmem:[%s3 + $0xd8] sm:$0xf]
        %v6312 = vld [vmem:[%s3 + $0xdc] sm:$0xf]
        %v6317 = vunpack.c.l.b16 %v6309
        %v6318 = vunpack.c.l.b16 %v6310
        %v6319 = vunpack.c.l.b16 %v6311
        %v6320 = vunpack.c.l.b16 %v6312
        %v6321 = vpack.c.b16 %v6318, %v6317
        %v6322 = vpack.c.b16 %v6320, %v6319
        %v6326 = vsel %vm1040, %v6308, 0
        %6328 = vmatprep.subr.bf16.mxu0 0
        %6329 = vmatpush1.bf16.msra.mxu0 %v6321
        %6330 = vmatprep.subr.bf16.mxu0 0
        %6331 = vmatpush1.bf16.msra.mxu0 %v6322
        %6332 = vmatprep.subr.bf16.mxu0 0
        %6333 = vmatpush1.bf16.msra.mxu0 0
        %6334 = vmatprep.subr.bf16.mxu0 0
        %6335 = vmatpush1.bf16.msra.mxu0 0
        %6336 = vmatprep.subr.bf16.mxu0 0
        %6337 = vmatpush1.bf16.msra.mxu0 0
        %6338 = vmatprep.subr.bf16.mxu0 0
        %6339 = vmatpush1.bf16.msra.mxu0 0
        %6340 = vmatprep.subr.bf16.mxu0 0
        %6341 = vmatpush1.bf16.msra.mxu0 0
        %6342 = vmatprep.subr.bf16.mxu0 0
        %6343 = vmatpush1.bf16.msra.mxu0 0
        %6344 = vmatprep.subr.bf16.mxu0 0
        %6345 = vmatpush1.bf16.msra.mxu0 0
        %6346 = vmatprep.subr.bf16.mxu0 0
        %6347 = vmatpush1.bf16.msra.mxu0 0
        %6348 = vmatprep.subr.bf16.mxu0 0
        %6349 = vmatpush1.bf16.msra.mxu0 0
        %6350 = vmatprep.subr.bf16.mxu0 0
        %6351 = vmatpush1.bf16.msra.mxu0 0
        %6352 = vmatprep.subr.bf16.mxu0 0
        %6353 = vmatpush1.bf16.msra.mxu0 0
        %6354 = vmatprep.subr.bf16.mxu0 0
        %6355 = vmatpush1.bf16.msra.mxu0 0
        %6356 = vmatprep.subr.bf16.mxu0 0
        %6357 = vmatpush1.bf16.msra.mxu0 0
        %6358 = vmatprep.subr.bf16.mxu0 0
        %6359 = vmatpush1.bf16.msra.mxu0 0
        %6360 = vmatprep.mubr.bf16.mxu0 0
        %6361 = vmatmul.mubr.bf16.gmra.mrb[0].mxu0 %v6326
        %v6362 = vpop.f32.mrb[0].mxu0
        %v6363 = vadd.f32 0.0, %v6362
        %v6364 = vpop.f32.mrb[0].mxu0
        %v6365 = vpop.f32.mrb[0].mxu0
        %v6366 = vpop.f32.mrb[0].mxu0
        %6367 = vdwg.mxu0
        %v6368 = vadd.f32 %v6306, %v6363
        %v6369 = vld [vmem:[%s1930] ss:$2 sm:$0x7]
        %v6370 = vpack.c.bf16 %v6369, %v6369
        %v6371 = vld [vmem:[%s3 + $0xe0] sm:$0xf]
        %v6372 = vld [vmem:[%s3 + $0xe4] sm:$0xf]
        %v6373 = vld [vmem:[%s3 + $0xe8] sm:$0xf]
        %v6374 = vld [vmem:[%s3 + $0xec] sm:$0xf]
        %v6379 = vunpack.c.l.b16 %v6371
        %v6380 = vunpack.c.l.b16 %v6372
        %v6381 = vunpack.c.l.b16 %v6373
        %v6382 = vunpack.c.l.b16 %v6374
        %v6383 = vpack.c.b16 %v6380, %v6379
        %v6384 = vpack.c.b16 %v6382, %v6381
        %v6388 = vsel %vm1040, %v6370, 0
        %6390 = vmatprep.subr.bf16.mxu0 0
        %6391 = vmatpush1.bf16.msra.mxu0 %v6383
        %6392 = vmatprep.subr.bf16.mxu0 0
        %6393 = vmatpush1.bf16.msra.mxu0 %v6384
        %6394 = vmatprep.subr.bf16.mxu0 0
        %6395 = vmatpush1.bf16.msra.mxu0 0
        %6396 = vmatprep.subr.bf16.mxu0 0
        %6397 = vmatpush1.bf16.msra.mxu0 0
        %6398 = vmatprep.subr.bf16.mxu0 0
        %6399 = vmatpush1.bf16.msra.mxu0 0
        %6400 = vmatprep.subr.bf16.mxu0 0
        %6401 = vmatpush1.bf16.msra.mxu0 0
        %6402 = vmatprep.subr.bf16.mxu0 0
        %6403 = vmatpush1.bf16.msra.mxu0 0
        %6404 = vmatprep.subr.bf16.mxu0 0
        %6405 = vmatpush1.bf16.msra.mxu0 0
        %6406 = vmatprep.subr.bf16.mxu0 0
        %6407 = vmatpush1.bf16.msra.mxu0 0
        %6408 = vmatprep.subr.bf16.mxu0 0
        %6409 = vmatpush1.bf16.msra.mxu0 0
        %6410 = vmatprep.subr.bf16.mxu0 0
        %6411 = vmatpush1.bf16.msra.mxu0 0
        %6412 = vmatprep.subr.bf16.mxu0 0
        %6413 = vmatpush1.bf16.msra.mxu0 0
        %6414 = vmatprep.subr.bf16.mxu0 0
        %6415 = vmatpush1.bf16.msra.mxu0 0
        %6416 = vmatprep.subr.bf16.mxu0 0
        %6417 = vmatpush1.bf16.msra.mxu0 0
        %6418 = vmatprep.subr.bf16.mxu0 0
        %6419 = vmatpush1.bf16.msra.mxu0 0
        %6420 = vmatprep.subr.bf16.mxu0 0
        %6421 = vmatpush1.bf16.msra.mxu0 0
        %6422 = vmatprep.mubr.bf16.mxu0 0
        %6423 = vmatmul.mubr.bf16.gmra.mrb[0].mxu0 %v6388
        %v6424 = vpop.f32.mrb[0].mxu0
        %v6425 = vadd.f32 0.0, %v6424
        %v6426 = vpop.f32.mrb[0].mxu0
        %v6427 = vpop.f32.mrb[0].mxu0
        %v6428 = vpop.f32.mrb[0].mxu0
        %6429 = vdwg.mxu0
        %v6430 = vadd.f32 %v6368, %v6425
        %v6431 = vld [vmem:[%s1993] ss:$2 sm:$0x7]
        %v6432 = vpack.c.bf16 %v6431, %v6431
        %v6433 = vld [vmem:[%s3 + $0xf0] sm:$0xf]
        %v6434 = vld [vmem:[%s3 + $0xf4] sm:$0xf]
        %v6435 = vld [vmem:[%s3 + $0xf8] sm:$0xf]
        %v6436 = vld [vmem:[%s3 + $0xfc] sm:$0xf]
        %v6441 = vunpack.c.l.b16 %v6433
        %v6442 = vunpack.c.l.b16 %v6434
        %v6443 = vunpack.c.l.b16 %v6435
        %v6444 = vunpack.c.l.b16 %v6436
        %v6445 = vpack.c.b16 %v6442, %v6441
        %v6446 = vpack.c.b16 %v6444, %v6443
        %v6450 = vsel %vm1040, %v6432, 0
        %6452 = vmatprep.subr.bf16.mxu0 0
        %6453 = vmatpush1.bf16.msra.mxu0 %v6445
        %6454 = vmatprep.subr.bf16.mxu0 0
        %6455 = vmatpush1.bf16.msra.mxu0 %v6446
        %6456 = vmatprep.subr.bf16.mxu0 0
        %6457 = vmatpush1.bf16.msra.mxu0 0
        %6458 = vmatprep.subr.bf16.mxu0 0
        %6459 = vmatpush1.bf16.msra.mxu0 0
        %6460 = vmatprep.subr.bf16.mxu0 0
        %6461 = vmatpush1.bf16.msra.mxu0 0
        %6462 = vmatprep.subr.bf16.mxu0 0
        %6463 = vmatpush1.bf16.msra.mxu0 0
        %6464 = vmatprep.subr.bf16.mxu0 0
        %6465 = vmatpush1.bf16.msra.mxu0 0
        %6466 = vmatprep.subr.bf16.mxu0 0
        %6467 = vmatpush1.bf16.msra.mxu0 0
        %6468 = vmatprep.subr.bf16.mxu0 0
        %6469 = vmatpush1.bf16.msra.mxu0 0
        %6470 = vmatprep.subr.bf16.mxu0 0
        %6471 = vmatpush1.bf16.msra.mxu0 0
        %6472 = vmatprep.subr.bf16.mxu0 0
        %6473 = vmatpush1.bf16.msra.mxu0 0
        %6474 = vmatprep.subr.bf16.mxu0 0
        %6475 = vmatpush1.bf16.msra.mxu0 0
        %6476 = vmatprep.subr.bf16.mxu0 0
        %6477 = vmatpush1.bf16.msra.mxu0 0
        %6478 = vmatprep.subr.bf16.mxu0 0
        %6479 = vmatpush1.bf16.msra.mxu0 0
        %6480 = vmatprep.subr.bf16.mxu0 0
        %6481 = vmatpush1.bf16.msra.mxu0 0
        %6482 = vmatprep.subr.bf16.mxu0 0
        %6483 = vmatpush1.bf16.msra.mxu0 0
        %6484 = vmatprep.mubr.bf16.mxu0 0
        %6485 = vmatmul.mubr.bf16.gmra.mrb[0].mxu0 %v6450
        %v6486 = vpop.f32.mrb[0].mxu0
        %v6487 = vadd.f32 0.0, %v6486
        %v6488 = vpop.f32.mrb[0].mxu0
        %v6489 = vpop.f32.mrb[0].mxu0
        %v6490 = vpop.f32.mrb[0].mxu0
        %6491 = vdwg.mxu0
        %v6492 = vadd.f32 %v6430, %v6487
        %v6493 = vld [vmem:[%s4] sm:$0x1]
        %v6495 = vlaneseq
        %v6496 = vshrl.u32 %v6495, 7
        %v6497 = vsub.s32 0, %v6496
        %v6498 = vrot.slane %v6493, %v6497
        %v6500 = vadd.f32 %v6492, %v6498
        %v6501 = vmax.f32 %v6500, 0.0
        %6502 = vst.msk [vmem:[#allocation3] sm:$0x7] %vm2065, %v6501
        %v6503 = vld [vmem:[%s1552] ss:$2 sm:$0x7]
        %v6504 = vpack.c.bf16 %v6503, %v6503
        %v6505 = vld [vmem:[%s3] sm:$0xf]
        %v6506 = vld [vmem:[%s3 + $0x4] sm:$0xf]
        %v6507 = vld [vmem:[%s3 + $0x8] sm:$0xf]
        %v6508 = vld [vmem:[%s3 + $0xc] sm:$0xf]
        %v6509 = vld [vmem:[%s1615] ss:$2 sm:$0x7]
        %v6510 = vpack.c.bf16 %v6509, %v6509
        %v6511 = vld [vmem:[%s3 + $0x10] sm:$0xf]
        %v6512 = vld [vmem:[%s3 + $0x14] sm:$0xf]
        %v6513 = vld [vmem:[%s3 + $0x18] sm:$0xf]
        %v6514 = vld [vmem:[%s3 + $0x1c] sm:$0xf]
        %v6519 = vunpack.c.l.b16 %v6511
        %v6520 = vunpack.c.l.b16 %v6512
        %v6521 = vunpack.c.l.b16 %v6513
        %v6522 = vunpack.c.l.b16 %v6514
        %v6523 = vpack.c.b16 %v6520, %v6519
        %v6524 = vpack.c.b16 %v6522, %v6521
        %v6528 = vsel %vm1040, %v6510, 0
        %6530 = vmatprep.subr.bf16.mxu0 0
        %6531 = vmatpush1.bf16.msra.mxu0 %v6523
        %6532 = vmatprep.subr.bf16.mxu0 0
        %6533 = vmatpush1.bf16.msra.mxu0 %v6524
        %6534 = vmatprep.subr.bf16.mxu0 0
        %6535 = vmatpush1.bf16.msra.mxu0 0
        %6536 = vmatprep.subr.bf16.mxu0 0
        %6537 = vmatpush1.bf16.msra.mxu0 0
        %6538 = vmatprep.subr.bf16.mxu0 0
        %6539 = vmatpush1.bf16.msra.mxu0 0
        %6540 = vmatprep.subr.bf16.mxu0 0
        %6541 = vmatpush1.bf16.msra.mxu0 0
        %6542 = vmatprep.subr.bf16.mxu0 0
        %6543 = vmatpush1.bf16.msra.mxu0 0
        %6544 = vmatprep.subr.bf16.mxu0 0
        %6545 = vmatpush1.bf16.msra.mxu0 0
        %6546 = vmatprep.subr.bf16.mxu0 0
        %6547 = vmatpush1.bf16.msra.mxu0 0
        %6548 = vmatprep.subr.bf16.mxu0 0
        %6549 = vmatpush1.bf16.msra.mxu0 0
        %6550 = vmatprep.subr.bf16.mxu0 0
        %6551 = vmatpush1.bf16.msra.mxu0 0
        %6552 = vmatprep.subr.bf16.mxu0 0
        %6553 = vmatpush1.bf16.msra.mxu0 0
        %6554 = vmatprep.subr.bf16.mxu0 0
        %6555 = vmatpush1.bf16.msra.mxu0 0
        %6556 = vmatprep.subr.bf16.mxu0 0
        %6557 = vmatpush1.bf16.msra.mxu0 0
        %6558 = vmatprep.subr.bf16.mxu0 0
        %6559 = vmatpush1.bf16.msra.mxu0 0
        %6560 = vmatprep.subr.bf16.mxu0 0
        %6561 = vmatpush1.bf16.msra.mxu0 0
        %6562 = vmatprep.mubr.bf16.mxu0 0
        %6563 = vmatmul.mubr.bf16.gmra.mrb[0].mxu0 %v6528
        %v6564 = vpop.f32.mrb[0].mxu0
        %v6565 = vadd.f32 0.0, %v6564
        %v6566 = vpop.f32.mrb[0].mxu0
        %v6567 = vpop.f32.mrb[0].mxu0
        %v6568 = vpop.f32.mrb[0].mxu0
        %6569 = vdwg.mxu0
        %v6574 = vunpack.c.l.b16 %v6505
        %v6575 = vunpack.c.l.b16 %v6506
        %v6576 = vunpack.c.l.b16 %v6507
        %v6577 = vunpack.c.l.b16 %v6508
        %v6578 = vpack.c.b16 %v6575, %v6574
        %v6579 = vpack.c.b16 %v6577, %v6576
        %v6583 = vsel %vm1040, %v6504, 0
        %6585 = vmatprep.subr.bf16.mxu0 0
        %6586 = vmatpush1.bf16.msra.mxu0 %v6578
        %6587 = vmatprep.subr.bf16.mxu0 0
        %6588 = vmatpush1.bf16.msra.mxu0 %v6579
        %6589 = vmatprep.subr.bf16.mxu0 0
        %6590 = vmatpush1.bf16.msra.mxu0 0
        %6591 = vmatprep.subr.bf16.mxu0 0
        %6592 = vmatpush1.bf16.msra.mxu0 0
        %6593 = vmatprep.subr.bf16.mxu0 0
        %6594 = vmatpush1.bf16.msra.mxu0 0
        %6595 = vmatprep.subr.bf16.mxu0 0
        %6596 = vmatpush1.bf16.msra.mxu0 0
        %6597 = vmatprep.subr.bf16.mxu0 0
        %6598 = vmatpush1.bf16.msra.mxu0 0
        %6599 = vmatprep.subr.bf16.mxu0 0
        %6600 = vmatpush1.bf16.msra.mxu0 0
        %6601 = vmatprep.subr.bf16.mxu0 0
        %6602 = vmatpush1.bf16.msra.mxu0 0
        %6603 = vmatprep.subr.bf16.mxu0 0
        %6604 = vmatpush1.bf16.msra.mxu0 0
        %6605 = vmatprep.subr.bf16.mxu0 0
        %6606 = vmatpush1.bf16.msra.mxu0 0
        %6607 = vmatprep.subr.bf16.mxu0 0
        %6608 = vmatpush1.bf16.msra.mxu0 0
        %6609 = vmatprep.subr.bf16.mxu0 0
        %6610 = vmatpush1.bf16.msra.mxu0 0
        %6611 = vmatprep.subr.bf16.mxu0 0
        %6612 = vmatpush1.bf16.msra.mxu0 0
        %6613 = vmatprep.subr.bf16.mxu0 0
        %6614 = vmatpush1.bf16.msra.mxu0 0
        %6615 = vmatprep.subr.bf16.mxu0 0
        %6616 = vmatpush1.bf16.msra.mxu0 0
        %6617 = vmatprep.mubr.bf16.mxu0 0
        %6618 = vmatmul.mubr.bf16.gmra.mrb[0].mxu0 %v6583
        %v6619 = vpop.f32.mrb[0].mxu0
        %v6620 = vadd.f32 %v6565, %v6619
        %v6621 = vpop.f32.mrb[0].mxu0
        %v6622 = vpop.f32.mrb[0].mxu0
        %v6623 = vpop.f32.mrb[0].mxu0
        %6624 = vdwg.mxu0
        %v6625 = vld [vmem:[%s1678] ss:$2 sm:$0x7]
        %v6626 = vpack.c.bf16 %v6625, %v6625
        %v6627 = vld [vmem:[%s3 + $0x20] sm:$0xf]
        %v6628 = vld [vmem:[%s3 + $0x24] sm:$0xf]
        %v6629 = vld [vmem:[%s3 + $0x28] sm:$0xf]
        %v6630 = vld [vmem:[%s3 + $0x2c] sm:$0xf]
        %v6635 = vunpack.c.l.b16 %v6627
        %v6636 = vunpack.c.l.b16 %v6628
        %v6637 = vunpack.c.l.b16 %v6629
        %v6638 = vunpack.c.l.b16 %v6630
        %v6639 = vpack.c.b16 %v6636, %v6635
        %v6640 = vpack.c.b16 %v6638, %v6637
        %v6644 = vsel %vm1040, %v6626, 0
        %6646 = vmatprep.subr.bf16.mxu0 0
        %6647 = vmatpush1.bf16.msra.mxu0 %v6639
        %6648 = vmatprep.subr.bf16.mxu0 0
        %6649 = vmatpush1.bf16.msra.mxu0 %v6640
        %6650 = vmatprep.subr.bf16.mxu0 0
        %6651 = vmatpush1.bf16.msra.mxu0 0
        %6652 = vmatprep.subr.bf16.mxu0 0
        %6653 = vmatpush1.bf16.msra.mxu0 0
        %6654 = vmatprep.subr.bf16.mxu0 0
        %6655 = vmatpush1.bf16.msra.mxu0 0
        %6656 = vmatprep.subr.bf16.mxu0 0
        %6657 = vmatpush1.bf16.msra.mxu0 0
        %6658 = vmatprep.subr.bf16.mxu0 0
        %6659 = vmatpush1.bf16.msra.mxu0 0
        %6660 = vmatprep.subr.bf16.mxu0 0
        %6661 = vmatpush1.bf16.msra.mxu0 0
        %6662 = vmatprep.subr.bf16.mxu0 0
        %6663 = vmatpush1.bf16.msra.mxu0 0
        %6664 = vmatprep.subr.bf16.mxu0 0
        %6665 = vmatpush1.bf16.msra.mxu0 0
        %6666 = vmatprep.subr.bf16.mxu0 0
        %6667 = vmatpush1.bf16.msra.mxu0 0
        %6668 = vmatprep.subr.bf16.mxu0 0
        %6669 = vmatpush1.bf16.msra.mxu0 0
        %6670 = vmatprep.subr.bf16.mxu0 0
        %6671 = vmatpush1.bf16.msra.mxu0 0
        %6672 = vmatprep.subr.bf16.mxu0 0
        %6673 = vmatpush1.bf16.msra.mxu0 0
        %6674 = vmatprep.subr.bf16.mxu0 0
        %6675 = vmatpush1.bf16.msra.mxu0 0
        %6676 = vmatprep.subr.bf16.mxu0 0
        %6677 = vmatpush1.bf16.msra.mxu0 0
        %6678 = vmatprep.mubr.bf16.mxu0 0
        %6679 = vmatmul.mubr.bf16.gmra.mrb[0].mxu0 %v6644
        %v6680 = vpop.f32.mrb[0].mxu0
        %v6681 = vadd.f32 0.0, %v6680
        %v6682 = vpop.f32.mrb[0].mxu0
        %v6683 = vpop.f32.mrb[0].mxu0
        %v6684 = vpop.f32.mrb[0].mxu0
        %6685 = vdwg.mxu0
        %v6686 = vadd.f32 %v6620, %v6681
        %v6687 = vld [vmem:[%s1741] ss:$2 sm:$0x7]
        %v6688 = vpack.c.bf16 %v6687, %v6687
        %v6689 = vld [vmem:[%s3 + $0x30] sm:$0xf]
        %v6690 = vld [vmem:[%s3 + $0x34] sm:$0xf]
        %v6691 = vld [vmem:[%s3 + $0x38] sm:$0xf]
        %v6692 = vld [vmem:[%s3 + $0x3c] sm:$0xf]
        %v6697 = vunpack.c.l.b16 %v6689
        %v6698 = vunpack.c.l.b16 %v6690
        %v6699 = vunpack.c.l.b16 %v6691
        %v6700 = vunpack.c.l.b16 %v6692
        %v6701 = vpack.c.b16 %v6698, %v6697
        %v6702 = vpack.c.b16 %v6700, %v6699
        %v6706 = vsel %vm1040, %v6688, 0
        %6708 = vmatprep.subr.bf16.mxu0 0
        %6709 = vmatpush1.bf16.msra.mxu0 %v6701
        %6710 = vmatprep.subr.bf16.mxu0 0
        %6711 = vmatpush1.bf16.msra.mxu0 %v6702
        %6712 = vmatprep.subr.bf16.mxu0 0
        %6713 = vmatpush1.bf16.msra.mxu0 0
        %6714 = vmatprep.subr.bf16.mxu0 0
        %6715 = vmatpush1.bf16.msra.mxu0 0
        %6716 = vmatprep.subr.bf16.mxu0 0
        %6717 = vmatpush1.bf16.msra.mxu0 0
        %6718 = vmatprep.subr.bf16.mxu0 0
        %6719 = vmatpush1.bf16.msra.mxu0 0
        %6720 = vmatprep.subr.bf16.mxu0 0
        %6721 = vmatpush1.bf16.msra.mxu0 0
        %6722 = vmatprep.subr.bf16.mxu0 0
        %6723 = vmatpush1.bf16.msra.mxu0 0
        %6724 = vmatprep.subr.bf16.mxu0 0
        %6725 = vmatpush1.bf16.msra.mxu0 0
        %6726 = vmatprep.subr.bf16.mxu0 0
        %6727 = vmatpush1.bf16.msra.mxu0 0
        %6728 = vmatprep.subr.bf16.mxu0 0
        %6729 = vmatpush1.bf16.msra.mxu0 0
        %6730 = vmatprep.subr.bf16.mxu0 0
        %6731 = vmatpush1.bf16.msra.mxu0 0
        %6732 = vmatprep.subr.bf16.mxu0 0
        %6733 = vmatpush1.bf16.msra.mxu0 0
        %6734 = vmatprep.subr.bf16.mxu0 0
        %6735 = vmatpush1.bf16.msra.mxu0 0
        %6736 = vmatprep.subr.bf16.mxu0 0
        %6737 = vmatpush1.bf16.msra.mxu0 0
        %6738 = vmatprep.subr.bf16.mxu0 0
        %6739 = vmatpush1.bf16.msra.mxu0 0
        %6740 = vmatprep.mubr.bf16.mxu0 0
        %6741 = vmatmul.mubr.bf16.gmra.mrb[0].mxu0 %v6706
        %v6742 = vpop.f32.mrb[0].mxu0
        %v6743 = vadd.f32 0.0, %v6742
        %v6744 = vpop.f32.mrb[0].mxu0
        %v6745 = vpop.f32.mrb[0].mxu0
        %v6746 = vpop.f32.mrb[0].mxu0
        %6747 = vdwg.mxu0
        %v6748 = vadd.f32 %v6686, %v6743
        %v6749 = vld [vmem:[%s1804] ss:$2 sm:$0x7]
        %v6750 = vpack.c.bf16 %v6749, %v6749
        %v6751 = vld [vmem:[%s3 + $0x40] sm:$0xf]
        %v6752 = vld [vmem:[%s3 + $0x44] sm:$0xf]
        %v6753 = vld [vmem:[%s3 + $0x48] sm:$0xf]
        %v6754 = vld [vmem:[%s3 + $0x4c] sm:$0xf]
        %v6759 = vunpack.c.l.b16 %v6751
        %v6760 = vunpack.c.l.b16 %v6752
        %v6761 = vunpack.c.l.b16 %v6753
        %v6762 = vunpack.c.l.b16 %v6754
        %v6763 = vpack.c.b16 %v6760, %v6759
        %v6764 = vpack.c.b16 %v6762, %v6761
        %v6768 = vsel %vm1040, %v6750, 0
        %6770 = vmatprep.subr.bf16.mxu0 0
        %6771 = vmatpush1.bf16.msra.mxu0 %v6763
        %6772 = vmatprep.subr.bf16.mxu0 0
        %6773 = vmatpush1.bf16.msra.mxu0 %v6764
        %6774 = vmatprep.subr.bf16.mxu0 0
        %6775 = vmatpush1.bf16.msra.mxu0 0
        %6776 = vmatprep.subr.bf16.mxu0 0
        %6777 = vmatpush1.bf16.msra.mxu0 0
        %6778 = vmatprep.subr.bf16.mxu0 0
        %6779 = vmatpush1.bf16.msra.mxu0 0
        %6780 = vmatprep.subr.bf16.mxu0 0
        %6781 = vmatpush1.bf16.msra.mxu0 0
        %6782 = vmatprep.subr.bf16.mxu0 0
        %6783 = vmatpush1.bf16.msra.mxu0 0
        %6784 = vmatprep.subr.bf16.mxu0 0
        %6785 = vmatpush1.bf16.msra.mxu0 0
        %6786 = vmatprep.subr.bf16.mxu0 0
        %6787 = vmatpush1.bf16.msra.mxu0 0
        %6788 = vmatprep.subr.bf16.mxu0 0
        %6789 = vmatpush1.bf16.msra.mxu0 0
        %6790 = vmatprep.subr.bf16.mxu0 0
        %6791 = vmatpush1.bf16.msra.mxu0 0
        %6792 = vmatprep.subr.bf16.mxu0 0
        %6793 = vmatpush1.bf16.msra.mxu0 0
        %6794 = vmatprep.subr.bf16.mxu0 0
        %6795 = vmatpush1.bf16.msra.mxu0 0
        %6796 = vmatprep.subr.bf16.mxu0 0
        %6797 = vmatpush1.bf16.msra.mxu0 0
        %6798 = vmatprep.subr.bf16.mxu0 0
        %6799 = vmatpush1.bf16.msra.mxu0 0
        %6800 = vmatprep.subr.bf16.mxu0 0
        %6801 = vmatpush1.bf16.msra.mxu0 0
        %6802 = vmatprep.mubr.bf16.mxu0 0
        %6803 = vmatmul.mubr.bf16.gmra.mrb[0].mxu0 %v6768
        %v6804 = vpop.f32.mrb[0].mxu0
        %v6805 = vadd.f32 0.0, %v6804
        %v6806 = vpop.f32.mrb[0].mxu0
        %v6807 = vpop.f32.mrb[0].mxu0
        %v6808 = vpop.f32.mrb[0].mxu0
        %6809 = vdwg.mxu0
        %v6810 = vadd.f32 %v6748, %v6805
        %v6811 = vld [vmem:[%s1867] ss:$2 sm:$0x7]
        %v6812 = vpack.c.bf16 %v6811, %v6811
        %v6813 = vld [vmem:[%s3 + $0x50] sm:$0xf]
        %v6814 = vld [vmem:[%s3 + $0x54] sm:$0xf]
        %v6815 = vld [vmem:[%s3 + $0x58] sm:$0xf]
        %v6816 = vld [vmem:[%s3 + $0x5c] sm:$0xf]
        %v6821 = vunpack.c.l.b16 %v6813
        %v6822 = vunpack.c.l.b16 %v6814
        %v6823 = vunpack.c.l.b16 %v6815
        %v6824 = vunpack.c.l.b16 %v6816
        %v6825 = vpack.c.b16 %v6822, %v6821
        %v6826 = vpack.c.b16 %v6824, %v6823
        %v6830 = vsel %vm1040, %v6812, 0
        %6832 = vmatprep.subr.bf16.mxu0 0
        %6833 = vmatpush1.bf16.msra.mxu0 %v6825
        %6834 = vmatprep.subr.bf16.mxu0 0
        %6835 = vmatpush1.bf16.msra.mxu0 %v6826
        %6836 = vmatprep.subr.bf16.mxu0 0
        %6837 = vmatpush1.bf16.msra.mxu0 0
        %6838 = vmatprep.subr.bf16.mxu0 0
        %6839 = vmatpush1.bf16.msra.mxu0 0
        %6840 = vmatprep.subr.bf16.mxu0 0
        %6841 = vmatpush1.bf16.msra.mxu0 0
        %6842 = vmatprep.subr.bf16.mxu0 0
        %6843 = vmatpush1.bf16.msra.mxu0 0
        %6844 = vmatprep.subr.bf16.mxu0 0
        %6845 = vmatpush1.bf16.msra.mxu0 0
        %6846 = vmatprep.subr.bf16.mxu0 0
        %6847 = vmatpush1.bf16.msra.mxu0 0
        %6848 = vmatprep.subr.bf16.mxu0 0
        %6849 = vmatpush1.bf16.msra.mxu0 0
        %6850 = vmatprep.subr.bf16.mxu0 0
        %6851 = vmatpush1.bf16.msra.mxu0 0
        %6852 = vmatprep.subr.bf16.mxu0 0
        %6853 = vmatpush1.bf16.msra.mxu0 0
        %6854 = vmatprep.subr.bf16.mxu0 0
        %6855 = vmatpush1.bf16.msra.mxu0 0
        %6856 = vmatprep.subr.bf16.mxu0 0
        %6857 = vmatpush1.bf16.msra.mxu0 0
        %6858 = vmatprep.subr.bf16.mxu0 0
        %6859 = vmatpush1.bf16.msra.mxu0 0
        %6860 = vmatprep.subr.bf16.mxu0 0
        %6861 = vmatpush1.bf16.msra.mxu0 0
        %6862 = vmatprep.subr.bf16.mxu0 0
        %6863 = vmatpush1.bf16.msra.mxu0 0
        %6864 = vmatprep.mubr.bf16.mxu0 0
        %6865 = vmatmul.mubr.bf16.gmra.mrb[0].mxu0 %v6830
        %v6866 = vpop.f32.mrb[0].mxu0
        %v6867 = vadd.f32 0.0, %v6866
        %v6868 = vpop.f32.mrb[0].mxu0
        %v6869 = vpop.f32.mrb[0].mxu0
        %v6870 = vpop.f32.mrb[0].mxu0
        %6871 = vdwg.mxu0
        %v6872 = vadd.f32 %v6810, %v6867
        %v6873 = vld [vmem:[%s1930] ss:$2 sm:$0x7]
        %v6874 = vpack.c.bf16 %v6873, %v6873
        %v6875 = vld [vmem:[%s3 + $0x60] sm:$0xf]
        %v6876 = vld [vmem:[%s3 + $0x64] sm:$0xf]
        %v6877 = vld [vmem:[%s3 + $0x68] sm:$0xf]
        %v6878 = vld [vmem:[%s3 + $0x6c] sm:$0xf]
        %v6883 = vunpack.c.l.b16 %v6875
        %v6884 = vunpack.c.l.b16 %v6876
        %v6885 = vunpack.c.l.b16 %v6877
        %v6886 = vunpack.c.l.b16 %v6878
        %v6887 = vpack.c.b16 %v6884, %v6883
        %v6888 = vpack.c.b16 %v6886, %v6885
        %v6892 = vsel %vm1040, %v6874, 0
        %6894 = vmatprep.subr.bf16.mxu0 0
        %6895 = vmatpush1.bf16.msra.mxu0 %v6887
        %6896 = vmatprep.subr.bf16.mxu0 0
        %6897 = vmatpush1.bf16.msra.mxu0 %v6888
        %6898 = vmatprep.subr.bf16.mxu0 0
        %6899 = vmatpush1.bf16.msra.mxu0 0
        %6900 = vmatprep.subr.bf16.mxu0 0
        %6901 = vmatpush1.bf16.msra.mxu0 0
        %6902 = vmatprep.subr.bf16.mxu0 0
        %6903 = vmatpush1.bf16.msra.mxu0 0
        %6904 = vmatprep.subr.bf16.mxu0 0
        %6905 = vmatpush1.bf16.msra.mxu0 0
        %6906 = vmatprep.subr.bf16.mxu0 0
        %6907 = vmatpush1.bf16.msra.mxu0 0
        %6908 = vmatprep.subr.bf16.mxu0 0
        %6909 = vmatpush1.bf16.msra.mxu0 0
        %6910 = vmatprep.subr.bf16.mxu0 0
        %6911 = vmatpush1.bf16.msra.mxu0 0
        %6912 = vmatprep.subr.bf16.mxu0 0
        %6913 = vmatpush1.bf16.msra.mxu0 0
        %6914 = vmatprep.subr.bf16.mxu0 0
        %6915 = vmatpush1.bf16.msra.mxu0 0
        %6916 = vmatprep.subr.bf16.mxu0 0
        %6917 = vmatpush1.bf16.msra.mxu0 0
        %6918 = vmatprep.subr.bf16.mxu0 0
        %6919 = vmatpush1.bf16.msra.mxu0 0
        %6920 = vmatprep.subr.bf16.mxu0 0
        %6921 = vmatpush1.bf16.msra.mxu0 0
        %6922 = vmatprep.subr.bf16.mxu0 0
        %6923 = vmatpush1.bf16.msra.mxu0 0
        %6924 = vmatprep.subr.bf16.mxu0 0
        %6925 = vmatpush1.bf16.msra.mxu0 0
        %6926 = vmatprep.mubr.bf16.mxu0 0
        %6927 = vmatmul.mubr.bf16.gmra.mrb[0].mxu0 %v6892
        %v6928 = vpop.f32.mrb[0].mxu0
        %v6929 = vadd.f32 0.0, %v6928
        %v6930 = vpop.f32.mrb[0].mxu0
        %v6931 = vpop.f32.mrb[0].mxu0
        %v6932 = vpop.f32.mrb[0].mxu0
        %6933 = vdwg.mxu0
        %v6934 = vadd.f32 %v6872, %v6929
        %v6935 = vld [vmem:[%s1993] ss:$2 sm:$0x7]
        %v6936 = vpack.c.bf16 %v6935, %v6935
        %v6937 = vld [vmem:[%s3 + $0x70] sm:$0xf]
        %v6938 = vld [vmem:[%s3 + $0x74] sm:$0xf]
        %v6939 = vld [vmem:[%s3 + $0x78] sm:$0xf]
        %v6940 = vld [vmem:[%s3 + $0x7c] sm:$0xf]
        %v6945 = vunpack.c.l.b16 %v6937
        %v6946 = vunpack.c.l.b16 %v6938
        %v6947 = vunpack.c.l.b16 %v6939
        %v6948 = vunpack.c.l.b16 %v6940
        %v6949 = vpack.c.b16 %v6946, %v6945
        %v6950 = vpack.c.b16 %v6948, %v6947
        %v6954 = vsel %vm1040, %v6936, 0
        %6956 = vmatprep.subr.bf16.mxu0 0
        %6957 = vmatpush1.bf16.msra.mxu0 %v6949
        %6958 = vmatprep.subr.bf16.mxu0 0
        %6959 = vmatpush1.bf16.msra.mxu0 %v6950
        %6960 = vmatprep.subr.bf16.mxu0 0
        %6961 = vmatpush1.bf16.msra.mxu0 0
        %6962 = vmatprep.subr.bf16.mxu0 0
        %6963 = vmatpush1.bf16.msra.mxu0 0
        %6964 = vmatprep.subr.bf16.mxu0 0
        %6965 = vmatpush1.bf16.msra.mxu0 0
        %6966 = vmatprep.subr.bf16.mxu0 0
        %6967 = vmatpush1.bf16.msra.mxu0 0
        %6968 = vmatprep.subr.bf16.mxu0 0
        %6969 = vmatpush1.bf16.msra.mxu0 0
        %6970 = vmatprep.subr.bf16.mxu0 0
        %6971 = vmatpush1.bf16.msra.mxu0 0
        %6972 = vmatprep.subr.bf16.mxu0 0
        %6973 = vmatpush1.bf16.msra.mxu0 0
        %6974 = vmatprep.subr.bf16.mxu0 0
        %6975 = vmatpush1.bf16.msra.mxu0 0
        %6976 = vmatprep.subr.bf16.mxu0 0
        %6977 = vmatpush1.bf16.msra.mxu0 0
        %6978 = vmatprep.subr.bf16.mxu0 0
        %6979 = vmatpush1.bf16.msra.mxu0 0
        %6980 = vmatprep.subr.bf16.mxu0 0
        %6981 = vmatpush1.bf16.msra.mxu0 0
        %6982 = vmatprep.subr.bf16.mxu0 0
        %6983 = vmatpush1.bf16.msra.mxu0 0
        %6984 = vmatprep.subr.bf16.mxu0 0
        %6985 = vmatpush1.bf16.msra.mxu0 0
        %6986 = vmatprep.subr.bf16.mxu0 0
        %6987 = vmatpush1.bf16.msra.mxu0 0
        %6988 = vmatprep.mubr.bf16.mxu0 0
        %6989 = vmatmul.mubr.bf16.gmra.mrb[0].mxu0 %v6954
        %v6990 = vpop.f32.mrb[0].mxu0
        %v6991 = vadd.f32 0.0, %v6990
        %v6992 = vpop.f32.mrb[0].mxu0
        %v6993 = vpop.f32.mrb[0].mxu0
        %v6994 = vpop.f32.mrb[0].mxu0
        %6995 = vdwg.mxu0
        %v6996 = vadd.f32 %v6934, %v6991
        %v6997 = vld [vmem:[%s2561] ss:$2 sm:$0x7]
        %v6998 = vpack.c.bf16 %v6997, %v6997
        %v6999 = vld [vmem:[%s3 + $0x80] sm:$0xf]
        %v7000 = vld [vmem:[%s3 + $0x84] sm:$0xf]
        %v7001 = vld [vmem:[%s3 + $0x88] sm:$0xf]
        %v7002 = vld [vmem:[%s3 + $0x8c] sm:$0xf]
        %v7007 = vunpack.c.l.b16 %v6999
        %v7008 = vunpack.c.l.b16 %v7000
        %v7009 = vunpack.c.l.b16 %v7001
        %v7010 = vunpack.c.l.b16 %v7002
        %v7011 = vpack.c.b16 %v7008, %v7007
        %v7012 = vpack.c.b16 %v7010, %v7009
        %v7016 = vsel %vm1040, %v6998, 0
        %7018 = vmatprep.subr.bf16.mxu0 0
        %7019 = vmatpush1.bf16.msra.mxu0 %v7011
        %7020 = vmatprep.subr.bf16.mxu0 0
        %7021 = vmatpush1.bf16.msra.mxu0 %v7012
        %7022 = vmatprep.subr.bf16.mxu0 0
        %7023 = vmatpush1.bf16.msra.mxu0 0
        %7024 = vmatprep.subr.bf16.mxu0 0
        %7025 = vmatpush1.bf16.msra.mxu0 0
        %7026 = vmatprep.subr.bf16.mxu0 0
        %7027 = vmatpush1.bf16.msra.mxu0 0
        %7028 = vmatprep.subr.bf16.mxu0 0
        %7029 = vmatpush1.bf16.msra.mxu0 0
        %7030 = vmatprep.subr.bf16.mxu0 0
        %7031 = vmatpush1.bf16.msra.mxu0 0
        %7032 = vmatprep.subr.bf16.mxu0 0
        %7033 = vmatpush1.bf16.msra.mxu0 0
        %7034 = vmatprep.subr.bf16.mxu0 0
        %7035 = vmatpush1.bf16.msra.mxu0 0
        %7036 = vmatprep.subr.bf16.mxu0 0
        %7037 = vmatpush1.bf16.msra.mxu0 0
        %7038 = vmatprep.subr.bf16.mxu0 0
        %7039 = vmatpush1.bf16.msra.mxu0 0
        %7040 = vmatprep.subr.bf16.mxu0 0
        %7041 = vmatpush1.bf16.msra.mxu0 0
        %7042 = vmatprep.subr.bf16.mxu0 0
        %7043 = vmatpush1.bf16.msra.mxu0 0
        %7044 = vmatprep.subr.bf16.mxu0 0
        %7045 = vmatpush1.bf16.msra.mxu0 0
        %7046 = vmatprep.subr.bf16.mxu0 0
        %7047 = vmatpush1.bf16.msra.mxu0 0
        %7048 = vmatprep.subr.bf16.mxu0 0
        %7049 = vmatpush1.bf16.msra.mxu0 0
        %7050 = vmatprep.mubr.bf16.mxu0 0
        %7051 = vmatmul.mubr.bf16.gmra.mrb[0].mxu0 %v7016
        %v7052 = vpop.f32.mrb[0].mxu0
        %v7053 = vadd.f32 0.0, %v7052
        %v7054 = vpop.f32.mrb[0].mxu0
        %v7055 = vpop.f32.mrb[0].mxu0
        %v7056 = vpop.f32.mrb[0].mxu0
        %7057 = vdwg.mxu0
        %v7058 = vadd.f32 %v6996, %v7053
        %v7059 = vld [vmem:[%s2624] ss:$2 sm:$0x7]
        %v7060 = vpack.c.bf16 %v7059, %v7059
        %v7061 = vld [vmem:[%s3 + $0x90] sm:$0xf]
        %v7062 = vld [vmem:[%s3 + $0x94] sm:$0xf]
        %v7063 = vld [vmem:[%s3 + $0x98] sm:$0xf]
        %v7064 = vld [vmem:[%s3 + $0x9c] sm:$0xf]
        %v7069 = vunpack.c.l.b16 %v7061
        %v7070 = vunpack.c.l.b16 %v7062
        %v7071 = vunpack.c.l.b16 %v7063
        %v7072 = vunpack.c.l.b16 %v7064
        %v7073 = vpack.c.b16 %v7070, %v7069
        %v7074 = vpack.c.b16 %v7072, %v7071
        %v7078 = vsel %vm1040, %v7060, 0
        %7080 = vmatprep.subr.bf16.mxu0 0
        %7081 = vmatpush1.bf16.msra.mxu0 %v7073
        %7082 = vmatprep.subr.bf16.mxu0 0
        %7083 = vmatpush1.bf16.msra.mxu0 %v7074
        %7084 = vmatprep.subr.bf16.mxu0 0
        %7085 = vmatpush1.bf16.msra.mxu0 0
        %7086 = vmatprep.subr.bf16.mxu0 0
        %7087 = vmatpush1.bf16.msra.mxu0 0
        %7088 = vmatprep.subr.bf16.mxu0 0
        %7089 = vmatpush1.bf16.msra.mxu0 0
        %7090 = vmatprep.subr.bf16.mxu0 0
        %7091 = vmatpush1.bf16.msra.mxu0 0
        %7092 = vmatprep.subr.bf16.mxu0 0
        %7093 = vmatpush1.bf16.msra.mxu0 0
        %7094 = vmatprep.subr.bf16.mxu0 0
        %7095 = vmatpush1.bf16.msra.mxu0 0
        %7096 = vmatprep.subr.bf16.mxu0 0
        %7097 = vmatpush1.bf16.msra.mxu0 0
        %7098 = vmatprep.subr.bf16.mxu0 0
        %7099 = vmatpush1.bf16.msra.mxu0 0
        %7100 = vmatprep.subr.bf16.mxu0 0
        %7101 = vmatpush1.bf16.msra.mxu0 0
        %7102 = vmatprep.subr.bf16.mxu0 0
        %7103 = vmatpush1.bf16.msra.mxu0 0
        %7104 = vmatprep.subr.bf16.mxu0 0
        %7105 = vmatpush1.bf16.msra.mxu0 0
        %7106 = vmatprep.subr.bf16.mxu0 0
        %7107 = vmatpush1.bf16.msra.mxu0 0
        %7108 = vmatprep.subr.bf16.mxu0 0
        %7109 = vmatpush1.bf16.msra.mxu0 0
        %7110 = vmatprep.subr.bf16.mxu0 0
        %7111 = vmatpush1.bf16.msra.mxu0 0
        %7112 = vmatprep.mubr.bf16.mxu0 0
        %7113 = vmatmul.mubr.bf16.gmra.mrb[0].mxu0 %v7078
        %v7114 = vpop.f32.mrb[0].mxu0
        %v7115 = vadd.f32 0.0, %v7114
        %v7116 = vpop.f32.mrb[0].mxu0
        %v7117 = vpop.f32.mrb[0].mxu0
        %v7118 = vpop.f32.mrb[0].mxu0
        %7119 = vdwg.mxu0
        %v7120 = vadd.f32 %v7058, %v7115
        %v7121 = vld [vmem:[%s2687] ss:$2 sm:$0x7]
        %v7122 = vpack.c.bf16 %v7121, %v7121
        %v7123 = vld [vmem:[%s3 + $0xa0] sm:$0xf]
        %v7124 = vld [vmem:[%s3 + $0xa4] sm:$0xf]
        %v7125 = vld [vmem:[%s3 + $0xa8] sm:$0xf]
        %v7126 = vld [vmem:[%s3 + $0xac] sm:$0xf]
        %v7131 = vunpack.c.l.b16 %v7123
        %v7132 = vunpack.c.l.b16 %v7124
        %v7133 = vunpack.c.l.b16 %v7125
        %v7134 = vunpack.c.l.b16 %v7126
        %v7135 = vpack.c.b16 %v7132, %v7131
        %v7136 = vpack.c.b16 %v7134, %v7133
        %v7140 = vsel %vm1040, %v7122, 0
        %7142 = vmatprep.subr.bf16.mxu0 0
        %7143 = vmatpush1.bf16.msra.mxu0 %v7135
        %7144 = vmatprep.subr.bf16.mxu0 0
        %7145 = vmatpush1.bf16.msra.mxu0 %v7136
        %7146 = vmatprep.subr.bf16.mxu0 0
        %7147 = vmatpush1.bf16.msra.mxu0 0
        %7148 = vmatprep.subr.bf16.mxu0 0
        %7149 = vmatpush1.bf16.msra.mxu0 0
        %7150 = vmatprep.subr.bf16.mxu0 0
        %7151 = vmatpush1.bf16.msra.mxu0 0
        %7152 = vmatprep.subr.bf16.mxu0 0
        %7153 = vmatpush1.bf16.msra.mxu0 0
        %7154 = vmatprep.subr.bf16.mxu0 0
        %7155 = vmatpush1.bf16.msra.mxu0 0
        %7156 = vmatprep.subr.bf16.mxu0 0
        %7157 = vmatpush1.bf16.msra.mxu0 0
        %7158 = vmatprep.subr.bf16.mxu0 0
        %7159 = vmatpush1.bf16.msra.mxu0 0
        %7160 = vmatprep.subr.bf16.mxu0 0
        %7161 = vmatpush1.bf16.msra.mxu0 0
        %7162 = vmatprep.subr.bf16.mxu0 0
        %7163 = vmatpush1.bf16.msra.mxu0 0
        %7164 = vmatprep.subr.bf16.mxu0 0
        %7165 = vmatpush1.bf16.msra.mxu0 0
        %7166 = vmatprep.subr.bf16.mxu0 0
        %7167 = vmatpush1.bf16.msra.mxu0 0
        %7168 = vmatprep.subr.bf16.mxu0 0
        %7169 = vmatpush1.bf16.msra.mxu0 0
        %7170 = vmatprep.subr.bf16.mxu0 0
        %7171 = vmatpush1.bf16.msra.mxu0 0
        %7172 = vmatprep.subr.bf16.mxu0 0
        %7173 = vmatpush1.bf16.msra.mxu0 0
        %7174 = vmatprep.mubr.bf16.mxu0 0
        %7175 = vmatmul.mubr.bf16.gmra.mrb[0].mxu0 %v7140
        %v7176 = vpop.f32.mrb[0].mxu0
        %v7177 = vadd.f32 0.0, %v7176
        %v7178 = vpop.f32.mrb[0].mxu0
        %v7179 = vpop.f32.mrb[0].mxu0
        %v7180 = vpop.f32.mrb[0].mxu0
        %7181 = vdwg.mxu0
        %v7182 = vadd.f32 %v7120, %v7177
        %v7183 = vld [vmem:[%s2750] ss:$2 sm:$0x7]
        %v7184 = vpack.c.bf16 %v7183, %v7183
        %v7185 = vld [vmem:[%s3 + $0xb0] sm:$0xf]
        %v7186 = vld [vmem:[%s3 + $0xb4] sm:$0xf]
        %v7187 = vld [vmem:[%s3 + $0xb8] sm:$0xf]
        %v7188 = vld [vmem:[%s3 + $0xbc] sm:$0xf]
        %v7193 = vunpack.c.l.b16 %v7185
        %v7194 = vunpack.c.l.b16 %v7186
        %v7195 = vunpack.c.l.b16 %v7187
        %v7196 = vunpack.c.l.b16 %v7188
        %v7197 = vpack.c.b16 %v7194, %v7193
        %v7198 = vpack.c.b16 %v7196, %v7195
        %v7202 = vsel %vm1040, %v7184, 0
        %7204 = vmatprep.subr.bf16.mxu0 0
        %7205 = vmatpush1.bf16.msra.mxu0 %v7197
        %7206 = vmatprep.subr.bf16.mxu0 0
        %7207 = vmatpush1.bf16.msra.mxu0 %v7198
        %7208 = vmatprep.subr.bf16.mxu0 0
        %7209 = vmatpush1.bf16.msra.mxu0 0
        %7210 = vmatprep.subr.bf16.mxu0 0
        %7211 = vmatpush1.bf16.msra.mxu0 0
        %7212 = vmatprep.subr.bf16.mxu0 0
        %7213 = vmatpush1.bf16.msra.mxu0 0
        %7214 = vmatprep.subr.bf16.mxu0 0
        %7215 = vmatpush1.bf16.msra.mxu0 0
        %7216 = vmatprep.subr.bf16.mxu0 0
        %7217 = vmatpush1.bf16.msra.mxu0 0
        %7218 = vmatprep.subr.bf16.mxu0 0
        %7219 = vmatpush1.bf16.msra.mxu0 0
        %7220 = vmatprep.subr.bf16.mxu0 0
        %7221 = vmatpush1.bf16.msra.mxu0 0
        %7222 = vmatprep.subr.bf16.mxu0 0
        %7223 = vmatpush1.bf16.msra.mxu0 0
        %7224 = vmatprep.subr.bf16.mxu0 0
        %7225 = vmatpush1.bf16.msra.mxu0 0
        %7226 = vmatprep.subr.bf16.mxu0 0
        %7227 = vmatpush1.bf16.msra.mxu0 0
        %7228 = vmatprep.subr.bf16.mxu0 0
        %7229 = vmatpush1.bf16.msra.mxu0 0
        %7230 = vmatprep.subr.bf16.mxu0 0
        %7231 = vmatpush1.bf16.msra.mxu0 0
        %7232 = vmatprep.subr.bf16.mxu0 0
        %7233 = vmatpush1.bf16.msra.mxu0 0
        %7234 = vmatprep.subr.bf16.mxu0 0
        %7235 = vmatpush1.bf16.msra.mxu0 0
        %7236 = vmatprep.mubr.bf16.mxu0 0
        %7237 = vmatmul.mubr.bf16.gmra.mrb[0].mxu0 %v7202
        %v7238 = vpop.f32.mrb[0].mxu0
        %v7239 = vadd.f32 0.0, %v7238
        %v7240 = vpop.f32.mrb[0].mxu0
        %v7241 = vpop.f32.mrb[0].mxu0
        %v7242 = vpop.f32.mrb[0].mxu0
        %7243 = vdwg.mxu0
        %v7244 = vadd.f32 %v7182, %v7239
        %v7245 = vld [vmem:[%s2813] ss:$2 sm:$0x7]
        %v7246 = vpack.c.bf16 %v7245, %v7245
        %v7247 = vld [vmem:[%s3 + $0xc0] sm:$0xf]
        %v7248 = vld [vmem:[%s3 + $0xc4] sm:$0xf]
        %v7249 = vld [vmem:[%s3 + $0xc8] sm:$0xf]
        %v7250 = vld [vmem:[%s3 + $0xcc] sm:$0xf]
        %v7255 = vunpack.c.l.b16 %v7247
        %v7256 = vunpack.c.l.b16 %v7248
        %v7257 = vunpack.c.l.b16 %v7249
        %v7258 = vunpack.c.l.b16 %v7250
        %v7259 = vpack.c.b16 %v7256, %v7255
        %v7260 = vpack.c.b16 %v7258, %v7257
        %v7264 = vsel %vm1040, %v7246, 0
        %7266 = vmatprep.subr.bf16.mxu0 0
        %7267 = vmatpush1.bf16.msra.mxu0 %v7259
        %7268 = vmatprep.subr.bf16.mxu0 0
        %7269 = vmatpush1.bf16.msra.mxu0 %v7260
        %7270 = vmatprep.subr.bf16.mxu0 0
        %7271 = vmatpush1.bf16.msra.mxu0 0
        %7272 = vmatprep.subr.bf16.mxu0 0
        %7273 = vmatpush1.bf16.msra.mxu0 0
        %7274 = vmatprep.subr.bf16.mxu0 0
        %7275 = vmatpush1.bf16.msra.mxu0 0
        %7276 = vmatprep.subr.bf16.mxu0 0
        %7277 = vmatpush1.bf16.msra.mxu0 0
        %7278 = vmatprep.subr.bf16.mxu0 0
        %7279 = vmatpush1.bf16.msra.mxu0 0
        %7280 = vmatprep.subr.bf16.mxu0 0
        %7281 = vmatpush1.bf16.msra.mxu0 0
        %7282 = vmatprep.subr.bf16.mxu0 0
        %7283 = vmatpush1.bf16.msra.mxu0 0
        %7284 = vmatprep.subr.bf16.mxu0 0
        %7285 = vmatpush1.bf16.msra.mxu0 0
        %7286 = vmatprep.subr.bf16.mxu0 0
        %7287 = vmatpush1.bf16.msra.mxu0 0
        %7288 = vmatprep.subr.bf16.mxu0 0
        %7289 = vmatpush1.bf16.msra.mxu0 0
        %7290 = vmatprep.subr.bf16.mxu0 0
        %7291 = vmatpush1.bf16.msra.mxu0 0
        %7292 = vmatprep.subr.bf16.mxu0 0
        %7293 = vmatpush1.bf16.msra.mxu0 0
        %7294 = vmatprep.subr.bf16.mxu0 0
        %7295 = vmatpush1.bf16.msra.mxu0 0
        %7296 = vmatprep.subr.bf16.mxu0 0
        %7297 = vmatpush1.bf16.msra.mxu0 0
        %7298 = vmatprep.mubr.bf16.mxu0 0
        %7299 = vmatmul.mubr.bf16.gmra.mrb[0].mxu0 %v7264
        %v7300 = vpop.f32.mrb[0].mxu0
        %v7301 = vadd.f32 0.0, %v7300
        %v7302 = vpop.f32.mrb[0].mxu0
        %v7303 = vpop.f32.mrb[0].mxu0
        %v7304 = vpop.f32.mrb[0].mxu0
        %7305 = vdwg.mxu0
        %v7306 = vadd.f32 %v7244, %v7301
        %v7307 = vld [vmem:[%s2876] ss:$2 sm:$0x7]
        %v7308 = vpack.c.bf16 %v7307, %v7307
        %v7309 = vld [vmem:[%s3 + $0xd0] sm:$0xf]
        %v7310 = vld [vmem:[%s3 + $0xd4] sm:$0xf]
        %v7311 = vld [vmem:[%s3 + $0xd8] sm:$0xf]
        %v7312 = vld [vmem:[%s3 + $0xdc] sm:$0xf]
        %v7317 = vunpack.c.l.b16 %v7309
        %v7318 = vunpack.c.l.b16 %v7310
        %v7319 = vunpack.c.l.b16 %v7311
        %v7320 = vunpack.c.l.b16 %v7312
        %v7321 = vpack.c.b16 %v7318, %v7317
        %v7322 = vpack.c.b16 %v7320, %v7319
        %v7326 = vsel %vm1040, %v7308, 0
        %7328 = vmatprep.subr.bf16.mxu0 0
        %7329 = vmatpush1.bf16.msra.mxu0 %v7321
        %7330 = vmatprep.subr.bf16.mxu0 0
        %7331 = vmatpush1.bf16.msra.mxu0 %v7322
        %7332 = vmatprep.subr.bf16.mxu0 0
        %7333 = vmatpush1.bf16.msra.mxu0 0
        %7334 = vmatprep.subr.bf16.mxu0 0
        %7335 = vmatpush1.bf16.msra.mxu0 0
        %7336 = vmatprep.subr.bf16.mxu0 0
        %7337 = vmatpush1.bf16.msra.mxu0 0
        %7338 = vmatprep.subr.bf16.mxu0 0
        %7339 = vmatpush1.bf16.msra.mxu0 0
        %7340 = vmatprep.subr.bf16.mxu0 0
        %7341 = vmatpush1.bf16.msra.mxu0 0
        %7342 = vmatprep.subr.bf16.mxu0 0
        %7343 = vmatpush1.bf16.msra.mxu0 0
        %7344 = vmatprep.subr.bf16.mxu0 0
        %7345 = vmatpush1.bf16.msra.mxu0 0
        %7346 = vmatprep.subr.bf16.mxu0 0
        %7347 = vmatpush1.bf16.msra.mxu0 0
        %7348 = vmatprep.subr.bf16.mxu0 0
        %7349 = vmatpush1.bf16.msra.mxu0 0
        %7350 = vmatprep.subr.bf16.mxu0 0
        %7351 = vmatpush1.bf16.msra.mxu0 0
        %7352 = vmatprep.subr.bf16.mxu0 0
        %7353 = vmatpush1.bf16.msra.mxu0 0
        %7354 = vmatprep.subr.bf16.mxu0 0
        %7355 = vmatpush1.bf16.msra.mxu0 0
        %7356 = vmatprep.subr.bf16.mxu0 0
        %7357 = vmatpush1.bf16.msra.mxu0 0
        %7358 = vmatprep.subr.bf16.mxu0 0
        %7359 = vmatpush1.bf16.msra.mxu0 0
        %7360 = vmatprep.mubr.bf16.mxu0 0
        %7361 = vmatmul.mubr.bf16.gmra.mrb[0].mxu0 %v7326
        %v7362 = vpop.f32.mrb[0].mxu0
        %v7363 = vadd.f32 0.0, %v7362
        %v7364 = vpop.f32.mrb[0].mxu0
        %v7365 = vpop.f32.mrb[0].mxu0
        %v7366 = vpop.f32.mrb[0].mxu0
        %7367 = vdwg.mxu0
        %v7368 = vadd.f32 %v7306, %v7363
        %v7369 = vld [vmem:[%s2939] ss:$2 sm:$0x7]
        %v7370 = vpack.c.bf16 %v7369, %v7369
        %v7371 = vld [vmem:[%s3 + $0xe0] sm:$0xf]
        %v7372 = vld [vmem:[%s3 + $0xe4] sm:$0xf]
        %v7373 = vld [vmem:[%s3 + $0xe8] sm:$0xf]
        %v7374 = vld [vmem:[%s3 + $0xec] sm:$0xf]
        %v7379 = vunpack.c.l.b16 %v7371
        %v7380 = vunpack.c.l.b16 %v7372
        %v7381 = vunpack.c.l.b16 %v7373
        %v7382 = vunpack.c.l.b16 %v7374
        %v7383 = vpack.c.b16 %v7380, %v7379
        %v7384 = vpack.c.b16 %v7382, %v7381
        %v7388 = vsel %vm1040, %v7370, 0
        %7390 = vmatprep.subr.bf16.mxu0 0
        %7391 = vmatpush1.bf16.msra.mxu0 %v7383
        %7392 = vmatprep.subr.bf16.mxu0 0
        %7393 = vmatpush1.bf16.msra.mxu0 %v7384
        %7394 = vmatprep.subr.bf16.mxu0 0
        %7395 = vmatpush1.bf16.msra.mxu0 0
        %7396 = vmatprep.subr.bf16.mxu0 0
        %7397 = vmatpush1.bf16.msra.mxu0 0
        %7398 = vmatprep.subr.bf16.mxu0 0
        %7399 = vmatpush1.bf16.msra.mxu0 0
        %7400 = vmatprep.subr.bf16.mxu0 0
        %7401 = vmatpush1.bf16.msra.mxu0 0
        %7402 = vmatprep.subr.bf16.mxu0 0
        %7403 = vmatpush1.bf16.msra.mxu0 0
        %7404 = vmatprep.subr.bf16.mxu0 0
        %7405 = vmatpush1.bf16.msra.mxu0 0
        %7406 = vmatprep.subr.bf16.mxu0 0
        %7407 = vmatpush1.bf16.msra.mxu0 0
        %7408 = vmatprep.subr.bf16.mxu0 0
        %7409 = vmatpush1.bf16.msra.mxu0 0
        %7410 = vmatprep.subr.bf16.mxu0 0
        %7411 = vmatpush1.bf16.msra.mxu0 0
        %7412 = vmatprep.subr.bf16.mxu0 0
        %7413 = vmatpush1.bf16.msra.mxu0 0
        %7414 = vmatprep.subr.bf16.mxu0 0
        %7415 = vmatpush1.bf16.msra.mxu0 0
        %7416 = vmatprep.subr.bf16.mxu0 0
        %7417 = vmatpush1.bf16.msra.mxu0 0
        %7418 = vmatprep.subr.bf16.mxu0 0
        %7419 = vmatpush1.bf16.msra.mxu0 0
        %7420 = vmatprep.subr.bf16.mxu0 0
        %7421 = vmatpush1.bf16.msra.mxu0 0
        %7422 = vmatprep.mubr.bf16.mxu0 0
        %7423 = vmatmul.mubr.bf16.gmra.mrb[0].mxu0 %v7388
        %v7424 = vpop.f32.mrb[0].mxu0
        %v7425 = vadd.f32 0.0, %v7424
        %v7426 = vpop.f32.mrb[0].mxu0
        %v7427 = vpop.f32.mrb[0].mxu0
        %v7428 = vpop.f32.mrb[0].mxu0
        %7429 = vdwg.mxu0
        %v7430 = vadd.f32 %v7368, %v7425
        %v7431 = vld [vmem:[%s3002] ss:$2 sm:$0x7]
        %v7432 = vpack.c.bf16 %v7431, %v7431
        %v7433 = vld [vmem:[%s3 + $0xf0] sm:$0xf]
        %v7434 = vld [vmem:[%s3 + $0xf4] sm:$0xf]
        %v7435 = vld [vmem:[%s3 + $0xf8] sm:$0xf]
        %v7436 = vld [vmem:[%s3 + $0xfc] sm:$0xf]
        %v7441 = vunpack.c.l.b16 %v7433
        %v7442 = vunpack.c.l.b16 %v7434
        %v7443 = vunpack.c.l.b16 %v7435
        %v7444 = vunpack.c.l.b16 %v7436
        %v7445 = vpack.c.b16 %v7442, %v7441
        %v7446 = vpack.c.b16 %v7444, %v7443
        %v7450 = vsel %vm1040, %v7432, 0
        %7452 = vmatprep.subr.bf16.mxu0 0
        %7453 = vmatpush1.bf16.msra.mxu0 %v7445
        %7454 = vmatprep.subr.bf16.mxu0 0
        %7455 = vmatpush1.bf16.msra.mxu0 %v7446
        %7456 = vmatprep.subr.bf16.mxu0 0
        %7457 = vmatpush1.bf16.msra.mxu0 0
        %7458 = vmatprep.subr.bf16.mxu0 0
        %7459 = vmatpush1.bf16.msra.mxu0 0
        %7460 = vmatprep.subr.bf16.mxu0 0
        %7461 = vmatpush1.bf16.msra.mxu0 0
        %7462 = vmatprep.subr.bf16.mxu0 0
        %7463 = vmatpush1.bf16.msra.mxu0 0
        %7464 = vmatprep.subr.bf16.mxu0 0
        %7465 = vmatpush1.bf16.msra.mxu0 0
        %7466 = vmatprep.subr.bf16.mxu0 0
        %7467 = vmatpush1.bf16.msra.mxu0 0
        %7468 = vmatprep.subr.bf16.mxu0 0
        %7469 = vmatpush1.bf16.msra.mxu0 0
        %7470 = vmatprep.subr.bf16.mxu0 0
        %7471 = vmatpush1.bf16.msra.mxu0 0
        %7472 = vmatprep.subr.bf16.mxu0 0
        %7473 = vmatpush1.bf16.msra.mxu0 0
        %7474 = vmatprep.subr.bf16.mxu0 0
        %7475 = vmatpush1.bf16.msra.mxu0 0
        %7476 = vmatprep.subr.bf16.mxu0 0
        %7477 = vmatpush1.bf16.msra.mxu0 0
        %7478 = vmatprep.subr.bf16.mxu0 0
        %7479 = vmatpush1.bf16.msra.mxu0 0
        %7480 = vmatprep.subr.bf16.mxu0 0
        %7481 = vmatpush1.bf16.msra.mxu0 0
        %7482 = vmatprep.subr.bf16.mxu0 0
        %7483 = vmatpush1.bf16.msra.mxu0 0
        %7484 = vmatprep.mubr.bf16.mxu0 0
        %7485 = vmatmul.mubr.bf16.gmra.mrb[0].mxu0 %v7450
        %v7486 = vpop.f32.mrb[0].mxu0
        %v7487 = vadd.f32 0.0, %v7486
        %v7488 = vpop.f32.mrb[0].mxu0
        %v7489 = vpop.f32.mrb[0].mxu0
        %v7490 = vpop.f32.mrb[0].mxu0
        %7491 = vdwg.mxu0
        %v7492 = vadd.f32 %v7430, %v7487
        %v7493 = vld [vmem:[%s4] sm:$0x1]
        %v7495 = vlaneseq
        %v7496 = vshrl.u32 %v7495, 7
        %v7497 = vsub.s32 0, %v7496
        %v7498 = vrot.slane %v7493, %v7497
        %v7500 = vadd.f32 %v7492, %v7498
        %v7501 = vmax.f32 %v7500, 0.0
        %7502 = vst.msk [vmem:[#allocation3 + $0x3] sm:$0x7] %vm2065, %v7501
        %v7503 = vld [vmem:[%s2561] ss:$2 sm:$0x7]
        %v7504 = vpack.c.bf16 %v7503, %v7503
        %v7505 = vld [vmem:[%s3] sm:$0xf]
        %v7506 = vld [vmem:[%s3 + $0x4] sm:$0xf]
        %v7507 = vld [vmem:[%s3 + $0x8] sm:$0xf]
        %v7508 = vld [vmem:[%s3 + $0xc] sm:$0xf]
        %v7509 = vld [vmem:[%s2624] ss:$2 sm:$0x7]
        %v7510 = vpack.c.bf16 %v7509, %v7509
        %v7511 = vld [vmem:[%s3 + $0x10] sm:$0xf]
        %v7512 = vld [vmem:[%s3 + $0x14] sm:$0xf]
        %v7513 = vld [vmem:[%s3 + $0x18] sm:$0xf]
        %v7514 = vld [vmem:[%s3 + $0x1c] sm:$0xf]
        %v7519 = vunpack.c.l.b16 %v7511
        %v7520 = vunpack.c.l.b16 %v7512
        %v7521 = vunpack.c.l.b16 %v7513
        %v7522 = vunpack.c.l.b16 %v7514
        %v7523 = vpack.c.b16 %v7520, %v7519
        %v7524 = vpack.c.b16 %v7522, %v7521
        %v7528 = vsel %vm1040, %v7510, 0
        %7530 = vmatprep.subr.bf16.mxu0 0
        %7531 = vmatpush1.bf16.msra.mxu0 %v7523
        %7532 = vmatprep.subr.bf16.mxu0 0
        %7533 = vmatpush1.bf16.msra.mxu0 %v7524
        %7534 = vmatprep.subr.bf16.mxu0 0
        %7535 = vmatpush1.bf16.msra.mxu0 0
        %7536 = vmatprep.subr.bf16.mxu0 0
        %7537 = vmatpush1.bf16.msra.mxu0 0
        %7538 = vmatprep.subr.bf16.mxu0 0
        %7539 = vmatpush1.bf16.msra.mxu0 0
        %7540 = vmatprep.subr.bf16.mxu0 0
        %7541 = vmatpush1.bf16.msra.mxu0 0
        %7542 = vmatprep.subr.bf16.mxu0 0
        %7543 = vmatpush1.bf16.msra.mxu0 0
        %7544 = vmatprep.subr.bf16.mxu0 0
        %7545 = vmatpush1.bf16.msra.mxu0 0
        %7546 = vmatprep.subr.bf16.mxu0 0
        %7547 = vmatpush1.bf16.msra.mxu0 0
        %7548 = vmatprep.subr.bf16.mxu0 0
        %7549 = vmatpush1.bf16.msra.mxu0 0
        %7550 = vmatprep.subr.bf16.mxu0 0
        %7551 = vmatpush1.bf16.msra.mxu0 0
        %7552 = vmatprep.subr.bf16.mxu0 0
        %7553 = vmatpush1.bf16.msra.mxu0 0
        %7554 = vmatprep.subr.bf16.mxu0 0
        %7555 = vmatpush1.bf16.msra.mxu0 0
        %7556 = vmatprep.subr.bf16.mxu0 0
        %7557 = vmatpush1.bf16.msra.mxu0 0
        %7558 = vmatprep.subr.bf16.mxu0 0
        %7559 = vmatpush1.bf16.msra.mxu0 0
        %7560 = vmatprep.subr.bf16.mxu0 0
        %7561 = vmatpush1.bf16.msra.mxu0 0
        %7562 = vmatprep.mubr.bf16.mxu0 0
        %7563 = vmatmul.mubr.bf16.gmra.mrb[0].mxu0 %v7528
        %v7564 = vpop.f32.mrb[0].mxu0
        %v7565 = vadd.f32 0.0, %v7564
        %v7566 = vpop.f32.mrb[0].mxu0
        %v7567 = vpop.f32.mrb[0].mxu0
        %v7568 = vpop.f32.mrb[0].mxu0
        %7569 = vdwg.mxu0
        %v7574 = vunpack.c.l.b16 %v7505
        %v7575 = vunpack.c.l.b16 %v7506
        %v7576 = vunpack.c.l.b16 %v7507
        %v7577 = vunpack.c.l.b16 %v7508
        %v7578 = vpack.c.b16 %v7575, %v7574
        %v7579 = vpack.c.b16 %v7577, %v7576
        %v7583 = vsel %vm1040, %v7504, 0
        %7585 = vmatprep.subr.bf16.mxu0 0
        %7586 = vmatpush1.bf16.msra.mxu0 %v7578
        %7587 = vmatprep.subr.bf16.mxu0 0
        %7588 = vmatpush1.bf16.msra.mxu0 %v7579
        %7589 = vmatprep.subr.bf16.mxu0 0
        %7590 = vmatpush1.bf16.msra.mxu0 0
        %7591 = vmatprep.subr.bf16.mxu0 0
        %7592 = vmatpush1.bf16.msra.mxu0 0
        %7593 = vmatprep.subr.bf16.mxu0 0
        %7594 = vmatpush1.bf16.msra.mxu0 0
        %7595 = vmatprep.subr.bf16.mxu0 0
        %7596 = vmatpush1.bf16.msra.mxu0 0
        %7597 = vmatprep.subr.bf16.mxu0 0
        %7598 = vmatpush1.bf16.msra.mxu0 0
        %7599 = vmatprep.subr.bf16.mxu0 0
        %7600 = vmatpush1.bf16.msra.mxu0 0
        %7601 = vmatprep.subr.bf16.mxu0 0
        %7602 = vmatpush1.bf16.msra.mxu0 0
        %7603 = vmatprep.subr.bf16.mxu0 0
        %7604 = vmatpush1.bf16.msra.mxu0 0
        %7605 = vmatprep.subr.bf16.mxu0 0
        %7606 = vmatpush1.bf16.msra.mxu0 0
        %7607 = vmatprep.subr.bf16.mxu0 0
        %7608 = vmatpush1.bf16.msra.mxu0 0
        %7609 = vmatprep.subr.bf16.mxu0 0
        %7610 = vmatpush1.bf16.msra.mxu0 0
        %7611 = vmatprep.subr.bf16.mxu0 0
        %7612 = vmatpush1.bf16.msra.mxu0 0
        %7613 = vmatprep.subr.bf16.mxu0 0
        %7614 = vmatpush1.bf16.msra.mxu0 0
        %7615 = vmatprep.subr.bf16.mxu0 0
        %7616 = vmatpush1.bf16.msra.mxu0 0
        %7617 = vmatprep.mubr.bf16.mxu0 0
        %7618 = vmatmul.mubr.bf16.gmra.mrb[0].mxu0 %v7583
        %v7619 = vpop.f32.mrb[0].mxu0
        %v7620 = vadd.f32 %v7565, %v7619
        %v7621 = vpop.f32.mrb[0].mxu0
        %v7622 = vpop.f32.mrb[0].mxu0
        %v7623 = vpop.f32.mrb[0].mxu0
        %7624 = vdwg.mxu0
        %v7625 = vld [vmem:[%s2687] ss:$2 sm:$0x7]
        %v7626 = vpack.c.bf16 %v7625, %v7625
        %v7627 = vld [vmem:[%s3 + $0x20] sm:$0xf]
        %v7628 = vld [vmem:[%s3 + $0x24] sm:$0xf]
        %v7629 = vld [vmem:[%s3 + $0x28] sm:$0xf]
        %v7630 = vld [vmem:[%s3 + $0x2c] sm:$0xf]
        %v7635 = vunpack.c.l.b16 %v7627
        %v7636 = vunpack.c.l.b16 %v7628
        %v7637 = vunpack.c.l.b16 %v7629
        %v7638 = vunpack.c.l.b16 %v7630
        %v7639 = vpack.c.b16 %v7636, %v7635
        %v7640 = vpack.c.b16 %v7638, %v7637
        %v7644 = vsel %vm1040, %v7626, 0
        %7646 = vmatprep.subr.bf16.mxu0 0
        %7647 = vmatpush1.bf16.msra.mxu0 %v7639
        %7648 = vmatprep.subr.bf16.mxu0 0
        %7649 = vmatpush1.bf16.msra.mxu0 %v7640
        %7650 = vmatprep.subr.bf16.mxu0 0
        %7651 = vmatpush1.bf16.msra.mxu0 0
        %7652 = vmatprep.subr.bf16.mxu0 0
        %7653 = vmatpush1.bf16.msra.mxu0 0
        %7654 = vmatprep.subr.bf16.mxu0 0
        %7655 = vmatpush1.bf16.msra.mxu0 0
        %7656 = vmatprep.subr.bf16.mxu0 0
        %7657 = vmatpush1.bf16.msra.mxu0 0
        %7658 = vmatprep.subr.bf16.mxu0 0
        %7659 = vmatpush1.bf16.msra.mxu0 0
        %7660 = vmatprep.subr.bf16.mxu0 0
        %7661 = vmatpush1.bf16.msra.mxu0 0
        %7662 = vmatprep.subr.bf16.mxu0 0
        %7663 = vmatpush1.bf16.msra.mxu0 0
        %7664 = vmatprep.subr.bf16.mxu0 0
        %7665 = vmatpush1.bf16.msra.mxu0 0
        %7666 = vmatprep.subr.bf16.mxu0 0
        %7667 = vmatpush1.bf16.msra.mxu0 0
        %7668 = vmatprep.subr.bf16.mxu0 0
        %7669 = vmatpush1.bf16.msra.mxu0 0
        %7670 = vmatprep.subr.bf16.mxu0 0
        %7671 = vmatpush1.bf16.msra.mxu0 0
        %7672 = vmatprep.subr.bf16.mxu0 0
        %7673 = vmatpush1.bf16.msra.mxu0 0
        %7674 = vmatprep.subr.bf16.mxu0 0
        %7675 = vmatpush1.bf16.msra.mxu0 0
        %7676 = vmatprep.subr.bf16.mxu0 0
        %7677 = vmatpush1.bf16.msra.mxu0 0
        %7678 = vmatprep.mubr.bf16.mxu0 0
        %7679 = vmatmul.mubr.bf16.gmra.mrb[0].mxu0 %v7644
        %v7680 = vpop.f32.mrb[0].mxu0
        %v7681 = vadd.f32 0.0, %v7680
        %v7682 = vpop.f32.mrb[0].mxu0
        %v7683 = vpop.f32.mrb[0].mxu0
        %v7684 = vpop.f32.mrb[0].mxu0
        %7685 = vdwg.mxu0
        %v7686 = vadd.f32 %v7620, %v7681
        %v7687 = vld [vmem:[%s2750] ss:$2 sm:$0x7]
        %v7688 = vpack.c.bf16 %v7687, %v7687
        %v7689 = vld [vmem:[%s3 + $0x30] sm:$0xf]
        %v7690 = vld [vmem:[%s3 + $0x34] sm:$0xf]
        %v7691 = vld [vmem:[%s3 + $0x38] sm:$0xf]
        %v7692 = vld [vmem:[%s3 + $0x3c] sm:$0xf]
        %v7697 = vunpack.c.l.b16 %v7689
        %v7698 = vunpack.c.l.b16 %v7690
        %v7699 = vunpack.c.l.b16 %v7691
        %v7700 = vunpack.c.l.b16 %v7692
        %v7701 = vpack.c.b16 %v7698, %v7697
        %v7702 = vpack.c.b16 %v7700, %v7699
        %v7706 = vsel %vm1040, %v7688, 0
        %7708 = vmatprep.subr.bf16.mxu0 0
        %7709 = vmatpush1.bf16.msra.mxu0 %v7701
        %7710 = vmatprep.subr.bf16.mxu0 0
        %7711 = vmatpush1.bf16.msra.mxu0 %v7702
        %7712 = vmatprep.subr.bf16.mxu0 0
        %7713 = vmatpush1.bf16.msra.mxu0 0
        %7714 = vmatprep.subr.bf16.mxu0 0
        %7715 = vmatpush1.bf16.msra.mxu0 0
        %7716 = vmatprep.subr.bf16.mxu0 0
        %7717 = vmatpush1.bf16.msra.mxu0 0
        %7718 = vmatprep.subr.bf16.mxu0 0
        %7719 = vmatpush1.bf16.msra.mxu0 0
        %7720 = vmatprep.subr.bf16.mxu0 0
        %7721 = vmatpush1.bf16.msra.mxu0 0
        %7722 = vmatprep.subr.bf16.mxu0 0
        %7723 = vmatpush1.bf16.msra.mxu0 0
        %7724 = vmatprep.subr.bf16.mxu0 0
        %7725 = vmatpush1.bf16.msra.mxu0 0
        %7726 = vmatprep.subr.bf16.mxu0 0
        %7727 = vmatpush1.bf16.msra.mxu0 0
        %7728 = vmatprep.subr.bf16.mxu0 0
        %7729 = vmatpush1.bf16.msra.mxu0 0
        %7730 = vmatprep.subr.bf16.mxu0 0
        %7731 = vmatpush1.bf16.msra.mxu0 0
        %7732 = vmatprep.subr.bf16.mxu0 0
        %7733 = vmatpush1.bf16.msra.mxu0 0
        %7734 = vmatprep.subr.bf16.mxu0 0
        %7735 = vmatpush1.bf16.msra.mxu0 0
        %7736 = vmatprep.subr.bf16.mxu0 0
        %7737 = vmatpush1.bf16.msra.mxu0 0
        %7738 = vmatprep.subr.bf16.mxu0 0
        %7739 = vmatpush1.bf16.msra.mxu0 0
        %7740 = vmatprep.mubr.bf16.mxu0 0
        %7741 = vmatmul.mubr.bf16.gmra.mrb[0].mxu0 %v7706
        %v7742 = vpop.f32.mrb[0].mxu0
        %v7743 = vadd.f32 0.0, %v7742
        %v7744 = vpop.f32.mrb[0].mxu0
        %v7745 = vpop.f32.mrb[0].mxu0
        %v7746 = vpop.f32.mrb[0].mxu0
        %7747 = vdwg.mxu0
        %v7748 = vadd.f32 %v7686, %v7743
        %v7749 = vld [vmem:[%s2813] ss:$2 sm:$0x7]
        %v7750 = vpack.c.bf16 %v7749, %v7749
        %v7751 = vld [vmem:[%s3 + $0x40] sm:$0xf]
        %v7752 = vld [vmem:[%s3 + $0x44] sm:$0xf]
        %v7753 = vld [vmem:[%s3 + $0x48] sm:$0xf]
        %v7754 = vld [vmem:[%s3 + $0x4c] sm:$0xf]
        %v7759 = vunpack.c.l.b16 %v7751
        %v7760 = vunpack.c.l.b16 %v7752
        %v7761 = vunpack.c.l.b16 %v7753
        %v7762 = vunpack.c.l.b16 %v7754
        %v7763 = vpack.c.b16 %v7760, %v7759
        %v7764 = vpack.c.b16 %v7762, %v7761
        %v7768 = vsel %vm1040, %v7750, 0
        %7770 = vmatprep.subr.bf16.mxu0 0
        %7771 = vmatpush1.bf16.msra.mxu0 %v7763
        %7772 = vmatprep.subr.bf16.mxu0 0
        %7773 = vmatpush1.bf16.msra.mxu0 %v7764
        %7774 = vmatprep.subr.bf16.mxu0 0
        %7775 = vmatpush1.bf16.msra.mxu0 0
        %7776 = vmatprep.subr.bf16.mxu0 0
        %7777 = vmatpush1.bf16.msra.mxu0 0
        %7778 = vmatprep.subr.bf16.mxu0 0
        %7779 = vmatpush1.bf16.msra.mxu0 0
        %7780 = vmatprep.subr.bf16.mxu0 0
        %7781 = vmatpush1.bf16.msra.mxu0 0
        %7782 = vmatprep.subr.bf16.mxu0 0
        %7783 = vmatpush1.bf16.msra.mxu0 0
        %7784 = vmatprep.subr.bf16.mxu0 0
        %7785 = vmatpush1.bf16.msra.mxu0 0
        %7786 = vmatprep.subr.bf16.mxu0 0
        %7787 = vmatpush1.bf16.msra.mxu0 0
        %7788 = vmatprep.subr.bf16.mxu0 0
        %7789 = vmatpush1.bf16.msra.mxu0 0
        %7790 = vmatprep.subr.bf16.mxu0 0
        %7791 = vmatpush1.bf16.msra.mxu0 0
        %7792 = vmatprep.subr.bf16.mxu0 0
        %7793 = vmatpush1.bf16.msra.mxu0 0
        %7794 = vmatprep.subr.bf16.mxu0 0
        %7795 = vmatpush1.bf16.msra.mxu0 0
        %7796 = vmatprep.subr.bf16.mxu0 0
        %7797 = vmatpush1.bf16.msra.mxu0 0
        %7798 = vmatprep.subr.bf16.mxu0 0
        %7799 = vmatpush1.bf16.msra.mxu0 0
        %7800 = vmatprep.subr.bf16.mxu0 0
        %7801 = vmatpush1.bf16.msra.mxu0 0
        %7802 = vmatprep.mubr.bf16.mxu0 0
        %7803 = vmatmul.mubr.bf16.gmra.mrb[0].mxu0 %v7768
        %v7804 = vpop.f32.mrb[0].mxu0
        %v7805 = vadd.f32 0.0, %v7804
        %v7806 = vpop.f32.mrb[0].mxu0
        %v7807 = vpop.f32.mrb[0].mxu0
        %v7808 = vpop.f32.mrb[0].mxu0
        %7809 = vdwg.mxu0
        %v7810 = vadd.f32 %v7748, %v7805
        %v7811 = vld [vmem:[%s2876] ss:$2 sm:$0x7]
        %v7812 = vpack.c.bf16 %v7811, %v7811
        %v7813 = vld [vmem:[%s3 + $0x50] sm:$0xf]
        %v7814 = vld [vmem:[%s3 + $0x54] sm:$0xf]
        %v7815 = vld [vmem:[%s3 + $0x58] sm:$0xf]
        %v7816 = vld [vmem:[%s3 + $0x5c] sm:$0xf]
        %v7821 = vunpack.c.l.b16 %v7813
        %v7822 = vunpack.c.l.b16 %v7814
        %v7823 = vunpack.c.l.b16 %v7815
        %v7824 = vunpack.c.l.b16 %v7816
        %v7825 = vpack.c.b16 %v7822, %v7821
        %v7826 = vpack.c.b16 %v7824, %v7823
        %v7830 = vsel %vm1040, %v7812, 0
        %7832 = vmatprep.subr.bf16.mxu0 0
        %7833 = vmatpush1.bf16.msra.mxu0 %v7825
        %7834 = vmatprep.subr.bf16.mxu0 0
        %7835 = vmatpush1.bf16.msra.mxu0 %v7826
        %7836 = vmatprep.subr.bf16.mxu0 0
        %7837 = vmatpush1.bf16.msra.mxu0 0
        %7838 = vmatprep.subr.bf16.mxu0 0
        %7839 = vmatpush1.bf16.msra.mxu0 0
        %7840 = vmatprep.subr.bf16.mxu0 0
        %7841 = vmatpush1.bf16.msra.mxu0 0
        %7842 = vmatprep.subr.bf16.mxu0 0
        %7843 = vmatpush1.bf16.msra.mxu0 0
        %7844 = vmatprep.subr.bf16.mxu0 0
        %7845 = vmatpush1.bf16.msra.mxu0 0
        %7846 = vmatprep.subr.bf16.mxu0 0
        %7847 = vmatpush1.bf16.msra.mxu0 0
        %7848 = vmatprep.subr.bf16.mxu0 0
        %7849 = vmatpush1.bf16.msra.mxu0 0
        %7850 = vmatprep.subr.bf16.mxu0 0
        %7851 = vmatpush1.bf16.msra.mxu0 0
        %7852 = vmatprep.subr.bf16.mxu0 0
        %7853 = vmatpush1.bf16.msra.mxu0 0
        %7854 = vmatprep.subr.bf16.mxu0 0
        %7855 = vmatpush1.bf16.msra.mxu0 0
        %7856 = vmatprep.subr.bf16.mxu0 0
        %7857 = vmatpush1.bf16.msra.mxu0 0
        %7858 = vmatprep.subr.bf16.mxu0 0
        %7859 = vmatpush1.bf16.msra.mxu0 0
        %7860 = vmatprep.subr.bf16.mxu0 0
        %7861 = vmatpush1.bf16.msra.mxu0 0
        %7862 = vmatprep.subr.bf16.mxu0 0
        %7863 = vmatpush1.bf16.msra.mxu0 0
        %7864 = vmatprep.mubr.bf16.mxu0 0
        %7865 = vmatmul.mubr.bf16.gmra.mrb[0].mxu0 %v7830
        %v7866 = vpop.f32.mrb[0].mxu0
        %v7867 = vadd.f32 0.0, %v7866
        %v7868 = vpop.f32.mrb[0].mxu0
        %v7869 = vpop.f32.mrb[0].mxu0
        %v7870 = vpop.f32.mrb[0].mxu0
        %7871 = vdwg.mxu0
        %v7872 = vadd.f32 %v7810, %v7867
        %v7873 = vld [vmem:[%s2939] ss:$2 sm:$0x7]
        %v7874 = vpack.c.bf16 %v7873, %v7873
        %v7875 = vld [vmem:[%s3 + $0x60] sm:$0xf]
        %v7876 = vld [vmem:[%s3 + $0x64] sm:$0xf]
        %v7877 = vld [vmem:[%s3 + $0x68] sm:$0xf]
        %v7878 = vld [vmem:[%s3 + $0x6c] sm:$0xf]
        %v7883 = vunpack.c.l.b16 %v7875
        %v7884 = vunpack.c.l.b16 %v7876
        %v7885 = vunpack.c.l.b16 %v7877
        %v7886 = vunpack.c.l.b16 %v7878
        %v7887 = vpack.c.b16 %v7884, %v7883
        %v7888 = vpack.c.b16 %v7886, %v7885
        %v7892 = vsel %vm1040, %v7874, 0
        %7894 = vmatprep.subr.bf16.mxu0 0
        %7895 = vmatpush1.bf16.msra.mxu0 %v7887
        %7896 = vmatprep.subr.bf16.mxu0 0
        %7897 = vmatpush1.bf16.msra.mxu0 %v7888
        %7898 = vmatprep.subr.bf16.mxu0 0
        %7899 = vmatpush1.bf16.msra.mxu0 0
        %7900 = vmatprep.subr.bf16.mxu0 0
        %7901 = vmatpush1.bf16.msra.mxu0 0
        %7902 = vmatprep.subr.bf16.mxu0 0
        %7903 = vmatpush1.bf16.msra.mxu0 0
        %7904 = vmatprep.subr.bf16.mxu0 0
        %7905 = vmatpush1.bf16.msra.mxu0 0
        %7906 = vmatprep.subr.bf16.mxu0 0
        %7907 = vmatpush1.bf16.msra.mxu0 0
        %7908 = vmatprep.subr.bf16.mxu0 0
        %7909 = vmatpush1.bf16.msra.mxu0 0
        %7910 = vmatprep.subr.bf16.mxu0 0
        %7911 = vmatpush1.bf16.msra.mxu0 0
        %7912 = vmatprep.subr.bf16.mxu0 0
        %7913 = vmatpush1.bf16.msra.mxu0 0
        %7914 = vmatprep.subr.bf16.mxu0 0
        %7915 = vmatpush1.bf16.msra.mxu0 0
        %7916 = vmatprep.subr.bf16.mxu0 0
        %7917 = vmatpush1.bf16.msra.mxu0 0
        %7918 = vmatprep.subr.bf16.mxu0 0
        %7919 = vmatpush1.bf16.msra.mxu0 0
        %7920 = vmatprep.subr.bf16.mxu0 0
        %7921 = vmatpush1.bf16.msra.mxu0 0
        %7922 = vmatprep.subr.bf16.mxu0 0
        %7923 = vmatpush1.bf16.msra.mxu0 0
        %7924 = vmatprep.subr.bf16.mxu0 0
        %7925 = vmatpush1.bf16.msra.mxu0 0
        %7926 = vmatprep.mubr.bf16.mxu0 0
        %7927 = vmatmul.mubr.bf16.gmra.mrb[0].mxu0 %v7892
        %v7928 = vpop.f32.mrb[0].mxu0
        %v7929 = vadd.f32 0.0, %v7928
        %v7930 = vpop.f32.mrb[0].mxu0
        %v7931 = vpop.f32.mrb[0].mxu0
        %v7932 = vpop.f32.mrb[0].mxu0
        %7933 = vdwg.mxu0
        %v7934 = vadd.f32 %v7872, %v7929
        %v7935 = vld [vmem:[%s3002] ss:$2 sm:$0x7]
        %v7936 = vpack.c.bf16 %v7935, %v7935
        %v7937 = vld [vmem:[%s3 + $0x70] sm:$0xf]
        %v7938 = vld [vmem:[%s3 + $0x74] sm:$0xf]
        %v7939 = vld [vmem:[%s3 + $0x78] sm:$0xf]
        %v7940 = vld [vmem:[%s3 + $0x7c] sm:$0xf]
        %v7945 = vunpack.c.l.b16 %v7937
        %v7946 = vunpack.c.l.b16 %v7938
        %v7947 = vunpack.c.l.b16 %v7939
        %v7948 = vunpack.c.l.b16 %v7940
        %v7949 = vpack.c.b16 %v7946, %v7945
        %v7950 = vpack.c.b16 %v7948, %v7947
        %v7954 = vsel %vm1040, %v7936, 0
        %7956 = vmatprep.subr.bf16.mxu0 0
        %7957 = vmatpush1.bf16.msra.mxu0 %v7949
        %7958 = vmatprep.subr.bf16.mxu0 0
        %7959 = vmatpush1.bf16.msra.mxu0 %v7950
        %7960 = vmatprep.subr.bf16.mxu0 0
        %7961 = vmatpush1.bf16.msra.mxu0 0
        %7962 = vmatprep.subr.bf16.mxu0 0
        %7963 = vmatpush1.bf16.msra.mxu0 0
        %7964 = vmatprep.subr.bf16.mxu0 0
        %7965 = vmatpush1.bf16.msra.mxu0 0
        %7966 = vmatprep.subr.bf16.mxu0 0
        %7967 = vmatpush1.bf16.msra.mxu0 0
        %7968 = vmatprep.subr.bf16.mxu0 0
        %7969 = vmatpush1.bf16.msra.mxu0 0
        %7970 = vmatprep.subr.bf16.mxu0 0
        %7971 = vmatpush1.bf16.msra.mxu0 0
        %7972 = vmatprep.subr.bf16.mxu0 0
        %7973 = vmatpush1.bf16.msra.mxu0 0
        %7974 = vmatprep.subr.bf16.mxu0 0
        %7975 = vmatpush1.bf16.msra.mxu0 0
        %7976 = vmatprep.subr.bf16.mxu0 0
        %7977 = vmatpush1.bf16.msra.mxu0 0
        %7978 = vmatprep.subr.bf16.mxu0 0
        %7979 = vmatpush1.bf16.msra.mxu0 0
        %7980 = vmatprep.subr.bf16.mxu0 0
        %7981 = vmatpush1.bf16.msra.mxu0 0
        %7982 = vmatprep.subr.bf16.mxu0 0
        %7983 = vmatpush1.bf16.msra.mxu0 0
        %7984 = vmatprep.subr.bf16.mxu0 0
        %7985 = vmatpush1.bf16.msra.mxu0 0
        %7986 = vmatprep.subr.bf16.mxu0 0
        %7987 = vmatpush1.bf16.msra.mxu0 0
        %7988 = vmatprep.mubr.bf16.mxu0 0
        %7989 = vmatmul.mubr.bf16.gmra.mrb[0].mxu0 %v7954
        %v7990 = vpop.f32.mrb[0].mxu0
        %v7991 = vadd.f32 0.0, %v7990
        %v7992 = vpop.f32.mrb[0].mxu0
        %v7993 = vpop.f32.mrb[0].mxu0
        %v7994 = vpop.f32.mrb[0].mxu0
        %7995 = vdwg.mxu0
        %v7996 = vadd.f32 %v7934, %v7991
        %v7997 = vld [vmem:[%s3569] ss:$2 sm:$0x7]
        %v7998 = vpack.c.bf16 %v7997, %v7997
        %v7999 = vld [vmem:[%s3 + $0x80] sm:$0xf]
        %v8000 = vld [vmem:[%s3 + $0x84] sm:$0xf]
        %v8001 = vld [vmem:[%s3 + $0x88] sm:$0xf]
        %v8002 = vld [vmem:[%s3 + $0x8c] sm:$0xf]
        %v8007 = vunpack.c.l.b16 %v7999
        %v8008 = vunpack.c.l.b16 %v8000
        %v8009 = vunpack.c.l.b16 %v8001
        %v8010 = vunpack.c.l.b16 %v8002
        %v8011 = vpack.c.b16 %v8008, %v8007
        %v8012 = vpack.c.b16 %v8010, %v8009
        %v8016 = vsel %vm1040, %v7998, 0
        %8018 = vmatprep.subr.bf16.mxu0 0
        %8019 = vmatpush1.bf16.msra.mxu0 %v8011
        %8020 = vmatprep.subr.bf16.mxu0 0
        %8021 = vmatpush1.bf16.msra.mxu0 %v8012
        %8022 = vmatprep.subr.bf16.mxu0 0
        %8023 = vmatpush1.bf16.msra.mxu0 0
        %8024 = vmatprep.subr.bf16.mxu0 0
        %8025 = vmatpush1.bf16.msra.mxu0 0
        %8026 = vmatprep.subr.bf16.mxu0 0
        %8027 = vmatpush1.bf16.msra.mxu0 0
        %8028 = vmatprep.subr.bf16.mxu0 0
        %8029 = vmatpush1.bf16.msra.mxu0 0
        %8030 = vmatprep.subr.bf16.mxu0 0
        %8031 = vmatpush1.bf16.msra.mxu0 0
        %8032 = vmatprep.subr.bf16.mxu0 0
        %8033 = vmatpush1.bf16.msra.mxu0 0
        %8034 = vmatprep.subr.bf16.mxu0 0
        %8035 = vmatpush1.bf16.msra.mxu0 0
        %8036 = vmatprep.subr.bf16.mxu0 0
        %8037 = vmatpush1.bf16.msra.mxu0 0
        %8038 = vmatprep.subr.bf16.mxu0 0
        %8039 = vmatpush1.bf16.msra.mxu0 0
        %8040 = vmatprep.subr.bf16.mxu0 0
        %8041 = vmatpush1.bf16.msra.mxu0 0
        %8042 = vmatprep.subr.bf16.mxu0 0
        %8043 = vmatpush1.bf16.msra.mxu0 0
        %8044 = vmatprep.subr.bf16.mxu0 0
        %8045 = vmatpush1.bf16.msra.mxu0 0
        %8046 = vmatprep.subr.bf16.mxu0 0
        %8047 = vmatpush1.bf16.msra.mxu0 0
        %8048 = vmatprep.subr.bf16.mxu0 0
        %8049 = vmatpush1.bf16.msra.mxu0 0
        %8050 = vmatprep.mubr.bf16.mxu0 0
        %8051 = vmatmul.mubr.bf16.gmra.mrb[0].mxu0 %v8016
        %v8052 = vpop.f32.mrb[0].mxu0
        %v8053 = vadd.f32 0.0, %v8052
        %v8054 = vpop.f32.mrb[0].mxu0
        %v8055 = vpop.f32.mrb[0].mxu0
        %v8056 = vpop.f32.mrb[0].mxu0
        %8057 = vdwg.mxu0
        %v8058 = vadd.f32 %v7996, %v8053
        %v8059 = vld [vmem:[%s3632] ss:$2 sm:$0x7]
        %v8060 = vpack.c.bf16 %v8059, %v8059
        %v8061 = vld [vmem:[%s3 + $0x90] sm:$0xf]
        %v8062 = vld [vmem:[%s3 + $0x94] sm:$0xf]
        %v8063 = vld [vmem:[%s3 + $0x98] sm:$0xf]
        %v8064 = vld [vmem:[%s3 + $0x9c] sm:$0xf]
        %v8069 = vunpack.c.l.b16 %v8061
        %v8070 = vunpack.c.l.b16 %v8062
        %v8071 = vunpack.c.l.b16 %v8063
        %v8072 = vunpack.c.l.b16 %v8064
        %v8073 = vpack.c.b16 %v8070, %v8069
        %v8074 = vpack.c.b16 %v8072, %v8071
        %v8078 = vsel %vm1040, %v8060, 0
        %8080 = vmatprep.subr.bf16.mxu0 0
        %8081 = vmatpush1.bf16.msra.mxu0 %v8073
        %8082 = vmatprep.subr.bf16.mxu0 0
        %8083 = vmatpush1.bf16.msra.mxu0 %v8074
        %8084 = vmatprep.subr.bf16.mxu0 0
        %8085 = vmatpush1.bf16.msra.mxu0 0
        %8086 = vmatprep.subr.bf16.mxu0 0
        %8087 = vmatpush1.bf16.msra.mxu0 0
        %8088 = vmatprep.subr.bf16.mxu0 0
        %8089 = vmatpush1.bf16.msra.mxu0 0
        %8090 = vmatprep.subr.bf16.mxu0 0
        %8091 = vmatpush1.bf16.msra.mxu0 0
        %8092 = vmatprep.subr.bf16.mxu0 0
        %8093 = vmatpush1.bf16.msra.mxu0 0
        %8094 = vmatprep.subr.bf16.mxu0 0
        %8095 = vmatpush1.bf16.msra.mxu0 0
        %8096 = vmatprep.subr.bf16.mxu0 0
        %8097 = vmatpush1.bf16.msra.mxu0 0
        %8098 = vmatprep.subr.bf16.mxu0 0
        %8099 = vmatpush1.bf16.msra.mxu0 0
        %8100 = vmatprep.subr.bf16.mxu0 0
        %8101 = vmatpush1.bf16.msra.mxu0 0
        %8102 = vmatprep.subr.bf16.mxu0 0
        %8103 = vmatpush1.bf16.msra.mxu0 0
        %8104 = vmatprep.subr.bf16.mxu0 0
        %8105 = vmatpush1.bf16.msra.mxu0 0
        %8106 = vmatprep.subr.bf16.mxu0 0
        %8107 = vmatpush1.bf16.msra.mxu0 0
        %8108 = vmatprep.subr.bf16.mxu0 0
        %8109 = vmatpush1.bf16.msra.mxu0 0
        %8110 = vmatprep.subr.bf16.mxu0 0
        %8111 = vmatpush1.bf16.msra.mxu0 0
        %8112 = vmatprep.mubr.bf16.mxu0 0
        %8113 = vmatmul.mubr.bf16.gmra.mrb[0].mxu0 %v8078
        %v8114 = vpop.f32.mrb[0].mxu0
        %v8115 = vadd.f32 0.0, %v8114
        %v8116 = vpop.f32.mrb[0].mxu0
        %v8117 = vpop.f32.mrb[0].mxu0
        %v8118 = vpop.f32.mrb[0].mxu0
        %8119 = vdwg.mxu0
        %v8120 = vadd.f32 %v8058, %v8115
        %v8121 = vld [vmem:[%s3695] ss:$2 sm:$0x7]
        %v8122 = vpack.c.bf16 %v8121, %v8121
        %v8123 = vld [vmem:[%s3 + $0xa0] sm:$0xf]
        %v8124 = vld [vmem:[%s3 + $0xa4] sm:$0xf]
        %v8125 = vld [vmem:[%s3 + $0xa8] sm:$0xf]
        %v8126 = vld [vmem:[%s3 + $0xac] sm:$0xf]
        %v8131 = vunpack.c.l.b16 %v8123
        %v8132 = vunpack.c.l.b16 %v8124
        %v8133 = vunpack.c.l.b16 %v8125
        %v8134 = vunpack.c.l.b16 %v8126
        %v8135 = vpack.c.b16 %v8132, %v8131
        %v8136 = vpack.c.b16 %v8134, %v8133
        %v8140 = vsel %vm1040, %v8122, 0
        %8142 = vmatprep.subr.bf16.mxu0 0
        %8143 = vmatpush1.bf16.msra.mxu0 %v8135
        %8144 = vmatprep.subr.bf16.mxu0 0
        %8145 = vmatpush1.bf16.msra.mxu0 %v8136
        %8146 = vmatprep.subr.bf16.mxu0 0
        %8147 = vmatpush1.bf16.msra.mxu0 0
        %8148 = vmatprep.subr.bf16.mxu0 0
        %8149 = vmatpush1.bf16.msra.mxu0 0
        %8150 = vmatprep.subr.bf16.mxu0 0
        %8151 = vmatpush1.bf16.msra.mxu0 0
        %8152 = vmatprep.subr.bf16.mxu0 0
        %8153 = vmatpush1.bf16.msra.mxu0 0
        %8154 = vmatprep.subr.bf16.mxu0 0
        %8155 = vmatpush1.bf16.msra.mxu0 0
        %8156 = vmatprep.subr.bf16.mxu0 0
        %8157 = vmatpush1.bf16.msra.mxu0 0
        %8158 = vmatprep.subr.bf16.mxu0 0
        %8159 = vmatpush1.bf16.msra.mxu0 0
        %8160 = vmatprep.subr.bf16.mxu0 0
        %8161 = vmatpush1.bf16.msra.mxu0 0
        %8162 = vmatprep.subr.bf16.mxu0 0
        %8163 = vmatpush1.bf16.msra.mxu0 0
        %8164 = vmatprep.subr.bf16.mxu0 0
        %8165 = vmatpush1.bf16.msra.mxu0 0
        %8166 = vmatprep.subr.bf16.mxu0 0
        %8167 = vmatpush1.bf16.msra.mxu0 0
        %8168 = vmatprep.subr.bf16.mxu0 0
        %8169 = vmatpush1.bf16.msra.mxu0 0
        %8170 = vmatprep.subr.bf16.mxu0 0
        %8171 = vmatpush1.bf16.msra.mxu0 0
        %8172 = vmatprep.subr.bf16.mxu0 0
        %8173 = vmatpush1.bf16.msra.mxu0 0
        %8174 = vmatprep.mubr.bf16.mxu0 0
        %8175 = vmatmul.mubr.bf16.gmra.mrb[0].mxu0 %v8140
        %v8176 = vpop.f32.mrb[0].mxu0
        %v8177 = vadd.f32 0.0, %v8176
        %v8178 = vpop.f32.mrb[0].mxu0
        %v8179 = vpop.f32.mrb[0].mxu0
        %v8180 = vpop.f32.mrb[0].mxu0
        %8181 = vdwg.mxu0
        %v8182 = vadd.f32 %v8120, %v8177
        %v8183 = vld [vmem:[%s3758] ss:$2 sm:$0x7]
        %v8184 = vpack.c.bf16 %v8183, %v8183
        %v8185 = vld [vmem:[%s3 + $0xb0] sm:$0xf]
        %v8186 = vld [vmem:[%s3 + $0xb4] sm:$0xf]
        %v8187 = vld [vmem:[%s3 + $0xb8] sm:$0xf]
        %v8188 = vld [vmem:[%s3 + $0xbc] sm:$0xf]
        %v8193 = vunpack.c.l.b16 %v8185
        %v8194 = vunpack.c.l.b16 %v8186
        %v8195 = vunpack.c.l.b16 %v8187
        %v8196 = vunpack.c.l.b16 %v8188
        %v8197 = vpack.c.b16 %v8194, %v8193
        %v8198 = vpack.c.b16 %v8196, %v8195
        %v8202 = vsel %vm1040, %v8184, 0
        %8204 = vmatprep.subr.bf16.mxu0 0
        %8205 = vmatpush1.bf16.msra.mxu0 %v8197
        %8206 = vmatprep.subr.bf16.mxu0 0
        %8207 = vmatpush1.bf16.msra.mxu0 %v8198
        %8208 = vmatprep.subr.bf16.mxu0 0
        %8209 = vmatpush1.bf16.msra.mxu0 0
        %8210 = vmatprep.subr.bf16.mxu0 0
        %8211 = vmatpush1.bf16.msra.mxu0 0
        %8212 = vmatprep.subr.bf16.mxu0 0
        %8213 = vmatpush1.bf16.msra.mxu0 0
        %8214 = vmatprep.subr.bf16.mxu0 0
        %8215 = vmatpush1.bf16.msra.mxu0 0
        %8216 = vmatprep.subr.bf16.mxu0 0
        %8217 = vmatpush1.bf16.msra.mxu0 0
        %8218 = vmatprep.subr.bf16.mxu0 0
        %8219 = vmatpush1.bf16.msra.mxu0 0
        %8220 = vmatprep.subr.bf16.mxu0 0
        %8221 = vmatpush1.bf16.msra.mxu0 0
        %8222 = vmatprep.subr.bf16.mxu0 0
        %8223 = vmatpush1.bf16.msra.mxu0 0
        %8224 = vmatprep.subr.bf16.mxu0 0
        %8225 = vmatpush1.bf16.msra.mxu0 0
        %8226 = vmatprep.subr.bf16.mxu0 0
        %8227 = vmatpush1.bf16.msra.mxu0 0
        %8228 = vmatprep.subr.bf16.mxu0 0
        %8229 = vmatpush1.bf16.msra.mxu0 0
        %8230 = vmatprep.subr.bf16.mxu0 0
        %8231 = vmatpush1.bf16.msra.mxu0 0
        %8232 = vmatprep.subr.bf16.mxu0 0
        %8233 = vmatpush1.bf16.msra.mxu0 0
        %8234 = vmatprep.subr.bf16.mxu0 0
        %8235 = vmatpush1.bf16.msra.mxu0 0
        %8236 = vmatprep.mubr.bf16.mxu0 0
        %8237 = vmatmul.mubr.bf16.gmra.mrb[0].mxu0 %v8202
        %v8238 = vpop.f32.mrb[0].mxu0
        %v8239 = vadd.f32 0.0, %v8238
        %v8240 = vpop.f32.mrb[0].mxu0
        %v8241 = vpop.f32.mrb[0].mxu0
        %v8242 = vpop.f32.mrb[0].mxu0
        %8243 = vdwg.mxu0
        %v8244 = vadd.f32 %v8182, %v8239
        %v8245 = vld [vmem:[%s3821] ss:$2 sm:$0x7]
        %v8246 = vpack.c.bf16 %v8245, %v8245
        %v8247 = vld [vmem:[%s3 + $0xc0] sm:$0xf]
        %v8248 = vld [vmem:[%s3 + $0xc4] sm:$0xf]
        %v8249 = vld [vmem:[%s3 + $0xc8] sm:$0xf]
        %v8250 = vld [vmem:[%s3 + $0xcc] sm:$0xf]
        %v8255 = vunpack.c.l.b16 %v8247
        %v8256 = vunpack.c.l.b16 %v8248
        %v8257 = vunpack.c.l.b16 %v8249
        %v8258 = vunpack.c.l.b16 %v8250
        %v8259 = vpack.c.b16 %v8256, %v8255
        %v8260 = vpack.c.b16 %v8258, %v8257
        %v8264 = vsel %vm1040, %v8246, 0
        %8266 = vmatprep.subr.bf16.mxu0 0
        %8267 = vmatpush1.bf16.msra.mxu0 %v8259
        %8268 = vmatprep.subr.bf16.mxu0 0
        %8269 = vmatpush1.bf16.msra.mxu0 %v8260
        %8270 = vmatprep.subr.bf16.mxu0 0
        %8271 = vmatpush1.bf16.msra.mxu0 0
        %8272 = vmatprep.subr.bf16.mxu0 0
        %8273 = vmatpush1.bf16.msra.mxu0 0
        %8274 = vmatprep.subr.bf16.mxu0 0
        %8275 = vmatpush1.bf16.msra.mxu0 0
        %8276 = vmatprep.subr.bf16.mxu0 0
        %8277 = vmatpush1.bf16.msra.mxu0 0
        %8278 = vmatprep.subr.bf16.mxu0 0
        %8279 = vmatpush1.bf16.msra.mxu0 0
        %8280 = vmatprep.subr.bf16.mxu0 0
        %8281 = vmatpush1.bf16.msra.mxu0 0
        %8282 = vmatprep.subr.bf16.mxu0 0
        %8283 = vmatpush1.bf16.msra.mxu0 0
        %8284 = vmatprep.subr.bf16.mxu0 0
        %8285 = vmatpush1.bf16.msra.mxu0 0
        %8286 = vmatprep.subr.bf16.mxu0 0
        %8287 = vmatpush1.bf16.msra.mxu0 0
        %8288 = vmatprep.subr.bf16.mxu0 0
        %8289 = vmatpush1.bf16.msra.mxu0 0
        %8290 = vmatprep.subr.bf16.mxu0 0
        %8291 = vmatpush1.bf16.msra.mxu0 0
        %8292 = vmatprep.subr.bf16.mxu0 0
        %8293 = vmatpush1.bf16.msra.mxu0 0
        %8294 = vmatprep.subr.bf16.mxu0 0
        %8295 = vmatpush1.bf16.msra.mxu0 0
        %8296 = vmatprep.subr.bf16.mxu0 0
        %8297 = vmatpush1.bf16.msra.mxu0 0
        %8298 = vmatprep.mubr.bf16.mxu0 0
        %8299 = vmatmul.mubr.bf16.gmra.mrb[0].mxu0 %v8264
        %v8300 = vpop.f32.mrb[0].mxu0
        %v8301 = vadd.f32 0.0, %v8300
        %v8302 = vpop.f32.mrb[0].mxu0
        %v8303 = vpop.f32.mrb[0].mxu0
        %v8304 = vpop.f32.mrb[0].mxu0
        %8305 = vdwg.mxu0
        %v8306 = vadd.f32 %v8244, %v8301
        %v8307 = vld [vmem:[%s3884] ss:$2 sm:$0x7]
        %v8308 = vpack.c.bf16 %v8307, %v8307
        %v8309 = vld [vmem:[%s3 + $0xd0] sm:$0xf]
        %v8310 = vld [vmem:[%s3 + $0xd4] sm:$0xf]
        %v8311 = vld [vmem:[%s3 + $0xd8] sm:$0xf]
        %v8312 = vld [vmem:[%s3 + $0xdc] sm:$0xf]
        %v8317 = vunpack.c.l.b16 %v8309
        %v8318 = vunpack.c.l.b16 %v8310
        %v8319 = vunpack.c.l.b16 %v8311
        %v8320 = vunpack.c.l.b16 %v8312
        %v8321 = vpack.c.b16 %v8318, %v8317
        %v8322 = vpack.c.b16 %v8320, %v8319
        %v8326 = vsel %vm1040, %v8308, 0
        %8328 = vmatprep.subr.bf16.mxu0 0
        %8329 = vmatpush1.bf16.msra.mxu0 %v8321
        %8330 = vmatprep.subr.bf16.mxu0 0
        %8331 = vmatpush1.bf16.msra.mxu0 %v8322
        %8332 = vmatprep.subr.bf16.mxu0 0
        %8333 = vmatpush1.bf16.msra.mxu0 0
        %8334 = vmatprep.subr.bf16.mxu0 0
        %8335 = vmatpush1.bf16.msra.mxu0 0
        %8336 = vmatprep.subr.bf16.mxu0 0
        %8337 = vmatpush1.bf16.msra.mxu0 0
        %8338 = vmatprep.subr.bf16.mxu0 0
        %8339 = vmatpush1.bf16.msra.mxu0 0
        %8340 = vmatprep.subr.bf16.mxu0 0
        %8341 = vmatpush1.bf16.msra.mxu0 0
        %8342 = vmatprep.subr.bf16.mxu0 0
        %8343 = vmatpush1.bf16.msra.mxu0 0
        %8344 = vmatprep.subr.bf16.mxu0 0
        %8345 = vmatpush1.bf16.msra.mxu0 0
        %8346 = vmatprep.subr.bf16.mxu0 0
        %8347 = vmatpush1.bf16.msra.mxu0 0
        %8348 = vmatprep.subr.bf16.mxu0 0
        %8349 = vmatpush1.bf16.msra.mxu0 0
        %8350 = vmatprep.subr.bf16.mxu0 0
        %8351 = vmatpush1.bf16.msra.mxu0 0
        %8352 = vmatprep.subr.bf16.mxu0 0
        %8353 = vmatpush1.bf16.msra.mxu0 0
        %8354 = vmatprep.subr.bf16.mxu0 0
        %8355 = vmatpush1.bf16.msra.mxu0 0
        %8356 = vmatprep.subr.bf16.mxu0 0
        %8357 = vmatpush1.bf16.msra.mxu0 0
        %8358 = vmatprep.subr.bf16.mxu0 0
        %8359 = vmatpush1.bf16.msra.mxu0 0
        %8360 = vmatprep.mubr.bf16.mxu0 0
        %8361 = vmatmul.mubr.bf16.gmra.mrb[0].mxu0 %v8326
        %v8362 = vpop.f32.mrb[0].mxu0
        %v8363 = vadd.f32 0.0, %v8362
        %v8364 = vpop.f32.mrb[0].mxu0
        %v8365 = vpop.f32.mrb[0].mxu0
        %v8366 = vpop.f32.mrb[0].mxu0
        %8367 = vdwg.mxu0
        %v8368 = vadd.f32 %v8306, %v8363
        %v8369 = vld [vmem:[%s3947] ss:$2 sm:$0x7]
        %v8370 = vpack.c.bf16 %v8369, %v8369
        %v8371 = vld [vmem:[%s3 + $0xe0] sm:$0xf]
        %v8372 = vld [vmem:[%s3 + $0xe4] sm:$0xf]
        %v8373 = vld [vmem:[%s3 + $0xe8] sm:$0xf]
        %v8374 = vld [vmem:[%s3 + $0xec] sm:$0xf]
        %v8379 = vunpack.c.l.b16 %v8371
        %v8380 = vunpack.c.l.b16 %v8372
        %v8381 = vunpack.c.l.b16 %v8373
        %v8382 = vunpack.c.l.b16 %v8374
        %v8383 = vpack.c.b16 %v8380, %v8379
        %v8384 = vpack.c.b16 %v8382, %v8381
        %v8388 = vsel %vm1040, %v8370, 0
        %8390 = vmatprep.subr.bf16.mxu0 0
        %8391 = vmatpush1.bf16.msra.mxu0 %v8383
        %8392 = vmatprep.subr.bf16.mxu0 0
        %8393 = vmatpush1.bf16.msra.mxu0 %v8384
        %8394 = vmatprep.subr.bf16.mxu0 0
        %8395 = vmatpush1.bf16.msra.mxu0 0
        %8396 = vmatprep.subr.bf16.mxu0 0
        %8397 = vmatpush1.bf16.msra.mxu0 0
        %8398 = vmatprep.subr.bf16.mxu0 0
        %8399 = vmatpush1.bf16.msra.mxu0 0
        %8400 = vmatprep.subr.bf16.mxu0 0
        %8401 = vmatpush1.bf16.msra.mxu0 0
        %8402 = vmatprep.subr.bf16.mxu0 0
        %8403 = vmatpush1.bf16.msra.mxu0 0
        %8404 = vmatprep.subr.bf16.mxu0 0
        %8405 = vmatpush1.bf16.msra.mxu0 0
        %8406 = vmatprep.subr.bf16.mxu0 0
        %8407 = vmatpush1.bf16.msra.mxu0 0
        %8408 = vmatprep.subr.bf16.mxu0 0
        %8409 = vmatpush1.bf16.msra.mxu0 0
        %8410 = vmatprep.subr.bf16.mxu0 0
        %8411 = vmatpush1.bf16.msra.mxu0 0
        %8412 = vmatprep.subr.bf16.mxu0 0
        %8413 = vmatpush1.bf16.msra.mxu0 0
        %8414 = vmatprep.subr.bf16.mxu0 0
        %8415 = vmatpush1.bf16.msra.mxu0 0
        %8416 = vmatprep.subr.bf16.mxu0 0
        %8417 = vmatpush1.bf16.msra.mxu0 0
        %8418 = vmatprep.subr.bf16.mxu0 0
        %8419 = vmatpush1.bf16.msra.mxu0 0
        %8420 = vmatprep.subr.bf16.mxu0 0
        %8421 = vmatpush1.bf16.msra.mxu0 0
        %8422 = vmatprep.mubr.bf16.mxu0 0
        %8423 = vmatmul.mubr.bf16.gmra.mrb[0].mxu0 %v8388
        %v8424 = vpop.f32.mrb[0].mxu0
        %v8425 = vadd.f32 0.0, %v8424
        %v8426 = vpop.f32.mrb[0].mxu0
        %v8427 = vpop.f32.mrb[0].mxu0
        %v8428 = vpop.f32.mrb[0].mxu0
        %8429 = vdwg.mxu0
        %v8430 = vadd.f32 %v8368, %v8425
        %v8431 = vld [vmem:[%s4010] ss:$2 sm:$0x7]
        %v8432 = vpack.c.bf16 %v8431, %v8431
        %v8433 = vld [vmem:[%s3 + $0xf0] sm:$0xf]
        %v8434 = vld [vmem:[%s3 + $0xf4] sm:$0xf]
        %v8435 = vld [vmem:[%s3 + $0xf8] sm:$0xf]
        %v8436 = vld [vmem:[%s3 + $0xfc] sm:$0xf]
        %v8441 = vunpack.c.l.b16 %v8433
        %v8442 = vunpack.c.l.b16 %v8434
        %v8443 = vunpack.c.l.b16 %v8435
        %v8444 = vunpack.c.l.b16 %v8436
        %v8445 = vpack.c.b16 %v8442, %v8441
        %v8446 = vpack.c.b16 %v8444, %v8443
        %v8450 = vsel %vm1040, %v8432, 0
        %8452 = vmatprep.subr.bf16.mxu0 0
        %8453 = vmatpush1.bf16.msra.mxu0 %v8445
        %8454 = vmatprep.subr.bf16.mxu0 0
        %8455 = vmatpush1.bf16.msra.mxu0 %v8446
        %8456 = vmatprep.subr.bf16.mxu0 0
        %8457 = vmatpush1.bf16.msra.mxu0 0
        %8458 = vmatprep.subr.bf16.mxu0 0
        %8459 = vmatpush1.bf16.msra.mxu0 0
        %8460 = vmatprep.subr.bf16.mxu0 0
        %8461 = vmatpush1.bf16.msra.mxu0 0
        %8462 = vmatprep.subr.bf16.mxu0 0
        %8463 = vmatpush1.bf16.msra.mxu0 0
        %8464 = vmatprep.subr.bf16.mxu0 0
        %8465 = vmatpush1.bf16.msra.mxu0 0
        %8466 = vmatprep.subr.bf16.mxu0 0
        %8467 = vmatpush1.bf16.msra.mxu0 0
        %8468 = vmatprep.subr.bf16.mxu0 0
        %8469 = vmatpush1.bf16.msra.mxu0 0
        %8470 = vmatprep.subr.bf16.mxu0 0
        %8471 = vmatpush1.bf16.msra.mxu0 0
        %8472 = vmatprep.subr.bf16.mxu0 0
        %8473 = vmatpush1.bf16.msra.mxu0 0
        %8474 = vmatprep.subr.bf16.mxu0 0
        %8475 = vmatpush1.bf16.msra.mxu0 0
        %8476 = vmatprep.subr.bf16.mxu0 0
        %8477 = vmatpush1.bf16.msra.mxu0 0
        %8478 = vmatprep.subr.bf16.mxu0 0
        %8479 = vmatpush1.bf16.msra.mxu0 0
        %8480 = vmatprep.subr.bf16.mxu0 0
        %8481 = vmatpush1.bf16.msra.mxu0 0
        %8482 = vmatprep.subr.bf16.mxu0 0
        %8483 = vmatpush1.bf16.msra.mxu0 0
        %8484 = vmatprep.mubr.bf16.mxu0 0
        %8485 = vmatmul.mubr.bf16.gmra.mrb[0].mxu0 %v8450
        %v8486 = vpop.f32.mrb[0].mxu0
        %v8487 = vadd.f32 0.0, %v8486
        %v8488 = vpop.f32.mrb[0].mxu0
        %v8489 = vpop.f32.mrb[0].mxu0
        %v8490 = vpop.f32.mrb[0].mxu0
        %8491 = vdwg.mxu0
        %v8492 = vadd.f32 %v8430, %v8487
        %v8493 = vld [vmem:[%s4] sm:$0x1]
        %v8495 = vlaneseq
        %v8496 = vshrl.u32 %v8495, 7
        %v8497 = vsub.s32 0, %v8496
        %v8498 = vrot.slane %v8493, %v8497
        %v8500 = vadd.f32 %v8492, %v8498
        %v8501 = vmax.f32 %v8500, 0.0
        %8502 = vst.msk [vmem:[#allocation3 + $0x6] sm:$0x7] %vm2065, %v8501
        %v8503 = vld [vmem:[#allocation3] sm:$0x1]
        %v8504 = vpack.c.bf16 %v8503, %v8503
        %v8505 = vld [vmem:[%s5] sm:$0xf]
        %v8506 = vld [vmem:[%s5 + $0x4] sm:$0xf]
        %v8507 = vld [vmem:[%s5 + $0x8] sm:$0xf]
        %v8508 = vld [vmem:[%s5 + $0xc] sm:$0xf]
        %v8509 = vld [vmem:[%s5 + $0x10] sm:$0xf]
        %v8510 = vld [vmem:[%s5 + $0x14] sm:$0xf]
        %v8511 = vld [vmem:[%s5 + $0x18] sm:$0xf]
        %v8512 = vld [vmem:[%s5 + $0x1c] sm:$0xf]
        %v8513 = vld [vmem:[#allocation3 + $0x1] sm:$0x1]
        %v8514 = vpack.c.bf16 %v8513, %v8513
        %v8515 = vld [vmem:[%s5 + $0x20] sm:$0xf]
        %v8516 = vld [vmem:[%s5 + $0x24] sm:$0xf]
        %v8517 = vld [vmem:[%s5 + $0x28] sm:$0xf]
        %v8518 = vld [vmem:[%s5 + $0x2c] sm:$0xf]
        %v8519 = vld [vmem:[%s5 + $0x30] sm:$0xf]
        %v8520 = vld [vmem:[%s5 + $0x34] sm:$0xf]
        %v8521 = vld [vmem:[%s5 + $0x38] sm:$0xf]
        %v8522 = vld [vmem:[%s5 + $0x3c] sm:$0xf]
        %v8531 = vunpack.c.l.b16 %v8515
        %v8532 = vunpack.c.l.b16 %v8516
        %v8533 = vunpack.c.l.b16 %v8517
        %v8534 = vunpack.c.l.b16 %v8518
        %v8535 = vunpack.c.l.b16 %v8519
        %v8536 = vunpack.c.l.b16 %v8520
        %v8537 = vunpack.c.l.b16 %v8521
        %v8538 = vunpack.c.l.b16 %v8522
        %v8539 = vpack.c.b16 %v8532, %v8531
        %v8540 = vpack.c.b16 %v8534, %v8533
        %v8541 = vpack.c.b16 %v8536, %v8535
        %v8542 = vpack.c.b16 %v8538, %v8537
        %v8548 = vsel %vm449, %v8514, 0
        %8550 = vmatprep.subr.bf16.mxu0 0
        %8551 = vmatpush1.bf16.msra.mxu0 %v8539
        %8552 = vmatprep.subr.bf16.mxu0 0
        %8553 = vmatpush1.bf16.msra.mxu0 %v8540
        %8554 = vmatprep.subr.bf16.mxu0 0
        %8555 = vmatpush1.bf16.msra.mxu0 %v8541
        %8556 = vmatprep.subr.bf16.mxu0 0
        %8557 = vmatpush1.bf16.msra.mxu0 %v8542
        %8558 = vmatprep.subr.bf16.mxu0 0
        %8559 = vmatpush1.bf16.msra.mxu0 0
        %8560 = vmatprep.subr.bf16.mxu0 0
        %8561 = vmatpush1.bf16.msra.mxu0 0
        %8562 = vmatprep.subr.bf16.mxu0 0
        %8563 = vmatpush1.bf16.msra.mxu0 0
        %8564 = vmatprep.subr.bf16.mxu0 0
        %8565 = vmatpush1.bf16.msra.mxu0 0
        %8566 = vmatprep.subr.bf16.mxu0 0
        %8567 = vmatpush1.bf16.msra.mxu0 0
        %8568 = vmatprep.subr.bf16.mxu0 0
        %8569 = vmatpush1.bf16.msra.mxu0 0
        %8570 = vmatprep.subr.bf16.mxu0 0
        %8571 = vmatpush1.bf16.msra.mxu0 0
        %8572 = vmatprep.subr.bf16.mxu0 0
        %8573 = vmatpush1.bf16.msra.mxu0 0
        %8574 = vmatprep.subr.bf16.mxu0 0
        %8575 = vmatpush1.bf16.msra.mxu0 0
        %8576 = vmatprep.subr.bf16.mxu0 0
        %8577 = vmatpush1.bf16.msra.mxu0 0
        %8578 = vmatprep.subr.bf16.mxu0 0
        %8579 = vmatpush1.bf16.msra.mxu0 0
        %8580 = vmatprep.subr.bf16.mxu0 0
        %8581 = vmatpush1.bf16.msra.mxu0 0
        %8582 = vmatprep.mubr.bf16.mxu0 0
        %8583 = vmatmul.mubr.bf16.gmra.mrb[0].mxu0 %v8548
        %v8584 = vpop.f32.mrb[0].mxu0
        %v8585 = vadd.f32 0.0, %v8584
        %v8586 = vpop.f32.mrb[0].mxu0
        %v8587 = vpop.f32.mrb[0].mxu0
        %v8588 = vpop.f32.mrb[0].mxu0
        %8589 = vdwg.mxu0
        %v8598 = vunpack.c.l.b16 %v8505
        %v8599 = vunpack.c.l.b16 %v8506
        %v8600 = vunpack.c.l.b16 %v8507
        %v8601 = vunpack.c.l.b16 %v8508
        %v8602 = vunpack.c.l.b16 %v8509
        %v8603 = vunpack.c.l.b16 %v8510
        %v8604 = vunpack.c.l.b16 %v8511
        %v8605 = vunpack.c.l.b16 %v8512
        %v8606 = vpack.c.b16 %v8599, %v8598
        %v8607 = vpack.c.b16 %v8601, %v8600
        %v8608 = vpack.c.b16 %v8603, %v8602
        %v8609 = vpack.c.b16 %v8605, %v8604
        %v8615 = vsel %vm449, %v8504, 0
        %8617 = vmatprep.subr.bf16.mxu0 0
        %8618 = vmatpush1.bf16.msra.mxu0 %v8606
        %8619 = vmatprep.subr.bf16.mxu0 0
        %8620 = vmatpush1.bf16.msra.mxu0 %v8607
        %8621 = vmatprep.subr.bf16.mxu0 0
        %8622 = vmatpush1.bf16.msra.mxu0 %v8608
        %8623 = vmatprep.subr.bf16.mxu0 0
        %8624 = vmatpush1.bf16.msra.mxu0 %v8609
        %8625 = vmatprep.subr.bf16.mxu0 0
        %8626 = vmatpush1.bf16.msra.mxu0 0
        %8627 = vmatprep.subr.bf16.mxu0 0
        %8628 = vmatpush1.bf16.msra.mxu0 0
        %8629 = vmatprep.subr.bf16.mxu0 0
        %8630 = vmatpush1.bf16.msra.mxu0 0
        %8631 = vmatprep.subr.bf16.mxu0 0
        %8632 = vmatpush1.bf16.msra.mxu0 0
        %8633 = vmatprep.subr.bf16.mxu0 0
        %8634 = vmatpush1.bf16.msra.mxu0 0
        %8635 = vmatprep.subr.bf16.mxu0 0
        %8636 = vmatpush1.bf16.msra.mxu0 0
        %8637 = vmatprep.subr.bf16.mxu0 0
        %8638 = vmatpush1.bf16.msra.mxu0 0
        %8639 = vmatprep.subr.bf16.mxu0 0
        %8640 = vmatpush1.bf16.msra.mxu0 0
        %8641 = vmatprep.subr.bf16.mxu0 0
        %8642 = vmatpush1.bf16.msra.mxu0 0
        %8643 = vmatprep.subr.bf16.mxu0 0
        %8644 = vmatpush1.bf16.msra.mxu0 0
        %8645 = vmatprep.subr.bf16.mxu0 0
        %8646 = vmatpush1.bf16.msra.mxu0 0
        %8647 = vmatprep.subr.bf16.mxu0 0
        %8648 = vmatpush1.bf16.msra.mxu0 0
        %8649 = vmatprep.mubr.bf16.mxu0 0
        %8650 = vmatmul.mubr.bf16.gmra.mrb[0].mxu0 %v8615
        %v8651 = vpop.f32.mrb[0].mxu0
        %v8652 = vadd.f32 %v8585, %v8651
        %v8653 = vpop.f32.mrb[0].mxu0
        %v8654 = vpop.f32.mrb[0].mxu0
        %v8655 = vpop.f32.mrb[0].mxu0
        %8656 = vdwg.mxu0
        %v8657 = vld [vmem:[#allocation3 + $0x2] sm:$0x1]
        %v8658 = vpack.c.bf16 %v8657, %v8657
        %v8659 = vld [vmem:[%s5 + $0x40] sm:$0xf]
        %v8660 = vld [vmem:[%s5 + $0x44] sm:$0xf]
        %v8661 = vld [vmem:[%s5 + $0x48] sm:$0xf]
        %v8662 = vld [vmem:[%s5 + $0x4c] sm:$0xf]
        %v8663 = vld [vmem:[%s5 + $0x50] sm:$0xf]
        %v8664 = vld [vmem:[%s5 + $0x54] sm:$0xf]
        %v8665 = vld [vmem:[%s5 + $0x58] sm:$0xf]
        %v8666 = vld [vmem:[%s5 + $0x5c] sm:$0xf]
        %v8675 = vunpack.c.l.b16 %v8659
        %v8676 = vunpack.c.l.b16 %v8660
        %v8677 = vunpack.c.l.b16 %v8661
        %v8678 = vunpack.c.l.b16 %v8662
        %v8679 = vunpack.c.l.b16 %v8663
        %v8680 = vunpack.c.l.b16 %v8664
        %v8681 = vunpack.c.l.b16 %v8665
        %v8682 = vunpack.c.l.b16 %v8666
        %v8683 = vpack.c.b16 %v8676, %v8675
        %v8684 = vpack.c.b16 %v8678, %v8677
        %v8685 = vpack.c.b16 %v8680, %v8679
        %v8686 = vpack.c.b16 %v8682, %v8681
        %v8692 = vsel %vm449, %v8658, 0
        %8694 = vmatprep.subr.bf16.mxu0 0
        %8695 = vmatpush1.bf16.msra.mxu0 %v8683
        %8696 = vmatprep.subr.bf16.mxu0 0
        %8697 = vmatpush1.bf16.msra.mxu0 %v8684
        %8698 = vmatprep.subr.bf16.mxu0 0
        %8699 = vmatpush1.bf16.msra.mxu0 %v8685
        %8700 = vmatprep.subr.bf16.mxu0 0
        %8701 = vmatpush1.bf16.msra.mxu0 %v8686
        %8702 = vmatprep.subr.bf16.mxu0 0
        %8703 = vmatpush1.bf16.msra.mxu0 0
        %8704 = vmatprep.subr.bf16.mxu0 0
        %8705 = vmatpush1.bf16.msra.mxu0 0
        %8706 = vmatprep.subr.bf16.mxu0 0
        %8707 = vmatpush1.bf16.msra.mxu0 0
        %8708 = vmatprep.subr.bf16.mxu0 0
        %8709 = vmatpush1.bf16.msra.mxu0 0
        %8710 = vmatprep.subr.bf16.mxu0 0
        %8711 = vmatpush1.bf16.msra.mxu0 0
        %8712 = vmatprep.subr.bf16.mxu0 0
        %8713 = vmatpush1.bf16.msra.mxu0 0
        %8714 = vmatprep.subr.bf16.mxu0 0
        %8715 = vmatpush1.bf16.msra.mxu0 0
        %8716 = vmatprep.subr.bf16.mxu0 0
        %8717 = vmatpush1.bf16.msra.mxu0 0
        %8718 = vmatprep.subr.bf16.mxu0 0
        %8719 = vmatpush1.bf16.msra.mxu0 0
        %8720 = vmatprep.subr.bf16.mxu0 0
        %8721 = vmatpush1.bf16.msra.mxu0 0
        %8722 = vmatprep.subr.bf16.mxu0 0
        %8723 = vmatpush1.bf16.msra.mxu0 0
        %8724 = vmatprep.subr.bf16.mxu0 0
        %8725 = vmatpush1.bf16.msra.mxu0 0
        %8726 = vmatprep.mubr.bf16.mxu0 0
        %8727 = vmatmul.mubr.bf16.gmra.mrb[0].mxu0 %v8692
        %v8728 = vpop.f32.mrb[0].mxu0
        %v8729 = vadd.f32 0.0, %v8728
        %v8730 = vpop.f32.mrb[0].mxu0
        %v8731 = vpop.f32.mrb[0].mxu0
        %v8732 = vpop.f32.mrb[0].mxu0
        %8733 = vdwg.mxu0
        %v8734 = vadd.f32 %v8652, %v8729
        %v8735 = vld [vmem:[#allocation3 + $0x3] sm:$0x1]
        %v8736 = vpack.c.bf16 %v8735, %v8735
        %v8737 = vld [vmem:[%s5 + $0x60] sm:$0xf]
        %v8738 = vld [vmem:[%s5 + $0x64] sm:$0xf]
        %v8739 = vld [vmem:[%s5 + $0x68] sm:$0xf]
        %v8740 = vld [vmem:[%s5 + $0x6c] sm:$0xf]
        %v8741 = vld [vmem:[%s5 + $0x70] sm:$0xf]
        %v8742 = vld [vmem:[%s5 + $0x74] sm:$0xf]
        %v8743 = vld [vmem:[%s5 + $0x78] sm:$0xf]
        %v8744 = vld [vmem:[%s5 + $0x7c] sm:$0xf]
        %v8753 = vunpack.c.l.b16 %v8737
        %v8754 = vunpack.c.l.b16 %v8738
        %v8755 = vunpack.c.l.b16 %v8739
        %v8756 = vunpack.c.l.b16 %v8740
        %v8757 = vunpack.c.l.b16 %v8741
        %v8758 = vunpack.c.l.b16 %v8742
        %v8759 = vunpack.c.l.b16 %v8743
        %v8760 = vunpack.c.l.b16 %v8744
        %v8761 = vpack.c.b16 %v8754, %v8753
        %v8762 = vpack.c.b16 %v8756, %v8755
        %v8763 = vpack.c.b16 %v8758, %v8757
        %v8764 = vpack.c.b16 %v8760, %v8759
        %v8770 = vsel %vm449, %v8736, 0
        %8772 = vmatprep.subr.bf16.mxu0 0
        %8773 = vmatpush1.bf16.msra.mxu0 %v8761
        %8774 = vmatprep.subr.bf16.mxu0 0
        %8775 = vmatpush1.bf16.msra.mxu0 %v8762
        %8776 = vmatprep.subr.bf16.mxu0 0
        %8777 = vmatpush1.bf16.msra.mxu0 %v8763
        %8778 = vmatprep.subr.bf16.mxu0 0
        %8779 = vmatpush1.bf16.msra.mxu0 %v8764
        %8780 = vmatprep.subr.bf16.mxu0 0
        %8781 = vmatpush1.bf16.msra.mxu0 0
        %8782 = vmatprep.subr.bf16.mxu0 0
        %8783 = vmatpush1.bf16.msra.mxu0 0
        %8784 = vmatprep.subr.bf16.mxu0 0
        %8785 = vmatpush1.bf16.msra.mxu0 0
        %8786 = vmatprep.subr.bf16.mxu0 0
        %8787 = vmatpush1.bf16.msra.mxu0 0
        %8788 = vmatprep.subr.bf16.mxu0 0
        %8789 = vmatpush1.bf16.msra.mxu0 0
        %8790 = vmatprep.subr.bf16.mxu0 0
        %8791 = vmatpush1.bf16.msra.mxu0 0
        %8792 = vmatprep.subr.bf16.mxu0 0
        %8793 = vmatpush1.bf16.msra.mxu0 0
        %8794 = vmatprep.subr.bf16.mxu0 0
        %8795 = vmatpush1.bf16.msra.mxu0 0
        %8796 = vmatprep.subr.bf16.mxu0 0
        %8797 = vmatpush1.bf16.msra.mxu0 0
        %8798 = vmatprep.subr.bf16.mxu0 0
        %8799 = vmatpush1.bf16.msra.mxu0 0
        %8800 = vmatprep.subr.bf16.mxu0 0
        %8801 = vmatpush1.bf16.msra.mxu0 0
        %8802 = vmatprep.subr.bf16.mxu0 0
        %8803 = vmatpush1.bf16.msra.mxu0 0
        %8804 = vmatprep.mubr.bf16.mxu0 0
        %8805 = vmatmul.mubr.bf16.gmra.mrb[0].mxu0 %v8770
        %v8806 = vpop.f32.mrb[0].mxu0
        %v8807 = vadd.f32 0.0, %v8806
        %v8808 = vpop.f32.mrb[0].mxu0
        %v8809 = vpop.f32.mrb[0].mxu0
        %v8810 = vpop.f32.mrb[0].mxu0
        %8811 = vdwg.mxu0
        %v8812 = vadd.f32 %v8734, %v8807
        %v8813 = vld [vmem:[#allocation3 + $0x4] sm:$0x1]
        %v8814 = vpack.c.bf16 %v8813, %v8813
        %v8815 = vld [vmem:[%s5 + $0x80] sm:$0xf]
        %v8816 = vld [vmem:[%s5 + $0x84] sm:$0xf]
        %v8817 = vld [vmem:[%s5 + $0x88] sm:$0xf]
        %v8818 = vld [vmem:[%s5 + $0x8c] sm:$0xf]
        %v8819 = vld [vmem:[%s5 + $0x90] sm:$0xf]
        %v8820 = vld [vmem:[%s5 + $0x94] sm:$0xf]
        %v8821 = vld [vmem:[%s5 + $0x98] sm:$0xf]
        %v8822 = vld [vmem:[%s5 + $0x9c] sm:$0xf]
        %v8831 = vunpack.c.l.b16 %v8815
        %v8832 = vunpack.c.l.b16 %v8816
        %v8833 = vunpack.c.l.b16 %v8817
        %v8834 = vunpack.c.l.b16 %v8818
        %v8835 = vunpack.c.l.b16 %v8819
        %v8836 = vunpack.c.l.b16 %v8820
        %v8837 = vunpack.c.l.b16 %v8821
        %v8838 = vunpack.c.l.b16 %v8822
        %v8839 = vpack.c.b16 %v8832, %v8831
        %v8840 = vpack.c.b16 %v8834, %v8833
        %v8841 = vpack.c.b16 %v8836, %v8835
        %v8842 = vpack.c.b16 %v8838, %v8837
        %v8848 = vsel %vm449, %v8814, 0
        %8850 = vmatprep.subr.bf16.mxu0 0
        %8851 = vmatpush1.bf16.msra.mxu0 %v8839
        %8852 = vmatprep.subr.bf16.mxu0 0
        %8853 = vmatpush1.bf16.msra.mxu0 %v8840
        %8854 = vmatprep.subr.bf16.mxu0 0
        %8855 = vmatpush1.bf16.msra.mxu0 %v8841
        %8856 = vmatprep.subr.bf16.mxu0 0
        %8857 = vmatpush1.bf16.msra.mxu0 %v8842
        %8858 = vmatprep.subr.bf16.mxu0 0
        %8859 = vmatpush1.bf16.msra.mxu0 0
        %8860 = vmatprep.subr.bf16.mxu0 0
        %8861 = vmatpush1.bf16.msra.mxu0 0
        %8862 = vmatprep.subr.bf16.mxu0 0
        %8863 = vmatpush1.bf16.msra.mxu0 0
        %8864 = vmatprep.subr.bf16.mxu0 0
        %8865 = vmatpush1.bf16.msra.mxu0 0
        %8866 = vmatprep.subr.bf16.mxu0 0
        %8867 = vmatpush1.bf16.msra.mxu0 0
        %8868 = vmatprep.subr.bf16.mxu0 0
        %8869 = vmatpush1.bf16.msra.mxu0 0
        %8870 = vmatprep.subr.bf16.mxu0 0
        %8871 = vmatpush1.bf16.msra.mxu0 0
        %8872 = vmatprep.subr.bf16.mxu0 0
        %8873 = vmatpush1.bf16.msra.mxu0 0
        %8874 = vmatprep.subr.bf16.mxu0 0
        %8875 = vmatpush1.bf16.msra.mxu0 0
        %8876 = vmatprep.subr.bf16.mxu0 0
        %8877 = vmatpush1.bf16.msra.mxu0 0
        %8878 = vmatprep.subr.bf16.mxu0 0
        %8879 = vmatpush1.bf16.msra.mxu0 0
        %8880 = vmatprep.subr.bf16.mxu0 0
        %8881 = vmatpush1.bf16.msra.mxu0 0
        %8882 = vmatprep.mubr.bf16.mxu0 0
        %8883 = vmatmul.mubr.bf16.gmra.mrb[0].mxu0 %v8848
        %v8884 = vpop.f32.mrb[0].mxu0
        %v8885 = vadd.f32 0.0, %v8884
        %v8886 = vpop.f32.mrb[0].mxu0
        %v8887 = vpop.f32.mrb[0].mxu0
        %v8888 = vpop.f32.mrb[0].mxu0
        %8889 = vdwg.mxu0
        %v8890 = vadd.f32 %v8812, %v8885
        %v8891 = vld [vmem:[#allocation3 + $0x5] sm:$0x1]
        %v8892 = vpack.c.bf16 %v8891, %v8891
        %v8893 = vld [vmem:[%s5 + $0xa0] sm:$0xf]
        %v8894 = vld [vmem:[%s5 + $0xa4] sm:$0xf]
        %v8895 = vld [vmem:[%s5 + $0xa8] sm:$0xf]
        %v8896 = vld [vmem:[%s5 + $0xac] sm:$0xf]
        %v8897 = vld [vmem:[%s5 + $0xb0] sm:$0xf]
        %v8898 = vld [vmem:[%s5 + $0xb4] sm:$0xf]
        %v8899 = vld [vmem:[%s5 + $0xb8] sm:$0xf]
        %v8900 = vld [vmem:[%s5 + $0xbc] sm:$0xf]
        %v8909 = vunpack.c.l.b16 %v8893
        %v8910 = vunpack.c.l.b16 %v8894
        %v8911 = vunpack.c.l.b16 %v8895
        %v8912 = vunpack.c.l.b16 %v8896
        %v8913 = vunpack.c.l.b16 %v8897
        %v8914 = vunpack.c.l.b16 %v8898
        %v8915 = vunpack.c.l.b16 %v8899
        %v8916 = vunpack.c.l.b16 %v8900
        %v8917 = vpack.c.b16 %v8910, %v8909
        %v8918 = vpack.c.b16 %v8912, %v8911
        %v8919 = vpack.c.b16 %v8914, %v8913
        %v8920 = vpack.c.b16 %v8916, %v8915
        %v8926 = vsel %vm449, %v8892, 0
        %8928 = vmatprep.subr.bf16.mxu0 0
        %8929 = vmatpush1.bf16.msra.mxu0 %v8917
        %8930 = vmatprep.subr.bf16.mxu0 0
        %8931 = vmatpush1.bf16.msra.mxu0 %v8918
        %8932 = vmatprep.subr.bf16.mxu0 0
        %8933 = vmatpush1.bf16.msra.mxu0 %v8919
        %8934 = vmatprep.subr.bf16.mxu0 0
        %8935 = vmatpush1.bf16.msra.mxu0 %v8920
        %8936 = vmatprep.subr.bf16.mxu0 0
        %8937 = vmatpush1.bf16.msra.mxu0 0
        %8938 = vmatprep.subr.bf16.mxu0 0
        %8939 = vmatpush1.bf16.msra.mxu0 0
        %8940 = vmatprep.subr.bf16.mxu0 0
        %8941 = vmatpush1.bf16.msra.mxu0 0
        %8942 = vmatprep.subr.bf16.mxu0 0
        %8943 = vmatpush1.bf16.msra.mxu0 0
        %8944 = vmatprep.subr.bf16.mxu0 0
        %8945 = vmatpush1.bf16.msra.mxu0 0
        %8946 = vmatprep.subr.bf16.mxu0 0
        %8947 = vmatpush1.bf16.msra.mxu0 0
        %8948 = vmatprep.subr.bf16.mxu0 0
        %8949 = vmatpush1.bf16.msra.mxu0 0
        %8950 = vmatprep.subr.bf16.mxu0 0
        %8951 = vmatpush1.bf16.msra.mxu0 0
        %8952 = vmatprep.subr.bf16.mxu0 0
        %8953 = vmatpush1.bf16.msra.mxu0 0
        %8954 = vmatprep.subr.bf16.mxu0 0
        %8955 = vmatpush1.bf16.msra.mxu0 0
        %8956 = vmatprep.subr.bf16.mxu0 0
        %8957 = vmatpush1.bf16.msra.mxu0 0
        %8958 = vmatprep.subr.bf16.mxu0 0
        %8959 = vmatpush1.bf16.msra.mxu0 0
        %8960 = vmatprep.mubr.bf16.mxu0 0
        %8961 = vmatmul.mubr.bf16.gmra.mrb[0].mxu0 %v8926
        %v8962 = vpop.f32.mrb[0].mxu0
        %v8963 = vadd.f32 0.0, %v8962
        %v8964 = vpop.f32.mrb[0].mxu0
        %v8965 = vpop.f32.mrb[0].mxu0
        %v8966 = vpop.f32.mrb[0].mxu0
        %8967 = vdwg.mxu0
        %v8968 = vadd.f32 %v8890, %v8963
        %v8969 = vld [vmem:[#allocation3 + $0x6] sm:$0x1]
        %v8970 = vpack.c.bf16 %v8969, %v8969
        %v8971 = vld [vmem:[%s5 + $0xc0] sm:$0xf]
        %v8972 = vld [vmem:[%s5 + $0xc4] sm:$0xf]
        %v8973 = vld [vmem:[%s5 + $0xc8] sm:$0xf]
        %v8974 = vld [vmem:[%s5 + $0xcc] sm:$0xf]
        %v8975 = vld [vmem:[%s5 + $0xd0] sm:$0xf]
        %v8976 = vld [vmem:[%s5 + $0xd4] sm:$0xf]
        %v8977 = vld [vmem:[%s5 + $0xd8] sm:$0xf]
        %v8978 = vld [vmem:[%s5 + $0xdc] sm:$0xf]
        %v8987 = vunpack.c.l.b16 %v8971
        %v8988 = vunpack.c.l.b16 %v8972
        %v8989 = vunpack.c.l.b16 %v8973
        %v8990 = vunpack.c.l.b16 %v8974
        %v8991 = vunpack.c.l.b16 %v8975
        %v8992 = vunpack.c.l.b16 %v8976
        %v8993 = vunpack.c.l.b16 %v8977
        %v8994 = vunpack.c.l.b16 %v8978
        %v8995 = vpack.c.b16 %v8988, %v8987
        %v8996 = vpack.c.b16 %v8990, %v8989
        %v8997 = vpack.c.b16 %v8992, %v8991
        %v8998 = vpack.c.b16 %v8994, %v8993
        %v9004 = vsel %vm449, %v8970, 0
        %9006 = vmatprep.subr.bf16.mxu0 0
        %9007 = vmatpush1.bf16.msra.mxu0 %v8995
        %9008 = vmatprep.subr.bf16.mxu0 0
        %9009 = vmatpush1.bf16.msra.mxu0 %v8996
        %9010 = vmatprep.subr.bf16.mxu0 0
        %9011 = vmatpush1.bf16.msra.mxu0 %v8997
        %9012 = vmatprep.subr.bf16.mxu0 0
        %9013 = vmatpush1.bf16.msra.mxu0 %v8998
        %9014 = vmatprep.subr.bf16.mxu0 0
        %9015 = vmatpush1.bf16.msra.mxu0 0
        %9016 = vmatprep.subr.bf16.mxu0 0
        %9017 = vmatpush1.bf16.msra.mxu0 0
        %9018 = vmatprep.subr.bf16.mxu0 0
        %9019 = vmatpush1.bf16.msra.mxu0 0
        %9020 = vmatprep.subr.bf16.mxu0 0
        %9021 = vmatpush1.bf16.msra.mxu0 0
        %9022 = vmatprep.subr.bf16.mxu0 0
        %9023 = vmatpush1.bf16.msra.mxu0 0
        %9024 = vmatprep.subr.bf16.mxu0 0
        %9025 = vmatpush1.bf16.msra.mxu0 0
        %9026 = vmatprep.subr.bf16.mxu0 0
        %9027 = vmatpush1.bf16.msra.mxu0 0
        %9028 = vmatprep.subr.bf16.mxu0 0
        %9029 = vmatpush1.bf16.msra.mxu0 0
        %9030 = vmatprep.subr.bf16.mxu0 0
        %9031 = vmatpush1.bf16.msra.mxu0 0
        %9032 = vmatprep.subr.bf16.mxu0 0
        %9033 = vmatpush1.bf16.msra.mxu0 0
        %9034 = vmatprep.subr.bf16.mxu0 0
        %9035 = vmatpush1.bf16.msra.mxu0 0
        %9036 = vmatprep.subr.bf16.mxu0 0
        %9037 = vmatpush1.bf16.msra.mxu0 0
        %9038 = vmatprep.mubr.bf16.mxu0 0
        %9039 = vmatmul.mubr.bf16.gmra.mrb[0].mxu0 %v9004
        %v9040 = vpop.f32.mrb[0].mxu0
        %v9041 = vadd.f32 0.0, %v9040
        %v9042 = vpop.f32.mrb[0].mxu0
        %v9043 = vpop.f32.mrb[0].mxu0
        %v9044 = vpop.f32.mrb[0].mxu0
        %9045 = vdwg.mxu0
        %v9046 = vadd.f32 %v8968, %v9041
        %v9047 = vld [vmem:[#allocation3 + $0x7] sm:$0x1]
        %v9048 = vpack.c.bf16 %v9047, %v9047
        %v9049 = vld [vmem:[%s5 + $0xe0] sm:$0xf]
        %v9050 = vld [vmem:[%s5 + $0xe4] sm:$0xf]
        %v9051 = vld [vmem:[%s5 + $0xe8] sm:$0xf]
        %v9052 = vld [vmem:[%s5 + $0xec] sm:$0xf]
        %v9053 = vld [vmem:[%s5 + $0xf0] sm:$0xf]
        %v9054 = vld [vmem:[%s5 + $0xf4] sm:$0xf]
        %v9055 = vld [vmem:[%s5 + $0xf8] sm:$0xf]
        %v9056 = vld [vmem:[%s5 + $0xfc] sm:$0xf]
        %v9065 = vunpack.c.l.b16 %v9049
        %v9066 = vunpack.c.l.b16 %v9050
        %v9067 = vunpack.c.l.b16 %v9051
        %v9068 = vunpack.c.l.b16 %v9052
        %v9069 = vunpack.c.l.b16 %v9053
        %v9070 = vunpack.c.l.b16 %v9054
        %v9071 = vunpack.c.l.b16 %v9055
        %v9072 = vunpack.c.l.b16 %v9056
        %v9073 = vpack.c.b16 %v9066, %v9065
        %v9074 = vpack.c.b16 %v9068, %v9067
        %v9075 = vpack.c.b16 %v9070, %v9069
        %v9076 = vpack.c.b16 %v9072, %v9071
        %v9082 = vsel %vm449, %v9048, 0
        %9084 = vmatprep.subr.bf16.mxu0 0
        %9085 = vmatpush1.bf16.msra.mxu0 %v9073
        %9086 = vmatprep.subr.bf16.mxu0 0
        %9087 = vmatpush1.bf16.msra.mxu0 %v9074
        %9088 = vmatprep.subr.bf16.mxu0 0
        %9089 = vmatpush1.bf16.msra.mxu0 %v9075
        %9090 = vmatprep.subr.bf16.mxu0 0
        %9091 = vmatpush1.bf16.msra.mxu0 %v9076
        %9092 = vmatprep.subr.bf16.mxu0 0
        %9093 = vmatpush1.bf16.msra.mxu0 0
        %9094 = vmatprep.subr.bf16.mxu0 0
        %9095 = vmatpush1.bf16.msra.mxu0 0
        %9096 = vmatprep.subr.bf16.mxu0 0
        %9097 = vmatpush1.bf16.msra.mxu0 0
        %9098 = vmatprep.subr.bf16.mxu0 0
        %9099 = vmatpush1.bf16.msra.mxu0 0
        %9100 = vmatprep.subr.bf16.mxu0 0
        %9101 = vmatpush1.bf16.msra.mxu0 0
        %9102 = vmatprep.subr.bf16.mxu0 0
        %9103 = vmatpush1.bf16.msra.mxu0 0
        %9104 = vmatprep.subr.bf16.mxu0 0
        %9105 = vmatpush1.bf16.msra.mxu0 0
        %9106 = vmatprep.subr.bf16.mxu0 0
        %9107 = vmatpush1.bf16.msra.mxu0 0
        %9108 = vmatprep.subr.bf16.mxu0 0
        %9109 = vmatpush1.bf16.msra.mxu0 0
        %9110 = vmatprep.subr.bf16.mxu0 0
        %9111 = vmatpush1.bf16.msra.mxu0 0
        %9112 = vmatprep.subr.bf16.mxu0 0
        %9113 = vmatpush1.bf16.msra.mxu0 0
        %9114 = vmatprep.subr.bf16.mxu0 0
        %9115 = vmatpush1.bf16.msra.mxu0 0
        %9116 = vmatprep.mubr.bf16.mxu0 0
        %9117 = vmatmul.mubr.bf16.gmra.mrb[0].mxu0 %v9082
        %v9118 = vpop.f32.mrb[0].mxu0
        %v9119 = vadd.f32 0.0, %v9118
        %v9120 = vpop.f32.mrb[0].mxu0
        %v9121 = vpop.f32.mrb[0].mxu0
        %v9122 = vpop.f32.mrb[0].mxu0
        %9123 = vdwg.mxu0
        %v9124 = vadd.f32 %v9046, %v9119
        %v9125 = vld [vmem:[#allocation3 + $0x8] sm:$0x1]
        %v9126 = vpack.c.bf16 %v9125, %v9125
        %v9127 = vld [vmem:[%s5 + $0x100] sm:$0xf]
        %v9128 = vld [vmem:[%s5 + $0x104] sm:$0xf]
        %v9129 = vld [vmem:[%s5 + $0x108] sm:$0xf]
        %v9130 = vld [vmem:[%s5 + $0x10c] sm:$0xf]
        %v9131 = vld [vmem:[%s5 + $0x110] sm:$0xf]
        %v9132 = vld [vmem:[%s5 + $0x114] sm:$0xf]
        %v9133 = vld [vmem:[%s5 + $0x118] sm:$0xf]
        %v9134 = vld [vmem:[%s5 + $0x11c] sm:$0xf]
        %v9143 = vunpack.c.l.b16 %v9127
        %v9144 = vunpack.c.l.b16 %v9128
        %v9145 = vunpack.c.l.b16 %v9129
        %v9146 = vunpack.c.l.b16 %v9130
        %v9147 = vunpack.c.l.b16 %v9131
        %v9148 = vunpack.c.l.b16 %v9132
        %v9149 = vunpack.c.l.b16 %v9133
        %v9150 = vunpack.c.l.b16 %v9134
        %v9151 = vpack.c.b16 %v9144, %v9143
        %v9152 = vpack.c.b16 %v9146, %v9145
        %v9153 = vpack.c.b16 %v9148, %v9147
        %v9154 = vpack.c.b16 %v9150, %v9149
        %v9160 = vsel %vm449, %v9126, 0
        %9162 = vmatprep.subr.bf16.mxu0 0
        %9163 = vmatpush1.bf16.msra.mxu0 %v9151
        %9164 = vmatprep.subr.bf16.mxu0 0
        %9165 = vmatpush1.bf16.msra.mxu0 %v9152
        %9166 = vmatprep.subr.bf16.mxu0 0
        %9167 = vmatpush1.bf16.msra.mxu0 %v9153
        %9168 = vmatprep.subr.bf16.mxu0 0
        %9169 = vmatpush1.bf16.msra.mxu0 %v9154
        %9170 = vmatprep.subr.bf16.mxu0 0
        %9171 = vmatpush1.bf16.msra.mxu0 0
        %9172 = vmatprep.subr.bf16.mxu0 0
        %9173 = vmatpush1.bf16.msra.mxu0 0
        %9174 = vmatprep.subr.bf16.mxu0 0
        %9175 = vmatpush1.bf16.msra.mxu0 0
        %9176 = vmatprep.subr.bf16.mxu0 0
        %9177 = vmatpush1.bf16.msra.mxu0 0
        %9178 = vmatprep.subr.bf16.mxu0 0
        %9179 = vmatpush1.bf16.msra.mxu0 0
        %9180 = vmatprep.subr.bf16.mxu0 0
        %9181 = vmatpush1.bf16.msra.mxu0 0
        %9182 = vmatprep.subr.bf16.mxu0 0
        %9183 = vmatpush1.bf16.msra.mxu0 0
        %9184 = vmatprep.subr.bf16.mxu0 0
        %9185 = vmatpush1.bf16.msra.mxu0 0
        %9186 = vmatprep.subr.bf16.mxu0 0
        %9187 = vmatpush1.bf16.msra.mxu0 0
        %9188 = vmatprep.subr.bf16.mxu0 0
        %9189 = vmatpush1.bf16.msra.mxu0 0
        %9190 = vmatprep.subr.bf16.mxu0 0
        %9191 = vmatpush1.bf16.msra.mxu0 0
        %9192 = vmatprep.subr.bf16.mxu0 0
        %9193 = vmatpush1.bf16.msra.mxu0 0
        %9194 = vmatprep.mubr.bf16.mxu0 0
        %9195 = vmatmul.mubr.bf16.gmra.mrb[0].mxu0 %v9160
        %v9196 = vpop.f32.mrb[0].mxu0
        %v9197 = vadd.f32 0.0, %v9196
        %v9198 = vpop.f32.mrb[0].mxu0
        %v9199 = vpop.f32.mrb[0].mxu0
        %v9200 = vpop.f32.mrb[0].mxu0
        %9201 = vdwg.mxu0
        %v9202 = vadd.f32 %v9124, %v9197
        %v9203 = vld [vmem:[%s6] sm:$0x1]
        %v9204 = vadd.f32 %v9202, %v9203
        %v9205 = vmax.f32 %v9204, 0.0
        %v9206 = vpack.c.bf16 %v9205, %v9205
        %v9209 = vunpack.c.l.s4 1966171168
        %v9210 = vunpack.c.0.s8 %v9209
        %v9211 = vlaneseq
        %v9212 = vshrl.u32 %v9211, 7
        %v9213 = vsub.s32 %v9210, %v9212
        %v9214 = vrot.slane %v9206, %v9213
        %v9216 = vunpack.c.l.s4 1966171168
        %v9217 = vunpack.c.0.s8 %v9216
        %v9218 = vlaneseq
        %v9219 = vshrl.u32 %v9218, 7
        %v9220 = vsub.s32 %v9217, %v9219
        %v9221 = vrot.slane %v9214, %v9220
        %v9223 = vshll.u32 %v9221, 16
        %vm9226 = vsmask.f32 7938
        %vm9227 = vmand %vm4787, %vm9226
        %v9228 = vld [vmem:[#allocation4] sm:$0x1]
        %v9229 = vsel %vm9227, %v9223, %v9228
        %9230 = vst [vmem:[#allocation4] sm:$0x1] %v9229
        %v9231 = vld [vmem:[#allocation4] sm:$0x1]
        %v9232 = vld [vmem:[%s7] sm:$0xf]
        %v9233 = vld [vmem:[%s7 + $0x4] sm:$0xf]
        %v9234 = vld [vmem:[%s7 + $0x8] sm:$0xf]
        %v9235 = vld [vmem:[%s7 + $0xc] sm:$0xf]
        %v9236 = vld [vmem:[%s7 + $0x10] sm:$0xf]
        %v9237 = vld [vmem:[%s7 + $0x14] sm:$0xf]
        %v9238 = vld [vmem:[%s7 + $0x18] sm:$0xf]
        %v9239 = vld [vmem:[%s7 + $0x1c] sm:$0xf]
        %v9240 = vld [vmem:[%s8] sm:$0x1]
        %v9242 = vlaneseq
        %v9243 = vshrl.u32 %v9242, 7
        %v9244 = vsub.s32 0, %v9243
        %v9245 = vrot.slane %v9240, %v9244
        %v9255 = vunpack.c.l.b16 %v9232
        %v9256 = vunpack.c.l.b16 %v9233
        %v9257 = vunpack.c.l.b16 %v9234
        %v9258 = vunpack.c.l.b16 %v9235
        %v9259 = vunpack.c.l.b16 %v9236
        %v9260 = vunpack.c.l.b16 %v9237
        %v9261 = vunpack.c.l.b16 %v9238
        %v9262 = vunpack.c.l.b16 %v9239
        %v9263 = vpack.c.b16 %v9256, %v9255
        %v9264 = vpack.c.b16 %v9258, %v9257
        %v9265 = vpack.c.b16 %v9260, %v9259
        %v9266 = vpack.c.b16 %v9262, %v9261
        %v9272 = vsel %vm449, %v9231, 0
        %9274 = vmatprep.subr.bf16.mxu0 0
        %9275 = vmatpush1.bf16.msra.mxu0 %v9263
        %9276 = vmatprep.subr.bf16.mxu0 0
        %9277 = vmatpush1.bf16.msra.mxu0 %v9264
        %9278 = vmatprep.subr.bf16.mxu0 0
        %9279 = vmatpush1.bf16.msra.mxu0 %v9265
        %9280 = vmatprep.subr.bf16.mxu0 0
        %9281 = vmatpush1.bf16.msra.mxu0 %v9266
        %9282 = vmatprep.subr.bf16.mxu0 0
        %9283 = vmatpush1.bf16.msra.mxu0 0
        %9284 = vmatprep.subr.bf16.mxu0 0
        %9285 = vmatpush1.bf16.msra.mxu0 0
        %9286 = vmatprep.subr.bf16.mxu0 0
        %9287 = vmatpush1.bf16.msra.mxu0 0
        %9288 = vmatprep.subr.bf16.mxu0 0
        %9289 = vmatpush1.bf16.msra.mxu0 0
        %9290 = vmatprep.subr.bf16.mxu0 0
        %9291 = vmatpush1.bf16.msra.mxu0 0
        %9292 = vmatprep.subr.bf16.mxu0 0
        %9293 = vmatpush1.bf16.msra.mxu0 0
        %9294 = vmatprep.subr.bf16.mxu0 0
        %9295 = vmatpush1.bf16.msra.mxu0 0
        %9296 = vmatprep.subr.bf16.mxu0 0
        %9297 = vmatpush1.bf16.msra.mxu0 0
        %9298 = vmatprep.subr.bf16.mxu0 0
        %9299 = vmatpush1.bf16.msra.mxu0 0
        %9300 = vmatprep.subr.bf16.mxu0 0
        %9301 = vmatpush1.bf16.msra.mxu0 0
        %9302 = vmatprep.subr.bf16.mxu0 0
        %9303 = vmatpush1.bf16.msra.mxu0 0
        %9304 = vmatprep.subr.bf16.mxu0 0
        %9305 = vmatpush1.bf16.msra.mxu0 0
        %9306 = vmatprep.mubr.bf16.mxu0 0
        %9307 = vmatmul.mubr.bf16.gmra.mrb[0].mxu0 %v9272
        %v9308 = vpop.f32.mrb[0].mxu0
        %v9309 = vadd.f32 %v9245, %v9308
        %v9310 = vpop.f32.mrb[0].mxu0
        %v9311 = vpop.f32.mrb[0].mxu0
        %v9312 = vpop.f32.mrb[0].mxu0
        %9313 = vdwg.mxu0
        %v9314 = vmax.f32 %v9309, 0.0
        %vm9315 = vcmask 123904
        %9316 = vst.msk [vmem:[%s328] sm:$0x3] %vm9315, %v9314
        %s9317 = sand.u32 %s225, 1
        %s9318 = scalar_lea.sflag [#allocation6], %s9317
        %s9319 = sand.u32 %s225, 1
        %s9320 = smul.addr %s9319, 2
        %s9321 = scalar_lea.vmem [#allocation5], %s9320
        // Predicated region
        $region57: #{forward.1} parent=55 // pred_check
          %p9322 = pneg %p235
        $region58: #{forward.1} parent=55 // pred_check_branch
          %9324 = sbr.rel (%p9322) target = $region60
        $region59: #{forward.1} parent=55 // pred_region
          %s9326 = ssub.s32 32, 32
          %9327 = vsyncadd %s9318, %s9326
          %s9328 = smul.addr %s23, 32
          %s9329 = scalar_lea.hbm %s9, %s9328
          %s9331 = sshll.u32 %s9321, 4
          %s9332 = int_to_ptr.vmem [resolvable:$true] %s9331
          %9334 = dma.vmem_to_hbm [thread:$0]  %s9332, 32, %s9329, %s9318
        $region60: #{forward.1} parent=55 // pred_fallthru
          _
      $region56: #{forward.1} parent=5 // pred_fallthru
        _
      %p9335 = scmp.le.s32.totalorder 2, %s18
      // Predicated region
      $region61: #{forward.1} parent=5 // pred_check
        %p9336 = pneg %p9335
      $region62: #{forward.1} parent=5 // pred_check_branch
        %9338 = sbr.rel (%p9336) target = $region64
      $region63: #{forward.1} parent=5 // pred_region
        %s9339 = ssub.s32 %s18, 2
        // Predicated region
        $region65: #{forward.1} parent=63 // pred_check
          %p9340 = pneg %p241
        $region66: #{forward.1} parent=63 // pred_check_branch
          %9342 = sbr.rel (%p9340) target = $region68
        $region67: #{forward.1} parent=63 // pred_region
          %s9343 = sand.u32 %s226, 1
          %s9344 = scalar_lea.sflag [#allocation6], %s9343
          %s9345 = sand.u32 %s226, 1
          %s9346 = smul.addr %s9345, 2
          %s9347 = scalar_lea.vmem [#allocation5], %s9346
          %9348 = dma.done %s9344, 32
        $region68: #{forward.1} parent=63 // pred_fallthru
          _
      $region64: #{forward.1} parent=5 // pred_fallthru
        _
    $region6: #{forward.1} parent=1 // loop_footer
      %s22 = sadd.s32 1, %s18
    $region7: #{forward.1} parent=1 // loop_footer_branch
      %17 = sbr.rel target = $region3
    $region8: #{forward.1} parent=1 // loop_exit
      _
    %9349 = vsyncpa [#allocation6], 1
    %s9350 = scalar_lea.sflag [#allocation6], 1
    %9351 = vsyncpa %s9350, 1

</llo_original>
